<compile_context>
chip_gen: v7x
topology: tpu7x:2x2x1
jax: 0.10.0
libtpu: 0.0.40
codegen_flags: <defaults>
</compile_context>

<pallas_src>
import jax
import jax.numpy as jnp
from jax.experimental import pallas as pl
from jax.experimental.pallas import tpu as pltpu

LANE = 128                       # lane width: channel dims are padded to this
VMEM_LIMIT = 48 * 1024 * 1024    # explicit scoped-VMEM budget (ok on v5e/v6e/v7x)


def _round_up(n, m):
    return ((n + m - 1) // m) * m


def _compiler_params():
    return pltpu.CompilerParams(
        dimension_semantics=("parallel",),
        vmem_limit_bytes=VMEM_LIMIT,
    )


# ----------------------------------------------------------------------------
# Pallas kernels
# ----------------------------------------------------------------------------
def _upconv_kernel(x_ref, w_ref, b_ref, o_ref):
    """ConvTranspose2d(k=2, s=2) as one GEMM over the 4 sub-pixel taps.

    x_ref: (TM, K)  bf16   TM = H*W pixels of one batch image, K = padded Cin
    w_ref: (K, N)   bf16   N columns ordered (di, dj, oc), zero-padded to LANE
    b_ref: (1, N)   f32
    o_ref: (TM, N)  bf16
    """
    y = jnp.dot(x_ref[...], w_ref[...], preferred_element_type=jnp.float32)
    o_ref[...] = (y + b_ref[...]).astype(o_ref.dtype)


def _conv3x3_bn_relu_kernel(x_ref, w_ref, shift_ref, o_ref):
    """3x3 conv (pad=1) + folded-BN shift + ReLU; patches built in VMEM.

    x_ref:     (1, H+2, W+2, Cp) bf16  spatially zero-padded, channel-padded
    w_ref:     (9, Cp, Np)       bf16  tap-major (ky*3+kx); BN scale pre-folded
    shift_ref: (1, Np)           f32   folded BN shift (zero in padded lanes)
    o_ref:     (1, H+2, W+2, Np)       written with a zero border so the next
                                       3x3 conv can consume it directly
    """
    Hpp, Wpp, Np = o_ref.shape[1], o_ref.shape[2], o_ref.shape[3]
    Cp = x_ref.shape[3]
    H, W = Hpp - 2, Wpp - 2

    acc = jnp.zeros((H * W, Np), jnp.float32)
    for ky in range(3):                       # 9 shifted in-VMEM dots (no im2col)
        for kx in range(3):
            patch = x_ref[:, ky:ky + H, kx:kx + W, :].reshape(H * W, Cp)
            acc = acc + jnp.dot(patch, w_ref[ky * 3 + kx],
                                preferred_element_type=jnp.float32)

    y = jnp.maximum(acc + shift_ref[...], 0.0).astype(o_ref.dtype)

    o_ref[...] = jnp.zeros(o_ref.shape, o_ref.dtype)           # zero halo border
    o_ref[:, 1:1 + H, 1:1 + W, :] = y.reshape(1, H, W, Np)


# ----------------------------------------------------------------------------
# Wrappers around pallas_call
# ----------------------------------------------------------------------------
def _upsample_conv_transpose(down_nhwc, w_ct, b_ct):
    """ConvTranspose2d(Cin, Cout, k=2, s=2) -> (B, 2H, 2W, Cout) in bf16."""
    B, H, W, Cin = down_nhwc.shape
    Cout = w_ct.shape[1]
    K = _round_up(Cin, LANE)
    N = 4 * Cout
    Np = _round_up(N, LANE)          # lane-dense GEMM output
    TM = H * W                       # one image worth of rows per grid step

    x = down_nhwc.reshape(B * H * W, Cin)
    x = jnp.pad(x, ((0, 0), (0, K - Cin))).astype(jnp.bfloat16)
    w = jnp.transpose(w_ct, (0, 2, 3, 1)).reshape(Cin, N)       # (Cin,(di,dj,oc))
    w = jnp.pad(w, ((0, K - Cin), (0, Np - N))).astype(jnp.bfloat16)
    b = jnp.pad(jnp.tile(b_ct, 4), (0, Np - N)).reshape(1, Np).astype(jnp.float32)

    y = pl.pallas_call(
        _upconv_kernel,
        out_shape=jax.ShapeDtypeStruct((B * H * W, Np), jnp.bfloat16),
        grid=(B,),
        in_specs=[pl.BlockSpec((TM, K), lambda i: (i, 0)),
                  pl.BlockSpec((K, Np), lambda i: (0, 0)),
                  pl.BlockSpec((1, Np), lambda i: (0, 0))],
        out_specs=pl.BlockSpec((TM, Np), lambda i: (i, 0)),
        compiler_params=_compiler_params(),
    )(x, w, b)

    # 2x2 pixel shuffle (layout glue): (B*H*W, 4*Cout) -> (B, 2H, 2W, Cout)
    y = y[:, :N].reshape(B, H, W, 2, 2, Cout)
    return y.transpose(0, 1, 3, 2, 4, 5).reshape(B, 2 * H, 2 * W, Cout)


def _fold_conv_bn(w_oihw, bias, gamma, beta, mean, var, *, cin_pad, cout_pad, eps):
    """Fold eval-mode BN into the conv weights; return (9, Cp, Np) bf16 + shift."""
    O, I = w_oihw.shape[0], w_oihw.shape[1]
    scale = gamma / jnp.sqrt(var + eps)                 # (O,)
    shift = (bias - mean) * scale + beta                # (O,)
    w = jnp.transpose(w_oihw, (2, 3, 1, 0)) * scale     # (3,3,I,O), scale folded
    w = w.reshape(9, I, O)
    w = jnp.pad(w, ((0, 0), (0, cin_pad - I), (0, cout_pad - O))).astype(jnp.bfloat16)
    shift = jnp.pad(shift, (0, cout_pad - O)).reshape(1, cout_pad).astype(jnp.float32)
    return w, shift


def _conv3x3_bn_relu(x_padded, w, shift, out_dtype):
    """x_padded: (B, H+2, W+2, Cp) bf16 -> (B, H+2, W+2, Np), zero border kept."""
    B, Hpp, Wpp, Cp = x_padded.shape
    Np = w.shape[-1]
    # TODO(synk): for large images, tile output rows with a +-1 halo instead of
    #             one full image per grid step (current blocks fit VMEM easily
    #             at the shapes this module is used with).
    return pl.pallas_call(
        _conv3x3_bn_relu_kernel,
        out_shape=jax.ShapeDtypeStruct((B, Hpp, Wpp, Np), out_dtype),
        grid=(B,),
        in_specs=[pl.BlockSpec((1, Hpp, Wpp, Cp), lambda i: (i, 0, 0, 0)),
                  pl.BlockSpec((9, Cp, Np), lambda i: (0, 0, 0)),
                  pl.BlockSpec((1, Np), lambda i: (0, 0))],
        out_specs=pl.BlockSpec((1, Hpp, Wpp, Np), lambda i: (i, 0, 0, 0)),
        compiler_params=_compiler_params(),
    )(x_padded, w, shift)


# ----------------------------------------------------------------------------
# UpBlock forward (NCHW in / NCHW out, matching the PyTorch module)
# ----------------------------------------------------------------------------
def up_block_forward(down_nchw, skip_nchw, params, eps=1e-5):
    down = jnp.transpose(down_nchw, (0, 2, 3, 1))        # -> NHWC
    skip = jnp.transpose(skip_nchw, (0, 2, 3, 1))        # -> NHWC
    B, H, W, Cin = down.shape
    Hf, Wf = 2 * H, 2 * W
    Cup = params["ct_w"].shape[1]
    Cs = skip.shape[-1]
    C1 = Cup + Cs
    Cmid = params["c1_w"].shape[0]
    Cfin = params["c2_w"].shape[0]
    assert Wf % 8 == 0, "upsampled width must be sublane-aligned (multiple of 8)"

    # ---- ConvTranspose2d(k=2, s=2): Pallas GEMM + pixel shuffle ------------
    up = _upsample_conv_transpose(down, params["ct_w"], params["ct_b"])

    # ---- channel concat + lane padding + 1px spatial halo (layout glue) ----
    # TODO(synk): fuse the pixel shuffle / concat / halo pad into the conv1
    #             kernel (split its weight into W_up / W_skip and accumulate
    #             two dots) to remove the remaining inter-kernel HBM traffic.
    C1p = _round_up(C1, LANE)
    x = jnp.concatenate([up, skip.astype(jnp.bfloat16)], axis=-1)
    x = jnp.pad(x, ((0, 0), (1, 1), (1, 1), (0, C1p - C1)))

    # ---- DoubleConv: (Conv3x3 + BN + ReLU) x 2 ------------------------------
    Cmidp = _round_up(Cmid, LANE)
    Cfinp = _round_up(Cfin, LANE)
    w1, s1 = _fold_conv_bn(params["c1_w"], params["c1_b"], params["bn1_g"],
                           params["bn1_b"], params["bn1_m"], params["bn1_v"],
                           cin_pad=C1p, cout_pad=Cmidp, eps=eps)
    w2, s2 = _fold_conv_bn(params["c2_w"], params["c2_b"], params["bn2_g"],
                           params["bn2_b"], params["bn2_m"], params["bn2_v"],
                           cin_pad=Cmidp, cout_pad=Cfinp, eps=eps)

    h = _conv3x3_bn_relu(x, w1, s1, out_dtype=jnp.bfloat16)   # bf16 writeback
    y = _conv3x3_bn_relu(h, w2, s2, out_dtype=jnp.float32)    # final in f32

    y = y[:, 1:1 + Hf, 1:1 + Wf, :Cfin]                       # drop halo + pad lanes
    return jnp.transpose(y, (0, 3, 1, 2))                     # back to NCHW


# TODO(synk): up_sample_mode='bilinear' (align_corners=True) path not implemented;
#             only the 'conv_transpose' branch is covered.


# ----------------------------------------------------------------------------
# Pure-JAX reference (independent conv implementation) for a correctness check
# ----------------------------------------------------------------------------
def _reference_forward(down_nchw, skip_nchw, params, eps=1e-5):
    down = jnp.transpose(down_nchw, (0, 2, 3, 1))
    skip = jnp.transpose(skip_nchw, (0, 2, 3, 1))
    B, H, W, Cin = down.shape
    Cout = params["ct_w"].shape[1]
    t = jnp.einsum("bhwc,codk->bhdwko", down, params["ct_w"])
    up = t.reshape(B, 2 * H, 2 * W, Cout) + params["ct_b"]
    x = jnp.concatenate([up, skip], axis=-1)

    def conv_bn_relu(xx, w_oihw, b, g, bt, m, v):
        w = jnp.transpose(w_oihw, (2, 3, 1, 0))          # HWIO
        y = jax.lax.conv_general_dilated(
            xx, w, window_strides=(1, 1), padding="SAME",
            dimension_numbers=("NHWC", "HWIO", "NHWC")) + b
        y = (y - m) / jnp.sqrt(v + eps) * g + bt
        return jnp.maximum(y, 0.0)

    x = conv_bn_relu(x, params["c1_w"], params["c1_b"],
                     params["bn1_g"], params["bn1_b"], params["bn1_m"], params["bn1_v"])
    x = conv_bn_relu(x, params["c2_w"], params["c2_b"],
                     params["bn2_g"], params["bn2_b"], params["bn2_m"], params["bn2_v"])
    return jnp.transpose(x, (0, 3, 1, 2))


# ----------------------------------------------------------------------------
if __name__ == "__main__":
    B, Cin, Cout, H, W = 2, 8, 4, 8, 8      # skip has Cin - Cout = 4 channels
    key = jax.random.PRNGKey(0)
    ks = jax.random.split(key, 12)

    # deterministic synthetic parameters (eval-mode BN: running stats used)
    params = {
        "ct_w": 0.1 * jax.random.normal(ks[0], (Cin, Cout, 2, 2), jnp.float32),
        "ct_b": 0.1 * jax.random.normal(ks[1], (Cout,), jnp.float32),
        "c1_w": 0.1 * jax.random.normal(ks[2], (Cout, Cin, 3, 3), jnp.float32),
        "c1_b": 0.1 * jax.random.normal(ks[3], (Cout,), jnp.float32),
        "bn1_g": 1.0 + 0.1 * jax.random.normal(ks[4], (Cout,), jnp.float32),
        "bn1_b": 0.1 * jax.random.normal(ks[5], (Cout,), jnp.float32),
        "bn1_m": 0.05 * jax.random.normal(ks[6], (Cout,), jnp.float32),
        "bn1_v": 1.0 + 0.1 * jax.random.uniform(ks[7], (Cout,), jnp.float32),
        "c2_w": 0.1 * jax.random.normal(ks[8], (Cout, Cout, 3, 3), jnp.float32),
        "c2_b": 0.1 * jax.random.normal(ks[9], (Cout,), jnp.float32),
        "bn2_g": 1.0 + 0.1 * jax.random.normal(ks[10], (Cout,), jnp.float32),
        "bn2_b": 0.1 * jax.random.normal(ks[11], (Cout,), jnp.float32),
        "bn2_m": jnp.zeros((Cout,), jnp.float32),
        "bn2_v": jnp.ones((Cout,), jnp.float32),
    }

    kd, ksk = jax.random.split(jax.random.PRNGKey(42))
    down_input = jax.random.normal(kd, (B, Cin, H, W), jnp.float32)          # NCHW
    skip_input = jax.random.normal(ksk, (B, Cin - Cout, 2 * H, 2 * W), jnp.float32)

    out = jax.jit(up_block_forward)(down_input, skip_input, params)
    out = jax.block_until_ready(out)

    ref = _reference_forward(down_input, skip_input, params)
    assert out.shape == (B, Cout, 2 * H, 2 * W), out.shape
    # bf16 GEMM operands -> loosened tolerance (still catches layout/index bugs)
    assert jnp.allclose(out, ref, atol=5e-2, rtol=5e-2), float(jnp.abs(out - ref).max())

    print("KERNEL_OK")
</pallas_src>

<mosaic_0001>
module attributes {stable_mosaic.version = 11 : i64} {
  func.func @_upconv_kernel(%arg0: i32, %arg1: memref<64x128xbf16, #tpu.memory_space<vmem>>, %arg2: memref<128x128xbf16, #tpu.memory_space<vmem>>, %arg3: memref<1x128xf32, #tpu.memory_space<vmem>>, %arg4: memref<64x128xbf16, #tpu.memory_space<vmem>>) attributes {dimension_semantics = [#tpu.dimension_semantics<parallel>], iteration_bounds = array<i64: 2>, scalar_prefetch = 0 : i64, scratch_operands = 0 : i64, tpu.core_type = #tpu.core_type<tc>, window_params = [{transform_indices = @transform_0, window_bounds = array<i64: 64, 128>}, {pipeline_mode = #tpu.pipeline_mode<synchronous>, transform_indices = @transform_1, window_bounds = array<i64: 128, 128>}, {pipeline_mode = #tpu.pipeline_mode<synchronous>, transform_indices = @transform_2, window_bounds = array<i64: 1, 128>}, {transform_indices = @transform_3, window_bounds = array<i64: 64, 128>}]} {
    %c0 = arith.constant 0 : index
    %c0_0 = arith.constant 0 : index
    %0 = vector.load %arg1[%c0, %c0_0] : memref<64x128xbf16, #tpu.memory_space<vmem>>, vector<64x128xbf16>
    %c0_1 = arith.constant 0 : index
    %c0_2 = arith.constant 0 : index
    %1 = vector.load %arg2[%c0_1, %c0_2] : memref<128x128xbf16, #tpu.memory_space<vmem>>, vector<128x128xbf16>
    %cst = arith.constant dense<0.000000e+00> : vector<64x128xf32>
    %2 = tpu.matmul %0, %1, %cst {dimension_numbers = #tpu.dot_dimension_numbers<[1], [0], [0], [1], [0, 0, 1, 1], [], []>} : vector<64x128xbf16>, vector<128x128xbf16>, vector<64x128xf32> -> vector<64x128xf32>
    %c0_3 = arith.constant 0 : index
    %c0_4 = arith.constant 0 : index
    %3 = vector.load %arg3[%c0_3, %c0_4] : memref<1x128xf32, #tpu.memory_space<vmem>>, vector<1x128xf32>
    %4 = vector.broadcast %3 : vector<1x128xf32> to vector<64x128xf32>
    %5 = arith.addf %2, %4 : vector<64x128xf32>
    %6 = arith.truncf %5 : vector<64x128xf32> to vector<64x128xbf16>
    %c0_5 = arith.constant 0 : index
    %c0_6 = arith.constant 0 : index
    %7 = vector.load %arg4[%c0_5, %c0_6] : memref<64x128xbf16, #tpu.memory_space<vmem>>, vector<64x128xbf16>
    tpu.vector_store %arg4[%c0_5, %c0_6], %6 {strides = array<i32>} : memref<64x128xbf16, #tpu.memory_space<vmem>>, vector<64x128xbf16>,
    return
  }
  func.func @transform_0(%arg0: i32) -> (i32, i32) {
    %c0_i32 = arith.constant 0 : i32
    %c0_i32_0 = arith.constant 0 : i32
    return %arg0, %c0_i32 : i32, i32
  }
  func.func @transform_1(%arg0: i32) -> (i32, i32) {
    %c0_i32 = arith.constant 0 : i32
    %c0_i32_0 = arith.constant 0 : i32
    %c0_i32_1 = arith.constant 0 : i32
    return %c0_i32, %c0_i32_0 : i32, i32
  }
  func.func @transform_2(%arg0: i32) -> (i32, i32) {
    %c0_i32 = arith.constant 0 : i32
    %c0_i32_0 = arith.constant 0 : i32
    %c0_i32_1 = arith.constant 0 : i32
    return %c0_i32, %c0_i32_0 : i32, i32
  }
  func.func @transform_3(%arg0: i32) -> (i32, i32) {
    %c0_i32 = arith.constant 0 : i32
    %c0_i32_0 = arith.constant 0 : i32
    return %arg0, %c0_i32 : i32, i32
  }
}

module attributes {stable_mosaic.version = 11 : i64} {
  func.func @_conv3x3_bn_relu_kernel(%arg0: i32, %arg1: memref<1x18x18x128xbf16, #tpu.memory_space<vmem>>, %arg2: memref<9x128x128xbf16, #tpu.memory_space<vmem>>, %arg3: memref<1x128xf32, #tpu.memory_space<vmem>>, %arg4: memref<1x18x18x128xf32, #tpu.memory_space<vmem>>) attributes {dimension_semantics = [#tpu.dimension_semantics<parallel>], iteration_bounds = array<i64: 2>, scalar_prefetch = 0 : i64, scratch_operands = 0 : i64, tpu.core_type = #tpu.core_type<tc>, window_params = [{transform_indices = @transform_0, window_bounds = array<i64: 1, 18, 18, 128>}, {pipeline_mode = #tpu.pipeline_mode<synchronous>, transform_indices = @transform_1, window_bounds = array<i64: 9, 128, 128>}, {pipeline_mode = #tpu.pipeline_mode<synchronous>, transform_indices = @transform_2, window_bounds = array<i64: 1, 128>}, {transform_indices = @transform_3, window_bounds = array<i64: 1, 18, 18, 128>}]} {
    %cst = arith.constant 0.000000e+00 : f32
    %0 = vector.broadcast %cst : f32 to vector<256x128xf32>
    %c0 = arith.constant 0 : index
    %c0_0 = arith.constant 0 : index
    %c0_1 = arith.constant 0 : index
    %c0_2 = arith.constant 0 : index
    %1 = vector.load %arg1[%c0, %c0_0, %c0_1, %c0_2] : memref<1x18x18x128xbf16, #tpu.memory_space<vmem>>, vector<1x16x16x128xbf16>
    %2 = vector.shape_cast %1 : vector<1x16x16x128xbf16> to vector<256x128xbf16>
    %c0_3 = arith.constant 0 : index
    %c0_4 = arith.constant 0 : index
    %c0_5 = arith.constant 0 : index
    %3 = vector.load %arg2[%c0_3, %c0_4, %c0_5] : memref<9x128x128xbf16, #tpu.memory_space<vmem>>, vector<1x128x128xbf16>
    %4 = vector.shape_cast %3 : vector<1x128x128xbf16> to vector<128x128xbf16>
    %cst_6 = arith.constant dense<0.000000e+00> : vector<256x128xf32>
    %5 = tpu.matmul %2, %4, %cst_6 {dimension_numbers = #tpu.dot_dimension_numbers<[1], [0], [0], [1], [0, 0, 1, 1], [], []>} : vector<256x128xbf16>, vector<128x128xbf16>, vector<256x128xf32> -> vector<256x128xf32>
    %6 = arith.addf %0, %5 : vector<256x128xf32>
    %c0_7 = arith.constant 0 : index
    %c0_8 = arith.constant 0 : index
    %c1 = arith.constant 1 : index
    %c0_9 = arith.constant 0 : index
    %7 = vector.load %arg1[%c0_7, %c0_8, %c1, %c0_9] : memref<1x18x18x128xbf16, #tpu.memory_space<vmem>>, vector<1x16x16x128xbf16>
    %8 = vector.shape_cast %7 : vector<1x16x16x128xbf16> to vector<256x128xbf16>
    %c1_10 = arith.constant 1 : index
    %c0_11 = arith.constant 0 : index
    %c0_12 = arith.constant 0 : index
    %9 = vector.load %arg2[%c1_10, %c0_11, %c0_12] : memref<9x128x128xbf16, #tpu.memory_space<vmem>>, vector<1x128x128xbf16>
    %10 = vector.shape_cast %9 : vector<1x128x128xbf16> to vector<128x128xbf16>
    %cst_13 = arith.constant dense<0.000000e+00> : vector<256x128xf32>
    %11 = tpu.matmul %8, %10, %cst_13 {dimension_numbers = #tpu.dot_dimension_numbers<[1], [0], [0], [1], [0, 0, 1, 1], [], []>} : vector<256x128xbf16>, vector<128x128xbf16>, vector<256x128xf32> -> vector<256x128xf32>
    %12 = arith.addf %6, %11 : vector<256x128xf32>
    %c0_14 = arith.constant 0 : index
    %c0_15 = arith.constant 0 : index
    %c2 = arith.constant 2 : index
    %c0_16 = arith.constant 0 : index
    %13 = vector.load %arg1[%c0_14, %c0_15, %c2, %c0_16] : memref<1x18x18x128xbf16, #tpu.memory_space<vmem>>, vector<1x16x16x128xbf16>
    %14 = vector.shape_cast %13 : vector<1x16x16x128xbf16> to vector<256x128xbf16>
    %c2_17 = arith.constant 2 : index
    %c0_18 = arith.constant 0 : index
    %c0_19 = arith.constant 0 : index
    %15 = vector.load %arg2[%c2_17, %c0_18, %c0_19] : memref<9x128x128xbf16, #tpu.memory_space<vmem>>, vector<1x128x128xbf16>
    %16 = vector.shape_cast %15 : vector<1x128x128xbf16> to vector<128x128xbf16>
    %cst_20 = arith.constant dense<0.000000e+00> : vector<256x128xf32>
    %17 = tpu.matmul %14, %16, %cst_20 {dimension_numbers = #tpu.dot_dimension_numbers<[1], [0], [0], [1], [0, 0, 1, 1], [], []>} : vector<256x128xbf16>, vector<128x128xbf16>, vector<256x128xf32> -> vector<256x128xf32>
    %18 = arith.addf %12, %17 : vector<256x128xf32>
    %c0_21 = arith.constant 0 : index
    %c1_22 = arith.constant 1 : index
    %c0_23 = arith.constant 0 : index
    %c0_24 = arith.constant 0 : index
    %19 = vector.load %arg1[%c0_21, %c1_22, %c0_23, %c0_24] : memref<1x18x18x128xbf16, #tpu.memory_space<vmem>>, vector<1x16x16x128xbf16>
    %20 = vector.shape_cast %19 : vector<1x16x16x128xbf16> to vector<256x128xbf16>
    %c3 = arith.constant 3 : index
    %c0_25 = arith.constant 0 : index
    %c0_26 = arith.constant 0 : index
    %21 = vector.load %arg2[%c3, %c0_25, %c0_26] : memref<9x128x128xbf16, #tpu.memory_space<vmem>>, vector<1x128x128xbf16>
    %22 = vector.shape_cast %21 : vector<1x128x128xbf16> to vector<128x128xbf16>
    %cst_27 = arith.constant dense<0.000000e+00> : vector<256x128xf32>
    %23 = tpu.matmul %20, %22, %cst_27 {dimension_numbers = #tpu.dot_dimension_numbers<[1], [0], [0], [1], [0, 0, 1, 1], [], []>} : vector<256x128xbf16>, vector<128x128xbf16>, vector<256x128xf32> -> vector<256x128xf32>
    %24 = arith.addf %18, %23 : vector<256x128xf32>
    %c0_28 = arith.constant 0 : index
    %c1_29 = arith.constant 1 : index
    %c1_30 = arith.constant 1 : index
    %c0_31 = arith.constant 0 : index
    %25 = vector.load %arg1[%c0_28, %c1_29, %c1_30, %c0_31] : memref<1x18x18x128xbf16, #tpu.memory_space<vmem>>, vector<1x16x16x128xbf16>
    %26 = vector.shape_cast %25 : vector<1x16x16x128xbf16> to vector<256x128xbf16>
    %c4 = arith.constant 4 : index
    %c0_32 = arith.constant 0 : index
    %c0_33 = arith.constant 0 : index
    %27 = vector.load %arg2[%c4, %c0_32, %c0_33] : memref<9x128x128xbf16, #tpu.memory_space<vmem>>, vector<1x128x128xbf16>
    %28 = vector.shape_cast %27 : vector<1x128x128xbf16> to vector<128x128xbf16>
    %cst_34 = arith.constant dense<0.000000e+00> : vector<256x128xf32>
    %29 = tpu.matmul %26, %28, %cst_34 {dimension_numbers = #tpu.dot_dimension_numbers<[1], [0], [0], [1], [0, 0, 1, 1], [], []>} : vector<256x128xbf16>, vector<128x128xbf16>, vector<256x128xf32> -> vector<256x128xf32>
    %30 = arith.addf %24, %29 : vector<256x128xf32>
    %c0_35 = arith.constant 0 : index
    %c1_36 = arith.constant 1 : index
    %c2_37 = arith.constant 2 : index
    %c0_38 = arith.constant 0 : index
    %31 = vector.load %arg1[%c0_35, %c1_36, %c2_37, %c0_38] : memref<1x18x18x128xbf16, #tpu.memory_space<vmem>>, vector<1x16x16x128xbf16>
    %32 = vector.shape_cast %31 : vector<1x16x16x128xbf16> to vector<256x128xbf16>
    %c5 = arith.constant 5 : index
    %c0_39 = arith.constant 0 : index
    %c0_40 = arith.constant 0 : index
    %33 = vector.load %arg2[%c5, %c0_39, %c0_40] : memref<9x128x128xbf16, #tpu.memory_space<vmem>>, vector<1x128x128xbf16>
    %34 = vector.shape_cast %33 : vector<1x128x128xbf16> to vector<128x128xbf16>
    %cst_41 = arith.constant dense<0.000000e+00> : vector<256x128xf32>
    %35 = tpu.matmul %32, %34, %cst_41 {dimension_numbers = #tpu.dot_dimension_numbers<[1], [0], [0], [1], [0, 0, 1, 1], [], []>} : vector<256x128xbf16>, vector<128x128xbf16>, vector<256x128xf32> -> vector<256x128xf32>
    %36 = arith.addf %30, %35 : vector<256x128xf32>
    %c0_42 = arith.constant 0 : index
    %c2_43 = arith.constant 2 : index
    %c0_44 = arith.constant 0 : index
    %c0_45 = arith.constant 0 : index
    %37 = vector.load %arg1[%c0_42, %c2_43, %c0_44, %c0_45] : memref<1x18x18x128xbf16, #tpu.memory_space<vmem>>, vector<1x16x16x128xbf16>
    %38 = vector.shape_cast %37 : vector<1x16x16x128xbf16> to vector<256x128xbf16>
    %c6 = arith.constant 6 : index
    %c0_46 = arith.constant 0 : index
    %c0_47 = arith.constant 0 : index
    %39 = vector.load %arg2[%c6, %c0_46, %c0_47] : memref<9x128x128xbf16, #tpu.memory_space<vmem>>, vector<1x128x128xbf16>
    %40 = vector.shape_cast %39 : vector<1x128x128xbf16> to vector<128x128xbf16>
    %cst_48 = arith.constant dense<0.000000e+00> : vector<256x128xf32>
    %41 = tpu.matmul %38, %40, %cst_48 {dimension_numbers = #tpu.dot_dimension_numbers<[1], [0], [0], [1], [0, 0, 1, 1], [], []>} : vector<256x128xbf16>, vector<128x128xbf16>, vector<256x128xf32> -> vector<256x128xf32>
    %42 = arith.addf %36, %41 : vector<256x128xf32>
    %c0_49 = arith.constant 0 : index
    %c2_50 = arith.constant 2 : index
    %c1_51 = arith.constant 1 : index
    %c0_52 = arith.constant 0 : index
    %43 = vector.load %arg1[%c0_49, %c2_50, %c1_51, %c0_52] : memref<1x18x18x128xbf16, #tpu.memory_space<vmem>>, vector<1x16x16x128xbf16>
    %44 = vector.shape_cast %43 : vector<1x16x16x128xbf16> to vector<256x128xbf16>
    %c7 = arith.constant 7 : index
    %c0_53 = arith.constant 0 : index
    %c0_54 = arith.constant 0 : index
    %45 = vector.load %arg2[%c7, %c0_53, %c0_54] : memref<9x128x128xbf16, #tpu.memory_space<vmem>>, vector<1x128x128xbf16>
    %46 = vector.shape_cast %45 : vector<1x128x128xbf16> to vector<128x128xbf16>
    %cst_55 = arith.constant dense<0.000000e+00> : vector<256x128xf32>
    %47 = tpu.matmul %44, %46, %cst_55 {dimension_numbers = #tpu.dot_dimension_numbers<[1], [0], [0], [1], [0, 0, 1, 1], [], []>} : vector<256x128xbf16>, vector<128x128xbf16>, vector<256x128xf32> -> vector<256x128xf32>
    %48 = arith.addf %42, %47 : vector<256x128xf32>
    %c0_56 = arith.constant 0 : index
    %c2_57 = arith.constant 2 : index
    %c2_58 = arith.constant 2 : index
    %c0_59 = arith.constant 0 : index
    %49 = vector.load %arg1[%c0_56, %c2_57, %c2_58, %c0_59] : memref<1x18x18x128xbf16, #tpu.memory_space<vmem>>, vector<1x16x16x128xbf16>
    %50 = vector.shape_cast %49 : vector<1x16x16x128xbf16> to vector<256x128xbf16>
    %c8 = arith.constant 8 : index
    %c0_60 = arith.constant 0 : index
    %c0_61 = arith.constant 0 : index
    %51 = vector.load %arg2[%c8, %c0_60, %c0_61] : memref<9x128x128xbf16, #tpu.memory_space<vmem>>, vector<1x128x128xbf16>
    %52 = vector.shape_cast %51 : vector<1x128x128xbf16> to vector<128x128xbf16>
    %cst_62 = arith.constant dense<0.000000e+00> : vector<256x128xf32>
    %53 = tpu.matmul %50, %52, %cst_62 {dimension_numbers = #tpu.dot_dimension_numbers<[1], [0], [0], [1], [0, 0, 1, 1], [], []>} : vector<256x128xbf16>, vector<128x128xbf16>, vector<256x128xf32> -> vector<256x128xf32>
    %54 = arith.addf %48, %53 : vector<256x128xf32>
    %c0_63 = arith.constant 0 : index
    %c0_64 = arith.constant 0 : index
    %55 = vector.load %arg3[%c0_63, %c0_64] : memref<1x128xf32, #tpu.memory_space<vmem>>, vector<1x128xf32>
    %56 = vector.broadcast %55 : vector<1x128xf32> to vector<256x128xf32>
    %57 = arith.addf %54, %56 : vector<256x128xf32>
    %cst_65 = arith.constant 0.000000e+00 : f32
    %58 = vector.broadcast %cst_65 : f32 to vector<256x128xf32>
    %59 = arith.maximumf %57, %58 : vector<256x128xf32>
    %cst_66 = arith.constant 0.000000e+00 : f32
    %60 = vector.broadcast %cst_66 : f32 to vector<1x18x18x128xf32>
    %c0_67 = arith.constant 0 : index
    %c0_68 = arith.constant 0 : index
    %c0_69 = arith.constant 0 : index
    %c0_70 = arith.constant 0 : index
    %61 = vector.load %arg4[%c0_67, %c0_68, %c0_69, %c0_70] : memref<1x18x18x128xf32, #tpu.memory_space<vmem>>, vector<1x18x18x128xf32>
    tpu.vector_store %arg4[%c0_67, %c0_68, %c0_69, %c0_70], %60 {strides = array<i32>} : memref<1x18x18x128xf32, #tpu.memory_space<vmem>>, vector<1x18x18x128xf32>,
    %62 = vector.shape_cast %59 : vector<256x128xf32> to vector<1x16x16x128xf32>
    %c0_71 = arith.constant 0 : index
    %c1_72 = arith.constant 1 : index
    %c1_73 = arith.constant 1 : index
    %c0_74 = arith.constant 0 : index
    %63 = vector.load %arg4[%c0_71, %c1_72, %c1_73, %c0_74] : memref<1x18x18x128xf32, #tpu.memory_space<vmem>>, vector<1x16x16x128xf32>
    tpu.vector_store %arg4[%c0_71, %c1_72, %c1_73, %c0_74], %62 {strides = array<i32>} : memref<1x18x18x128xf32, #tpu.memory_space<vmem>>, vector<1x16x16x128xf32>,
    return
  }
  func.func @transform_0(%arg0: i32) -> (i32, i32, i32, i32) {
    %c0_i32 = arith.constant 0 : i32
    %c0_i32_0 = arith.constant 0 : i32
    %c0_i32_1 = arith.constant 0 : i32
    %c0_i32_2 = arith.constant 0 : i32
    return %arg0, %c0_i32, %c0_i32_0, %c0_i32_1 : i32, i32, i32, i32
  }
  func.func @transform_1(%arg0: i32) -> (i32, i32, i32) {
    %c0_i32 = arith.constant 0 : i32
    %c0_i32_0 = arith.constant 0 : i32
    %c0_i32_1 = arith.constant 0 : i32
    %c0_i32_2 = arith.constant 0 : i32
    return %c0_i32, %c0_i32_0, %c0_i32_1 : i32, i32, i32
  }
  func.func @transform_2(%arg0: i32) -> (i32, i32) {
    %c0_i32 = arith.constant 0 : i32
    %c0_i32_0 = arith.constant 0 : i32
    %c0_i32_1 = arith.constant 0 : i32
    return %c0_i32, %c0_i32_0 : i32, i32
  }
  func.func @transform_3(%arg0: i32) -> (i32, i32, i32, i32) {
    %c0_i32 = arith.constant 0 : i32
    %c0_i32_0 = arith.constant 0 : i32
    %c0_i32_1 = arith.constant 0 : i32
    %c0_i32_2 = arith.constant 0 : i32
    return %arg0, %c0_i32, %c0_i32_0, %c0_i32_1 : i32, i32, i32, i32
  }
}

module attributes {stable_mosaic.version = 11 : i64} {
  func.func @_conv3x3_bn_relu_kernel(%arg0: i32, %arg1: memref<1x18x18x128xbf16, #tpu.memory_space<vmem>>, %arg2: memref<9x128x128xbf16, #tpu.memory_space<vmem>>, %arg3: memref<1x128xf32, #tpu.memory_space<vmem>>, %arg4: memref<1x18x18x128xbf16, #tpu.memory_space<vmem>>) attributes {dimension_semantics = [#tpu.dimension_semantics<parallel>], iteration_bounds = array<i64: 2>, scalar_prefetch = 0 : i64, scratch_operands = 0 : i64, tpu.core_type = #tpu.core_type<tc>, window_params = [{transform_indices = @transform_0, window_bounds = array<i64: 1, 18, 18, 128>}, {pipeline_mode = #tpu.pipeline_mode<synchronous>, transform_indices = @transform_1, window_bounds = array<i64: 9, 128, 128>}, {pipeline_mode = #tpu.pipeline_mode<synchronous>, transform_indices = @transform_2, window_bounds = array<i64: 1, 128>}, {transform_indices = @transform_3, window_bounds = array<i64: 1, 18, 18, 128>}]} {
    %cst = arith.constant 0.000000e+00 : f32
    %0 = vector.broadcast %cst : f32 to vector<256x128xf32>
    %c0 = arith.constant 0 : index
    %c0_0 = arith.constant 0 : index
    %c0_1 = arith.constant 0 : index
    %c0_2 = arith.constant 0 : index
    %1 = vector.load %arg1[%c0, %c0_0, %c0_1, %c0_2] : memref<1x18x18x128xbf16, #tpu.memory_space<vmem>>, vector<1x16x16x128xbf16>
    %2 = vector.shape_cast %1 : vector<1x16x16x128xbf16> to vector<256x128xbf16>
    %c0_3 = arith.constant 0 : index
    %c0_4 = arith.constant 0 : index
    %c0_5 = arith.constant 0 : index
    %3 = vector.load %arg2[%c0_3, %c0_4, %c0_5] : memref<9x128x128xbf16, #tpu.memory_space<vmem>>, vector<1x128x128xbf16>
    %4 = vector.shape_cast %3 : vector<1x128x128xbf16> to vector<128x128xbf16>
    %cst_6 = arith.constant dense<0.000000e+00> : vector<256x128xf32>
    %5 = tpu.matmul %2, %4, %cst_6 {dimension_numbers = #tpu.dot_dimension_numbers<[1], [0], [0], [1], [0, 0, 1, 1], [], []>} : vector<256x128xbf16>, vector<128x128xbf16>, vector<256x128xf32> -> vector<256x128xf32>
    %6 = arith.addf %0, %5 : vector<256x128xf32>
    %c0_7 = arith.constant 0 : index
    %c0_8 = arith.constant 0 : index
    %c1 = arith.constant 1 : index
    %c0_9 = arith.constant 0 : index
    %7 = vector.load %arg1[%c0_7, %c0_8, %c1, %c0_9] : memref<1x18x18x128xbf16, #tpu.memory_space<vmem>>, vector<1x16x16x128xbf16>
    %8 = vector.shape_cast %7 : vector<1x16x16x128xbf16> to vector<256x128xbf16>
    %c1_10 = arith.constant 1 : index
    %c0_11 = arith.constant 0 : index
    %c0_12 = arith.constant 0 : index
    %9 = vector.load %arg2[%c1_10, %c0_11, %c0_12] : memref<9x128x128xbf16, #tpu.memory_space<vmem>>, vector<1x128x128xbf16>
    %10 = vector.shape_cast %9 : vector<1x128x128xbf16> to vector<128x128xbf16>
    %cst_13 = arith.constant dense<0.000000e+00> : vector<256x128xf32>
    %11 = tpu.matmul %8, %10, %cst_13 {dimension_numbers = #tpu.dot_dimension_numbers<[1], [0], [0], [1], [0, 0, 1, 1], [], []>} : vector<256x128xbf16>, vector<128x128xbf16>, vector<256x128xf32> -> vector<256x128xf32>
    %12 = arith.addf %6, %11 : vector<256x128xf32>
    %c0_14 = arith.constant 0 : index
    %c0_15 = arith.constant 0 : index
    %c2 = arith.constant 2 : index
    %c0_16 = arith.constant 0 : index
    %13 = vector.load %arg1[%c0_14, %c0_15, %c2, %c0_16] : memref<1x18x18x128xbf16, #tpu.memory_space<vmem>>, vector<1x16x16x128xbf16>
    %14 = vector.shape_cast %13 : vector<1x16x16x128xbf16> to vector<256x128xbf16>
    %c2_17 = arith.constant 2 : index
    %c0_18 = arith.constant 0 : index
    %c0_19 = arith.constant 0 : index
    %15 = vector.load %arg2[%c2_17, %c0_18, %c0_19] : memref<9x128x128xbf16, #tpu.memory_space<vmem>>, vector<1x128x128xbf16>
    %16 = vector.shape_cast %15 : vector<1x128x128xbf16> to vector<128x128xbf16>
    %cst_20 = arith.constant dense<0.000000e+00> : vector<256x128xf32>
    %17 = tpu.matmul %14, %16, %cst_20 {dimension_numbers = #tpu.dot_dimension_numbers<[1], [0], [0], [1], [0, 0, 1, 1], [], []>} : vector<256x128xbf16>, vector<128x128xbf16>, vector<256x128xf32> -> vector<256x128xf32>
    %18 = arith.addf %12, %17 : vector<256x128xf32>
    %c0_21 = arith.constant 0 : index
    %c1_22 = arith.constant 1 : index
    %c0_23 = arith.constant 0 : index
    %c0_24 = arith.constant 0 : index
    %19 = vector.load %arg1[%c0_21, %c1_22, %c0_23, %c0_24] : memref<1x18x18x128xbf16, #tpu.memory_space<vmem>>, vector<1x16x16x128xbf16>
    %20 = vector.shape_cast %19 : vector<1x16x16x128xbf16> to vector<256x128xbf16>
    %c3 = arith.constant 3 : index
    %c0_25 = arith.constant 0 : index
    %c0_26 = arith.constant 0 : index
    %21 = vector.load %arg2[%c3, %c0_25, %c0_26] : memref<9x128x128xbf16, #tpu.memory_space<vmem>>, vector<1x128x128xbf16>
    %22 = vector.shape_cast %21 : vector<1x128x128xbf16> to vector<128x128xbf16>
    %cst_27 = arith.constant dense<0.000000e+00> : vector<256x128xf32>
    %23 = tpu.matmul %20, %22, %cst_27 {dimension_numbers = #tpu.dot_dimension_numbers<[1], [0], [0], [1], [0, 0, 1, 1], [], []>} : vector<256x128xbf16>, vector<128x128xbf16>, vector<256x128xf32> -> vector<256x128xf32>
    %24 = arith.addf %18, %23 : vector<256x128xf32>
    %c0_28 = arith.constant 0 : index
    %c1_29 = arith.constant 1 : index
    %c1_30 = arith.constant 1 : index
    %c0_31 = arith.constant 0 : index
    %25 = vector.load %arg1[%c0_28, %c1_29, %c1_30, %c0_31] : memref<1x18x18x128xbf16, #tpu.memory_space<vmem>>, vector<1x16x16x128xbf16>
    %26 = vector.shape_cast %25 : vector<1x16x16x128xbf16> to vector<256x128xbf16>
    %c4 = arith.constant 4 : index
    %c0_32 = arith.constant 0 : index
    %c0_33 = arith.constant 0 : index
    %27 = vector.load %arg2[%c4, %c0_32, %c0_33] : memref<9x128x128xbf16, #tpu.memory_space<vmem>>, vector<1x128x128xbf16>
    %28 = vector.shape_cast %27 : vector<1x128x128xbf16> to vector<128x128xbf16>
    %cst_34 = arith.constant dense<0.000000e+00> : vector<256x128xf32>
    %29 = tpu.matmul %26, %28, %cst_34 {dimension_numbers = #tpu.dot_dimension_numbers<[1], [0], [0], [1], [0, 0, 1, 1], [], []>} : vector<256x128xbf16>, vector<128x128xbf16>, vector<256x128xf32> -> vector<256x128xf32>
    %30 = arith.addf %24, %29 : vector<256x128xf32>
    %c0_35 = arith.constant 0 : index
    %c1_36 = arith.constant 1 : index
    %c2_37 = arith.constant 2 : index
    %c0_38 = arith.constant 0 : index
    %31 = vector.load %arg1[%c0_35, %c1_36, %c2_37, %c0_38] : memref<1x18x18x128xbf16, #tpu.memory_space<vmem>>, vector<1x16x16x128xbf16>
    %32 = vector.shape_cast %31 : vector<1x16x16x128xbf16> to vector<256x128xbf16>
    %c5 = arith.constant 5 : index
    %c0_39 = arith.constant 0 : index
    %c0_40 = arith.constant 0 : index
    %33 = vector.load %arg2[%c5, %c0_39, %c0_40] : memref<9x128x128xbf16, #tpu.memory_space<vmem>>, vector<1x128x128xbf16>
    %34 = vector.shape_cast %33 : vector<1x128x128xbf16> to vector<128x128xbf16>
    %cst_41 = arith.constant dense<0.000000e+00> : vector<256x128xf32>
    %35 = tpu.matmul %32, %34, %cst_41 {dimension_numbers = #tpu.dot_dimension_numbers<[1], [0], [0], [1], [0, 0, 1, 1], [], []>} : vector<256x128xbf16>, vector<128x128xbf16>, vector<256x128xf32> -> vector<256x128xf32>
    %36 = arith.addf %30, %35 : vector<256x128xf32>
    %c0_42 = arith.constant 0 : index
    %c2_43 = arith.constant 2 : index
    %c0_44 = arith.constant 0 : index
    %c0_45 = arith.constant 0 : index
    %37 = vector.load %arg1[%c0_42, %c2_43, %c0_44, %c0_45] : memref<1x18x18x128xbf16, #tpu.memory_space<vmem>>, vector<1x16x16x128xbf16>
    %38 = vector.shape_cast %37 : vector<1x16x16x128xbf16> to vector<256x128xbf16>
    %c6 = arith.constant 6 : index
    %c0_46 = arith.constant 0 : index
    %c0_47 = arith.constant 0 : index
    %39 = vector.load %arg2[%c6, %c0_46, %c0_47] : memref<9x128x128xbf16, #tpu.memory_space<vmem>>, vector<1x128x128xbf16>
    %40 = vector.shape_cast %39 : vector<1x128x128xbf16> to vector<128x128xbf16>
    %cst_48 = arith.constant dense<0.000000e+00> : vector<256x128xf32>
    %41 = tpu.matmul %38, %40, %cst_48 {dimension_numbers = #tpu.dot_dimension_numbers<[1], [0], [0], [1], [0, 0, 1, 1], [], []>} : vector<256x128xbf16>, vector<128x128xbf16>, vector<256x128xf32> -> vector<256x128xf32>
    %42 = arith.addf %36, %41 : vector<256x128xf32>
    %c0_49 = arith.constant 0 : index
    %c2_50 = arith.constant 2 : index
    %c1_51 = arith.constant 1 : index
    %c0_52 = arith.constant 0 : index
    %43 = vector.load %arg1[%c0_49, %c2_50, %c1_51, %c0_52] : memref<1x18x18x128xbf16, #tpu.memory_space<vmem>>, vector<1x16x16x128xbf16>
    %44 = vector.shape_cast %43 : vector<1x16x16x128xbf16> to vector<256x128xbf16>
    %c7 = arith.constant 7 : index
    %c0_53 = arith.constant 0 : index
    %c0_54 = arith.constant 0 : index
    %45 = vector.load %arg2[%c7, %c0_53, %c0_54] : memref<9x128x128xbf16, #tpu.memory_space<vmem>>, vector<1x128x128xbf16>
    %46 = vector.shape_cast %45 : vector<1x128x128xbf16> to vector<128x128xbf16>
    %cst_55 = arith.constant dense<0.000000e+00> : vector<256x128xf32>
    %47 = tpu.matmul %44, %46, %cst_55 {dimension_numbers = #tpu.dot_dimension_numbers<[1], [0], [0], [1], [0, 0, 1, 1], [], []>} : vector<256x128xbf16>, vector<128x128xbf16>, vector<256x128xf32> -> vector<256x128xf32>
    %48 = arith.addf %42, %47 : vector<256x128xf32>
    %c0_56 = arith.constant 0 : index
    %c2_57 = arith.constant 2 : index
    %c2_58 = arith.constant 2 : index
    %c0_59 = arith.constant 0 : index
    %49 = vector.load %arg1[%c0_56, %c2_57, %c2_58, %c0_59] : memref<1x18x18x128xbf16, #tpu.memory_space<vmem>>, vector<1x16x16x128xbf16>
    %50 = vector.shape_cast %49 : vector<1x16x16x128xbf16> to vector<256x128xbf16>
    %c8 = arith.constant 8 : index
    %c0_60 = arith.constant 0 : index
    %c0_61 = arith.constant 0 : index
    %51 = vector.load %arg2[%c8, %c0_60, %c0_61] : memref<9x128x128xbf16, #tpu.memory_space<vmem>>, vector<1x128x128xbf16>
    %52 = vector.shape_cast %51 : vector<1x128x128xbf16> to vector<128x128xbf16>
    %cst_62 = arith.constant dense<0.000000e+00> : vector<256x128xf32>
    %53 = tpu.matmul %50, %52, %cst_62 {dimension_numbers = #tpu.dot_dimension_numbers<[1], [0], [0], [1], [0, 0, 1, 1], [], []>} : vector<256x128xbf16>, vector<128x128xbf16>, vector<256x128xf32> -> vector<256x128xf32>
    %54 = arith.addf %48, %53 : vector<256x128xf32>
    %c0_63 = arith.constant 0 : index
    %c0_64 = arith.constant 0 : index
    %55 = vector.load %arg3[%c0_63, %c0_64] : memref<1x128xf32, #tpu.memory_space<vmem>>, vector<1x128xf32>
    %56 = vector.broadcast %55 : vector<1x128xf32> to vector<256x128xf32>
    %57 = arith.addf %54, %56 : vector<256x128xf32>
    %cst_65 = arith.constant 0.000000e+00 : f32
    %58 = vector.broadcast %cst_65 : f32 to vector<256x128xf32>
    %59 = arith.maximumf %57, %58 : vector<256x128xf32>
    %60 = arith.truncf %59 : vector<256x128xf32> to vector<256x128xbf16>
    %cst_66 = arith.constant 0.000000e+00 : bf16
    %61 = vector.broadcast %cst_66 : bf16 to vector<1x18x18x128xbf16>
    %c0_67 = arith.constant 0 : index
    %c0_68 = arith.constant 0 : index
    %c0_69 = arith.constant 0 : index
    %c0_70 = arith.constant 0 : index
    %62 = vector.load %arg4[%c0_67, %c0_68, %c0_69, %c0_70] : memref<1x18x18x128xbf16, #tpu.memory_space<vmem>>, vector<1x18x18x128xbf16>
    tpu.vector_store %arg4[%c0_67, %c0_68, %c0_69, %c0_70], %61 {strides = array<i32>} : memref<1x18x18x128xbf16, #tpu.memory_space<vmem>>, vector<1x18x18x128xbf16>,
    %63 = vector.shape_cast %60 : vector<256x128xbf16> to vector<1x16x16x128xbf16>
    %c0_71 = arith.constant 0 : index
    %c1_72 = arith.constant 1 : index
    %c1_73 = arith.constant 1 : index
    %c0_74 = arith.constant 0 : index
    %64 = vector.load %arg4[%c0_71, %c1_72, %c1_73, %c0_74] : memref<1x18x18x128xbf16, #tpu.memory_space<vmem>>, vector<1x16x16x128xbf16>
    tpu.vector_store %arg4[%c0_71, %c1_72, %c1_73, %c0_74], %63 {strides = array<i32>} : memref<1x18x18x128xbf16, #tpu.memory_space<vmem>>, vector<1x16x16x128xbf16>,
    return
  }
  func.func @transform_0(%arg0: i32) -> (i32, i32, i32, i32) {
    %c0_i32 = arith.constant 0 : i32
    %c0_i32_0 = arith.constant 0 : i32
    %c0_i32_1 = arith.constant 0 : i32
    %c0_i32_2 = arith.constant 0 : i32
    return %arg0, %c0_i32, %c0_i32_0, %c0_i32_1 : i32, i32, i32, i32
  }
  func.func @transform_1(%arg0: i32) -> (i32, i32, i32) {
    %c0_i32 = arith.constant 0 : i32
    %c0_i32_0 = arith.constant 0 : i32
    %c0_i32_1 = arith.constant 0 : i32
    %c0_i32_2 = arith.constant 0 : i32
    return %c0_i32, %c0_i32_0, %c0_i32_1 : i32, i32, i32
  }
  func.func @transform_2(%arg0: i32) -> (i32, i32) {
    %c0_i32 = arith.constant 0 : i32
    %c0_i32_0 = arith.constant 0 : i32
    %c0_i32_1 = arith.constant 0 : i32
    return %c0_i32, %c0_i32_0 : i32, i32
  }
  func.func @transform_3(%arg0: i32) -> (i32, i32, i32, i32) {
    %c0_i32 = arith.constant 0 : i32
    %c0_i32_0 = arith.constant 0 : i32
    %c0_i32_1 = arith.constant 0 : i32
    %c0_i32_2 = arith.constant 0 : i32
    return %arg0, %c0_i32, %c0_i32_0, %c0_i32_1 : i32, i32, i32, i32
  }
}

</mosaic_0001>

<llo_original>
// kernel: tile.8
$region0: #{tile.8}
  #allocation0 [shape = 's32[1]{0}', space=sflag, size = 0x4, scoped, tag = 'scoped memory for tile.8']
  %s0 = inlined_call_operand.vmem [shape: f32[4], index: 0, kind: input, shape index: {}]
  %s1 = inlined_call_operand.vmem [shape: f32[4,4], index: 1, kind: output, shape index: {}]
  // Predicated region
  $region2: #{tile.8} parent=0 // pred_check
    _
  $region3: #{tile.8} parent=0 // pred_check_branch
    %3 = sbr.rel (0) target = $region5
  $region4: #{tile.8} parent=0 // pred_region
    _
  $region5: #{tile.8} parent=0 // pred_fallthru
    _
  %v4 = vld [vmem:[%s0] ss:$0 sm:$0xff]
  %5 = vst [vmem:[%s1] sm:$0xf] %v4

// kernel: tile.9
$region0: #{tile.9}
  %s0 = inlined_call_operand.vmem [shape: f32[4,4], index: 0, kind: input, shape index: {}]
  %s1 = inlined_call_operand.vmem [shape: f32[16], index: 1, kind: output, shape index: {}]
  $region1: #{tile.9} parent=0
    #allocation0 [shape = 'u8[4096]{0}', space=vmem, size = 0x1000, scoped, tag = 'scoped mem for output reshape']
    #allocation1 [shape = 'u8[4096]{0}', space=vmem, size = 0x1000, scoped, tag = 'scoped mem for input reshape']
    %s3 = sshllo.u32 0, 4
    %v4 = vld [vmem:[%s0] sm:%s3]
    %5 = vst [vmem:[#allocation1] sm:%s3] %v4
    %v6 = vld [vmem:[#allocation1] sm:$0x1]
    %vm7 = vcmask 31744
    %8 = vst.msk [vmem:[#allocation0] sm:$0x1] %vm7, %v6
    %s9 = scalar_lea.vmem [#allocation1], 3
    %v10 = vld [vmem:[%s9] sm:$0x1]
    %11 = vrot.lane.b32.xlu0 %v10, 12
    %v12 = vpop.permute.xlu0 %11
    %vm13 = vcmask 130144
    %14 = vst.msk [vmem:[#allocation0] sm:$0x1] %vm13, %v12
    %s15 = scalar_lea.vmem [#allocation1], 2
    %v16 = vld [vmem:[%s15] sm:$0x1]
    %17 = vrot.lane.b32.xlu0 %v16, 8
    %v18 = vpop.permute.xlu0 %17
    %vm19 = vcmask 97344
    %20 = vst.msk [vmem:[#allocation0] sm:$0x1] %vm19, %v18
    %s21 = scalar_lea.vmem [#allocation1], 1
    %v22 = vld [vmem:[%s21] sm:$0x1]
    %23 = vrot.lane.b32.xlu0 %v22, 4
    %v24 = vpop.permute.xlu0 %23
    %vm25 = vcmask 64544
    %26 = vst.msk [vmem:[#allocation0] sm:$0x1] %vm25, %v24
    %s28 = sshllo.u32 0, 1
    %v30 = vld [vmem:[#allocation0] sm:%s28]
    %s31 = sshllo.u32 0, 1
    %32 = vst [vmem:[%s1] sm:%s31] %v30

// kernel: up_block_forward.3
$region0: #{up_block_forward.3}
  #allocation0 [shape = 'u32[]', space=smem, size = 0x4, offset = 0x4, fixed_abs, tag = 'smem constant byte address 0x4 - core index']
  #allocation1 [shape = 'u32[144,128]{1,0:T(1,128)}', space=vmem, size = 0x12000, scoped, tag = 'internal scratch']
  %s0 = inlined_call_operand.vmem [shape: bf16[128,128], index: 0, kind: input, shape index: {}]
  %s1 = inlined_call_operand.vmem [shape: bf16[128,128], index: 1, kind: input, shape index: {}]
  %s2 = inlined_call_operand.vmem [shape: f32[1,128], index: 2, kind: input, shape index: {}]
  %s3 = inlined_call_operand.vmem [shape: bf16[128,128], index: 3, kind: output, shape index: {}]
  %s4 = sld [smem:[#allocation0]]
  $region45: #{up_block_forward.3} parent=0
    _
  %s6 = ssub.s32 1, %s4
  %s7 = scalar_select 0, %s6, %s4
  loop: start=0, step=1, limit=4
  $region2: #{up_block_forward.3} parent=0 // loop_pre_header
    _
  $region3: #{up_block_forward.3} parent=0 // loop_header
    %s9 = sphi 0, %s13
    %p10 = scmp.ge.s32.totalorder %s9, 4
    %s19 = sphi 0, %s21
    %s22 = sphi 0, %s19
    %s23 = sphi 0, %s22
    %s39 = sphi 0, %s23
    %s43 = sphi 0, %s43
    %s45 = sphi 0, %s43
    %s46 = sphi 0, %s45
    %s60 = sphi 0, %s46
    %s64 = sphi 0, %s64
    %s66 = sphi 0, %s64
    %s67 = sphi 0, %s66
    %s81 = sphi 0, %s67
    %s87 = sphi 0, %s89
    %s90 = sphi 0, %s87
    %s91 = sphi 0, %s90
    %s107 = sphi 0, %s91
  $region4: #{up_block_forward.3} parent=0 // loop_header_branch
    %12 = sbr.rel (%p10) target = $region8
  $region5: #{up_block_forward.3} parent=0 // loop_body
    %s14 = ssub.s32 %s9, 1
    %s15 = ssub.s32 %s9, 2
    %s16 = sadd.s32 %s9, 1
    %s17 = ssub.s32 %s9, %s16
    %p18 = scmp.eq.s32.totalorder %s17, 0
    %s20 = sadd.s32 %s19, 1
    %s21 = scalar_select %p18, %s19, %s20
    %p24 = pneg %p18
    %p25 = scmp.eq.s32.totalorder %s9, 1
    %p26 = por %p24, %p25
    %p27 = scmp.ne.s32.totalorder %s19, %s22
    %p28 = scmp.eq.s32.totalorder %s9, 0
    %p29 = por %p27, %p28
    %p30 = scmp.ne.s32.totalorder %s19, %s22
    %p31 = scmp.eq.s32.totalorder %s14, 1
    %p32 = por %p30, %p31
    %p33 = scmp.ne.s32.totalorder %s22, %s23
    %p34 = scmp.eq.s32.totalorder %s14, 0
    %p35 = por %p33, %p34
    %p36 = scmp.ne.s32.totalorder %s22, %s23
    %p37 = scmp.eq.s32.totalorder %s15, 1
    %p38 = por %p36, %p37
    %p40 = scmp.ne.s32.totalorder %s23, %s39
    %p41 = scmp.eq.s32.totalorder %s15, 0
    %p42 = por %p40, %p41
    %s44 = sadd.s32 %s43, 1
    %p47 = scmp.eq.s32.totalorder %s9, 1
    %p48 = scmp.ne.s32.totalorder %s43, %s45
    %p49 = scmp.eq.s32.totalorder %s9, 0
    %p50 = por %p48, %p49
    %p51 = scmp.ne.s32.totalorder %s43, %s45
    %p52 = scmp.eq.s32.totalorder %s14, 1
    %p53 = por %p51, %p52
    %p54 = scmp.ne.s32.totalorder %s45, %s46
    %p55 = scmp.eq.s32.totalorder %s14, 0
    %p56 = por %p54, %p55
    %p57 = scmp.ne.s32.totalorder %s45, %s46
    %p58 = scmp.eq.s32.totalorder %s15, 1
    %p59 = por %p57, %p58
    %p61 = scmp.ne.s32.totalorder %s46, %s60
    %p62 = scmp.eq.s32.totalorder %s15, 0
    %p63 = por %p61, %p62
    %s65 = sadd.s32 %s64, 1
    %p68 = scmp.eq.s32.totalorder %s9, 1
    %p69 = scmp.ne.s32.totalorder %s64, %s66
    %p70 = scmp.eq.s32.totalorder %s9, 0
    %p71 = por %p69, %p70
    %p72 = scmp.ne.s32.totalorder %s64, %s66
    %p73 = scmp.eq.s32.totalorder %s14, 1
    %p74 = por %p72, %p73
    %p75 = scmp.ne.s32.totalorder %s66, %s67
    %p76 = scmp.eq.s32.totalorder %s14, 0
    %p77 = por %p75, %p76
    %p78 = scmp.ne.s32.totalorder %s66, %s67
    %p79 = scmp.eq.s32.totalorder %s15, 1
    %p80 = por %p78, %p79
    %p82 = scmp.ne.s32.totalorder %s67, %s81
    %p83 = scmp.eq.s32.totalorder %s15, 0
    %p84 = por %p82, %p83
    %s85 = ssub.s32 %s9, %s16
    %p86 = scmp.eq.s32.totalorder %s85, 0
    %s88 = sadd.s32 %s87, 1
    %s89 = scalar_select %p86, %s87, %s88
    %p92 = pneg %p86
    %p93 = scmp.eq.s32.totalorder %s9, 1
    %p94 = por %p92, %p93
    %p95 = scmp.ne.s32.totalorder %s87, %s90
    %p96 = scmp.eq.s32.totalorder %s9, 0
    %p97 = por %p95, %p96
    %p98 = scmp.ne.s32.totalorder %s87, %s90
    %p99 = scmp.eq.s32.totalorder %s14, 1
    %p100 = por %p98, %p99
    %p101 = scmp.ne.s32.totalorder %s90, %s91
    %p102 = scmp.eq.s32.totalorder %s14, 0
    %p103 = por %p101, %p102
    %p104 = scmp.ne.s32.totalorder %s90, %s91
    %p105 = scmp.eq.s32.totalorder %s15, 1
    %p106 = por %p104, %p105
    %p108 = scmp.ne.s32.totalorder %s91, %s107
    %p109 = scmp.eq.s32.totalorder %s15, 0
    %p110 = por %p108, %p109
    %p111 = scmp.le.s32.totalorder 1, %s9
    %p112 = scmp.lt.s32.totalorder %s9, 3
    %p113 = pnand %p111, %p112
    %p114 = pneg %p113
    // Predicated region
    $region9: #{up_block_forward.3} parent=5 // pred_check
      _
    $region10: #{up_block_forward.3} parent=5 // pred_check_branch
      %116 = sbr.rel (%p113) target = $region12
    $region11: #{up_block_forward.3} parent=5 // pred_region
      %s117 = ssub.s32 %s9, 1
      // Predicated region
      $region13: #{up_block_forward.3} parent=11 // pred_check
        %p118 = pneg %p56
      $region14: #{up_block_forward.3} parent=11 // pred_check_branch
        %120 = sbr.rel (%p118) target = $region16
      $region15: #{up_block_forward.3} parent=11 // pred_region
        _
      $region16: #{up_block_forward.3} parent=11 // pred_fallthru
        _
      // Predicated region
      $region17: #{up_block_forward.3} parent=11 // pred_check
        %p121 = pneg %p77
      $region18: #{up_block_forward.3} parent=11 // pred_check_branch
        %123 = sbr.rel (%p121) target = $region20
      $region19: #{up_block_forward.3} parent=11 // pred_region
        _
      $region20: #{up_block_forward.3} parent=11 // pred_fallthru
        _
    $region12: #{up_block_forward.3} parent=5 // pred_fallthru
      _
    %p124 = scmp.lt.s32.totalorder %s9, 2
    // Predicated region
    $region21: #{up_block_forward.3} parent=5 // pred_check
      %p125 = pneg %p124
    $region22: #{up_block_forward.3} parent=5 // pred_check_branch
      %127 = sbr.rel (%p125) target = $region24
    $region23: #{up_block_forward.3} parent=5 // pred_region
      // Predicated region
      $region25: #{up_block_forward.3} parent=23 // pred_check
        %p128 = pneg %p29
      $region26: #{up_block_forward.3} parent=23 // pred_check_branch
        %130 = sbr.rel (%p128) target = $region28
      $region27: #{up_block_forward.3} parent=23 // pred_region
        %s131 = smul.u32 8, %s9
        %p132 = scmp.lt.s32.totalorder %s131, 15
        %s133 = scalar_select %p132, %s131, 15
        %s134 = smul.addr %s133, 4
        %s135 = scalar_lea.vmem %s0, %s134
        %s136 = smul.u32 8, %s9
      $region28: #{up_block_forward.3} parent=23 // pred_fallthru
        _
    $region24: #{up_block_forward.3} parent=5 // pred_fallthru
      _
    %p137 = scmp.le.s32.totalorder 1, %s9
    %p138 = scmp.lt.s32.totalorder %s9, 3
    %p139 = pnand %p137, %p138
    %p140 = pneg %p139
    // Predicated region
    $region29: #{up_block_forward.3} parent=5 // pred_check
      _
    $region30: #{up_block_forward.3} parent=5 // pred_check_branch
      %142 = sbr.rel (%p139) target = $region32
    $region31: #{up_block_forward.3} parent=5 // pred_region
      %s143 = ssub.s32 %s9, 1
      %s144 = smul.u32 8, %s14
      %p145 = scmp.lt.s32.totalorder %s144, 15
      %s146 = scalar_select %p145, %s144, 15
      %s147 = smul.addr %s146, 4
      %s148 = scalar_lea.vmem %s0, %s147
      %p149 = pneg %p35
      %p150 = pneg %p32
      %p151 = pneg %p56
      %p152 = pneg %p53
      %p153 = pneg %p77
      %p154 = pneg %p74
      %p155 = pneg %p103
      %p156 = pneg %p100
      %s157 = smul.u32 8, %s14
      %p158 = scmp.lt.s32.totalorder %s157, 15
      %s159 = scalar_select %p158, %s157, 15
      %s160 = smul.addr %s159, 4
      %s161 = scalar_lea.vmem %s3, %s160
      %s162 = smul.u32 8, %s14
      %p163 = scmp.lt.s32.totalorder %s162, 15
      %s164 = scalar_select %p163, %s162, 15
      %s165 = smul.addr %s164, 4
      %s166 = scalar_lea.vmem %s0, %s165
      %s167 = smul.u32 8, %s14
      %s168 = smul.u32 8, %s14
      %p169 = scmp.lt.s32.totalorder %s168, 15
      %s170 = scalar_select %p169, %s168, 15
      %s171 = smul.addr %s170, 4
      %s172 = scalar_lea.vmem %s3, %s171
      %s173 = smul.u32 8, %s14
      %v175 = vld [vmem:[%s166] sm:$0xf]
      %v176 = vld [vmem:[%s166 + $0x4] sm:$0xf]
      %v177 = vld [vmem:[%s166 + $0x8] sm:$0xf]
      %v178 = vld [vmem:[%s166 + $0xc] sm:$0xf]
      %v179 = vld [vmem:[%s166 + $0x10] sm:$0xf]
      %v180 = vld [vmem:[%s166 + $0x14] sm:$0xf]
      %v181 = vld [vmem:[%s166 + $0x18] sm:$0xf]
      %v182 = vld [vmem:[%s166 + $0x1c] sm:$0xf]
      %v183 = vld [vmem:[%s1] sm:$0xf]
      %v184 = vld [vmem:[%s1 + $0x4] sm:$0xf]
      %v185 = vld [vmem:[%s1 + $0x8] sm:$0xf]
      %v186 = vld [vmem:[%s1 + $0xc] sm:$0xf]
      %v187 = vld [vmem:[%s1 + $0x10] sm:$0xf]
      %v188 = vld [vmem:[%s1 + $0x14] sm:$0xf]
      %v189 = vld [vmem:[%s1 + $0x18] sm:$0xf]
      %v190 = vld [vmem:[%s1 + $0x1c] sm:$0xf]
      %v191 = vld [vmem:[%s1 + $0x20] sm:$0xf]
      %v192 = vld [vmem:[%s1 + $0x24] sm:$0xf]
      %v193 = vld [vmem:[%s1 + $0x28] sm:$0xf]
      %v194 = vld [vmem:[%s1 + $0x2c] sm:$0xf]
      %v195 = vld [vmem:[%s1 + $0x30] sm:$0xf]
      %v196 = vld [vmem:[%s1 + $0x34] sm:$0xf]
      %v197 = vld [vmem:[%s1 + $0x38] sm:$0xf]
      %v198 = vld [vmem:[%s1 + $0x3c] sm:$0xf]
      %v199 = vld [vmem:[%s2] sm:$0x1]
      %v201 = vlaneseq
      %v202 = vshrl.u32 %v201, 7
      %v203 = vsub.s32 0, %v202
      %v204 = vrot.slane %v199, %v203
      %v214 = vunpack.c.l.b16 %v175
      %v215 = vunpack.c.l.b16 %v176
      %v216 = vunpack.c.l.b16 %v177
      %v217 = vunpack.c.l.b16 %v178
      %v218 = vunpack.c.l.b16 %v179
      %v219 = vunpack.c.l.b16 %v180
      %v220 = vunpack.c.l.b16 %v181
      %v221 = vunpack.c.l.b16 %v182
      %v222 = vpack.c.b16 %v215, %v214
      %v223 = vpack.c.b16 %v217, %v216
      %v224 = vpack.c.b16 %v219, %v218
      %v225 = vpack.c.b16 %v221, %v220
      %v246 = vunpack.c.l.b16 %v183
      %v247 = vunpack.c.l.b16 %v184
      %v248 = vunpack.c.l.b16 %v185
      %v249 = vunpack.c.l.b16 %v186
      %v250 = vunpack.c.l.b16 %v187
      %v251 = vunpack.c.l.b16 %v188
      %v252 = vunpack.c.l.b16 %v189
      %v253 = vunpack.c.l.b16 %v190
      %v254 = vunpack.c.l.b16 %v191
      %v255 = vunpack.c.l.b16 %v192
      %v256 = vunpack.c.l.b16 %v193
      %v257 = vunpack.c.l.b16 %v194
      %v258 = vunpack.c.l.b16 %v195
      %v259 = vunpack.c.l.b16 %v196
      %v260 = vunpack.c.l.b16 %v197
      %v261 = vunpack.c.l.b16 %v198
      %v262 = vpack.c.b16 %v247, %v246
      %v263 = vpack.c.b16 %v249, %v248
      %v264 = vpack.c.b16 %v251, %v250
      %v265 = vpack.c.b16 %v253, %v252
      %v266 = vpack.c.b16 %v255, %v254
      %v267 = vpack.c.b16 %v257, %v256
      %v268 = vpack.c.b16 %v259, %v258
      %v269 = vpack.c.b16 %v261, %v260
      %278 = vmatprep.subr.bf16.mxu0 0
      %279 = vmatpush1.bf16.msra.mxu0 %v262
      %280 = vmatprep.subr.bf16.mxu0 0
      %281 = vmatpush1.bf16.msra.mxu0 %v263
      %282 = vmatprep.subr.bf16.mxu0 0
      %283 = vmatpush1.bf16.msra.mxu0 %v264
      %284 = vmatprep.subr.bf16.mxu0 0
      %285 = vmatpush1.bf16.msra.mxu0 %v265
      %286 = vmatprep.subr.bf16.mxu0 0
      %287 = vmatpush1.bf16.msra.mxu0 %v266
      %288 = vmatprep.subr.bf16.mxu0 0
      %289 = vmatpush1.bf16.msra.mxu0 %v267
      %290 = vmatprep.subr.bf16.mxu0 0
      %291 = vmatpush1.bf16.msra.mxu0 %v268
      %292 = vmatprep.subr.bf16.mxu0 0
      %293 = vmatpush1.bf16.msra.mxu0 %v269
      %294 = vmatprep.subr.bf16.mxu0 0
      %295 = vmatpush1.bf16.msra.mxu0 0
      %296 = vmatprep.subr.bf16.mxu0 0
      %297 = vmatpush1.bf16.msra.mxu0 0
      %298 = vmatprep.subr.bf16.mxu0 0
      %299 = vmatpush1.bf16.msra.mxu0 0
      %300 = vmatprep.subr.bf16.mxu0 0
      %301 = vmatpush1.bf16.msra.mxu0 0
      %302 = vmatprep.subr.bf16.mxu0 0
      %303 = vmatpush1.bf16.msra.mxu0 0
      %304 = vmatprep.subr.bf16.mxu0 0
      %305 = vmatpush1.bf16.msra.mxu0 0
      %306 = vmatprep.subr.bf16.mxu0 0
      %307 = vmatpush1.bf16.msra.mxu0 0
      %308 = vmatprep.subr.bf16.mxu0 0
      %309 = vmatpush1.bf16.msra.mxu0 0
      %310 = vmatprep.mubr.bf16.mxu0 0
      %311 = vmatmul.mubr.bf16.gmra.mrb[0].mxu0 %v222
      %v312 = vpop.f32.mrb[0].mxu0
      %v313 = vadd.f32 %v204, %v312
      %v314 = vpop.f32.mrb[0].mxu0
      %v315 = vpop.f32.mrb[0].mxu0
      %v316 = vadd.f32 %v204, %v315
      %v317 = vpop.f32.mrb[0].mxu0
      %318 = vmatprep.mubr.bf16.mxu0 0
      %319 = vmatmul.mubr.bf16.gmra.mrb[0].mxu0 %v223
      %v320 = vpop.f32.mrb[0].mxu0
      %v321 = vadd.f32 %v204, %v320
      %v322 = vpop.f32.mrb[0].mxu0
      %v323 = vpop.f32.mrb[0].mxu0
      %v324 = vadd.f32 %v204, %v323
      %v325 = vpop.f32.mrb[0].mxu0
      %326 = vmatprep.mubr.bf16.mxu0 0
      %327 = vmatmul.mubr.bf16.gmra.mrb[0].mxu0 %v224
      %v328 = vpop.f32.mrb[0].mxu0
      %v329 = vadd.f32 %v204, %v328
      %v330 = vpop.f32.mrb[0].mxu0
      %v331 = vpop.f32.mrb[0].mxu0
      %v332 = vadd.f32 %v204, %v331
      %v333 = vpop.f32.mrb[0].mxu0
      %334 = vmatprep.mubr.bf16.mxu0 0
      %335 = vmatmul.mubr.bf16.gmra.mrb[0].mxu0 %v225
      %v336 = vpop.f32.mrb[0].mxu0
      %v337 = vadd.f32 %v204, %v336
      %v338 = vpop.f32.mrb[0].mxu0
      %v339 = vpop.f32.mrb[0].mxu0
      %v340 = vadd.f32 %v204, %v339
      %v341 = vpop.f32.mrb[0].mxu0
      %342 = vdwg.mxu0
      %v343 = vpack.c.bf16 %v316, %v313
      %v344 = vpack.c.bf16 %v324, %v321
      %v345 = vpack.c.bf16 %v332, %v329
      %v346 = vpack.c.bf16 %v340, %v337
      %v351 = vunpack.c.l.b16 %v343
      %v352 = vunpack.c.h.b16 %v343
      %v353 = vunpack.c.l.b16 %v344
      %v354 = vunpack.c.h.b16 %v344
      %v355 = vunpack.c.l.b16 %v345
      %v356 = vunpack.c.h.b16 %v345
      %v357 = vunpack.c.l.b16 %v346
      %v358 = vunpack.c.h.b16 %v346
      %v359 = vpack.c.b16 %v351, %v351
      %v360 = vpack.c.b16 %v352, %v352
      %v361 = vpack.c.b16 %v353, %v353
      %v362 = vpack.c.b16 %v354, %v354
      %v363 = vpack.c.b16 %v355, %v355
      %v364 = vpack.c.b16 %v356, %v356
      %v365 = vpack.c.b16 %v357, %v357
      %v366 = vpack.c.b16 %v358, %v358
      %375 = vst [vmem:[%s172] sm:$0xf] %v359
      %376 = vst [vmem:[%s172 + $0x4] sm:$0xf] %v360
      %377 = vst [vmem:[%s172 + $0x8] sm:$0xf] %v361
      %378 = vst [vmem:[%s172 + $0xc] sm:$0xf] %v362
      %379 = vst [vmem:[%s172 + $0x10] sm:$0xf] %v363
      %380 = vst [vmem:[%s172 + $0x14] sm:$0xf] %v364
      %381 = vst [vmem:[%s172 + $0x18] sm:$0xf] %v365
      %382 = vst [vmem:[%s172 + $0x1c] sm:$0xf] %v366
      %s383 = smul.u32 8, %s14
      %p384 = scmp.lt.s32.totalorder %s383, 15
      %s385 = scalar_select %p384, %s383, 15
      %s386 = smul.addr %s385, 4
      %s387 = scalar_lea.vmem %s3, %s386
      // Predicated region
      $region33: #{up_block_forward.3} parent=31 // pred_check
        %p388 = pneg %p100
      $region34: #{up_block_forward.3} parent=31 // pred_check_branch
        %390 = sbr.rel (%p388) target = $region36
      $region35: #{up_block_forward.3} parent=31 // pred_region
        %s391 = smul.u32 8, %s14
      $region36: #{up_block_forward.3} parent=31 // pred_fallthru
        _
    $region32: #{up_block_forward.3} parent=5 // pred_fallthru
      _
    %p392 = scmp.le.s32.totalorder 2, %s9
    // Predicated region
    $region37: #{up_block_forward.3} parent=5 // pred_check
      %p393 = pneg %p392
    $region38: #{up_block_forward.3} parent=5 // pred_check_branch
      %395 = sbr.rel (%p393) target = $region40
    $region39: #{up_block_forward.3} parent=5 // pred_region
      %s396 = ssub.s32 %s9, 2
      // Predicated region
      $region41: #{up_block_forward.3} parent=39 // pred_check
        %p397 = pneg %p106
      $region42: #{up_block_forward.3} parent=39 // pred_check_branch
        %399 = sbr.rel (%p397) target = $region44
      $region43: #{up_block_forward.3} parent=39 // pred_region
        %s400 = smul.u32 8, %s15
        %p401 = scmp.lt.s32.totalorder %s400, 15
        %s402 = scalar_select %p401, %s400, 15
        %s403 = smul.addr %s402, 4
        %s404 = scalar_lea.vmem %s3, %s403
      $region44: #{up_block_forward.3} parent=39 // pred_fallthru
        _
    $region40: #{up_block_forward.3} parent=5 // pred_fallthru
      _
  $region6: #{up_block_forward.3} parent=0 // loop_footer
    %s13 = sadd.s32 1, %s9
  $region7: #{up_block_forward.3} parent=0 // loop_footer_branch
    %8 = sbr.rel target = $region3
  $region8: #{up_block_forward.3} parent=0 // loop_exit
    _

// kernel: up_block_forward.5
$region0: #{up_block_forward.5}
  #allocation0 [shape = 'u32[]', space=smem, size = 0x4, offset = 0x4, fixed_abs, tag = 'smem constant byte address 0x4 - core index']
  #allocation1 [shape = 'u32[144,128]{1,0:T(1,128)}', space=vmem, size = 0x12000, scoped, tag = 'internal scratch']
  %s0 = inlined_call_operand.vmem [shape: bf16[2,18,18,128], index: 0, kind: input, shape index: {}]
  %s1 = inlined_call_operand.vmem [shape: bf16[9,128,128], index: 1, kind: input, shape index: {}]
  %s2 = inlined_call_operand.vmem [shape: f32[1,128], index: 2, kind: input, shape index: {}]
  %s3 = inlined_call_operand.vmem [shape: f32[2,18,18,128], index: 3, kind: output, shape index: {}]
  %s4 = sld [smem:[#allocation0]]
  $region45: #{up_block_forward.5} parent=0
    _
  %s6 = ssub.s32 1, %s4
  %s7 = scalar_select 0, %s6, %s4
  loop: start=0, step=1, limit=4
  $region2: #{up_block_forward.5} parent=0 // loop_pre_header
    _
  $region3: #{up_block_forward.5} parent=0 // loop_header
    %s9 = sphi 0, %s13
    %p10 = scmp.ge.s32.totalorder %s9, 4
    %s19 = sphi 0, %s21
    %s22 = sphi 0, %s19
    %s23 = sphi 0, %s22
    %s39 = sphi 0, %s23
    %s43 = sphi 0, %s43
    %s45 = sphi 0, %s43
    %s46 = sphi 0, %s45
    %s60 = sphi 0, %s46
    %s64 = sphi 0, %s64
    %s66 = sphi 0, %s64
    %s67 = sphi 0, %s66
    %s81 = sphi 0, %s67
    %s87 = sphi 0, %s89
    %s90 = sphi 0, %s87
    %s91 = sphi 0, %s90
    %s107 = sphi 0, %s91
  $region4: #{up_block_forward.5} parent=0 // loop_header_branch
    %12 = sbr.rel (%p10) target = $region8
  $region5: #{up_block_forward.5} parent=0 // loop_body
    %s14 = ssub.s32 %s9, 1
    %s15 = ssub.s32 %s9, 2
    %s16 = sadd.s32 %s9, 1
    %s17 = ssub.s32 %s9, %s16
    %p18 = scmp.eq.s32.totalorder %s17, 0
    %s20 = sadd.s32 %s19, 1
    %s21 = scalar_select %p18, %s19, %s20
    %p24 = pneg %p18
    %p25 = scmp.eq.s32.totalorder %s9, 1
    %p26 = por %p24, %p25
    %p27 = scmp.ne.s32.totalorder %s19, %s22
    %p28 = scmp.eq.s32.totalorder %s9, 0
    %p29 = por %p27, %p28
    %p30 = scmp.ne.s32.totalorder %s19, %s22
    %p31 = scmp.eq.s32.totalorder %s14, 1
    %p32 = por %p30, %p31
    %p33 = scmp.ne.s32.totalorder %s22, %s23
    %p34 = scmp.eq.s32.totalorder %s14, 0
    %p35 = por %p33, %p34
    %p36 = scmp.ne.s32.totalorder %s22, %s23
    %p37 = scmp.eq.s32.totalorder %s15, 1
    %p38 = por %p36, %p37
    %p40 = scmp.ne.s32.totalorder %s23, %s39
    %p41 = scmp.eq.s32.totalorder %s15, 0
    %p42 = por %p40, %p41
    %s44 = sadd.s32 %s43, 1
    %p47 = scmp.eq.s32.totalorder %s9, 1
    %p48 = scmp.ne.s32.totalorder %s43, %s45
    %p49 = scmp.eq.s32.totalorder %s9, 0
    %p50 = por %p48, %p49
    %p51 = scmp.ne.s32.totalorder %s43, %s45
    %p52 = scmp.eq.s32.totalorder %s14, 1
    %p53 = por %p51, %p52
    %p54 = scmp.ne.s32.totalorder %s45, %s46
    %p55 = scmp.eq.s32.totalorder %s14, 0
    %p56 = por %p54, %p55
    %p57 = scmp.ne.s32.totalorder %s45, %s46
    %p58 = scmp.eq.s32.totalorder %s15, 1
    %p59 = por %p57, %p58
    %p61 = scmp.ne.s32.totalorder %s46, %s60
    %p62 = scmp.eq.s32.totalorder %s15, 0
    %p63 = por %p61, %p62
    %s65 = sadd.s32 %s64, 1
    %p68 = scmp.eq.s32.totalorder %s9, 1
    %p69 = scmp.ne.s32.totalorder %s64, %s66
    %p70 = scmp.eq.s32.totalorder %s9, 0
    %p71 = por %p69, %p70
    %p72 = scmp.ne.s32.totalorder %s64, %s66
    %p73 = scmp.eq.s32.totalorder %s14, 1
    %p74 = por %p72, %p73
    %p75 = scmp.ne.s32.totalorder %s66, %s67
    %p76 = scmp.eq.s32.totalorder %s14, 0
    %p77 = por %p75, %p76
    %p78 = scmp.ne.s32.totalorder %s66, %s67
    %p79 = scmp.eq.s32.totalorder %s15, 1
    %p80 = por %p78, %p79
    %p82 = scmp.ne.s32.totalorder %s67, %s81
    %p83 = scmp.eq.s32.totalorder %s15, 0
    %p84 = por %p82, %p83
    %s85 = ssub.s32 %s9, %s16
    %p86 = scmp.eq.s32.totalorder %s85, 0
    %s88 = sadd.s32 %s87, 1
    %s89 = scalar_select %p86, %s87, %s88
    %p92 = pneg %p86
    %p93 = scmp.eq.s32.totalorder %s9, 1
    %p94 = por %p92, %p93
    %p95 = scmp.ne.s32.totalorder %s87, %s90
    %p96 = scmp.eq.s32.totalorder %s9, 0
    %p97 = por %p95, %p96
    %p98 = scmp.ne.s32.totalorder %s87, %s90
    %p99 = scmp.eq.s32.totalorder %s14, 1
    %p100 = por %p98, %p99
    %p101 = scmp.ne.s32.totalorder %s90, %s91
    %p102 = scmp.eq.s32.totalorder %s14, 0
    %p103 = por %p101, %p102
    %p104 = scmp.ne.s32.totalorder %s90, %s91
    %p105 = scmp.eq.s32.totalorder %s15, 1
    %p106 = por %p104, %p105
    %p108 = scmp.ne.s32.totalorder %s91, %s107
    %p109 = scmp.eq.s32.totalorder %s15, 0
    %p110 = por %p108, %p109
    %p111 = scmp.le.s32.totalorder 1, %s9
    %p112 = scmp.lt.s32.totalorder %s9, 3
    %p113 = pnand %p111, %p112
    %p114 = pneg %p113
    // Predicated region
    $region9: #{up_block_forward.5} parent=5 // pred_check
      _
    $region10: #{up_block_forward.5} parent=5 // pred_check_branch
      %116 = sbr.rel (%p113) target = $region12
    $region11: #{up_block_forward.5} parent=5 // pred_region
      %s117 = ssub.s32 %s9, 1
      // Predicated region
      $region13: #{up_block_forward.5} parent=11 // pred_check
        %p118 = pneg %p56
      $region14: #{up_block_forward.5} parent=11 // pred_check_branch
        %120 = sbr.rel (%p118) target = $region16
      $region15: #{up_block_forward.5} parent=11 // pred_region
        _
      $region16: #{up_block_forward.5} parent=11 // pred_fallthru
        _
      // Predicated region
      $region17: #{up_block_forward.5} parent=11 // pred_check
        %p121 = pneg %p77
      $region18: #{up_block_forward.5} parent=11 // pred_check_branch
        %123 = sbr.rel (%p121) target = $region20
      $region19: #{up_block_forward.5} parent=11 // pred_region
        _
      $region20: #{up_block_forward.5} parent=11 // pred_fallthru
        _
    $region12: #{up_block_forward.5} parent=5 // pred_fallthru
      _
    %p124 = scmp.lt.s32.totalorder %s9, 2
    // Predicated region
    $region21: #{up_block_forward.5} parent=5 // pred_check
      %p125 = pneg %p124
    $region22: #{up_block_forward.5} parent=5 // pred_check_branch
      %127 = sbr.rel (%p125) target = $region24
    $region23: #{up_block_forward.5} parent=5 // pred_region
      // Predicated region
      $region25: #{up_block_forward.5} parent=23 // pred_check
        %p128 = pneg %p29
      $region26: #{up_block_forward.5} parent=23 // pred_check_branch
        %130 = sbr.rel (%p128) target = $region28
      $region27: #{up_block_forward.5} parent=23 // pred_region
        %p131 = scmp.lt.s32.totalorder %s9, 1
        %s132 = scalar_select %p131, %s9, 1
        %s133 = smul.addr %s132, 54
        %s134 = smul.addr %s133, 4
        %s135 = scalar_lea.vmem %s0, %s134
      $region28: #{up_block_forward.5} parent=23 // pred_fallthru
        _
    $region24: #{up_block_forward.5} parent=5 // pred_fallthru
      _
    %p136 = scmp.le.s32.totalorder 1, %s9
    %p137 = scmp.lt.s32.totalorder %s9, 3
    %p138 = pnand %p136, %p137
    %p139 = pneg %p138
    // Predicated region
    $region29: #{up_block_forward.5} parent=5 // pred_check
      _
    $region30: #{up_block_forward.5} parent=5 // pred_check_branch
      %141 = sbr.rel (%p138) target = $region32
    $region31: #{up_block_forward.5} parent=5 // pred_region
      %s142 = ssub.s32 %s9, 1
      %p143 = scmp.lt.s32.totalorder %s14, 1
      %s144 = scalar_select %p143, %s14, 1
      %s145 = smul.addr %s144, 54
      %s146 = smul.addr %s145, 4
      %s147 = scalar_lea.vmem %s0, %s146
      %p148 = pneg %p35
      %p149 = pneg %p32
      %p150 = pneg %p56
      %p151 = pneg %p53
      %p152 = pneg %p77
      %p153 = pneg %p74
      %p154 = pneg %p103
      %p155 = pneg %p100
      %p156 = scmp.lt.s32.totalorder %s14, 1
      %s157 = scalar_select %p156, %s14, 1
      %s158 = smul.addr %s157, 54
      %s159 = smul.addr %s158, 8
      %s160 = scalar_lea.vmem %s3, %s159
      %p161 = scmp.lt.s32.totalorder %s14, 1
      %s162 = scalar_select %p161, %s14, 1
      %s163 = smul.addr %s162, 54
      %s164 = smul.addr %s163, 4
      %s165 = scalar_lea.vmem %s0, %s164
      %p166 = scmp.lt.s32.totalorder %s14, 1
      %s167 = scalar_select %p166, %s14, 1
      %s168 = smul.addr %s167, 54
      %s169 = smul.addr %s168, 8
      %s170 = scalar_lea.vmem %s3, %s169
      %v172 = vld [vmem:[%s165] sm:$0xf]
      %v173 = vld [vmem:[%s165 + $0x4] sm:$0xf]
      %v174 = vld [vmem:[%s165 + $0xc] sm:$0xf]
      %v175 = vld [vmem:[%s165 + $0x10] sm:$0xf]
      %v176 = vld [vmem:[%s165 + $0x18] sm:$0xf]
      %v177 = vld [vmem:[%s165 + $0x1c] sm:$0xf]
      %v178 = vld [vmem:[%s165 + $0x24] sm:$0xf]
      %v179 = vld [vmem:[%s165 + $0x28] sm:$0xf]
      %v180 = vld [vmem:[%s165 + $0x30] sm:$0xf]
      %v181 = vld [vmem:[%s165 + $0x34] sm:$0xf]
      %v182 = vld [vmem:[%s165 + $0x3c] sm:$0xf]
      %v183 = vld [vmem:[%s165 + $0x40] sm:$0xf]
      %v184 = vld [vmem:[%s165 + $0x48] sm:$0xf]
      %v185 = vld [vmem:[%s165 + $0x4c] sm:$0xf]
      %v186 = vld [vmem:[%s165 + $0x54] sm:$0xf]
      %v187 = vld [vmem:[%s165 + $0x58] sm:$0xf]
      %v188 = vld [vmem:[%s165 + $0x60] sm:$0xf]
      %v189 = vld [vmem:[%s165 + $0x64] sm:$0xf]
      %v190 = vld [vmem:[%s165 + $0x6c] sm:$0xf]
      %v191 = vld [vmem:[%s165 + $0x70] sm:$0xf]
      %v192 = vld [vmem:[%s165 + $0x78] sm:$0xf]
      %v193 = vld [vmem:[%s165 + $0x7c] sm:$0xf]
      %v194 = vld [vmem:[%s165 + $0x84] sm:$0xf]
      %v195 = vld [vmem:[%s165 + $0x88] sm:$0xf]
      %v196 = vld [vmem:[%s165 + $0x90] sm:$0xf]
      %v197 = vld [vmem:[%s165 + $0x94] sm:$0xf]
      %v198 = vld [vmem:[%s165 + $0x9c] sm:$0xf]
      %v199 = vld [vmem:[%s165 + $0xa0] sm:$0xf]
      %v200 = vld [vmem:[%s165 + $0xa8] sm:$0xf]
      %v201 = vld [vmem:[%s165 + $0xac] sm:$0xf]
      %v202 = vld [vmem:[%s165 + $0xb4] sm:$0xf]
      %v203 = vld [vmem:[%s165 + $0xb8] sm:$0xf]
      %v204 = vld [vmem:[%s1] sm:$0xf]
      %v205 = vld [vmem:[%s1 + $0x4] sm:$0xf]
      %v206 = vld [vmem:[%s1 + $0x8] sm:$0xf]
      %v207 = vld [vmem:[%s1 + $0xc] sm:$0xf]
      %v208 = vld [vmem:[%s1 + $0x10] sm:$0xf]
      %v209 = vld [vmem:[%s1 + $0x14] sm:$0xf]
      %v210 = vld [vmem:[%s1 + $0x18] sm:$0xf]
      %v211 = vld [vmem:[%s1 + $0x1c] sm:$0xf]
      %v212 = vld [vmem:[%s1 + $0x20] sm:$0xf]
      %v213 = vld [vmem:[%s1 + $0x24] sm:$0xf]
      %v214 = vld [vmem:[%s1 + $0x28] sm:$0xf]
      %v215 = vld [vmem:[%s1 + $0x2c] sm:$0xf]
      %v216 = vld [vmem:[%s1 + $0x30] sm:$0xf]
      %v217 = vld [vmem:[%s1 + $0x34] sm:$0xf]
      %v218 = vld [vmem:[%s1 + $0x38] sm:$0xf]
      %v219 = vld [vmem:[%s1 + $0x3c] sm:$0xf]
      %v220 = vld [vmem:[%s165 + $0x8] sm:$0x1]
      %v221 = vld [vmem:[%s165 + $0x14] sm:$0x1]
      %v222 = vld [vmem:[%s165 + $0x20] sm:$0x1]
      %v223 = vld [vmem:[%s165 + $0x2c] sm:$0x1]
      %v224 = vld [vmem:[%s165 + $0x38] sm:$0x1]
      %v225 = vld [vmem:[%s165 + $0x44] sm:$0x1]
      %v226 = vld [vmem:[%s165 + $0x50] sm:$0x1]
      %v227 = vld [vmem:[%s165 + $0x5c] sm:$0x1]
      %v228 = vld [vmem:[%s165 + $0x68] sm:$0x1]
      %v229 = vld [vmem:[%s165 + $0x74] sm:$0x1]
      %v230 = vld [vmem:[%s165 + $0x80] sm:$0x1]
      %v231 = vld [vmem:[%s165 + $0x8c] sm:$0x1]
      %v232 = vld [vmem:[%s165 + $0x98] sm:$0x1]
      %v233 = vld [vmem:[%s165 + $0xa4] sm:$0x1]
      %v234 = vld [vmem:[%s165 + $0xb0] sm:$0x1]
      %v235 = vld [vmem:[%s165 + $0xbc] sm:$0x1]
      %vm236 = vsmask.f32 3328
      %vm237 = vsmask.f32 7440
      %vm238 = vmor %vm236, %vm237
      %v240 = vshrl.u32 %v172, 16
      %v242 = vrot.slane %v240, 4
      %v243 = vshll.u32 %v172, 16
      %v245 = vrot.slane %v243, 5
      %v246 = vor.u32 %v242, %v245
      %v247 = vrot.slane %v246, 4
      %v249 = vshll.u32 %v173, 16
      %v251 = vrot.slane %v249, 5
      %v252 = vsel %vm238, %v247, %v251
      %v253 = vshrl.u32 %v173, 16
      %v255 = vrot.slane %v253, 4
      %v256 = vor.u32 %v255, %v251
      %v257 = vrot.slane %v256, 4
      %v259 = vshll.u32 %v220, 16
      %v261 = vrot.slane %v259, 5
      %v262 = vsel %vm238, %v257, %v261
      %v264 = vshrl.u32 %v174, 16
      %v266 = vrot.slane %v264, 4
      %v267 = vshll.u32 %v174, 16
      %v269 = vrot.slane %v267, 5
      %v270 = vor.u32 %v266, %v269
      %v271 = vrot.slane %v270, 4
      %v273 = vshll.u32 %v175, 16
      %v275 = vrot.slane %v273, 5
      %v276 = vsel %vm238, %v271, %v275
      %v277 = vshrl.u32 %v175, 16
      %v279 = vrot.slane %v277, 4
      %v280 = vor.u32 %v279, %v275
      %v281 = vrot.slane %v280, 4
      %v283 = vshll.u32 %v221, 16
      %v285 = vrot.slane %v283, 5
      %v286 = vsel %vm238, %v281, %v285
      %v288 = vshrl.u32 %v176, 16
      %v290 = vrot.slane %v288, 4
      %v291 = vshll.u32 %v176, 16
      %v293 = vrot.slane %v291, 5
      %v294 = vor.u32 %v290, %v293
      %v295 = vrot.slane %v294, 4
      %v297 = vshll.u32 %v177, 16
      %v299 = vrot.slane %v297, 5
      %v300 = vsel %vm238, %v295, %v299
      %v301 = vshrl.u32 %v177, 16
      %v303 = vrot.slane %v301, 4
      %v304 = vor.u32 %v303, %v299
      %v305 = vrot.slane %v304, 4
      %v307 = vshll.u32 %v222, 16
      %v309 = vrot.slane %v307, 5
      %v310 = vsel %vm238, %v305, %v309
      %v312 = vshrl.u32 %v178, 16
      %v314 = vrot.slane %v312, 4
      %v315 = vshll.u32 %v178, 16
      %v317 = vrot.slane %v315, 5
      %v318 = vor.u32 %v314, %v317
      %v319 = vrot.slane %v318, 4
      %v321 = vshll.u32 %v179, 16
      %v323 = vrot.slane %v321, 5
      %v324 = vsel %vm238, %v319, %v323
      %v325 = vshrl.u32 %v179, 16
      %v327 = vrot.slane %v325, 4
      %v328 = vor.u32 %v327, %v323
      %v329 = vrot.slane %v328, 4
      %v331 = vshll.u32 %v223, 16
      %v333 = vrot.slane %v331, 5
      %v334 = vsel %vm238, %v329, %v333
      %v336 = vshrl.u32 %v180, 16
      %v338 = vrot.slane %v336, 4
      %v339 = vshll.u32 %v180, 16
      %v341 = vrot.slane %v339, 5
      %v342 = vor.u32 %v338, %v341
      %v343 = vrot.slane %v342, 4
      %v345 = vshll.u32 %v181, 16
      %v347 = vrot.slane %v345, 5
      %v348 = vsel %vm238, %v343, %v347
      %v349 = vshrl.u32 %v181, 16
      %v351 = vrot.slane %v349, 4
      %v352 = vor.u32 %v351, %v347
      %v353 = vrot.slane %v352, 4
      %v355 = vshll.u32 %v224, 16
      %v357 = vrot.slane %v355, 5
      %v358 = vsel %vm238, %v353, %v357
      %v360 = vshrl.u32 %v182, 16
      %v362 = vrot.slane %v360, 4
      %v363 = vshll.u32 %v182, 16
      %v365 = vrot.slane %v363, 5
      %v366 = vor.u32 %v362, %v365
      %v367 = vrot.slane %v366, 4
      %v369 = vshll.u32 %v183, 16
      %v371 = vrot.slane %v369, 5
      %v372 = vsel %vm238, %v367, %v371
      %v373 = vshrl.u32 %v183, 16
      %v375 = vrot.slane %v373, 4
      %v376 = vor.u32 %v375, %v371
      %v377 = vrot.slane %v376, 4
      %v379 = vshll.u32 %v225, 16
      %v381 = vrot.slane %v379, 5
      %v382 = vsel %vm238, %v377, %v381
      %v384 = vshrl.u32 %v184, 16
      %v386 = vrot.slane %v384, 4
      %v387 = vshll.u32 %v184, 16
      %v389 = vrot.slane %v387, 5
      %v390 = vor.u32 %v386, %v389
      %v391 = vrot.slane %v390, 4
      %v393 = vshll.u32 %v185, 16
      %v395 = vrot.slane %v393, 5
      %v396 = vsel %vm238, %v391, %v395
      %v397 = vshrl.u32 %v185, 16
      %v399 = vrot.slane %v397, 4
      %v400 = vor.u32 %v399, %v395
      %v401 = vrot.slane %v400, 4
      %v403 = vshll.u32 %v226, 16
      %v405 = vrot.slane %v403, 5
      %v406 = vsel %vm238, %v401, %v405
      %v408 = vshrl.u32 %v186, 16
      %v410 = vrot.slane %v408, 4
      %v411 = vshll.u32 %v186, 16
      %v413 = vrot.slane %v411, 5
      %v414 = vor.u32 %v410, %v413
      %v415 = vrot.slane %v414, 4
      %v417 = vshll.u32 %v187, 16
      %v419 = vrot.slane %v417, 5
      %v420 = vsel %vm238, %v415, %v419
      %v421 = vshrl.u32 %v187, 16
      %v423 = vrot.slane %v421, 4
      %v424 = vor.u32 %v423, %v419
      %v425 = vrot.slane %v424, 4
      %v427 = vshll.u32 %v227, 16
      %v429 = vrot.slane %v427, 5
      %v430 = vsel %vm238, %v425, %v429
      %v432 = vshrl.u32 %v188, 16
      %v434 = vrot.slane %v432, 4
      %v435 = vshll.u32 %v188, 16
      %v437 = vrot.slane %v435, 5
      %v438 = vor.u32 %v434, %v437
      %v439 = vrot.slane %v438, 4
      %v441 = vshll.u32 %v189, 16
      %v443 = vrot.slane %v441, 5
      %v444 = vsel %vm238, %v439, %v443
      %v445 = vshrl.u32 %v189, 16
      %v447 = vrot.slane %v445, 4
      %v448 = vor.u32 %v447, %v443
      %v449 = vrot.slane %v448, 4
      %v451 = vshll.u32 %v228, 16
      %v453 = vrot.slane %v451, 5
      %v454 = vsel %vm238, %v449, %v453
      %v456 = vshrl.u32 %v190, 16
      %v458 = vrot.slane %v456, 4
      %v459 = vshll.u32 %v190, 16
      %v461 = vrot.slane %v459, 5
      %v462 = vor.u32 %v458, %v461
      %v463 = vrot.slane %v462, 4
      %v465 = vshll.u32 %v191, 16
      %v467 = vrot.slane %v465, 5
      %v468 = vsel %vm238, %v463, %v467
      %v469 = vshrl.u32 %v191, 16
      %v471 = vrot.slane %v469, 4
      %v472 = vor.u32 %v471, %v467
      %v473 = vrot.slane %v472, 4
      %v475 = vshll.u32 %v229, 16
      %v477 = vrot.slane %v475, 5
      %v478 = vsel %vm238, %v473, %v477
      %v480 = vshrl.u32 %v192, 16
      %v482 = vrot.slane %v480, 4
      %v483 = vshll.u32 %v192, 16
      %v485 = vrot.slane %v483, 5
      %v486 = vor.u32 %v482, %v485
      %v487 = vrot.slane %v486, 4
      %v489 = vshll.u32 %v193, 16
      %v491 = vrot.slane %v489, 5
      %v492 = vsel %vm238, %v487, %v491
      %v493 = vshrl.u32 %v193, 16
      %v495 = vrot.slane %v493, 4
      %v496 = vor.u32 %v495, %v491
      %v497 = vrot.slane %v496, 4
      %v499 = vshll.u32 %v230, 16
      %v501 = vrot.slane %v499, 5
      %v502 = vsel %vm238, %v497, %v501
      %v504 = vshrl.u32 %v194, 16
      %v506 = vrot.slane %v504, 4
      %v507 = vshll.u32 %v194, 16
      %v509 = vrot.slane %v507, 5
      %v510 = vor.u32 %v506, %v509
      %v511 = vrot.slane %v510, 4
      %v513 = vshll.u32 %v195, 16
      %v515 = vrot.slane %v513, 5
      %v516 = vsel %vm238, %v511, %v515
      %v517 = vshrl.u32 %v195, 16
      %v519 = vrot.slane %v517, 4
      %v520 = vor.u32 %v519, %v515
      %v521 = vrot.slane %v520, 4
      %v523 = vshll.u32 %v231, 16
      %v525 = vrot.slane %v523, 5
      %v526 = vsel %vm238, %v521, %v525
      %v528 = vshrl.u32 %v196, 16
      %v530 = vrot.slane %v528, 4
      %v531 = vshll.u32 %v196, 16
      %v533 = vrot.slane %v531, 5
      %v534 = vor.u32 %v530, %v533
      %v535 = vrot.slane %v534, 4
      %v537 = vshll.u32 %v197, 16
      %v539 = vrot.slane %v537, 5
      %v540 = vsel %vm238, %v535, %v539
      %v541 = vshrl.u32 %v197, 16
      %v543 = vrot.slane %v541, 4
      %v544 = vor.u32 %v543, %v539
      %v545 = vrot.slane %v544, 4
      %v547 = vshll.u32 %v232, 16
      %v549 = vrot.slane %v547, 5
      %v550 = vsel %vm238, %v545, %v549
      %v552 = vshrl.u32 %v198, 16
      %v554 = vrot.slane %v552, 4
      %v555 = vshll.u32 %v198, 16
      %v557 = vrot.slane %v555, 5
      %v558 = vor.u32 %v554, %v557
      %v559 = vrot.slane %v558, 4
      %v561 = vshll.u32 %v199, 16
      %v563 = vrot.slane %v561, 5
      %v564 = vsel %vm238, %v559, %v563
      %v565 = vshrl.u32 %v199, 16
      %v567 = vrot.slane %v565, 4
      %v568 = vor.u32 %v567, %v563
      %v569 = vrot.slane %v568, 4
      %v571 = vshll.u32 %v233, 16
      %v573 = vrot.slane %v571, 5
      %v574 = vsel %vm238, %v569, %v573
      %v576 = vshrl.u32 %v200, 16
      %v578 = vrot.slane %v576, 4
      %v579 = vshll.u32 %v200, 16
      %v581 = vrot.slane %v579, 5
      %v582 = vor.u32 %v578, %v581
      %v583 = vrot.slane %v582, 4
      %v585 = vshll.u32 %v201, 16
      %v587 = vrot.slane %v585, 5
      %v588 = vsel %vm238, %v583, %v587
      %v589 = vshrl.u32 %v201, 16
      %v591 = vrot.slane %v589, 4
      %v592 = vor.u32 %v591, %v587
      %v593 = vrot.slane %v592, 4
      %v595 = vshll.u32 %v234, 16
      %v597 = vrot.slane %v595, 5
      %v598 = vsel %vm238, %v593, %v597
      %v600 = vshrl.u32 %v202, 16
      %v602 = vrot.slane %v600, 4
      %v603 = vshll.u32 %v202, 16
      %v605 = vrot.slane %v603, 5
      %v606 = vor.u32 %v602, %v605
      %v607 = vrot.slane %v606, 4
      %v609 = vshll.u32 %v203, 16
      %v611 = vrot.slane %v609, 5
      %v612 = vsel %vm238, %v607, %v611
      %v613 = vshrl.u32 %v203, 16
      %v615 = vrot.slane %v613, 4
      %v616 = vor.u32 %v615, %v611
      %v617 = vrot.slane %v616, 4
      %v619 = vshll.u32 %v235, 16
      %v621 = vrot.slane %v619, 5
      %v622 = vsel %vm238, %v617, %v621
      %s623 = scalar_lea.vmem %s1, 64
      %v624 = vld [vmem:[%s623] sm:$0xf]
      %v625 = vld [vmem:[%s623 + $0x4] sm:$0xf]
      %v626 = vld [vmem:[%s623 + $0x8] sm:$0xf]
      %v627 = vld [vmem:[%s623 + $0xc] sm:$0xf]
      %v628 = vld [vmem:[%s623 + $0x10] sm:$0xf]
      %v629 = vld [vmem:[%s623 + $0x14] sm:$0xf]
      %v630 = vld [vmem:[%s623 + $0x18] sm:$0xf]
      %v631 = vld [vmem:[%s623 + $0x1c] sm:$0xf]
      %v632 = vld [vmem:[%s623 + $0x20] sm:$0xf]
      %v633 = vld [vmem:[%s623 + $0x24] sm:$0xf]
      %v634 = vld [vmem:[%s623 + $0x28] sm:$0xf]
      %v635 = vld [vmem:[%s623 + $0x2c] sm:$0xf]
      %v636 = vld [vmem:[%s623 + $0x30] sm:$0xf]
      %v637 = vld [vmem:[%s623 + $0x34] sm:$0xf]
      %v638 = vld [vmem:[%s623 + $0x38] sm:$0xf]
      %v639 = vld [vmem:[%s623 + $0x3c] sm:$0xf]
      %v640 = vunpack.c.l.b16 %v252
      %v641 = vunpack.c.l.b16 %v262
      %v642 = vunpack.c.l.b16 %v276
      %v643 = vunpack.c.l.b16 %v286
      %v644 = vunpack.c.l.b16 %v300
      %v645 = vunpack.c.l.b16 %v310
      %v646 = vunpack.c.l.b16 %v324
      %v647 = vunpack.c.l.b16 %v334
      %v648 = vunpack.c.l.b16 %v348
      %v649 = vunpack.c.l.b16 %v358
      %v650 = vunpack.c.l.b16 %v372
      %v651 = vunpack.c.l.b16 %v382
      %v652 = vunpack.c.l.b16 %v396
      %v653 = vunpack.c.l.b16 %v406
      %v654 = vunpack.c.l.b16 %v420
      %v655 = vunpack.c.l.b16 %v430
      %v656 = vunpack.c.l.b16 %v444
      %v657 = vunpack.c.l.b16 %v454
      %v658 = vunpack.c.l.b16 %v468
      %v659 = vunpack.c.l.b16 %v478
      %v660 = vunpack.c.l.b16 %v492
      %v661 = vunpack.c.l.b16 %v502
      %v662 = vunpack.c.l.b16 %v516
      %v663 = vunpack.c.l.b16 %v526
      %v664 = vunpack.c.l.b16 %v540
      %v665 = vunpack.c.l.b16 %v550
      %v666 = vunpack.c.l.b16 %v564
      %v667 = vunpack.c.l.b16 %v574
      %v668 = vunpack.c.l.b16 %v588
      %v669 = vunpack.c.l.b16 %v598
      %v670 = vunpack.c.l.b16 %v612
      %v671 = vunpack.c.l.b16 %v622
      %v672 = vpack.c.b16 %v641, %v640
      %v673 = vpack.c.b16 %v643, %v642
      %v674 = vpack.c.b16 %v645, %v644
      %v675 = vpack.c.b16 %v647, %v646
      %v676 = vpack.c.b16 %v649, %v648
      %v677 = vpack.c.b16 %v651, %v650
      %v678 = vpack.c.b16 %v653, %v652
      %v679 = vpack.c.b16 %v655, %v654
      %v680 = vpack.c.b16 %v657, %v656
      %v681 = vpack.c.b16 %v659, %v658
      %v682 = vpack.c.b16 %v661, %v660
      %v683 = vpack.c.b16 %v663, %v662
      %v684 = vpack.c.b16 %v665, %v664
      %v685 = vpack.c.b16 %v667, %v666
      %v686 = vpack.c.b16 %v669, %v668
      %v687 = vpack.c.b16 %v671, %v670
      %v720 = vunpack.c.l.b16 %v624
      %v721 = vunpack.c.l.b16 %v625
      %v722 = vunpack.c.l.b16 %v626
      %v723 = vunpack.c.l.b16 %v627
      %v724 = vunpack.c.l.b16 %v628
      %v725 = vunpack.c.l.b16 %v629
      %v726 = vunpack.c.l.b16 %v630
      %v727 = vunpack.c.l.b16 %v631
      %v728 = vunpack.c.l.b16 %v632
      %v729 = vunpack.c.l.b16 %v633
      %v730 = vunpack.c.l.b16 %v634
      %v731 = vunpack.c.l.b16 %v635
      %v732 = vunpack.c.l.b16 %v636
      %v733 = vunpack.c.l.b16 %v637
      %v734 = vunpack.c.l.b16 %v638
      %v735 = vunpack.c.l.b16 %v639
      %v736 = vpack.c.b16 %v721, %v720
      %v737 = vpack.c.b16 %v723, %v722
      %v738 = vpack.c.b16 %v725, %v724
      %v739 = vpack.c.b16 %v727, %v726
      %v740 = vpack.c.b16 %v729, %v728
      %v741 = vpack.c.b16 %v731, %v730
      %v742 = vpack.c.b16 %v733, %v732
      %v743 = vpack.c.b16 %v735, %v734
      %752 = vmatprep.subr.bf16.mxu0 0
      %753 = vmatpush1.bf16.msra.mxu0 %v736
      %754 = vmatprep.subr.bf16.mxu0 0
      %755 = vmatpush1.bf16.msra.mxu0 %v737
      %756 = vmatprep.subr.bf16.mxu0 0
      %757 = vmatpush1.bf16.msra.mxu0 %v738
      %758 = vmatprep.subr.bf16.mxu0 0
      %759 = vmatpush1.bf16.msra.mxu0 %v739
      %760 = vmatprep.subr.bf16.mxu0 0
      %761 = vmatpush1.bf16.msra.mxu0 %v740
      %762 = vmatprep.subr.bf16.mxu0 0
      %763 = vmatpush1.bf16.msra.mxu0 %v741
      %764 = vmatprep.subr.bf16.mxu0 0
      %765 = vmatpush1.bf16.msra.mxu0 %v742
      %766 = vmatprep.subr.bf16.mxu0 0
      %767 = vmatpush1.bf16.msra.mxu0 %v743
      %768 = vmatprep.subr.bf16.mxu0 0
      %769 = vmatpush1.bf16.msra.mxu0 0
      %770 = vmatprep.subr.bf16.mxu0 0
      %771 = vmatpush1.bf16.msra.mxu0 0
      %772 = vmatprep.subr.bf16.mxu0 0
      %773 = vmatpush1.bf16.msra.mxu0 0
      %774 = vmatprep.subr.bf16.mxu0 0
      %775 = vmatpush1.bf16.msra.mxu0 0
      %776 = vmatprep.subr.bf16.mxu0 0
      %777 = vmatpush1.bf16.msra.mxu0 0
      %778 = vmatprep.subr.bf16.mxu0 0
      %779 = vmatpush1.bf16.msra.mxu0 0
      %780 = vmatprep.subr.bf16.mxu0 0
      %781 = vmatpush1.bf16.msra.mxu0 0
      %782 = vmatprep.subr.bf16.mxu0 0
      %783 = vmatpush1.bf16.msra.mxu0 0
      %784 = vmatprep.mubr.bf16.mxu0 0
      %785 = vmatmul.mubr.bf16.gmra.mrb[0].mxu0 %v672
      %v786 = vpop.f32.mrb[0].mxu0
      %v787 = vadd.f32 0.0, %v786
      %v788 = vpop.f32.mrb[0].mxu0
      %v789 = vpop.f32.mrb[0].mxu0
      %v790 = vadd.f32 0.0, %v789
      %v791 = vpop.f32.mrb[0].mxu0
      %792 = vmatprep.mubr.bf16.mxu0 0
      %793 = vmatmul.mubr.bf16.gmra.mrb[0].mxu0 %v673
      %v794 = vpop.f32.mrb[0].mxu0
      %v795 = vadd.f32 0.0, %v794
      %v796 = vpop.f32.mrb[0].mxu0
      %v797 = vpop.f32.mrb[0].mxu0
      %v798 = vadd.f32 0.0, %v797
      %v799 = vpop.f32.mrb[0].mxu0
      %800 = vmatprep.mubr.bf16.mxu0 0
      %801 = vmatmul.mubr.bf16.gmra.mrb[0].mxu0 %v674
      %v802 = vpop.f32.mrb[0].mxu0
      %v803 = vadd.f32 0.0, %v802
      %v804 = vpop.f32.mrb[0].mxu0
      %v805 = vpop.f32.mrb[0].mxu0
      %v806 = vadd.f32 0.0, %v805
      %v807 = vpop.f32.mrb[0].mxu0
      %808 = vmatprep.mubr.bf16.mxu0 0
      %809 = vmatmul.mubr.bf16.gmra.mrb[0].mxu0 %v675
      %v810 = vpop.f32.mrb[0].mxu0
      %v811 = vadd.f32 0.0, %v810
      %v812 = vpop.f32.mrb[0].mxu0
      %v813 = vpop.f32.mrb[0].mxu0
      %v814 = vadd.f32 0.0, %v813
      %v815 = vpop.f32.mrb[0].mxu0
      %816 = vmatprep.mubr.bf16.mxu0 0
      %817 = vmatmul.mubr.bf16.gmra.mrb[0].mxu0 %v676
      %v818 = vpop.f32.mrb[0].mxu0
      %v819 = vadd.f32 0.0, %v818
      %v820 = vpop.f32.mrb[0].mxu0
      %v821 = vpop.f32.mrb[0].mxu0
      %v822 = vadd.f32 0.0, %v821
      %v823 = vpop.f32.mrb[0].mxu0
      %824 = vmatprep.mubr.bf16.mxu0 0
      %825 = vmatmul.mubr.bf16.gmra.mrb[0].mxu0 %v677
      %v826 = vpop.f32.mrb[0].mxu0
      %v827 = vadd.f32 0.0, %v826
      %v828 = vpop.f32.mrb[0].mxu0
      %v829 = vpop.f32.mrb[0].mxu0
      %v830 = vadd.f32 0.0, %v829
      %v831 = vpop.f32.mrb[0].mxu0
      %832 = vmatprep.mubr.bf16.mxu0 0
      %833 = vmatmul.mubr.bf16.gmra.mrb[0].mxu0 %v678
      %v834 = vpop.f32.mrb[0].mxu0
      %v835 = vadd.f32 0.0, %v834
      %v836 = vpop.f32.mrb[0].mxu0
      %v837 = vpop.f32.mrb[0].mxu0
      %v838 = vadd.f32 0.0, %v837
      %v839 = vpop.f32.mrb[0].mxu0
      %840 = vmatprep.mubr.bf16.mxu0 0
      %841 = vmatmul.mubr.bf16.gmra.mrb[0].mxu0 %v679
      %v842 = vpop.f32.mrb[0].mxu0
      %v843 = vadd.f32 0.0, %v842
      %v844 = vpop.f32.mrb[0].mxu0
      %v845 = vpop.f32.mrb[0].mxu0
      %v846 = vadd.f32 0.0, %v845
      %v847 = vpop.f32.mrb[0].mxu0
      %848 = vmatprep.mubr.bf16.mxu0 0
      %849 = vmatmul.mubr.bf16.gmra.mrb[0].mxu0 %v680
      %v850 = vpop.f32.mrb[0].mxu0
      %v851 = vadd.f32 0.0, %v850
      %v852 = vpop.f32.mrb[0].mxu0
      %v853 = vpop.f32.mrb[0].mxu0
      %v854 = vadd.f32 0.0, %v853
      %v855 = vpop.f32.mrb[0].mxu0
      %856 = vmatprep.mubr.bf16.mxu0 0
      %857 = vmatmul.mubr.bf16.gmra.mrb[0].mxu0 %v681
      %v858 = vpop.f32.mrb[0].mxu0
      %v859 = vadd.f32 0.0, %v858
      %v860 = vpop.f32.mrb[0].mxu0
      %v861 = vpop.f32.mrb[0].mxu0
      %v862 = vadd.f32 0.0, %v861
      %v863 = vpop.f32.mrb[0].mxu0
      %864 = vmatprep.mubr.bf16.mxu0 0
      %865 = vmatmul.mubr.bf16.gmra.mrb[0].mxu0 %v682
      %v866 = vpop.f32.mrb[0].mxu0
      %v867 = vadd.f32 0.0, %v866
      %v868 = vpop.f32.mrb[0].mxu0
      %v869 = vpop.f32.mrb[0].mxu0
      %v870 = vadd.f32 0.0, %v869
      %v871 = vpop.f32.mrb[0].mxu0
      %872 = vmatprep.mubr.bf16.mxu0 0
      %873 = vmatmul.mubr.bf16.gmra.mrb[0].mxu0 %v683
      %v874 = vpop.f32.mrb[0].mxu0
      %v875 = vadd.f32 0.0, %v874
      %v876 = vpop.f32.mrb[0].mxu0
      %v877 = vpop.f32.mrb[0].mxu0
      %v878 = vadd.f32 0.0, %v877
      %v879 = vpop.f32.mrb[0].mxu0
      %880 = vmatprep.mubr.bf16.mxu0 0
      %881 = vmatmul.mubr.bf16.gmra.mrb[0].mxu0 %v684
      %v882 = vpop.f32.mrb[0].mxu0
      %v883 = vadd.f32 0.0, %v882
      %v884 = vpop.f32.mrb[0].mxu0
      %v885 = vpop.f32.mrb[0].mxu0
      %v886 = vadd.f32 0.0, %v885
      %v887 = vpop.f32.mrb[0].mxu0
      %888 = vmatprep.mubr.bf16.mxu0 0
      %889 = vmatmul.mubr.bf16.gmra.mrb[0].mxu0 %v685
      %v890 = vpop.f32.mrb[0].mxu0
      %v891 = vadd.f32 0.0, %v890
      %v892 = vpop.f32.mrb[0].mxu0
      %v893 = vpop.f32.mrb[0].mxu0
      %v894 = vadd.f32 0.0, %v893
      %v895 = vpop.f32.mrb[0].mxu0
      %896 = vmatprep.mubr.bf16.mxu0 0
      %897 = vmatmul.mubr.bf16.gmra.mrb[0].mxu0 %v686
      %v898 = vpop.f32.mrb[0].mxu0
      %v899 = vadd.f32 0.0, %v898
      %v900 = vpop.f32.mrb[0].mxu0
      %v901 = vpop.f32.mrb[0].mxu0
      %v902 = vadd.f32 0.0, %v901
      %v903 = vpop.f32.mrb[0].mxu0
      %904 = vmatprep.mubr.bf16.mxu0 0
      %905 = vmatmul.mubr.bf16.gmra.mrb[0].mxu0 %v687
      %v906 = vpop.f32.mrb[0].mxu0
      %v907 = vadd.f32 0.0, %v906
      %v908 = vpop.f32.mrb[0].mxu0
      %v909 = vpop.f32.mrb[0].mxu0
      %v910 = vadd.f32 0.0, %v909
      %v911 = vpop.f32.mrb[0].mxu0
      %912 = vdwg.mxu0
      %v945 = vunpack.c.l.b16 %v172
      %v946 = vunpack.c.l.b16 %v173
      %v947 = vunpack.c.l.b16 %v174
      %v948 = vunpack.c.l.b16 %v175
      %v949 = vunpack.c.l.b16 %v176
      %v950 = vunpack.c.l.b16 %v177
      %v951 = vunpack.c.l.b16 %v178
      %v952 = vunpack.c.l.b16 %v179
      %v953 = vunpack.c.l.b16 %v180
      %v954 = vunpack.c.l.b16 %v181
      %v955 = vunpack.c.l.b16 %v182
      %v956 = vunpack.c.l.b16 %v183
      %v957 = vunpack.c.l.b16 %v184
      %v958 = vunpack.c.l.b16 %v185
      %v959 = vunpack.c.l.b16 %v186
      %v960 = vunpack.c.l.b16 %v187
      %v961 = vunpack.c.l.b16 %v188
      %v962 = vunpack.c.l.b16 %v189
      %v963 = vunpack.c.l.b16 %v190
      %v964 = vunpack.c.l.b16 %v191
      %v965 = vunpack.c.l.b16 %v192
      %v966 = vunpack.c.l.b16 %v193
      %v967 = vunpack.c.l.b16 %v194
      %v968 = vunpack.c.l.b16 %v195
      %v969 = vunpack.c.l.b16 %v196
      %v970 = vunpack.c.l.b16 %v197
      %v971 = vunpack.c.l.b16 %v198
      %v972 = vunpack.c.l.b16 %v199
      %v973 = vunpack.c.l.b16 %v200
      %v974 = vunpack.c.l.b16 %v201
      %v975 = vunpack.c.l.b16 %v202
      %v976 = vunpack.c.l.b16 %v203
      %v977 = vpack.c.b16 %v946, %v945
      %v978 = vpack.c.b16 %v948, %v947
      %v979 = vpack.c.b16 %v950, %v949
      %v980 = vpack.c.b16 %v952, %v951
      %v981 = vpack.c.b16 %v954, %v953
      %v982 = vpack.c.b16 %v956, %v955
      %v983 = vpack.c.b16 %v958, %v957
      %v984 = vpack.c.b16 %v960, %v959
      %v985 = vpack.c.b16 %v962, %v961
      %v986 = vpack.c.b16 %v964, %v963
      %v987 = vpack.c.b16 %v966, %v965
      %v988 = vpack.c.b16 %v968, %v967
      %v989 = vpack.c.b16 %v970, %v969
      %v990 = vpack.c.b16 %v972, %v971
      %v991 = vpack.c.b16 %v974, %v973
      %v992 = vpack.c.b16 %v976, %v975
      %v1025 = vunpack.c.l.b16 %v204
      %v1026 = vunpack.c.l.b16 %v205
      %v1027 = vunpack.c.l.b16 %v206
      %v1028 = vunpack.c.l.b16 %v207
      %v1029 = vunpack.c.l.b16 %v208
      %v1030 = vunpack.c.l.b16 %v209
      %v1031 = vunpack.c.l.b16 %v210
      %v1032 = vunpack.c.l.b16 %v211
      %v1033 = vunpack.c.l.b16 %v212
      %v1034 = vunpack.c.l.b16 %v213
      %v1035 = vunpack.c.l.b16 %v214
      %v1036 = vunpack.c.l.b16 %v215
      %v1037 = vunpack.c.l.b16 %v216
      %v1038 = vunpack.c.l.b16 %v217
      %v1039 = vunpack.c.l.b16 %v218
      %v1040 = vunpack.c.l.b16 %v219
      %v1041 = vpack.c.b16 %v1026, %v1025
      %v1042 = vpack.c.b16 %v1028, %v1027
      %v1043 = vpack.c.b16 %v1030, %v1029
      %v1044 = vpack.c.b16 %v1032, %v1031
      %v1045 = vpack.c.b16 %v1034, %v1033
      %v1046 = vpack.c.b16 %v1036, %v1035
      %v1047 = vpack.c.b16 %v1038, %v1037
      %v1048 = vpack.c.b16 %v1040, %v1039
      %1057 = vmatprep.subr.bf16.mxu0 0
      %1058 = vmatpush1.bf16.msra.mxu0 %v1041
      %1059 = vmatprep.subr.bf16.mxu0 0
      %1060 = vmatpush1.bf16.msra.mxu0 %v1042
      %1061 = vmatprep.subr.bf16.mxu0 0
      %1062 = vmatpush1.bf16.msra.mxu0 %v1043
      %1063 = vmatprep.subr.bf16.mxu0 0
      %1064 = vmatpush1.bf16.msra.mxu0 %v1044
      %1065 = vmatprep.subr.bf16.mxu0 0
      %1066 = vmatpush1.bf16.msra.mxu0 %v1045
      %1067 = vmatprep.subr.bf16.mxu0 0
      %1068 = vmatpush1.bf16.msra.mxu0 %v1046
      %1069 = vmatprep.subr.bf16.mxu0 0
      %1070 = vmatpush1.bf16.msra.mxu0 %v1047
      %1071 = vmatprep.subr.bf16.mxu0 0
      %1072 = vmatpush1.bf16.msra.mxu0 %v1048
      %1073 = vmatprep.subr.bf16.mxu0 0
      %1074 = vmatpush1.bf16.msra.mxu0 0
      %1075 = vmatprep.subr.bf16.mxu0 0
      %1076 = vmatpush1.bf16.msra.mxu0 0
      %1077 = vmatprep.subr.bf16.mxu0 0
      %1078 = vmatpush1.bf16.msra.mxu0 0
      %1079 = vmatprep.subr.bf16.mxu0 0
      %1080 = vmatpush1.bf16.msra.mxu0 0
      %1081 = vmatprep.subr.bf16.mxu0 0
      %1082 = vmatpush1.bf16.msra.mxu0 0
      %1083 = vmatprep.subr.bf16.mxu0 0
      %1084 = vmatpush1.bf16.msra.mxu0 0
      %1085 = vmatprep.subr.bf16.mxu0 0
      %1086 = vmatpush1.bf16.msra.mxu0 0
      %1087 = vmatprep.subr.bf16.mxu0 0
      %1088 = vmatpush1.bf16.msra.mxu0 0
      %1089 = vmatprep.mubr.bf16.mxu0 0
      %1090 = vmatmul.mubr.bf16.gmra.mrb[0].mxu0 %v977
      %v1091 = vpop.f32.mrb[0].mxu0
      %v1092 = vadd.f32 %v787, %v1091
      %v1093 = vpop.f32.mrb[0].mxu0
      %v1094 = vpop.f32.mrb[0].mxu0
      %v1095 = vadd.f32 %v790, %v1094
      %v1096 = vpop.f32.mrb[0].mxu0
      %1097 = vmatprep.mubr.bf16.mxu0 0
      %1098 = vmatmul.mubr.bf16.gmra.mrb[0].mxu0 %v978
      %v1099 = vpop.f32.mrb[0].mxu0
      %v1100 = vadd.f32 %v795, %v1099
      %v1101 = vpop.f32.mrb[0].mxu0
      %v1102 = vpop.f32.mrb[0].mxu0
      %v1103 = vadd.f32 %v798, %v1102
      %v1104 = vpop.f32.mrb[0].mxu0
      %1105 = vmatprep.mubr.bf16.mxu0 0
      %1106 = vmatmul.mubr.bf16.gmra.mrb[0].mxu0 %v979
      %v1107 = vpop.f32.mrb[0].mxu0
      %v1108 = vadd.f32 %v803, %v1107
      %v1109 = vpop.f32.mrb[0].mxu0
      %v1110 = vpop.f32.mrb[0].mxu0
      %v1111 = vadd.f32 %v806, %v1110
      %v1112 = vpop.f32.mrb[0].mxu0
      %1113 = vmatprep.mubr.bf16.mxu0 0
      %1114 = vmatmul.mubr.bf16.gmra.mrb[0].mxu0 %v980
      %v1115 = vpop.f32.mrb[0].mxu0
      %v1116 = vadd.f32 %v811, %v1115
      %v1117 = vpop.f32.mrb[0].mxu0
      %v1118 = vpop.f32.mrb[0].mxu0
      %v1119 = vadd.f32 %v814, %v1118
      %v1120 = vpop.f32.mrb[0].mxu0
      %1121 = vmatprep.mubr.bf16.mxu0 0
      %1122 = vmatmul.mubr.bf16.gmra.mrb[0].mxu0 %v981
      %v1123 = vpop.f32.mrb[0].mxu0
      %v1124 = vadd.f32 %v819, %v1123
      %v1125 = vpop.f32.mrb[0].mxu0
      %v1126 = vpop.f32.mrb[0].mxu0
      %v1127 = vadd.f32 %v822, %v1126
      %v1128 = vpop.f32.mrb[0].mxu0
      %1129 = vmatprep.mubr.bf16.mxu0 0
      %1130 = vmatmul.mubr.bf16.gmra.mrb[0].mxu0 %v982
      %v1131 = vpop.f32.mrb[0].mxu0
      %v1132 = vadd.f32 %v827, %v1131
      %v1133 = vpop.f32.mrb[0].mxu0
      %v1134 = vpop.f32.mrb[0].mxu0
      %v1135 = vadd.f32 %v830, %v1134
      %v1136 = vpop.f32.mrb[0].mxu0
      %1137 = vmatprep.mubr.bf16.mxu0 0
      %1138 = vmatmul.mubr.bf16.gmra.mrb[0].mxu0 %v983
      %v1139 = vpop.f32.mrb[0].mxu0
      %v1140 = vadd.f32 %v835, %v1139
      %v1141 = vpop.f32.mrb[0].mxu0
      %v1142 = vpop.f32.mrb[0].mxu0
      %v1143 = vadd.f32 %v838, %v1142
      %v1144 = vpop.f32.mrb[0].mxu0
      %1145 = vmatprep.mubr.bf16.mxu0 0
      %1146 = vmatmul.mubr.bf16.gmra.mrb[0].mxu0 %v984
      %v1147 = vpop.f32.mrb[0].mxu0
      %v1148 = vadd.f32 %v843, %v1147
      %v1149 = vpop.f32.mrb[0].mxu0
      %v1150 = vpop.f32.mrb[0].mxu0
      %v1151 = vadd.f32 %v846, %v1150
      %v1152 = vpop.f32.mrb[0].mxu0
      %1153 = vmatprep.mubr.bf16.mxu0 0
      %1154 = vmatmul.mubr.bf16.gmra.mrb[0].mxu0 %v985
      %v1155 = vpop.f32.mrb[0].mxu0
      %v1156 = vadd.f32 %v851, %v1155
      %v1157 = vpop.f32.mrb[0].mxu0
      %v1158 = vpop.f32.mrb[0].mxu0
      %v1159 = vadd.f32 %v854, %v1158
      %v1160 = vpop.f32.mrb[0].mxu0
      %1161 = vmatprep.mubr.bf16.mxu0 0
      %1162 = vmatmul.mubr.bf16.gmra.mrb[0].mxu0 %v986
      %v1163 = vpop.f32.mrb[0].mxu0
      %v1164 = vadd.f32 %v859, %v1163
      %v1165 = vpop.f32.mrb[0].mxu0
      %v1166 = vpop.f32.mrb[0].mxu0
      %v1167 = vadd.f32 %v862, %v1166
      %v1168 = vpop.f32.mrb[0].mxu0
      %1169 = vmatprep.mubr.bf16.mxu0 0
      %1170 = vmatmul.mubr.bf16.gmra.mrb[0].mxu0 %v987
      %v1171 = vpop.f32.mrb[0].mxu0
      %v1172 = vadd.f32 %v867, %v1171
      %v1173 = vpop.f32.mrb[0].mxu0
      %v1174 = vpop.f32.mrb[0].mxu0
      %v1175 = vadd.f32 %v870, %v1174
      %v1176 = vpop.f32.mrb[0].mxu0
      %1177 = vmatprep.mubr.bf16.mxu0 0
      %1178 = vmatmul.mubr.bf16.gmra.mrb[0].mxu0 %v988
      %v1179 = vpop.f32.mrb[0].mxu0
      %v1180 = vadd.f32 %v875, %v1179
      %v1181 = vpop.f32.mrb[0].mxu0
      %v1182 = vpop.f32.mrb[0].mxu0
      %v1183 = vadd.f32 %v878, %v1182
      %v1184 = vpop.f32.mrb[0].mxu0
      %1185 = vmatprep.mubr.bf16.mxu0 0
      %1186 = vmatmul.mubr.bf16.gmra.mrb[0].mxu0 %v989
      %v1187 = vpop.f32.mrb[0].mxu0
      %v1188 = vadd.f32 %v883, %v1187
      %v1189 = vpop.f32.mrb[0].mxu0
      %v1190 = vpop.f32.mrb[0].mxu0
      %v1191 = vadd.f32 %v886, %v1190
      %v1192 = vpop.f32.mrb[0].mxu0
      %1193 = vmatprep.mubr.bf16.mxu0 0
      %1194 = vmatmul.mubr.bf16.gmra.mrb[0].mxu0 %v990
      %v1195 = vpop.f32.mrb[0].mxu0
      %v1196 = vadd.f32 %v891, %v1195
      %v1197 = vpop.f32.mrb[0].mxu0
      %v1198 = vpop.f32.mrb[0].mxu0
      %v1199 = vadd.f32 %v894, %v1198
      %v1200 = vpop.f32.mrb[0].mxu0
      %1201 = vmatprep.mubr.bf16.mxu0 0
      %1202 = vmatmul.mubr.bf16.gmra.mrb[0].mxu0 %v991
      %v1203 = vpop.f32.mrb[0].mxu0
      %v1204 = vadd.f32 %v899, %v1203
      %v1205 = vpop.f32.mrb[0].mxu0
      %v1206 = vpop.f32.mrb[0].mxu0
      %v1207 = vadd.f32 %v902, %v1206
      %v1208 = vpop.f32.mrb[0].mxu0
      %1209 = vmatprep.mubr.bf16.mxu0 0
      %1210 = vmatmul.mubr.bf16.gmra.mrb[0].mxu0 %v992
      %v1211 = vpop.f32.mrb[0].mxu0
      %v1212 = vadd.f32 %v907, %v1211
      %v1213 = vpop.f32.mrb[0].mxu0
      %v1214 = vpop.f32.mrb[0].mxu0
      %v1215 = vadd.f32 %v910, %v1214
      %v1216 = vpop.f32.mrb[0].mxu0
      %1217 = vdwg.mxu0
      %v1218 = vld [vmem:[%s165] sm:$0xe]
      %v1219 = vld [vmem:[%s165 + $0xc] sm:$0xe]
      %v1220 = vld [vmem:[%s165 + $0x18] sm:$0xe]
      %v1221 = vld [vmem:[%s165 + $0x24] sm:$0xe]
      %v1222 = vld [vmem:[%s165 + $0x30] sm:$0xe]
      %v1223 = vld [vmem:[%s165 + $0x3c] sm:$0xe]
      %v1224 = vld [vmem:[%s165 + $0x48] sm:$0xe]
      %v1225 = vld [vmem:[%s165 + $0x54] sm:$0xe]
      %v1226 = vld [vmem:[%s165 + $0x60] sm:$0xe]
      %v1227 = vld [vmem:[%s165 + $0x6c] sm:$0xe]
      %v1228 = vld [vmem:[%s165 + $0x78] sm:$0xe]
      %v1229 = vld [vmem:[%s165 + $0x84] sm:$0xe]
      %v1230 = vld [vmem:[%s165 + $0x90] sm:$0xe]
      %v1231 = vld [vmem:[%s165 + $0x9c] sm:$0xe]
      %v1232 = vld [vmem:[%s165 + $0xa8] sm:$0xe]
      %v1233 = vld [vmem:[%s165 + $0xb4] sm:$0xe]
      %vm1266 = vcmask 1042432
      %vm1267 = vcmask 1046532
      %vm1268 = vmor %vm1266, %vm1267
      %v1269 = vrot.slane %v1218, 5
      %v1270 = vrot.slane %v1269, 4
      %v1271 = vrot.slane %v173, 5
      %v1272 = vsel %vm1268, %v1270, %v1271
      %v1273 = vrot.slane %v1271, 4
      %v1274 = vrot.slane %v220, 5
      %v1275 = vsel %vm1268, %v1273, %v1274
      %v1276 = vrot.slane %v1219, 5
      %v1277 = vrot.slane %v1276, 4
      %v1278 = vrot.slane %v175, 5
      %v1279 = vsel %vm1268, %v1277, %v1278
      %v1280 = vrot.slane %v1278, 4
      %v1281 = vrot.slane %v221, 5
      %v1282 = vsel %vm1268, %v1280, %v1281
      %v1283 = vrot.slane %v1220, 5
      %v1284 = vrot.slane %v1283, 4
      %v1285 = vrot.slane %v177, 5
      %v1286 = vsel %vm1268, %v1284, %v1285
      %v1287 = vrot.slane %v1285, 4
      %v1288 = vrot.slane %v222, 5
      %v1289 = vsel %vm1268, %v1287, %v1288
      %v1290 = vrot.slane %v1221, 5
      %v1291 = vrot.slane %v1290, 4
      %v1292 = vrot.slane %v179, 5
      %v1293 = vsel %vm1268, %v1291, %v1292
      %v1294 = vrot.slane %v1292, 4
      %v1295 = vrot.slane %v223, 5
      %v1296 = vsel %vm1268, %v1294, %v1295
      %v1297 = vrot.slane %v1222, 5
      %v1298 = vrot.slane %v1297, 4
      %v1299 = vrot.slane %v181, 5
      %v1300 = vsel %vm1268, %v1298, %v1299
      %v1301 = vrot.slane %v1299, 4
      %v1302 = vrot.slane %v224, 5
      %v1303 = vsel %vm1268, %v1301, %v1302
      %v1304 = vrot.slane %v1223, 5
      %v1305 = vrot.slane %v1304, 4
      %v1306 = vrot.slane %v183, 5
      %v1307 = vsel %vm1268, %v1305, %v1306
      %v1308 = vrot.slane %v1306, 4
      %v1309 = vrot.slane %v225, 5
      %v1310 = vsel %vm1268, %v1308, %v1309
      %v1311 = vrot.slane %v1224, 5
      %v1312 = vrot.slane %v1311, 4
      %v1313 = vrot.slane %v185, 5
      %v1314 = vsel %vm1268, %v1312, %v1313
      %v1315 = vrot.slane %v1313, 4
      %v1316 = vrot.slane %v226, 5
      %v1317 = vsel %vm1268, %v1315, %v1316
      %v1318 = vrot.slane %v1225, 5
      %v1319 = vrot.slane %v1318, 4
      %v1320 = vrot.slane %v187, 5
      %v1321 = vsel %vm1268, %v1319, %v1320
      %v1322 = vrot.slane %v1320, 4
      %v1323 = vrot.slane %v227, 5
      %v1324 = vsel %vm1268, %v1322, %v1323
      %v1325 = vrot.slane %v1226, 5
      %v1326 = vrot.slane %v1325, 4
      %v1327 = vrot.slane %v189, 5
      %v1328 = vsel %vm1268, %v1326, %v1327
      %v1329 = vrot.slane %v1327, 4
      %v1330 = vrot.slane %v228, 5
      %v1331 = vsel %vm1268, %v1329, %v1330
      %v1332 = vrot.slane %v1227, 5
      %v1333 = vrot.slane %v1332, 4
      %v1334 = vrot.slane %v191, 5
      %v1335 = vsel %vm1268, %v1333, %v1334
      %v1336 = vrot.slane %v1334, 4
      %v1337 = vrot.slane %v229, 5
      %v1338 = vsel %vm1268, %v1336, %v1337
      %v1339 = vrot.slane %v1228, 5
      %v1340 = vrot.slane %v1339, 4
      %v1341 = vrot.slane %v193, 5
      %v1342 = vsel %vm1268, %v1340, %v1341
      %v1343 = vrot.slane %v1341, 4
      %v1344 = vrot.slane %v230, 5
      %v1345 = vsel %vm1268, %v1343, %v1344
      %v1346 = vrot.slane %v1229, 5
      %v1347 = vrot.slane %v1346, 4
      %v1348 = vrot.slane %v195, 5
      %v1349 = vsel %vm1268, %v1347, %v1348
      %v1350 = vrot.slane %v1348, 4
      %v1351 = vrot.slane %v231, 5
      %v1352 = vsel %vm1268, %v1350, %v1351
      %v1353 = vrot.slane %v1230, 5
      %v1354 = vrot.slane %v1353, 4
      %v1355 = vrot.slane %v197, 5
      %v1356 = vsel %vm1268, %v1354, %v1355
      %v1357 = vrot.slane %v1355, 4
      %v1358 = vrot.slane %v232, 5
      %v1359 = vsel %vm1268, %v1357, %v1358
      %v1360 = vrot.slane %v1231, 5
      %v1361 = vrot.slane %v1360, 4
      %v1362 = vrot.slane %v199, 5
      %v1363 = vsel %vm1268, %v1361, %v1362
      %v1364 = vrot.slane %v1362, 4
      %v1365 = vrot.slane %v233, 5
      %v1366 = vsel %vm1268, %v1364, %v1365
      %v1367 = vrot.slane %v1232, 5
      %v1368 = vrot.slane %v1367, 4
      %v1369 = vrot.slane %v201, 5
      %v1370 = vsel %vm1268, %v1368, %v1369
      %v1371 = vrot.slane %v1369, 4
      %v1372 = vrot.slane %v234, 5
      %v1373 = vsel %vm1268, %v1371, %v1372
      %v1374 = vrot.slane %v1233, 5
      %v1375 = vrot.slane %v1374, 4
      %v1376 = vrot.slane %v203, 5
      %v1377 = vsel %vm1268, %v1375, %v1376
      %v1378 = vrot.slane %v1376, 4
      %v1379 = vrot.slane %v235, 5
      %v1380 = vsel %vm1268, %v1378, %v1379
      %s1381 = scalar_lea.vmem %s1, 128
      %v1382 = vld [vmem:[%s1381] sm:$0xf]
      %v1383 = vld [vmem:[%s1381 + $0x4] sm:$0xf]
      %v1384 = vld [vmem:[%s1381 + $0x8] sm:$0xf]
      %v1385 = vld [vmem:[%s1381 + $0xc] sm:$0xf]
      %v1386 = vld [vmem:[%s1381 + $0x10] sm:$0xf]
      %v1387 = vld [vmem:[%s1381 + $0x14] sm:$0xf]
      %v1388 = vld [vmem:[%s1381 + $0x18] sm:$0xf]
      %v1389 = vld [vmem:[%s1381 + $0x1c] sm:$0xf]
      %v1390 = vld [vmem:[%s1381 + $0x20] sm:$0xf]
      %v1391 = vld [vmem:[%s1381 + $0x24] sm:$0xf]
      %v1392 = vld [vmem:[%s1381 + $0x28] sm:$0xf]
      %v1393 = vld [vmem:[%s1381 + $0x2c] sm:$0xf]
      %v1394 = vld [vmem:[%s1381 + $0x30] sm:$0xf]
      %v1395 = vld [vmem:[%s1381 + $0x34] sm:$0xf]
      %v1396 = vld [vmem:[%s1381 + $0x38] sm:$0xf]
      %v1397 = vld [vmem:[%s1381 + $0x3c] sm:$0xf]
      %v1398 = vunpack.c.l.b16 %v1272
      %v1399 = vunpack.c.l.b16 %v1275
      %v1400 = vunpack.c.l.b16 %v1279
      %v1401 = vunpack.c.l.b16 %v1282
      %v1402 = vunpack.c.l.b16 %v1286
      %v1403 = vunpack.c.l.b16 %v1289
      %v1404 = vunpack.c.l.b16 %v1293
      %v1405 = vunpack.c.l.b16 %v1296
      %v1406 = vunpack.c.l.b16 %v1300
      %v1407 = vunpack.c.l.b16 %v1303
      %v1408 = vunpack.c.l.b16 %v1307
      %v1409 = vunpack.c.l.b16 %v1310
      %v1410 = vunpack.c.l.b16 %v1314
      %v1411 = vunpack.c.l.b16 %v1317
      %v1412 = vunpack.c.l.b16 %v1321
      %v1413 = vunpack.c.l.b16 %v1324
      %v1414 = vunpack.c.l.b16 %v1328
      %v1415 = vunpack.c.l.b16 %v1331
      %v1416 = vunpack.c.l.b16 %v1335
      %v1417 = vunpack.c.l.b16 %v1338
      %v1418 = vunpack.c.l.b16 %v1342
      %v1419 = vunpack.c.l.b16 %v1345
      %v1420 = vunpack.c.l.b16 %v1349
      %v1421 = vunpack.c.l.b16 %v1352
      %v1422 = vunpack.c.l.b16 %v1356
      %v1423 = vunpack.c.l.b16 %v1359
      %v1424 = vunpack.c.l.b16 %v1363
      %v1425 = vunpack.c.l.b16 %v1366
      %v1426 = vunpack.c.l.b16 %v1370
      %v1427 = vunpack.c.l.b16 %v1373
      %v1428 = vunpack.c.l.b16 %v1377
      %v1429 = vunpack.c.l.b16 %v1380
      %v1430 = vpack.c.b16 %v1399, %v1398
      %v1431 = vpack.c.b16 %v1401, %v1400
      %v1432 = vpack.c.b16 %v1403, %v1402
      %v1433 = vpack.c.b16 %v1405, %v1404
      %v1434 = vpack.c.b16 %v1407, %v1406
      %v1435 = vpack.c.b16 %v1409, %v1408
      %v1436 = vpack.c.b16 %v1411, %v1410
      %v1437 = vpack.c.b16 %v1413, %v1412
      %v1438 = vpack.c.b16 %v1415, %v1414
      %v1439 = vpack.c.b16 %v1417, %v1416
      %v1440 = vpack.c.b16 %v1419, %v1418
      %v1441 = vpack.c.b16 %v1421, %v1420
      %v1442 = vpack.c.b16 %v1423, %v1422
      %v1443 = vpack.c.b16 %v1425, %v1424
      %v1444 = vpack.c.b16 %v1427, %v1426
      %v1445 = vpack.c.b16 %v1429, %v1428
      %v1478 = vunpack.c.l.b16 %v1382
      %v1479 = vunpack.c.l.b16 %v1383
      %v1480 = vunpack.c.l.b16 %v1384
      %v1481 = vunpack.c.l.b16 %v1385
      %v1482 = vunpack.c.l.b16 %v1386
      %v1483 = vunpack.c.l.b16 %v1387
      %v1484 = vunpack.c.l.b16 %v1388
      %v1485 = vunpack.c.l.b16 %v1389
      %v1486 = vunpack.c.l.b16 %v1390
      %v1487 = vunpack.c.l.b16 %v1391
      %v1488 = vunpack.c.l.b16 %v1392
      %v1489 = vunpack.c.l.b16 %v1393
      %v1490 = vunpack.c.l.b16 %v1394
      %v1491 = vunpack.c.l.b16 %v1395
      %v1492 = vunpack.c.l.b16 %v1396
      %v1493 = vunpack.c.l.b16 %v1397
      %v1494 = vpack.c.b16 %v1479, %v1478
      %v1495 = vpack.c.b16 %v1481, %v1480
      %v1496 = vpack.c.b16 %v1483, %v1482
      %v1497 = vpack.c.b16 %v1485, %v1484
      %v1498 = vpack.c.b16 %v1487, %v1486
      %v1499 = vpack.c.b16 %v1489, %v1488
      %v1500 = vpack.c.b16 %v1491, %v1490
      %v1501 = vpack.c.b16 %v1493, %v1492
      %1510 = vmatprep.subr.bf16.mxu0 0
      %1511 = vmatpush1.bf16.msra.mxu0 %v1494
      %1512 = vmatprep.subr.bf16.mxu0 0
      %1513 = vmatpush1.bf16.msra.mxu0 %v1495
      %1514 = vmatprep.subr.bf16.mxu0 0
      %1515 = vmatpush1.bf16.msra.mxu0 %v1496
      %1516 = vmatprep.subr.bf16.mxu0 0
      %1517 = vmatpush1.bf16.msra.mxu0 %v1497
      %1518 = vmatprep.subr.bf16.mxu0 0
      %1519 = vmatpush1.bf16.msra.mxu0 %v1498
      %1520 = vmatprep.subr.bf16.mxu0 0
      %1521 = vmatpush1.bf16.msra.mxu0 %v1499
      %1522 = vmatprep.subr.bf16.mxu0 0
      %1523 = vmatpush1.bf16.msra.mxu0 %v1500
      %1524 = vmatprep.subr.bf16.mxu0 0
      %1525 = vmatpush1.bf16.msra.mxu0 %v1501
      %1526 = vmatprep.subr.bf16.mxu0 0
      %1527 = vmatpush1.bf16.msra.mxu0 0
      %1528 = vmatprep.subr.bf16.mxu0 0
      %1529 = vmatpush1.bf16.msra.mxu0 0
      %1530 = vmatprep.subr.bf16.mxu0 0
      %1531 = vmatpush1.bf16.msra.mxu0 0
      %1532 = vmatprep.subr.bf16.mxu0 0
      %1533 = vmatpush1.bf16.msra.mxu0 0
      %1534 = vmatprep.subr.bf16.mxu0 0
      %1535 = vmatpush1.bf16.msra.mxu0 0
      %1536 = vmatprep.subr.bf16.mxu0 0
      %1537 = vmatpush1.bf16.msra.mxu0 0
      %1538 = vmatprep.subr.bf16.mxu0 0
      %1539 = vmatpush1.bf16.msra.mxu0 0
      %1540 = vmatprep.subr.bf16.mxu0 0
      %1541 = vmatpush1.bf16.msra.mxu0 0
      %1542 = vmatprep.mubr.bf16.mxu0 0
      %1543 = vmatmul.mubr.bf16.gmra.mrb[0].mxu0 %v1430
      %v1544 = vpop.f32.mrb[0].mxu0
      %v1545 = vadd.f32 0.0, %v1544
      %v1546 = vpop.f32.mrb[0].mxu0
      %v1547 = vpop.f32.mrb[0].mxu0
      %v1548 = vadd.f32 0.0, %v1547
      %v1549 = vpop.f32.mrb[0].mxu0
      %1550 = vmatprep.mubr.bf16.mxu0 0
      %1551 = vmatmul.mubr.bf16.gmra.mrb[0].mxu0 %v1431
      %v1552 = vpop.f32.mrb[0].mxu0
      %v1553 = vadd.f32 0.0, %v1552
      %v1554 = vpop.f32.mrb[0].mxu0
      %v1555 = vpop.f32.mrb[0].mxu0
      %v1556 = vadd.f32 0.0, %v1555
      %v1557 = vpop.f32.mrb[0].mxu0
      %1558 = vmatprep.mubr.bf16.mxu0 0
      %1559 = vmatmul.mubr.bf16.gmra.mrb[0].mxu0 %v1432
      %v1560 = vpop.f32.mrb[0].mxu0
      %v1561 = vadd.f32 0.0, %v1560
      %v1562 = vpop.f32.mrb[0].mxu0
      %v1563 = vpop.f32.mrb[0].mxu0
      %v1564 = vadd.f32 0.0, %v1563
      %v1565 = vpop.f32.mrb[0].mxu0
      %1566 = vmatprep.mubr.bf16.mxu0 0
      %1567 = vmatmul.mubr.bf16.gmra.mrb[0].mxu0 %v1433
      %v1568 = vpop.f32.mrb[0].mxu0
      %v1569 = vadd.f32 0.0, %v1568
      %v1570 = vpop.f32.mrb[0].mxu0
      %v1571 = vpop.f32.mrb[0].mxu0
      %v1572 = vadd.f32 0.0, %v1571
      %v1573 = vpop.f32.mrb[0].mxu0
      %1574 = vmatprep.mubr.bf16.mxu0 0
      %1575 = vmatmul.mubr.bf16.gmra.mrb[0].mxu0 %v1434
      %v1576 = vpop.f32.mrb[0].mxu0
      %v1577 = vadd.f32 0.0, %v1576
      %v1578 = vpop.f32.mrb[0].mxu0
      %v1579 = vpop.f32.mrb[0].mxu0
      %v1580 = vadd.f32 0.0, %v1579
      %v1581 = vpop.f32.mrb[0].mxu0
      %1582 = vmatprep.mubr.bf16.mxu0 0
      %1583 = vmatmul.mubr.bf16.gmra.mrb[0].mxu0 %v1435
      %v1584 = vpop.f32.mrb[0].mxu0
      %v1585 = vadd.f32 0.0, %v1584
      %v1586 = vpop.f32.mrb[0].mxu0
      %v1587 = vpop.f32.mrb[0].mxu0
      %v1588 = vadd.f32 0.0, %v1587
      %v1589 = vpop.f32.mrb[0].mxu0
      %1590 = vmatprep.mubr.bf16.mxu0 0
      %1591 = vmatmul.mubr.bf16.gmra.mrb[0].mxu0 %v1436
      %v1592 = vpop.f32.mrb[0].mxu0
      %v1593 = vadd.f32 0.0, %v1592
      %v1594 = vpop.f32.mrb[0].mxu0
      %v1595 = vpop.f32.mrb[0].mxu0
      %v1596 = vadd.f32 0.0, %v1595
      %v1597 = vpop.f32.mrb[0].mxu0
      %1598 = vmatprep.mubr.bf16.mxu0 0
      %1599 = vmatmul.mubr.bf16.gmra.mrb[0].mxu0 %v1437
      %v1600 = vpop.f32.mrb[0].mxu0
      %v1601 = vadd.f32 0.0, %v1600
      %v1602 = vpop.f32.mrb[0].mxu0
      %v1603 = vpop.f32.mrb[0].mxu0
      %v1604 = vadd.f32 0.0, %v1603
      %v1605 = vpop.f32.mrb[0].mxu0
      %1606 = vmatprep.mubr.bf16.mxu0 0
      %1607 = vmatmul.mubr.bf16.gmra.mrb[0].mxu0 %v1438
      %v1608 = vpop.f32.mrb[0].mxu0
      %v1609 = vadd.f32 0.0, %v1608
      %v1610 = vpop.f32.mrb[0].mxu0
      %v1611 = vpop.f32.mrb[0].mxu0
      %v1612 = vadd.f32 0.0, %v1611
      %v1613 = vpop.f32.mrb[0].mxu0
      %1614 = vmatprep.mubr.bf16.mxu0 0
      %1615 = vmatmul.mubr.bf16.gmra.mrb[0].mxu0 %v1439
      %v1616 = vpop.f32.mrb[0].mxu0
      %v1617 = vadd.f32 0.0, %v1616
      %v1618 = vpop.f32.mrb[0].mxu0
      %v1619 = vpop.f32.mrb[0].mxu0
      %v1620 = vadd.f32 0.0, %v1619
      %v1621 = vpop.f32.mrb[0].mxu0
      %1622 = vmatprep.mubr.bf16.mxu0 0
      %1623 = vmatmul.mubr.bf16.gmra.mrb[0].mxu0 %v1440
      %v1624 = vpop.f32.mrb[0].mxu0
      %v1625 = vadd.f32 0.0, %v1624
      %v1626 = vpop.f32.mrb[0].mxu0
      %v1627 = vpop.f32.mrb[0].mxu0
      %v1628 = vadd.f32 0.0, %v1627
      %v1629 = vpop.f32.mrb[0].mxu0
      %1630 = vmatprep.mubr.bf16.mxu0 0
      %1631 = vmatmul.mubr.bf16.gmra.mrb[0].mxu0 %v1441
      %v1632 = vpop.f32.mrb[0].mxu0
      %v1633 = vadd.f32 0.0, %v1632
      %v1634 = vpop.f32.mrb[0].mxu0
      %v1635 = vpop.f32.mrb[0].mxu0
      %v1636 = vadd.f32 0.0, %v1635
      %v1637 = vpop.f32.mrb[0].mxu0
      %1638 = vmatprep.mubr.bf16.mxu0 0
      %1639 = vmatmul.mubr.bf16.gmra.mrb[0].mxu0 %v1442
      %v1640 = vpop.f32.mrb[0].mxu0
      %v1641 = vadd.f32 0.0, %v1640
      %v1642 = vpop.f32.mrb[0].mxu0
      %v1643 = vpop.f32.mrb[0].mxu0
      %v1644 = vadd.f32 0.0, %v1643
      %v1645 = vpop.f32.mrb[0].mxu0
      %1646 = vmatprep.mubr.bf16.mxu0 0
      %1647 = vmatmul.mubr.bf16.gmra.mrb[0].mxu0 %v1443
      %v1648 = vpop.f32.mrb[0].mxu0
      %v1649 = vadd.f32 0.0, %v1648
      %v1650 = vpop.f32.mrb[0].mxu0
      %v1651 = vpop.f32.mrb[0].mxu0
      %v1652 = vadd.f32 0.0, %v1651
      %v1653 = vpop.f32.mrb[0].mxu0
      %1654 = vmatprep.mubr.bf16.mxu0 0
      %1655 = vmatmul.mubr.bf16.gmra.mrb[0].mxu0 %v1444
      %v1656 = vpop.f32.mrb[0].mxu0
      %v1657 = vadd.f32 0.0, %v1656
      %v1658 = vpop.f32.mrb[0].mxu0
      %v1659 = vpop.f32.mrb[0].mxu0
      %v1660 = vadd.f32 0.0, %v1659
      %v1661 = vpop.f32.mrb[0].mxu0
      %1662 = vmatprep.mubr.bf16.mxu0 0
      %1663 = vmatmul.mubr.bf16.gmra.mrb[0].mxu0 %v1445
      %v1664 = vpop.f32.mrb[0].mxu0
      %v1665 = vadd.f32 0.0, %v1664
      %v1666 = vpop.f32.mrb[0].mxu0
      %v1667 = vpop.f32.mrb[0].mxu0
      %v1668 = vadd.f32 0.0, %v1667
      %v1669 = vpop.f32.mrb[0].mxu0
      %1670 = vdwg.mxu0
      %v1671 = vadd.f32 %v1092, %v1545
      %v1672 = vadd.f32 %v1095, %v1548
      %v1673 = vadd.f32 %v1100, %v1553
      %v1674 = vadd.f32 %v1103, %v1556
      %v1675 = vadd.f32 %v1108, %v1561
      %v1676 = vadd.f32 %v1111, %v1564
      %v1677 = vadd.f32 %v1116, %v1569
      %v1678 = vadd.f32 %v1119, %v1572
      %v1679 = vadd.f32 %v1124, %v1577
      %v1680 = vadd.f32 %v1127, %v1580
      %v1681 = vadd.f32 %v1132, %v1585
      %v1682 = vadd.f32 %v1135, %v1588
      %v1683 = vadd.f32 %v1140, %v1593
      %v1684 = vadd.f32 %v1143, %v1596
      %v1685 = vadd.f32 %v1148, %v1601
      %v1686 = vadd.f32 %v1151, %v1604
      %v1687 = vadd.f32 %v1156, %v1609
      %v1688 = vadd.f32 %v1159, %v1612
      %v1689 = vadd.f32 %v1164, %v1617
      %v1690 = vadd.f32 %v1167, %v1620
      %v1691 = vadd.f32 %v1172, %v1625
      %v1692 = vadd.f32 %v1175, %v1628
      %v1693 = vadd.f32 %v1180, %v1633
      %v1694 = vadd.f32 %v1183, %v1636
      %v1695 = vadd.f32 %v1188, %v1641
      %v1696 = vadd.f32 %v1191, %v1644
      %v1697 = vadd.f32 %v1196, %v1649
      %v1698 = vadd.f32 %v1199, %v1652
      %v1699 = vadd.f32 %v1204, %v1657
      %v1700 = vadd.f32 %v1207, %v1660
      %v1701 = vadd.f32 %v1212, %v1665
      %v1702 = vadd.f32 %v1215, %v1668
      %s1703 = scalar_lea.vmem %s165, 12
      %v1704 = vld [vmem:[%s1703] sm:$0xf]
      %v1705 = vld [vmem:[%s1703 + $0x4] sm:$0xf]
      %v1706 = vld [vmem:[%s1703 + $0xc] sm:$0xf]
      %v1707 = vld [vmem:[%s1703 + $0x10] sm:$0xf]
      %v1708 = vld [vmem:[%s1703 + $0x18] sm:$0xf]
      %v1709 = vld [vmem:[%s1703 + $0x1c] sm:$0xf]
      %v1710 = vld [vmem:[%s1703 + $0x24] sm:$0xf]
      %v1711 = vld [vmem:[%s1703 + $0x28] sm:$0xf]
      %v1712 = vld [vmem:[%s1703 + $0x30] sm:$0xf]
      %v1713 = vld [vmem:[%s1703 + $0x34] sm:$0xf]
      %v1714 = vld [vmem:[%s1703 + $0x3c] sm:$0xf]
      %v1715 = vld [vmem:[%s1703 + $0x40] sm:$0xf]
      %v1716 = vld [vmem:[%s1703 + $0x48] sm:$0xf]
      %v1717 = vld [vmem:[%s1703 + $0x4c] sm:$0xf]
      %v1718 = vld [vmem:[%s1703 + $0x54] sm:$0xf]
      %v1719 = vld [vmem:[%s1703 + $0x58] sm:$0xf]
      %v1720 = vld [vmem:[%s1703 + $0x60] sm:$0xf]
      %v1721 = vld [vmem:[%s1703 + $0x64] sm:$0xf]
      %v1722 = vld [vmem:[%s1703 + $0x6c] sm:$0xf]
      %v1723 = vld [vmem:[%s1703 + $0x70] sm:$0xf]
      %v1724 = vld [vmem:[%s1703 + $0x78] sm:$0xf]
      %v1725 = vld [vmem:[%s1703 + $0x7c] sm:$0xf]
      %v1726 = vld [vmem:[%s1703 + $0x84] sm:$0xf]
      %v1727 = vld [vmem:[%s1703 + $0x88] sm:$0xf]
      %v1728 = vld [vmem:[%s1703 + $0x90] sm:$0xf]
      %v1729 = vld [vmem:[%s1703 + $0x94] sm:$0xf]
      %v1730 = vld [vmem:[%s1703 + $0x9c] sm:$0xf]
      %v1731 = vld [vmem:[%s1703 + $0xa0] sm:$0xf]
      %v1732 = vld [vmem:[%s1703 + $0xa8] sm:$0xf]
      %v1733 = vld [vmem:[%s1703 + $0xac] sm:$0xf]
      %v1734 = vld [vmem:[%s1703 + $0xb4] sm:$0xf]
      %v1735 = vld [vmem:[%s1703 + $0xb8] sm:$0xf]
      %s1736 = scalar_lea.vmem %s1, 192
      %v1737 = vld [vmem:[%s1736] sm:$0xf]
      %v1738 = vld [vmem:[%s1736 + $0x4] sm:$0xf]
      %v1739 = vld [vmem:[%s1736 + $0x8] sm:$0xf]
      %v1740 = vld [vmem:[%s1736 + $0xc] sm:$0xf]
      %v1741 = vld [vmem:[%s1736 + $0x10] sm:$0xf]
      %v1742 = vld [vmem:[%s1736 + $0x14] sm:$0xf]
      %v1743 = vld [vmem:[%s1736 + $0x18] sm:$0xf]
      %v1744 = vld [vmem:[%s1736 + $0x1c] sm:$0xf]
      %v1745 = vld [vmem:[%s1736 + $0x20] sm:$0xf]
      %v1746 = vld [vmem:[%s1736 + $0x24] sm:$0xf]
      %v1747 = vld [vmem:[%s1736 + $0x28] sm:$0xf]
      %v1748 = vld [vmem:[%s1736 + $0x2c] sm:$0xf]
      %v1749 = vld [vmem:[%s1736 + $0x30] sm:$0xf]
      %v1750 = vld [vmem:[%s1736 + $0x34] sm:$0xf]
      %v1751 = vld [vmem:[%s1736 + $0x38] sm:$0xf]
      %v1752 = vld [vmem:[%s1736 + $0x3c] sm:$0xf]
      %v1785 = vunpack.c.l.b16 %v1704
      %v1786 = vunpack.c.l.b16 %v1705
      %v1787 = vunpack.c.l.b16 %v1706
      %v1788 = vunpack.c.l.b16 %v1707
      %v1789 = vunpack.c.l.b16 %v1708
      %v1790 = vunpack.c.l.b16 %v1709
      %v1791 = vunpack.c.l.b16 %v1710
      %v1792 = vunpack.c.l.b16 %v1711
      %v1793 = vunpack.c.l.b16 %v1712
      %v1794 = vunpack.c.l.b16 %v1713
      %v1795 = vunpack.c.l.b16 %v1714
      %v1796 = vunpack.c.l.b16 %v1715
      %v1797 = vunpack.c.l.b16 %v1716
      %v1798 = vunpack.c.l.b16 %v1717
      %v1799 = vunpack.c.l.b16 %v1718
      %v1800 = vunpack.c.l.b16 %v1719
      %v1801 = vunpack.c.l.b16 %v1720
      %v1802 = vunpack.c.l.b16 %v1721
      %v1803 = vunpack.c.l.b16 %v1722
      %v1804 = vunpack.c.l.b16 %v1723
      %v1805 = vunpack.c.l.b16 %v1724
      %v1806 = vunpack.c.l.b16 %v1725
      %v1807 = vunpack.c.l.b16 %v1726
      %v1808 = vunpack.c.l.b16 %v1727
      %v1809 = vunpack.c.l.b16 %v1728
      %v1810 = vunpack.c.l.b16 %v1729
      %v1811 = vunpack.c.l.b16 %v1730
      %v1812 = vunpack.c.l.b16 %v1731
      %v1813 = vunpack.c.l.b16 %v1732
      %v1814 = vunpack.c.l.b16 %v1733
      %v1815 = vunpack.c.l.b16 %v1734
      %v1816 = vunpack.c.l.b16 %v1735
      %v1817 = vpack.c.b16 %v1786, %v1785
      %v1818 = vpack.c.b16 %v1788, %v1787
      %v1819 = vpack.c.b16 %v1790, %v1789
      %v1820 = vpack.c.b16 %v1792, %v1791
      %v1821 = vpack.c.b16 %v1794, %v1793
      %v1822 = vpack.c.b16 %v1796, %v1795
      %v1823 = vpack.c.b16 %v1798, %v1797
      %v1824 = vpack.c.b16 %v1800, %v1799
      %v1825 = vpack.c.b16 %v1802, %v1801
      %v1826 = vpack.c.b16 %v1804, %v1803
      %v1827 = vpack.c.b16 %v1806, %v1805
      %v1828 = vpack.c.b16 %v1808, %v1807
      %v1829 = vpack.c.b16 %v1810, %v1809
      %v1830 = vpack.c.b16 %v1812, %v1811
      %v1831 = vpack.c.b16 %v1814, %v1813
      %v1832 = vpack.c.b16 %v1816, %v1815
      %v1865 = vunpack.c.l.b16 %v1737
      %v1866 = vunpack.c.l.b16 %v1738
      %v1867 = vunpack.c.l.b16 %v1739
      %v1868 = vunpack.c.l.b16 %v1740
      %v1869 = vunpack.c.l.b16 %v1741
      %v1870 = vunpack.c.l.b16 %v1742
      %v1871 = vunpack.c.l.b16 %v1743
      %v1872 = vunpack.c.l.b16 %v1744
      %v1873 = vunpack.c.l.b16 %v1745
      %v1874 = vunpack.c.l.b16 %v1746
      %v1875 = vunpack.c.l.b16 %v1747
      %v1876 = vunpack.c.l.b16 %v1748
      %v1877 = vunpack.c.l.b16 %v1749
      %v1878 = vunpack.c.l.b16 %v1750
      %v1879 = vunpack.c.l.b16 %v1751
      %v1880 = vunpack.c.l.b16 %v1752
      %v1881 = vpack.c.b16 %v1866, %v1865
      %v1882 = vpack.c.b16 %v1868, %v1867
      %v1883 = vpack.c.b16 %v1870, %v1869
      %v1884 = vpack.c.b16 %v1872, %v1871
      %v1885 = vpack.c.b16 %v1874, %v1873
      %v1886 = vpack.c.b16 %v1876, %v1875
      %v1887 = vpack.c.b16 %v1878, %v1877
      %v1888 = vpack.c.b16 %v1880, %v1879
      %1897 = vmatprep.subr.bf16.mxu0 0
      %1898 = vmatpush1.bf16.msra.mxu0 %v1881
      %1899 = vmatprep.subr.bf16.mxu0 0
      %1900 = vmatpush1.bf16.msra.mxu0 %v1882
      %1901 = vmatprep.subr.bf16.mxu0 0
      %1902 = vmatpush1.bf16.msra.mxu0 %v1883
      %1903 = vmatprep.subr.bf16.mxu0 0
      %1904 = vmatpush1.bf16.msra.mxu0 %v1884
      %1905 = vmatprep.subr.bf16.mxu0 0
      %1906 = vmatpush1.bf16.msra.mxu0 %v1885
      %1907 = vmatprep.subr.bf16.mxu0 0
      %1908 = vmatpush1.bf16.msra.mxu0 %v1886
      %1909 = vmatprep.subr.bf16.mxu0 0
      %1910 = vmatpush1.bf16.msra.mxu0 %v1887
      %1911 = vmatprep.subr.bf16.mxu0 0
      %1912 = vmatpush1.bf16.msra.mxu0 %v1888
      %1913 = vmatprep.subr.bf16.mxu0 0
      %1914 = vmatpush1.bf16.msra.mxu0 0
      %1915 = vmatprep.subr.bf16.mxu0 0
      %1916 = vmatpush1.bf16.msra.mxu0 0
      %1917 = vmatprep.subr.bf16.mxu0 0
      %1918 = vmatpush1.bf16.msra.mxu0 0
      %1919 = vmatprep.subr.bf16.mxu0 0
      %1920 = vmatpush1.bf16.msra.mxu0 0
      %1921 = vmatprep.subr.bf16.mxu0 0
      %1922 = vmatpush1.bf16.msra.mxu0 0
      %1923 = vmatprep.subr.bf16.mxu0 0
      %1924 = vmatpush1.bf16.msra.mxu0 0
      %1925 = vmatprep.subr.bf16.mxu0 0
      %1926 = vmatpush1.bf16.msra.mxu0 0
      %1927 = vmatprep.subr.bf16.mxu0 0
      %1928 = vmatpush1.bf16.msra.mxu0 0
      %1929 = vmatprep.mubr.bf16.mxu0 0
      %1930 = vmatmul.mubr.bf16.gmra.mrb[0].mxu0 %v1817
      %v1931 = vpop.f32.mrb[0].mxu0
      %v1932 = vadd.f32 0.0, %v1931
      %v1933 = vpop.f32.mrb[0].mxu0
      %v1934 = vpop.f32.mrb[0].mxu0
      %v1935 = vadd.f32 0.0, %v1934
      %v1936 = vpop.f32.mrb[0].mxu0
      %1937 = vmatprep.mubr.bf16.mxu0 0
      %1938 = vmatmul.mubr.bf16.gmra.mrb[0].mxu0 %v1818
      %v1939 = vpop.f32.mrb[0].mxu0
      %v1940 = vadd.f32 0.0, %v1939
      %v1941 = vpop.f32.mrb[0].mxu0
      %v1942 = vpop.f32.mrb[0].mxu0
      %v1943 = vadd.f32 0.0, %v1942
      %v1944 = vpop.f32.mrb[0].mxu0
      %1945 = vmatprep.mubr.bf16.mxu0 0
      %1946 = vmatmul.mubr.bf16.gmra.mrb[0].mxu0 %v1819
      %v1947 = vpop.f32.mrb[0].mxu0
      %v1948 = vadd.f32 0.0, %v1947
      %v1949 = vpop.f32.mrb[0].mxu0
      %v1950 = vpop.f32.mrb[0].mxu0
      %v1951 = vadd.f32 0.0, %v1950
      %v1952 = vpop.f32.mrb[0].mxu0
      %1953 = vmatprep.mubr.bf16.mxu0 0
      %1954 = vmatmul.mubr.bf16.gmra.mrb[0].mxu0 %v1820
      %v1955 = vpop.f32.mrb[0].mxu0
      %v1956 = vadd.f32 0.0, %v1955
      %v1957 = vpop.f32.mrb[0].mxu0
      %v1958 = vpop.f32.mrb[0].mxu0
      %v1959 = vadd.f32 0.0, %v1958
      %v1960 = vpop.f32.mrb[0].mxu0
      %1961 = vmatprep.mubr.bf16.mxu0 0
      %1962 = vmatmul.mubr.bf16.gmra.mrb[0].mxu0 %v1821
      %v1963 = vpop.f32.mrb[0].mxu0
      %v1964 = vadd.f32 0.0, %v1963
      %v1965 = vpop.f32.mrb[0].mxu0
      %v1966 = vpop.f32.mrb[0].mxu0
      %v1967 = vadd.f32 0.0, %v1966
      %v1968 = vpop.f32.mrb[0].mxu0
      %1969 = vmatprep.mubr.bf16.mxu0 0
      %1970 = vmatmul.mubr.bf16.gmra.mrb[0].mxu0 %v1822
      %v1971 = vpop.f32.mrb[0].mxu0
      %v1972 = vadd.f32 0.0, %v1971
      %v1973 = vpop.f32.mrb[0].mxu0
      %v1974 = vpop.f32.mrb[0].mxu0
      %v1975 = vadd.f32 0.0, %v1974
      %v1976 = vpop.f32.mrb[0].mxu0
      %1977 = vmatprep.mubr.bf16.mxu0 0
      %1978 = vmatmul.mubr.bf16.gmra.mrb[0].mxu0 %v1823
      %v1979 = vpop.f32.mrb[0].mxu0
      %v1980 = vadd.f32 0.0, %v1979
      %v1981 = vpop.f32.mrb[0].mxu0
      %v1982 = vpop.f32.mrb[0].mxu0
      %v1983 = vadd.f32 0.0, %v1982
      %v1984 = vpop.f32.mrb[0].mxu0
      %1985 = vmatprep.mubr.bf16.mxu0 0
      %1986 = vmatmul.mubr.bf16.gmra.mrb[0].mxu0 %v1824
      %v1987 = vpop.f32.mrb[0].mxu0
      %v1988 = vadd.f32 0.0, %v1987
      %v1989 = vpop.f32.mrb[0].mxu0
      %v1990 = vpop.f32.mrb[0].mxu0
      %v1991 = vadd.f32 0.0, %v1990
      %v1992 = vpop.f32.mrb[0].mxu0
      %1993 = vmatprep.mubr.bf16.mxu0 0
      %1994 = vmatmul.mubr.bf16.gmra.mrb[0].mxu0 %v1825
      %v1995 = vpop.f32.mrb[0].mxu0
      %v1996 = vadd.f32 0.0, %v1995
      %v1997 = vpop.f32.mrb[0].mxu0
      %v1998 = vpop.f32.mrb[0].mxu0
      %v1999 = vadd.f32 0.0, %v1998
      %v2000 = vpop.f32.mrb[0].mxu0
      %2001 = vmatprep.mubr.bf16.mxu0 0
      %2002 = vmatmul.mubr.bf16.gmra.mrb[0].mxu0 %v1826
      %v2003 = vpop.f32.mrb[0].mxu0
      %v2004 = vadd.f32 0.0, %v2003
      %v2005 = vpop.f32.mrb[0].mxu0
      %v2006 = vpop.f32.mrb[0].mxu0
      %v2007 = vadd.f32 0.0, %v2006
      %v2008 = vpop.f32.mrb[0].mxu0
      %2009 = vmatprep.mubr.bf16.mxu0 0
      %2010 = vmatmul.mubr.bf16.gmra.mrb[0].mxu0 %v1827
      %v2011 = vpop.f32.mrb[0].mxu0
      %v2012 = vadd.f32 0.0, %v2011
      %v2013 = vpop.f32.mrb[0].mxu0
      %v2014 = vpop.f32.mrb[0].mxu0
      %v2015 = vadd.f32 0.0, %v2014
      %v2016 = vpop.f32.mrb[0].mxu0
      %2017 = vmatprep.mubr.bf16.mxu0 0
      %2018 = vmatmul.mubr.bf16.gmra.mrb[0].mxu0 %v1828
      %v2019 = vpop.f32.mrb[0].mxu0
      %v2020 = vadd.f32 0.0, %v2019
      %v2021 = vpop.f32.mrb[0].mxu0
      %v2022 = vpop.f32.mrb[0].mxu0
      %v2023 = vadd.f32 0.0, %v2022
      %v2024 = vpop.f32.mrb[0].mxu0
      %2025 = vmatprep.mubr.bf16.mxu0 0
      %2026 = vmatmul.mubr.bf16.gmra.mrb[0].mxu0 %v1829
      %v2027 = vpop.f32.mrb[0].mxu0
      %v2028 = vadd.f32 0.0, %v2027
      %v2029 = vpop.f32.mrb[0].mxu0
      %v2030 = vpop.f32.mrb[0].mxu0
      %v2031 = vadd.f32 0.0, %v2030
      %v2032 = vpop.f32.mrb[0].mxu0
      %2033 = vmatprep.mubr.bf16.mxu0 0
      %2034 = vmatmul.mubr.bf16.gmra.mrb[0].mxu0 %v1830
      %v2035 = vpop.f32.mrb[0].mxu0
      %v2036 = vadd.f32 0.0, %v2035
      %v2037 = vpop.f32.mrb[0].mxu0
      %v2038 = vpop.f32.mrb[0].mxu0
      %v2039 = vadd.f32 0.0, %v2038
      %v2040 = vpop.f32.mrb[0].mxu0
      %2041 = vmatprep.mubr.bf16.mxu0 0
      %2042 = vmatmul.mubr.bf16.gmra.mrb[0].mxu0 %v1831
      %v2043 = vpop.f32.mrb[0].mxu0
      %v2044 = vadd.f32 0.0, %v2043
      %v2045 = vpop.f32.mrb[0].mxu0
      %v2046 = vpop.f32.mrb[0].mxu0
      %v2047 = vadd.f32 0.0, %v2046
      %v2048 = vpop.f32.mrb[0].mxu0
      %2049 = vmatprep.mubr.bf16.mxu0 0
      %2050 = vmatmul.mubr.bf16.gmra.mrb[0].mxu0 %v1832
      %v2051 = vpop.f32.mrb[0].mxu0
      %v2052 = vadd.f32 0.0, %v2051
      %v2053 = vpop.f32.mrb[0].mxu0
      %v2054 = vpop.f32.mrb[0].mxu0
      %v2055 = vadd.f32 0.0, %v2054
      %v2056 = vpop.f32.mrb[0].mxu0
      %2057 = vdwg.mxu0
      %v2058 = vadd.f32 %v1671, %v1932
      %v2059 = vadd.f32 %v1672, %v1935
      %v2060 = vadd.f32 %v1673, %v1940
      %v2061 = vadd.f32 %v1674, %v1943
      %v2062 = vadd.f32 %v1675, %v1948
      %v2063 = vadd.f32 %v1676, %v1951
      %v2064 = vadd.f32 %v1677, %v1956
      %v2065 = vadd.f32 %v1678, %v1959
      %v2066 = vadd.f32 %v1679, %v1964
      %v2067 = vadd.f32 %v1680, %v1967
      %v2068 = vadd.f32 %v1681, %v1972
      %v2069 = vadd.f32 %v1682, %v1975
      %v2070 = vadd.f32 %v1683, %v1980
      %v2071 = vadd.f32 %v1684, %v1983
      %v2072 = vadd.f32 %v1685, %v1988
      %v2073 = vadd.f32 %v1686, %v1991
      %v2074 = vadd.f32 %v1687, %v1996
      %v2075 = vadd.f32 %v1688, %v1999
      %v2076 = vadd.f32 %v1689, %v2004
      %v2077 = vadd.f32 %v1690, %v2007
      %v2078 = vadd.f32 %v1691, %v2012
      %v2079 = vadd.f32 %v1692, %v2015
      %v2080 = vadd.f32 %v1693, %v2020
      %v2081 = vadd.f32 %v1694, %v2023
      %v2082 = vadd.f32 %v1695, %v2028
      %v2083 = vadd.f32 %v1696, %v2031
      %v2084 = vadd.f32 %v1697, %v2036
      %v2085 = vadd.f32 %v1698, %v2039
      %v2086 = vadd.f32 %v1699, %v2044
      %v2087 = vadd.f32 %v1700, %v2047
      %v2088 = vadd.f32 %v1701, %v2052
      %v2089 = vadd.f32 %v1702, %v2055
      %v2090 = vld [vmem:[%s1703] sm:$0xf]
      %v2091 = vld [vmem:[%s1703 + $0x4] sm:$0xf]
      %v2092 = vld [vmem:[%s1703 + $0x8] sm:$0x1]
      %v2093 = vld [vmem:[%s1703 + $0xc] sm:$0xf]
      %v2094 = vld [vmem:[%s1703 + $0x10] sm:$0xf]
      %v2095 = vld [vmem:[%s1703 + $0x14] sm:$0x1]
      %v2096 = vld [vmem:[%s1703 + $0x18] sm:$0xf]
      %v2097 = vld [vmem:[%s1703 + $0x1c] sm:$0xf]
      %v2098 = vld [vmem:[%s1703 + $0x20] sm:$0x1]
      %v2099 = vld [vmem:[%s1703 + $0x24] sm:$0xf]
      %v2100 = vld [vmem:[%s1703 + $0x28] sm:$0xf]
      %v2101 = vld [vmem:[%s1703 + $0x2c] sm:$0x1]
      %v2102 = vld [vmem:[%s1703 + $0x30] sm:$0xf]
      %v2103 = vld [vmem:[%s1703 + $0x34] sm:$0xf]
      %v2104 = vld [vmem:[%s1703 + $0x38] sm:$0x1]
      %v2105 = vld [vmem:[%s1703 + $0x3c] sm:$0xf]
      %v2106 = vld [vmem:[%s1703 + $0x40] sm:$0xf]
      %v2107 = vld [vmem:[%s1703 + $0x44] sm:$0x1]
      %v2108 = vld [vmem:[%s1703 + $0x48] sm:$0xf]
      %v2109 = vld [vmem:[%s1703 + $0x4c] sm:$0xf]
      %v2110 = vld [vmem:[%s1703 + $0x50] sm:$0x1]
      %v2111 = vld [vmem:[%s1703 + $0x54] sm:$0xf]
      %v2112 = vld [vmem:[%s1703 + $0x58] sm:$0xf]
      %v2113 = vld [vmem:[%s1703 + $0x5c] sm:$0x1]
      %v2114 = vld [vmem:[%s1703 + $0x60] sm:$0xf]
      %v2115 = vld [vmem:[%s1703 + $0x64] sm:$0xf]
      %v2116 = vld [vmem:[%s1703 + $0x68] sm:$0x1]
      %v2117 = vld [vmem:[%s1703 + $0x6c] sm:$0xf]
      %v2118 = vld [vmem:[%s1703 + $0x70] sm:$0xf]
      %v2119 = vld [vmem:[%s1703 + $0x74] sm:$0x1]
      %v2120 = vld [vmem:[%s1703 + $0x78] sm:$0xf]
      %v2121 = vld [vmem:[%s1703 + $0x7c] sm:$0xf]
      %v2122 = vld [vmem:[%s1703 + $0x80] sm:$0x1]
      %v2123 = vld [vmem:[%s1703 + $0x84] sm:$0xf]
      %v2124 = vld [vmem:[%s1703 + $0x88] sm:$0xf]
      %v2125 = vld [vmem:[%s1703 + $0x8c] sm:$0x1]
      %v2126 = vld [vmem:[%s1703 + $0x90] sm:$0xf]
      %v2127 = vld [vmem:[%s1703 + $0x94] sm:$0xf]
      %v2128 = vld [vmem:[%s1703 + $0x98] sm:$0x1]
      %v2129 = vld [vmem:[%s1703 + $0x9c] sm:$0xf]
      %v2130 = vld [vmem:[%s1703 + $0xa0] sm:$0xf]
      %v2131 = vld [vmem:[%s1703 + $0xa4] sm:$0x1]
      %v2132 = vld [vmem:[%s1703 + $0xa8] sm:$0xf]
      %v2133 = vld [vmem:[%s1703 + $0xac] sm:$0xf]
      %v2134 = vld [vmem:[%s1703 + $0xb0] sm:$0x1]
      %v2135 = vld [vmem:[%s1703 + $0xb4] sm:$0xf]
      %v2136 = vld [vmem:[%s1703 + $0xb8] sm:$0xf]
      %v2137 = vld [vmem:[%s1703 + $0xbc] sm:$0x1]
      %v2139 = vshrl.u32 %v2090, 16
      %v2141 = vrot.slane %v2139, 4
      %v2142 = vshll.u32 %v2090, 16
      %v2144 = vrot.slane %v2142, 5
      %v2145 = vor.u32 %v2141, %v2144
      %v2146 = vrot.slane %v2145, 4
      %v2148 = vshll.u32 %v2091, 16
      %v2150 = vrot.slane %v2148, 5
      %v2151 = vsel %vm238, %v2146, %v2150
      %v2152 = vshrl.u32 %v2091, 16
      %v2154 = vrot.slane %v2152, 4
      %v2155 = vor.u32 %v2154, %v2150
      %v2156 = vrot.slane %v2155, 4
      %v2158 = vshll.u32 %v2092, 16
      %v2160 = vrot.slane %v2158, 5
      %v2161 = vsel %vm238, %v2156, %v2160
      %v2163 = vshrl.u32 %v2093, 16
      %v2165 = vrot.slane %v2163, 4
      %v2166 = vshll.u32 %v2093, 16
      %v2168 = vrot.slane %v2166, 5
      %v2169 = vor.u32 %v2165, %v2168
      %v2170 = vrot.slane %v2169, 4
      %v2172 = vshll.u32 %v2094, 16
      %v2174 = vrot.slane %v2172, 5
      %v2175 = vsel %vm238, %v2170, %v2174
      %v2176 = vshrl.u32 %v2094, 16
      %v2178 = vrot.slane %v2176, 4
      %v2179 = vor.u32 %v2178, %v2174
      %v2180 = vrot.slane %v2179, 4
      %v2182 = vshll.u32 %v2095, 16
      %v2184 = vrot.slane %v2182, 5
      %v2185 = vsel %vm238, %v2180, %v2184
      %v2187 = vshrl.u32 %v2096, 16
      %v2189 = vrot.slane %v2187, 4
      %v2190 = vshll.u32 %v2096, 16
      %v2192 = vrot.slane %v2190, 5
      %v2193 = vor.u32 %v2189, %v2192
      %v2194 = vrot.slane %v2193, 4
      %v2196 = vshll.u32 %v2097, 16
      %v2198 = vrot.slane %v2196, 5
      %v2199 = vsel %vm238, %v2194, %v2198
      %v2200 = vshrl.u32 %v2097, 16
      %v2202 = vrot.slane %v2200, 4
      %v2203 = vor.u32 %v2202, %v2198
      %v2204 = vrot.slane %v2203, 4
      %v2206 = vshll.u32 %v2098, 16
      %v2208 = vrot.slane %v2206, 5
      %v2209 = vsel %vm238, %v2204, %v2208
      %v2211 = vshrl.u32 %v2099, 16
      %v2213 = vrot.slane %v2211, 4
      %v2214 = vshll.u32 %v2099, 16
      %v2216 = vrot.slane %v2214, 5
      %v2217 = vor.u32 %v2213, %v2216
      %v2218 = vrot.slane %v2217, 4
      %v2220 = vshll.u32 %v2100, 16
      %v2222 = vrot.slane %v2220, 5
      %v2223 = vsel %vm238, %v2218, %v2222
      %v2224 = vshrl.u32 %v2100, 16
      %v2226 = vrot.slane %v2224, 4
      %v2227 = vor.u32 %v2226, %v2222
      %v2228 = vrot.slane %v2227, 4
      %v2230 = vshll.u32 %v2101, 16
      %v2232 = vrot.slane %v2230, 5
      %v2233 = vsel %vm238, %v2228, %v2232
      %v2235 = vshrl.u32 %v2102, 16
      %v2237 = vrot.slane %v2235, 4
      %v2238 = vshll.u32 %v2102, 16
      %v2240 = vrot.slane %v2238, 5
      %v2241 = vor.u32 %v2237, %v2240
      %v2242 = vrot.slane %v2241, 4
      %v2244 = vshll.u32 %v2103, 16
      %v2246 = vrot.slane %v2244, 5
      %v2247 = vsel %vm238, %v2242, %v2246
      %v2248 = vshrl.u32 %v2103, 16
      %v2250 = vrot.slane %v2248, 4
      %v2251 = vor.u32 %v2250, %v2246
      %v2252 = vrot.slane %v2251, 4
      %v2254 = vshll.u32 %v2104, 16
      %v2256 = vrot.slane %v2254, 5
      %v2257 = vsel %vm238, %v2252, %v2256
      %v2259 = vshrl.u32 %v2105, 16
      %v2261 = vrot.slane %v2259, 4
      %v2262 = vshll.u32 %v2105, 16
      %v2264 = vrot.slane %v2262, 5
      %v2265 = vor.u32 %v2261, %v2264
      %v2266 = vrot.slane %v2265, 4
      %v2268 = vshll.u32 %v2106, 16
      %v2270 = vrot.slane %v2268, 5
      %v2271 = vsel %vm238, %v2266, %v2270
      %v2272 = vshrl.u32 %v2106, 16
      %v2274 = vrot.slane %v2272, 4
      %v2275 = vor.u32 %v2274, %v2270
      %v2276 = vrot.slane %v2275, 4
      %v2278 = vshll.u32 %v2107, 16
      %v2280 = vrot.slane %v2278, 5
      %v2281 = vsel %vm238, %v2276, %v2280
      %v2283 = vshrl.u32 %v2108, 16
      %v2285 = vrot.slane %v2283, 4
      %v2286 = vshll.u32 %v2108, 16
      %v2288 = vrot.slane %v2286, 5
      %v2289 = vor.u32 %v2285, %v2288
      %v2290 = vrot.slane %v2289, 4
      %v2292 = vshll.u32 %v2109, 16
      %v2294 = vrot.slane %v2292, 5
      %v2295 = vsel %vm238, %v2290, %v2294
      %v2296 = vshrl.u32 %v2109, 16
      %v2298 = vrot.slane %v2296, 4
      %v2299 = vor.u32 %v2298, %v2294
      %v2300 = vrot.slane %v2299, 4
      %v2302 = vshll.u32 %v2110, 16
      %v2304 = vrot.slane %v2302, 5
      %v2305 = vsel %vm238, %v2300, %v2304
      %v2307 = vshrl.u32 %v2111, 16
      %v2309 = vrot.slane %v2307, 4
      %v2310 = vshll.u32 %v2111, 16
      %v2312 = vrot.slane %v2310, 5
      %v2313 = vor.u32 %v2309, %v2312
      %v2314 = vrot.slane %v2313, 4
      %v2316 = vshll.u32 %v2112, 16
      %v2318 = vrot.slane %v2316, 5
      %v2319 = vsel %vm238, %v2314, %v2318
      %v2320 = vshrl.u32 %v2112, 16
      %v2322 = vrot.slane %v2320, 4
      %v2323 = vor.u32 %v2322, %v2318
      %v2324 = vrot.slane %v2323, 4
      %v2326 = vshll.u32 %v2113, 16
      %v2328 = vrot.slane %v2326, 5
      %v2329 = vsel %vm238, %v2324, %v2328
      %v2331 = vshrl.u32 %v2114, 16
      %v2333 = vrot.slane %v2331, 4
      %v2334 = vshll.u32 %v2114, 16
      %v2336 = vrot.slane %v2334, 5
      %v2337 = vor.u32 %v2333, %v2336
      %v2338 = vrot.slane %v2337, 4
      %v2340 = vshll.u32 %v2115, 16
      %v2342 = vrot.slane %v2340, 5
      %v2343 = vsel %vm238, %v2338, %v2342
      %v2344 = vshrl.u32 %v2115, 16
      %v2346 = vrot.slane %v2344, 4
      %v2347 = vor.u32 %v2346, %v2342
      %v2348 = vrot.slane %v2347, 4
      %v2350 = vshll.u32 %v2116, 16
      %v2352 = vrot.slane %v2350, 5
      %v2353 = vsel %vm238, %v2348, %v2352
      %v2355 = vshrl.u32 %v2117, 16
      %v2357 = vrot.slane %v2355, 4
      %v2358 = vshll.u32 %v2117, 16
      %v2360 = vrot.slane %v2358, 5
      %v2361 = vor.u32 %v2357, %v2360
      %v2362 = vrot.slane %v2361, 4
      %v2364 = vshll.u32 %v2118, 16
      %v2366 = vrot.slane %v2364, 5
      %v2367 = vsel %vm238, %v2362, %v2366
      %v2368 = vshrl.u32 %v2118, 16
      %v2370 = vrot.slane %v2368, 4
      %v2371 = vor.u32 %v2370, %v2366
      %v2372 = vrot.slane %v2371, 4
      %v2374 = vshll.u32 %v2119, 16
      %v2376 = vrot.slane %v2374, 5
      %v2377 = vsel %vm238, %v2372, %v2376
      %v2379 = vshrl.u32 %v2120, 16
      %v2381 = vrot.slane %v2379, 4
      %v2382 = vshll.u32 %v2120, 16
      %v2384 = vrot.slane %v2382, 5
      %v2385 = vor.u32 %v2381, %v2384
      %v2386 = vrot.slane %v2385, 4
      %v2388 = vshll.u32 %v2121, 16
      %v2390 = vrot.slane %v2388, 5
      %v2391 = vsel %vm238, %v2386, %v2390
      %v2392 = vshrl.u32 %v2121, 16
      %v2394 = vrot.slane %v2392, 4
      %v2395 = vor.u32 %v2394, %v2390
      %v2396 = vrot.slane %v2395, 4
      %v2398 = vshll.u32 %v2122, 16
      %v2400 = vrot.slane %v2398, 5
      %v2401 = vsel %vm238, %v2396, %v2400
      %v2403 = vshrl.u32 %v2123, 16
      %v2405 = vrot.slane %v2403, 4
      %v2406 = vshll.u32 %v2123, 16
      %v2408 = vrot.slane %v2406, 5
      %v2409 = vor.u32 %v2405, %v2408
      %v2410 = vrot.slane %v2409, 4
      %v2412 = vshll.u32 %v2124, 16
      %v2414 = vrot.slane %v2412, 5
      %v2415 = vsel %vm238, %v2410, %v2414
      %v2416 = vshrl.u32 %v2124, 16
      %v2418 = vrot.slane %v2416, 4
      %v2419 = vor.u32 %v2418, %v2414
      %v2420 = vrot.slane %v2419, 4
      %v2422 = vshll.u32 %v2125, 16
      %v2424 = vrot.slane %v2422, 5
      %v2425 = vsel %vm238, %v2420, %v2424
      %v2427 = vshrl.u32 %v2126, 16
      %v2429 = vrot.slane %v2427, 4
      %v2430 = vshll.u32 %v2126, 16
      %v2432 = vrot.slane %v2430, 5
      %v2433 = vor.u32 %v2429, %v2432
      %v2434 = vrot.slane %v2433, 4
      %v2436 = vshll.u32 %v2127, 16
      %v2438 = vrot.slane %v2436, 5
      %v2439 = vsel %vm238, %v2434, %v2438
      %v2440 = vshrl.u32 %v2127, 16
      %v2442 = vrot.slane %v2440, 4
      %v2443 = vor.u32 %v2442, %v2438
      %v2444 = vrot.slane %v2443, 4
      %v2446 = vshll.u32 %v2128, 16
      %v2448 = vrot.slane %v2446, 5
      %v2449 = vsel %vm238, %v2444, %v2448
      %v2451 = vshrl.u32 %v2129, 16
      %v2453 = vrot.slane %v2451, 4
      %v2454 = vshll.u32 %v2129, 16
      %v2456 = vrot.slane %v2454, 5
      %v2457 = vor.u32 %v2453, %v2456
      %v2458 = vrot.slane %v2457, 4
      %v2460 = vshll.u32 %v2130, 16
      %v2462 = vrot.slane %v2460, 5
      %v2463 = vsel %vm238, %v2458, %v2462
      %v2464 = vshrl.u32 %v2130, 16
      %v2466 = vrot.slane %v2464, 4
      %v2467 = vor.u32 %v2466, %v2462
      %v2468 = vrot.slane %v2467, 4
      %v2470 = vshll.u32 %v2131, 16
      %v2472 = vrot.slane %v2470, 5
      %v2473 = vsel %vm238, %v2468, %v2472
      %v2475 = vshrl.u32 %v2132, 16
      %v2477 = vrot.slane %v2475, 4
      %v2478 = vshll.u32 %v2132, 16
      %v2480 = vrot.slane %v2478, 5
      %v2481 = vor.u32 %v2477, %v2480
      %v2482 = vrot.slane %v2481, 4
      %v2484 = vshll.u32 %v2133, 16
      %v2486 = vrot.slane %v2484, 5
      %v2487 = vsel %vm238, %v2482, %v2486
      %v2488 = vshrl.u32 %v2133, 16
      %v2490 = vrot.slane %v2488, 4
      %v2491 = vor.u32 %v2490, %v2486
      %v2492 = vrot.slane %v2491, 4
      %v2494 = vshll.u32 %v2134, 16
      %v2496 = vrot.slane %v2494, 5
      %v2497 = vsel %vm238, %v2492, %v2496
      %v2499 = vshrl.u32 %v2135, 16
      %v2501 = vrot.slane %v2499, 4
      %v2502 = vshll.u32 %v2135, 16
      %v2504 = vrot.slane %v2502, 5
      %v2505 = vor.u32 %v2501, %v2504
      %v2506 = vrot.slane %v2505, 4
      %v2508 = vshll.u32 %v2136, 16
      %v2510 = vrot.slane %v2508, 5
      %v2511 = vsel %vm238, %v2506, %v2510
      %v2512 = vshrl.u32 %v2136, 16
      %v2514 = vrot.slane %v2512, 4
      %v2515 = vor.u32 %v2514, %v2510
      %v2516 = vrot.slane %v2515, 4
      %v2518 = vshll.u32 %v2137, 16
      %v2520 = vrot.slane %v2518, 5
      %v2521 = vsel %vm238, %v2516, %v2520
      %s2522 = scalar_lea.vmem %s1, 256
      %v2523 = vld [vmem:[%s2522] sm:$0xf]
      %v2524 = vld [vmem:[%s2522 + $0x4] sm:$0xf]
      %v2525 = vld [vmem:[%s2522 + $0x8] sm:$0xf]
      %v2526 = vld [vmem:[%s2522 + $0xc] sm:$0xf]
      %v2527 = vld [vmem:[%s2522 + $0x10] sm:$0xf]
      %v2528 = vld [vmem:[%s2522 + $0x14] sm:$0xf]
      %v2529 = vld [vmem:[%s2522 + $0x18] sm:$0xf]
      %v2530 = vld [vmem:[%s2522 + $0x1c] sm:$0xf]
      %v2531 = vld [vmem:[%s2522 + $0x20] sm:$0xf]
      %v2532 = vld [vmem:[%s2522 + $0x24] sm:$0xf]
      %v2533 = vld [vmem:[%s2522 + $0x28] sm:$0xf]
      %v2534 = vld [vmem:[%s2522 + $0x2c] sm:$0xf]
      %v2535 = vld [vmem:[%s2522 + $0x30] sm:$0xf]
      %v2536 = vld [vmem:[%s2522 + $0x34] sm:$0xf]
      %v2537 = vld [vmem:[%s2522 + $0x38] sm:$0xf]
      %v2538 = vld [vmem:[%s2522 + $0x3c] sm:$0xf]
      %v2539 = vunpack.c.l.b16 %v2151
      %v2540 = vunpack.c.l.b16 %v2161
      %v2541 = vunpack.c.l.b16 %v2175
      %v2542 = vunpack.c.l.b16 %v2185
      %v2543 = vunpack.c.l.b16 %v2199
      %v2544 = vunpack.c.l.b16 %v2209
      %v2545 = vunpack.c.l.b16 %v2223
      %v2546 = vunpack.c.l.b16 %v2233
      %v2547 = vunpack.c.l.b16 %v2247
      %v2548 = vunpack.c.l.b16 %v2257
      %v2549 = vunpack.c.l.b16 %v2271
      %v2550 = vunpack.c.l.b16 %v2281
      %v2551 = vunpack.c.l.b16 %v2295
      %v2552 = vunpack.c.l.b16 %v2305
      %v2553 = vunpack.c.l.b16 %v2319
      %v2554 = vunpack.c.l.b16 %v2329
      %v2555 = vunpack.c.l.b16 %v2343
      %v2556 = vunpack.c.l.b16 %v2353
      %v2557 = vunpack.c.l.b16 %v2367
      %v2558 = vunpack.c.l.b16 %v2377
      %v2559 = vunpack.c.l.b16 %v2391
      %v2560 = vunpack.c.l.b16 %v2401
      %v2561 = vunpack.c.l.b16 %v2415
      %v2562 = vunpack.c.l.b16 %v2425
      %v2563 = vunpack.c.l.b16 %v2439
      %v2564 = vunpack.c.l.b16 %v2449
      %v2565 = vunpack.c.l.b16 %v2463
      %v2566 = vunpack.c.l.b16 %v2473
      %v2567 = vunpack.c.l.b16 %v2487
      %v2568 = vunpack.c.l.b16 %v2497
      %v2569 = vunpack.c.l.b16 %v2511
      %v2570 = vunpack.c.l.b16 %v2521
      %v2571 = vpack.c.b16 %v2540, %v2539
      %v2572 = vpack.c.b16 %v2542, %v2541
      %v2573 = vpack.c.b16 %v2544, %v2543
      %v2574 = vpack.c.b16 %v2546, %v2545
      %v2575 = vpack.c.b16 %v2548, %v2547
      %v2576 = vpack.c.b16 %v2550, %v2549
      %v2577 = vpack.c.b16 %v2552, %v2551
      %v2578 = vpack.c.b16 %v2554, %v2553
      %v2579 = vpack.c.b16 %v2556, %v2555
      %v2580 = vpack.c.b16 %v2558, %v2557
      %v2581 = vpack.c.b16 %v2560, %v2559
      %v2582 = vpack.c.b16 %v2562, %v2561
      %v2583 = vpack.c.b16 %v2564, %v2563
      %v2584 = vpack.c.b16 %v2566, %v2565
      %v2585 = vpack.c.b16 %v2568, %v2567
      %v2586 = vpack.c.b16 %v2570, %v2569
      %v2619 = vunpack.c.l.b16 %v2523
      %v2620 = vunpack.c.l.b16 %v2524
      %v2621 = vunpack.c.l.b16 %v2525
      %v2622 = vunpack.c.l.b16 %v2526
      %v2623 = vunpack.c.l.b16 %v2527
      %v2624 = vunpack.c.l.b16 %v2528
      %v2625 = vunpack.c.l.b16 %v2529
      %v2626 = vunpack.c.l.b16 %v2530
      %v2627 = vunpack.c.l.b16 %v2531
      %v2628 = vunpack.c.l.b16 %v2532
      %v2629 = vunpack.c.l.b16 %v2533
      %v2630 = vunpack.c.l.b16 %v2534
      %v2631 = vunpack.c.l.b16 %v2535
      %v2632 = vunpack.c.l.b16 %v2536
      %v2633 = vunpack.c.l.b16 %v2537
      %v2634 = vunpack.c.l.b16 %v2538
      %v2635 = vpack.c.b16 %v2620, %v2619
      %v2636 = vpack.c.b16 %v2622, %v2621
      %v2637 = vpack.c.b16 %v2624, %v2623
      %v2638 = vpack.c.b16 %v2626, %v2625
      %v2639 = vpack.c.b16 %v2628, %v2627
      %v2640 = vpack.c.b16 %v2630, %v2629
      %v2641 = vpack.c.b16 %v2632, %v2631
      %v2642 = vpack.c.b16 %v2634, %v2633
      %2651 = vmatprep.subr.bf16.mxu0 0
      %2652 = vmatpush1.bf16.msra.mxu0 %v2635
      %2653 = vmatprep.subr.bf16.mxu0 0
      %2654 = vmatpush1.bf16.msra.mxu0 %v2636
      %2655 = vmatprep.subr.bf16.mxu0 0
      %2656 = vmatpush1.bf16.msra.mxu0 %v2637
      %2657 = vmatprep.subr.bf16.mxu0 0
      %2658 = vmatpush1.bf16.msra.mxu0 %v2638
      %2659 = vmatprep.subr.bf16.mxu0 0
      %2660 = vmatpush1.bf16.msra.mxu0 %v2639
      %2661 = vmatprep.subr.bf16.mxu0 0
      %2662 = vmatpush1.bf16.msra.mxu0 %v2640
      %2663 = vmatprep.subr.bf16.mxu0 0
      %2664 = vmatpush1.bf16.msra.mxu0 %v2641
      %2665 = vmatprep.subr.bf16.mxu0 0
      %2666 = vmatpush1.bf16.msra.mxu0 %v2642
      %2667 = vmatprep.subr.bf16.mxu0 0
      %2668 = vmatpush1.bf16.msra.mxu0 0
      %2669 = vmatprep.subr.bf16.mxu0 0
      %2670 = vmatpush1.bf16.msra.mxu0 0
      %2671 = vmatprep.subr.bf16.mxu0 0
      %2672 = vmatpush1.bf16.msra.mxu0 0
      %2673 = vmatprep.subr.bf16.mxu0 0
      %2674 = vmatpush1.bf16.msra.mxu0 0
      %2675 = vmatprep.subr.bf16.mxu0 0
      %2676 = vmatpush1.bf16.msra.mxu0 0
      %2677 = vmatprep.subr.bf16.mxu0 0
      %2678 = vmatpush1.bf16.msra.mxu0 0
      %2679 = vmatprep.subr.bf16.mxu0 0
      %2680 = vmatpush1.bf16.msra.mxu0 0
      %2681 = vmatprep.subr.bf16.mxu0 0
      %2682 = vmatpush1.bf16.msra.mxu0 0
      %2683 = vmatprep.mubr.bf16.mxu0 0
      %2684 = vmatmul.mubr.bf16.gmra.mrb[0].mxu0 %v2571
      %v2685 = vpop.f32.mrb[0].mxu0
      %v2686 = vadd.f32 0.0, %v2685
      %v2687 = vpop.f32.mrb[0].mxu0
      %v2688 = vpop.f32.mrb[0].mxu0
      %v2689 = vadd.f32 0.0, %v2688
      %v2690 = vpop.f32.mrb[0].mxu0
      %2691 = vmatprep.mubr.bf16.mxu0 0
      %2692 = vmatmul.mubr.bf16.gmra.mrb[0].mxu0 %v2572
      %v2693 = vpop.f32.mrb[0].mxu0
      %v2694 = vadd.f32 0.0, %v2693
      %v2695 = vpop.f32.mrb[0].mxu0
      %v2696 = vpop.f32.mrb[0].mxu0
      %v2697 = vadd.f32 0.0, %v2696
      %v2698 = vpop.f32.mrb[0].mxu0
      %2699 = vmatprep.mubr.bf16.mxu0 0
      %2700 = vmatmul.mubr.bf16.gmra.mrb[0].mxu0 %v2573
      %v2701 = vpop.f32.mrb[0].mxu0
      %v2702 = vadd.f32 0.0, %v2701
      %v2703 = vpop.f32.mrb[0].mxu0
      %v2704 = vpop.f32.mrb[0].mxu0
      %v2705 = vadd.f32 0.0, %v2704
      %v2706 = vpop.f32.mrb[0].mxu0
      %2707 = vmatprep.mubr.bf16.mxu0 0
      %2708 = vmatmul.mubr.bf16.gmra.mrb[0].mxu0 %v2574
      %v2709 = vpop.f32.mrb[0].mxu0
      %v2710 = vadd.f32 0.0, %v2709
      %v2711 = vpop.f32.mrb[0].mxu0
      %v2712 = vpop.f32.mrb[0].mxu0
      %v2713 = vadd.f32 0.0, %v2712
      %v2714 = vpop.f32.mrb[0].mxu0
      %2715 = vmatprep.mubr.bf16.mxu0 0
      %2716 = vmatmul.mubr.bf16.gmra.mrb[0].mxu0 %v2575
      %v2717 = vpop.f32.mrb[0].mxu0
      %v2718 = vadd.f32 0.0, %v2717
      %v2719 = vpop.f32.mrb[0].mxu0
      %v2720 = vpop.f32.mrb[0].mxu0
      %v2721 = vadd.f32 0.0, %v2720
      %v2722 = vpop.f32.mrb[0].mxu0
      %2723 = vmatprep.mubr.bf16.mxu0 0
      %2724 = vmatmul.mubr.bf16.gmra.mrb[0].mxu0 %v2576
      %v2725 = vpop.f32.mrb[0].mxu0
      %v2726 = vadd.f32 0.0, %v2725
      %v2727 = vpop.f32.mrb[0].mxu0
      %v2728 = vpop.f32.mrb[0].mxu0
      %v2729 = vadd.f32 0.0, %v2728
      %v2730 = vpop.f32.mrb[0].mxu0
      %2731 = vmatprep.mubr.bf16.mxu0 0
      %2732 = vmatmul.mubr.bf16.gmra.mrb[0].mxu0 %v2577
      %v2733 = vpop.f32.mrb[0].mxu0
      %v2734 = vadd.f32 0.0, %v2733
      %v2735 = vpop.f32.mrb[0].mxu0
      %v2736 = vpop.f32.mrb[0].mxu0
      %v2737 = vadd.f32 0.0, %v2736
      %v2738 = vpop.f32.mrb[0].mxu0
      %2739 = vmatprep.mubr.bf16.mxu0 0
      %2740 = vmatmul.mubr.bf16.gmra.mrb[0].mxu0 %v2578
      %v2741 = vpop.f32.mrb[0].mxu0
      %v2742 = vadd.f32 0.0, %v2741
      %v2743 = vpop.f32.mrb[0].mxu0
      %v2744 = vpop.f32.mrb[0].mxu0
      %v2745 = vadd.f32 0.0, %v2744
      %v2746 = vpop.f32.mrb[0].mxu0
      %2747 = vmatprep.mubr.bf16.mxu0 0
      %2748 = vmatmul.mubr.bf16.gmra.mrb[0].mxu0 %v2579
      %v2749 = vpop.f32.mrb[0].mxu0
      %v2750 = vadd.f32 0.0, %v2749
      %v2751 = vpop.f32.mrb[0].mxu0
      %v2752 = vpop.f32.mrb[0].mxu0
      %v2753 = vadd.f32 0.0, %v2752
      %v2754 = vpop.f32.mrb[0].mxu0
      %2755 = vmatprep.mubr.bf16.mxu0 0
      %2756 = vmatmul.mubr.bf16.gmra.mrb[0].mxu0 %v2580
      %v2757 = vpop.f32.mrb[0].mxu0
      %v2758 = vadd.f32 0.0, %v2757
      %v2759 = vpop.f32.mrb[0].mxu0
      %v2760 = vpop.f32.mrb[0].mxu0
      %v2761 = vadd.f32 0.0, %v2760
      %v2762 = vpop.f32.mrb[0].mxu0
      %2763 = vmatprep.mubr.bf16.mxu0 0
      %2764 = vmatmul.mubr.bf16.gmra.mrb[0].mxu0 %v2581
      %v2765 = vpop.f32.mrb[0].mxu0
      %v2766 = vadd.f32 0.0, %v2765
      %v2767 = vpop.f32.mrb[0].mxu0
      %v2768 = vpop.f32.mrb[0].mxu0
      %v2769 = vadd.f32 0.0, %v2768
      %v2770 = vpop.f32.mrb[0].mxu0
      %2771 = vmatprep.mubr.bf16.mxu0 0
      %2772 = vmatmul.mubr.bf16.gmra.mrb[0].mxu0 %v2582
      %v2773 = vpop.f32.mrb[0].mxu0
      %v2774 = vadd.f32 0.0, %v2773
      %v2775 = vpop.f32.mrb[0].mxu0
      %v2776 = vpop.f32.mrb[0].mxu0
      %v2777 = vadd.f32 0.0, %v2776
      %v2778 = vpop.f32.mrb[0].mxu0
      %2779 = vmatprep.mubr.bf16.mxu0 0
      %2780 = vmatmul.mubr.bf16.gmra.mrb[0].mxu0 %v2583
      %v2781 = vpop.f32.mrb[0].mxu0
      %v2782 = vadd.f32 0.0, %v2781
      %v2783 = vpop.f32.mrb[0].mxu0
      %v2784 = vpop.f32.mrb[0].mxu0
      %v2785 = vadd.f32 0.0, %v2784
      %v2786 = vpop.f32.mrb[0].mxu0
      %2787 = vmatprep.mubr.bf16.mxu0 0
      %2788 = vmatmul.mubr.bf16.gmra.mrb[0].mxu0 %v2584
      %v2789 = vpop.f32.mrb[0].mxu0
      %v2790 = vadd.f32 0.0, %v2789
      %v2791 = vpop.f32.mrb[0].mxu0
      %v2792 = vpop.f32.mrb[0].mxu0
      %v2793 = vadd.f32 0.0, %v2792
      %v2794 = vpop.f32.mrb[0].mxu0
      %2795 = vmatprep.mubr.bf16.mxu0 0
      %2796 = vmatmul.mubr.bf16.gmra.mrb[0].mxu0 %v2585
      %v2797 = vpop.f32.mrb[0].mxu0
      %v2798 = vadd.f32 0.0, %v2797
      %v2799 = vpop.f32.mrb[0].mxu0
      %v2800 = vpop.f32.mrb[0].mxu0
      %v2801 = vadd.f32 0.0, %v2800
      %v2802 = vpop.f32.mrb[0].mxu0
      %2803 = vmatprep.mubr.bf16.mxu0 0
      %2804 = vmatmul.mubr.bf16.gmra.mrb[0].mxu0 %v2586
      %v2805 = vpop.f32.mrb[0].mxu0
      %v2806 = vadd.f32 0.0, %v2805
      %v2807 = vpop.f32.mrb[0].mxu0
      %v2808 = vpop.f32.mrb[0].mxu0
      %v2809 = vadd.f32 0.0, %v2808
      %v2810 = vpop.f32.mrb[0].mxu0
      %2811 = vdwg.mxu0
      %v2812 = vadd.f32 %v2058, %v2686
      %v2813 = vadd.f32 %v2059, %v2689
      %v2814 = vadd.f32 %v2060, %v2694
      %v2815 = vadd.f32 %v2061, %v2697
      %v2816 = vadd.f32 %v2062, %v2702
      %v2817 = vadd.f32 %v2063, %v2705
      %v2818 = vadd.f32 %v2064, %v2710
      %v2819 = vadd.f32 %v2065, %v2713
      %v2820 = vadd.f32 %v2066, %v2718
      %v2821 = vadd.f32 %v2067, %v2721
      %v2822 = vadd.f32 %v2068, %v2726
      %v2823 = vadd.f32 %v2069, %v2729
      %v2824 = vadd.f32 %v2070, %v2734
      %v2825 = vadd.f32 %v2071, %v2737
      %v2826 = vadd.f32 %v2072, %v2742
      %v2827 = vadd.f32 %v2073, %v2745
      %v2828 = vadd.f32 %v2074, %v2750
      %v2829 = vadd.f32 %v2075, %v2753
      %v2830 = vadd.f32 %v2076, %v2758
      %v2831 = vadd.f32 %v2077, %v2761
      %v2832 = vadd.f32 %v2078, %v2766
      %v2833 = vadd.f32 %v2079, %v2769
      %v2834 = vadd.f32 %v2080, %v2774
      %v2835 = vadd.f32 %v2081, %v2777
      %v2836 = vadd.f32 %v2082, %v2782
      %v2837 = vadd.f32 %v2083, %v2785
      %v2838 = vadd.f32 %v2084, %v2790
      %v2839 = vadd.f32 %v2085, %v2793
      %v2840 = vadd.f32 %v2086, %v2798
      %v2841 = vadd.f32 %v2087, %v2801
      %v2842 = vadd.f32 %v2088, %v2806
      %v2843 = vadd.f32 %v2089, %v2809
      %v2844 = vld [vmem:[%s1703] sm:$0xe]
      %v2845 = vld [vmem:[%s1703 + $0xc] sm:$0xe]
      %v2846 = vld [vmem:[%s1703 + $0x18] sm:$0xe]
      %v2847 = vld [vmem:[%s1703 + $0x24] sm:$0xe]
      %v2848 = vld [vmem:[%s1703 + $0x30] sm:$0xe]
      %v2849 = vld [vmem:[%s1703 + $0x3c] sm:$0xe]
      %v2850 = vld [vmem:[%s1703 + $0x48] sm:$0xe]
      %v2851 = vld [vmem:[%s1703 + $0x54] sm:$0xe]
      %v2852 = vld [vmem:[%s1703 + $0x60] sm:$0xe]
      %v2853 = vld [vmem:[%s1703 + $0x6c] sm:$0xe]
      %v2854 = vld [vmem:[%s1703 + $0x78] sm:$0xe]
      %v2855 = vld [vmem:[%s1703 + $0x84] sm:$0xe]
      %v2856 = vld [vmem:[%s1703 + $0x90] sm:$0xe]
      %v2857 = vld [vmem:[%s1703 + $0x9c] sm:$0xe]
      %v2858 = vld [vmem:[%s1703 + $0xa8] sm:$0xe]
      %v2859 = vld [vmem:[%s1703 + $0xb4] sm:$0xe]
      %v2908 = vrot.slane %v2844, 5
      %v2909 = vrot.slane %v2908, 4
      %v2910 = vrot.slane %v2091, 5
      %v2911 = vsel %vm1268, %v2909, %v2910
      %v2912 = vrot.slane %v2910, 4
      %v2913 = vrot.slane %v2092, 5
      %v2914 = vsel %vm1268, %v2912, %v2913
      %v2915 = vrot.slane %v2845, 5
      %v2916 = vrot.slane %v2915, 4
      %v2917 = vrot.slane %v2094, 5
      %v2918 = vsel %vm1268, %v2916, %v2917
      %v2919 = vrot.slane %v2917, 4
      %v2920 = vrot.slane %v2095, 5
      %v2921 = vsel %vm1268, %v2919, %v2920
      %v2922 = vrot.slane %v2846, 5
      %v2923 = vrot.slane %v2922, 4
      %v2924 = vrot.slane %v2097, 5
      %v2925 = vsel %vm1268, %v2923, %v2924
      %v2926 = vrot.slane %v2924, 4
      %v2927 = vrot.slane %v2098, 5
      %v2928 = vsel %vm1268, %v2926, %v2927
      %v2929 = vrot.slane %v2847, 5
      %v2930 = vrot.slane %v2929, 4
      %v2931 = vrot.slane %v2100, 5
      %v2932 = vsel %vm1268, %v2930, %v2931
      %v2933 = vrot.slane %v2931, 4
      %v2934 = vrot.slane %v2101, 5
      %v2935 = vsel %vm1268, %v2933, %v2934
      %v2936 = vrot.slane %v2848, 5
      %v2937 = vrot.slane %v2936, 4
      %v2938 = vrot.slane %v2103, 5
      %v2939 = vsel %vm1268, %v2937, %v2938
      %v2940 = vrot.slane %v2938, 4
      %v2941 = vrot.slane %v2104, 5
      %v2942 = vsel %vm1268, %v2940, %v2941
      %v2943 = vrot.slane %v2849, 5
      %v2944 = vrot.slane %v2943, 4
      %v2945 = vrot.slane %v2106, 5
      %v2946 = vsel %vm1268, %v2944, %v2945
      %v2947 = vrot.slane %v2945, 4
      %v2948 = vrot.slane %v2107, 5
      %v2949 = vsel %vm1268, %v2947, %v2948
      %v2950 = vrot.slane %v2850, 5
      %v2951 = vrot.slane %v2950, 4
      %v2952 = vrot.slane %v2109, 5
      %v2953 = vsel %vm1268, %v2951, %v2952
      %v2954 = vrot.slane %v2952, 4
      %v2955 = vrot.slane %v2110, 5
      %v2956 = vsel %vm1268, %v2954, %v2955
      %v2957 = vrot.slane %v2851, 5
      %v2958 = vrot.slane %v2957, 4
      %v2959 = vrot.slane %v2112, 5
      %v2960 = vsel %vm1268, %v2958, %v2959
      %v2961 = vrot.slane %v2959, 4
      %v2962 = vrot.slane %v2113, 5
      %v2963 = vsel %vm1268, %v2961, %v2962
      %v2964 = vrot.slane %v2852, 5
      %v2965 = vrot.slane %v2964, 4
      %v2966 = vrot.slane %v2115, 5
      %v2967 = vsel %vm1268, %v2965, %v2966
      %v2968 = vrot.slane %v2966, 4
      %v2969 = vrot.slane %v2116, 5
      %v2970 = vsel %vm1268, %v2968, %v2969
      %v2971 = vrot.slane %v2853, 5
      %v2972 = vrot.slane %v2971, 4
      %v2973 = vrot.slane %v2118, 5
      %v2974 = vsel %vm1268, %v2972, %v2973
      %v2975 = vrot.slane %v2973, 4
      %v2976 = vrot.slane %v2119, 5
      %v2977 = vsel %vm1268, %v2975, %v2976
      %v2978 = vrot.slane %v2854, 5
      %v2979 = vrot.slane %v2978, 4
      %v2980 = vrot.slane %v2121, 5
      %v2981 = vsel %vm1268, %v2979, %v2980
      %v2982 = vrot.slane %v2980, 4
      %v2983 = vrot.slane %v2122, 5
      %v2984 = vsel %vm1268, %v2982, %v2983
      %v2985 = vrot.slane %v2855, 5
      %v2986 = vrot.slane %v2985, 4
      %v2987 = vrot.slane %v2124, 5
      %v2988 = vsel %vm1268, %v2986, %v2987
      %v2989 = vrot.slane %v2987, 4
      %v2990 = vrot.slane %v2125, 5
      %v2991 = vsel %vm1268, %v2989, %v2990
      %v2992 = vrot.slane %v2856, 5
      %v2993 = vrot.slane %v2992, 4
      %v2994 = vrot.slane %v2127, 5
      %v2995 = vsel %vm1268, %v2993, %v2994
      %v2996 = vrot.slane %v2994, 4
      %v2997 = vrot.slane %v2128, 5
      %v2998 = vsel %vm1268, %v2996, %v2997
      %v2999 = vrot.slane %v2857, 5
      %v3000 = vrot.slane %v2999, 4
      %v3001 = vrot.slane %v2130, 5
      %v3002 = vsel %vm1268, %v3000, %v3001
      %v3003 = vrot.slane %v3001, 4
      %v3004 = vrot.slane %v2131, 5
      %v3005 = vsel %vm1268, %v3003, %v3004
      %v3006 = vrot.slane %v2858, 5
      %v3007 = vrot.slane %v3006, 4
      %v3008 = vrot.slane %v2133, 5
      %v3009 = vsel %vm1268, %v3007, %v3008
      %v3010 = vrot.slane %v3008, 4
      %v3011 = vrot.slane %v2134, 5
      %v3012 = vsel %vm1268, %v3010, %v3011
      %v3013 = vrot.slane %v2859, 5
      %v3014 = vrot.slane %v3013, 4
      %v3015 = vrot.slane %v2136, 5
      %v3016 = vsel %vm1268, %v3014, %v3015
      %v3017 = vrot.slane %v3015, 4
      %v3018 = vrot.slane %v2137, 5
      %v3019 = vsel %vm1268, %v3017, %v3018
      %s3020 = scalar_lea.vmem %s1, 320
      %v3021 = vld [vmem:[%s3020] sm:$0xf]
      %v3022 = vld [vmem:[%s3020 + $0x4] sm:$0xf]
      %v3023 = vld [vmem:[%s3020 + $0x8] sm:$0xf]
      %v3024 = vld [vmem:[%s3020 + $0xc] sm:$0xf]
      %v3025 = vld [vmem:[%s3020 + $0x10] sm:$0xf]
      %v3026 = vld [vmem:[%s3020 + $0x14] sm:$0xf]
      %v3027 = vld [vmem:[%s3020 + $0x18] sm:$0xf]
      %v3028 = vld [vmem:[%s3020 + $0x1c] sm:$0xf]
      %v3029 = vld [vmem:[%s3020 + $0x20] sm:$0xf]
      %v3030 = vld [vmem:[%s3020 + $0x24] sm:$0xf]
      %v3031 = vld [vmem:[%s3020 + $0x28] sm:$0xf]
      %v3032 = vld [vmem:[%s3020 + $0x2c] sm:$0xf]
      %v3033 = vld [vmem:[%s3020 + $0x30] sm:$0xf]
      %v3034 = vld [vmem:[%s3020 + $0x34] sm:$0xf]
      %v3035 = vld [vmem:[%s3020 + $0x38] sm:$0xf]
      %v3036 = vld [vmem:[%s3020 + $0x3c] sm:$0xf]
      %v3037 = vunpack.c.l.b16 %v2911
      %v3038 = vunpack.c.l.b16 %v2914
      %v3039 = vunpack.c.l.b16 %v2918
      %v3040 = vunpack.c.l.b16 %v2921
      %v3041 = vunpack.c.l.b16 %v2925
      %v3042 = vunpack.c.l.b16 %v2928
      %v3043 = vunpack.c.l.b16 %v2932
      %v3044 = vunpack.c.l.b16 %v2935
      %v3045 = vunpack.c.l.b16 %v2939
      %v3046 = vunpack.c.l.b16 %v2942
      %v3047 = vunpack.c.l.b16 %v2946
      %v3048 = vunpack.c.l.b16 %v2949
      %v3049 = vunpack.c.l.b16 %v2953
      %v3050 = vunpack.c.l.b16 %v2956
      %v3051 = vunpack.c.l.b16 %v2960
      %v3052 = vunpack.c.l.b16 %v2963
      %v3053 = vunpack.c.l.b16 %v2967
      %v3054 = vunpack.c.l.b16 %v2970
      %v3055 = vunpack.c.l.b16 %v2974
      %v3056 = vunpack.c.l.b16 %v2977
      %v3057 = vunpack.c.l.b16 %v2981
      %v3058 = vunpack.c.l.b16 %v2984
      %v3059 = vunpack.c.l.b16 %v2988
      %v3060 = vunpack.c.l.b16 %v2991
      %v3061 = vunpack.c.l.b16 %v2995
      %v3062 = vunpack.c.l.b16 %v2998
      %v3063 = vunpack.c.l.b16 %v3002
      %v3064 = vunpack.c.l.b16 %v3005
      %v3065 = vunpack.c.l.b16 %v3009
      %v3066 = vunpack.c.l.b16 %v3012
      %v3067 = vunpack.c.l.b16 %v3016
      %v3068 = vunpack.c.l.b16 %v3019
      %v3069 = vpack.c.b16 %v3038, %v3037
      %v3070 = vpack.c.b16 %v3040, %v3039
      %v3071 = vpack.c.b16 %v3042, %v3041
      %v3072 = vpack.c.b16 %v3044, %v3043
      %v3073 = vpack.c.b16 %v3046, %v3045
      %v3074 = vpack.c.b16 %v3048, %v3047
      %v3075 = vpack.c.b16 %v3050, %v3049
      %v3076 = vpack.c.b16 %v3052, %v3051
      %v3077 = vpack.c.b16 %v3054, %v3053
      %v3078 = vpack.c.b16 %v3056, %v3055
      %v3079 = vpack.c.b16 %v3058, %v3057
      %v3080 = vpack.c.b16 %v3060, %v3059
      %v3081 = vpack.c.b16 %v3062, %v3061
      %v3082 = vpack.c.b16 %v3064, %v3063
      %v3083 = vpack.c.b16 %v3066, %v3065
      %v3084 = vpack.c.b16 %v3068, %v3067
      %v3117 = vunpack.c.l.b16 %v3021
      %v3118 = vunpack.c.l.b16 %v3022
      %v3119 = vunpack.c.l.b16 %v3023
      %v3120 = vunpack.c.l.b16 %v3024
      %v3121 = vunpack.c.l.b16 %v3025
      %v3122 = vunpack.c.l.b16 %v3026
      %v3123 = vunpack.c.l.b16 %v3027
      %v3124 = vunpack.c.l.b16 %v3028
      %v3125 = vunpack.c.l.b16 %v3029
      %v3126 = vunpack.c.l.b16 %v3030
      %v3127 = vunpack.c.l.b16 %v3031
      %v3128 = vunpack.c.l.b16 %v3032
      %v3129 = vunpack.c.l.b16 %v3033
      %v3130 = vunpack.c.l.b16 %v3034
      %v3131 = vunpack.c.l.b16 %v3035
      %v3132 = vunpack.c.l.b16 %v3036
      %v3133 = vpack.c.b16 %v3118, %v3117
      %v3134 = vpack.c.b16 %v3120, %v3119
      %v3135 = vpack.c.b16 %v3122, %v3121
      %v3136 = vpack.c.b16 %v3124, %v3123
      %v3137 = vpack.c.b16 %v3126, %v3125
      %v3138 = vpack.c.b16 %v3128, %v3127
      %v3139 = vpack.c.b16 %v3130, %v3129
      %v3140 = vpack.c.b16 %v3132, %v3131
      %3149 = vmatprep.subr.bf16.mxu0 0
      %3150 = vmatpush1.bf16.msra.mxu0 %v3133
      %3151 = vmatprep.subr.bf16.mxu0 0
      %3152 = vmatpush1.bf16.msra.mxu0 %v3134
      %3153 = vmatprep.subr.bf16.mxu0 0
      %3154 = vmatpush1.bf16.msra.mxu0 %v3135
      %3155 = vmatprep.subr.bf16.mxu0 0
      %3156 = vmatpush1.bf16.msra.mxu0 %v3136
      %3157 = vmatprep.subr.bf16.mxu0 0
      %3158 = vmatpush1.bf16.msra.mxu0 %v3137
      %3159 = vmatprep.subr.bf16.mxu0 0
      %3160 = vmatpush1.bf16.msra.mxu0 %v3138
      %3161 = vmatprep.subr.bf16.mxu0 0
      %3162 = vmatpush1.bf16.msra.mxu0 %v3139
      %3163 = vmatprep.subr.bf16.mxu0 0
      %3164 = vmatpush1.bf16.msra.mxu0 %v3140
      %3165 = vmatprep.subr.bf16.mxu0 0
      %3166 = vmatpush1.bf16.msra.mxu0 0
      %3167 = vmatprep.subr.bf16.mxu0 0
      %3168 = vmatpush1.bf16.msra.mxu0 0
      %3169 = vmatprep.subr.bf16.mxu0 0
      %3170 = vmatpush1.bf16.msra.mxu0 0
      %3171 = vmatprep.subr.bf16.mxu0 0
      %3172 = vmatpush1.bf16.msra.mxu0 0
      %3173 = vmatprep.subr.bf16.mxu0 0
      %3174 = vmatpush1.bf16.msra.mxu0 0
      %3175 = vmatprep.subr.bf16.mxu0 0
      %3176 = vmatpush1.bf16.msra.mxu0 0
      %3177 = vmatprep.subr.bf16.mxu0 0
      %3178 = vmatpush1.bf16.msra.mxu0 0
      %3179 = vmatprep.subr.bf16.mxu0 0
      %3180 = vmatpush1.bf16.msra.mxu0 0
      %3181 = vmatprep.mubr.bf16.mxu0 0
      %3182 = vmatmul.mubr.bf16.gmra.mrb[0].mxu0 %v3069
      %v3183 = vpop.f32.mrb[0].mxu0
      %v3184 = vadd.f32 0.0, %v3183
      %v3185 = vpop.f32.mrb[0].mxu0
      %v3186 = vpop.f32.mrb[0].mxu0
      %v3187 = vadd.f32 0.0, %v3186
      %v3188 = vpop.f32.mrb[0].mxu0
      %3189 = vmatprep.mubr.bf16.mxu0 0
      %3190 = vmatmul.mubr.bf16.gmra.mrb[0].mxu0 %v3070
      %v3191 = vpop.f32.mrb[0].mxu0
      %v3192 = vadd.f32 0.0, %v3191
      %v3193 = vpop.f32.mrb[0].mxu0
      %v3194 = vpop.f32.mrb[0].mxu0
      %v3195 = vadd.f32 0.0, %v3194
      %v3196 = vpop.f32.mrb[0].mxu0
      %3197 = vmatprep.mubr.bf16.mxu0 0
      %3198 = vmatmul.mubr.bf16.gmra.mrb[0].mxu0 %v3071
      %v3199 = vpop.f32.mrb[0].mxu0
      %v3200 = vadd.f32 0.0, %v3199
      %v3201 = vpop.f32.mrb[0].mxu0
      %v3202 = vpop.f32.mrb[0].mxu0
      %v3203 = vadd.f32 0.0, %v3202
      %v3204 = vpop.f32.mrb[0].mxu0
      %3205 = vmatprep.mubr.bf16.mxu0 0
      %3206 = vmatmul.mubr.bf16.gmra.mrb[0].mxu0 %v3072
      %v3207 = vpop.f32.mrb[0].mxu0
      %v3208 = vadd.f32 0.0, %v3207
      %v3209 = vpop.f32.mrb[0].mxu0
      %v3210 = vpop.f32.mrb[0].mxu0
      %v3211 = vadd.f32 0.0, %v3210
      %v3212 = vpop.f32.mrb[0].mxu0
      %3213 = vmatprep.mubr.bf16.mxu0 0
      %3214 = vmatmul.mubr.bf16.gmra.mrb[0].mxu0 %v3073
      %v3215 = vpop.f32.mrb[0].mxu0
      %v3216 = vadd.f32 0.0, %v3215
      %v3217 = vpop.f32.mrb[0].mxu0
      %v3218 = vpop.f32.mrb[0].mxu0
      %v3219 = vadd.f32 0.0, %v3218
      %v3220 = vpop.f32.mrb[0].mxu0
      %3221 = vmatprep.mubr.bf16.mxu0 0
      %3222 = vmatmul.mubr.bf16.gmra.mrb[0].mxu0 %v3074
      %v3223 = vpop.f32.mrb[0].mxu0
      %v3224 = vadd.f32 0.0, %v3223
      %v3225 = vpop.f32.mrb[0].mxu0
      %v3226 = vpop.f32.mrb[0].mxu0
      %v3227 = vadd.f32 0.0, %v3226
      %v3228 = vpop.f32.mrb[0].mxu0
      %3229 = vmatprep.mubr.bf16.mxu0 0
      %3230 = vmatmul.mubr.bf16.gmra.mrb[0].mxu0 %v3075
      %v3231 = vpop.f32.mrb[0].mxu0
      %v3232 = vadd.f32 0.0, %v3231
      %v3233 = vpop.f32.mrb[0].mxu0
      %v3234 = vpop.f32.mrb[0].mxu0
      %v3235 = vadd.f32 0.0, %v3234
      %v3236 = vpop.f32.mrb[0].mxu0
      %3237 = vmatprep.mubr.bf16.mxu0 0
      %3238 = vmatmul.mubr.bf16.gmra.mrb[0].mxu0 %v3076
      %v3239 = vpop.f32.mrb[0].mxu0
      %v3240 = vadd.f32 0.0, %v3239
      %v3241 = vpop.f32.mrb[0].mxu0
      %v3242 = vpop.f32.mrb[0].mxu0
      %v3243 = vadd.f32 0.0, %v3242
      %v3244 = vpop.f32.mrb[0].mxu0
      %3245 = vmatprep.mubr.bf16.mxu0 0
      %3246 = vmatmul.mubr.bf16.gmra.mrb[0].mxu0 %v3077
      %v3247 = vpop.f32.mrb[0].mxu0
      %v3248 = vadd.f32 0.0, %v3247
      %v3249 = vpop.f32.mrb[0].mxu0
      %v3250 = vpop.f32.mrb[0].mxu0
      %v3251 = vadd.f32 0.0, %v3250
      %v3252 = vpop.f32.mrb[0].mxu0
      %3253 = vmatprep.mubr.bf16.mxu0 0
      %3254 = vmatmul.mubr.bf16.gmra.mrb[0].mxu0 %v3078
      %v3255 = vpop.f32.mrb[0].mxu0
      %v3256 = vadd.f32 0.0, %v3255
      %v3257 = vpop.f32.mrb[0].mxu0
      %v3258 = vpop.f32.mrb[0].mxu0
      %v3259 = vadd.f32 0.0, %v3258
      %v3260 = vpop.f32.mrb[0].mxu0
      %3261 = vmatprep.mubr.bf16.mxu0 0
      %3262 = vmatmul.mubr.bf16.gmra.mrb[0].mxu0 %v3079
      %v3263 = vpop.f32.mrb[0].mxu0
      %v3264 = vadd.f32 0.0, %v3263
      %v3265 = vpop.f32.mrb[0].mxu0
      %v3266 = vpop.f32.mrb[0].mxu0
      %v3267 = vadd.f32 0.0, %v3266
      %v3268 = vpop.f32.mrb[0].mxu0
      %3269 = vmatprep.mubr.bf16.mxu0 0
      %3270 = vmatmul.mubr.bf16.gmra.mrb[0].mxu0 %v3080
      %v3271 = vpop.f32.mrb[0].mxu0
      %v3272 = vadd.f32 0.0, %v3271
      %v3273 = vpop.f32.mrb[0].mxu0
      %v3274 = vpop.f32.mrb[0].mxu0
      %v3275 = vadd.f32 0.0, %v3274
      %v3276 = vpop.f32.mrb[0].mxu0
      %3277 = vmatprep.mubr.bf16.mxu0 0
      %3278 = vmatmul.mubr.bf16.gmra.mrb[0].mxu0 %v3081
      %v3279 = vpop.f32.mrb[0].mxu0
      %v3280 = vadd.f32 0.0, %v3279
      %v3281 = vpop.f32.mrb[0].mxu0
      %v3282 = vpop.f32.mrb[0].mxu0
      %v3283 = vadd.f32 0.0, %v3282
      %v3284 = vpop.f32.mrb[0].mxu0
      %3285 = vmatprep.mubr.bf16.mxu0 0
      %3286 = vmatmul.mubr.bf16.gmra.mrb[0].mxu0 %v3082
      %v3287 = vpop.f32.mrb[0].mxu0
      %v3288 = vadd.f32 0.0, %v3287
      %v3289 = vpop.f32.mrb[0].mxu0
      %v3290 = vpop.f32.mrb[0].mxu0
      %v3291 = vadd.f32 0.0, %v3290
      %v3292 = vpop.f32.mrb[0].mxu0
      %3293 = vmatprep.mubr.bf16.mxu0 0
      %3294 = vmatmul.mubr.bf16.gmra.mrb[0].mxu0 %v3083
      %v3295 = vpop.f32.mrb[0].mxu0
      %v3296 = vadd.f32 0.0, %v3295
      %v3297 = vpop.f32.mrb[0].mxu0
      %v3298 = vpop.f32.mrb[0].mxu0
      %v3299 = vadd.f32 0.0, %v3298
      %v3300 = vpop.f32.mrb[0].mxu0
      %3301 = vmatprep.mubr.bf16.mxu0 0
      %3302 = vmatmul.mubr.bf16.gmra.mrb[0].mxu0 %v3084
      %v3303 = vpop.f32.mrb[0].mxu0
      %v3304 = vadd.f32 0.0, %v3303
      %v3305 = vpop.f32.mrb[0].mxu0
      %v3306 = vpop.f32.mrb[0].mxu0
      %v3307 = vadd.f32 0.0, %v3306
      %v3308 = vpop.f32.mrb[0].mxu0
      %3309 = vdwg.mxu0
      %v3310 = vadd.f32 %v2812, %v3184
      %v3311 = vadd.f32 %v2813, %v3187
      %v3312 = vadd.f32 %v2814, %v3192
      %v3313 = vadd.f32 %v2815, %v3195
      %v3314 = vadd.f32 %v2816, %v3200
      %v3315 = vadd.f32 %v2817, %v3203
      %v3316 = vadd.f32 %v2818, %v3208
      %v3317 = vadd.f32 %v2819, %v3211
      %v3318 = vadd.f32 %v2820, %v3216
      %v3319 = vadd.f32 %v2821, %v3219
      %v3320 = vadd.f32 %v2822, %v3224
      %v3321 = vadd.f32 %v2823, %v3227
      %v3322 = vadd.f32 %v2824, %v3232
      %v3323 = vadd.f32 %v2825, %v3235
      %v3324 = vadd.f32 %v2826, %v3240
      %v3325 = vadd.f32 %v2827, %v3243
      %v3326 = vadd.f32 %v2828, %v3248
      %v3327 = vadd.f32 %v2829, %v3251
      %v3328 = vadd.f32 %v2830, %v3256
      %v3329 = vadd.f32 %v2831, %v3259
      %v3330 = vadd.f32 %v2832, %v3264
      %v3331 = vadd.f32 %v2833, %v3267
      %v3332 = vadd.f32 %v2834, %v3272
      %v3333 = vadd.f32 %v2835, %v3275
      %v3334 = vadd.f32 %v2836, %v3280
      %v3335 = vadd.f32 %v2837, %v3283
      %v3336 = vadd.f32 %v2838, %v3288
      %v3337 = vadd.f32 %v2839, %v3291
      %v3338 = vadd.f32 %v2840, %v3296
      %v3339 = vadd.f32 %v2841, %v3299
      %v3340 = vadd.f32 %v2842, %v3304
      %v3341 = vadd.f32 %v2843, %v3307
      %s3342 = scalar_lea.vmem %s165, 24
      %v3343 = vld [vmem:[%s3342] sm:$0xf]
      %v3344 = vld [vmem:[%s3342 + $0x4] sm:$0xf]
      %v3345 = vld [vmem:[%s3342 + $0xc] sm:$0xf]
      %v3346 = vld [vmem:[%s3342 + $0x10] sm:$0xf]
      %v3347 = vld [vmem:[%s3342 + $0x18] sm:$0xf]
      %v3348 = vld [vmem:[%s3342 + $0x1c] sm:$0xf]
      %v3349 = vld [vmem:[%s3342 + $0x24] sm:$0xf]
      %v3350 = vld [vmem:[%s3342 + $0x28] sm:$0xf]
      %v3351 = vld [vmem:[%s3342 + $0x30] sm:$0xf]
      %v3352 = vld [vmem:[%s3342 + $0x34] sm:$0xf]
      %v3353 = vld [vmem:[%s3342 + $0x3c] sm:$0xf]
      %v3354 = vld [vmem:[%s3342 + $0x40] sm:$0xf]
      %v3355 = vld [vmem:[%s3342 + $0x48] sm:$0xf]
      %v3356 = vld [vmem:[%s3342 + $0x4c] sm:$0xf]
      %v3357 = vld [vmem:[%s3342 + $0x54] sm:$0xf]
      %v3358 = vld [vmem:[%s3342 + $0x58] sm:$0xf]
      %v3359 = vld [vmem:[%s3342 + $0x60] sm:$0xf]
      %v3360 = vld [vmem:[%s3342 + $0x64] sm:$0xf]
      %v3361 = vld [vmem:[%s3342 + $0x6c] sm:$0xf]
      %v3362 = vld [vmem:[%s3342 + $0x70] sm:$0xf]
      %v3363 = vld [vmem:[%s3342 + $0x78] sm:$0xf]
      %v3364 = vld [vmem:[%s3342 + $0x7c] sm:$0xf]
      %v3365 = vld [vmem:[%s3342 + $0x84] sm:$0xf]
      %v3366 = vld [vmem:[%s3342 + $0x88] sm:$0xf]
      %v3367 = vld [vmem:[%s3342 + $0x90] sm:$0xf]
      %v3368 = vld [vmem:[%s3342 + $0x94] sm:$0xf]
      %v3369 = vld [vmem:[%s3342 + $0x9c] sm:$0xf]
      %v3370 = vld [vmem:[%s3342 + $0xa0] sm:$0xf]
      %v3371 = vld [vmem:[%s3342 + $0xa8] sm:$0xf]
      %v3372 = vld [vmem:[%s3342 + $0xac] sm:$0xf]
      %v3373 = vld [vmem:[%s3342 + $0xb4] sm:$0xf]
      %v3374 = vld [vmem:[%s3342 + $0xb8] sm:$0xf]
      %s3375 = scalar_lea.vmem %s1, 384
      %v3376 = vld [vmem:[%s3375] sm:$0xf]
      %v3377 = vld [vmem:[%s3375 + $0x4] sm:$0xf]
      %v3378 = vld [vmem:[%s3375 + $0x8] sm:$0xf]
      %v3379 = vld [vmem:[%s3375 + $0xc] sm:$0xf]
      %v3380 = vld [vmem:[%s3375 + $0x10] sm:$0xf]
      %v3381 = vld [vmem:[%s3375 + $0x14] sm:$0xf]
      %v3382 = vld [vmem:[%s3375 + $0x18] sm:$0xf]
      %v3383 = vld [vmem:[%s3375 + $0x1c] sm:$0xf]
      %v3384 = vld [vmem:[%s3375 + $0x20] sm:$0xf]
      %v3385 = vld [vmem:[%s3375 + $0x24] sm:$0xf]
      %v3386 = vld [vmem:[%s3375 + $0x28] sm:$0xf]
      %v3387 = vld [vmem:[%s3375 + $0x2c] sm:$0xf]
      %v3388 = vld [vmem:[%s3375 + $0x30] sm:$0xf]
      %v3389 = vld [vmem:[%s3375 + $0x34] sm:$0xf]
      %v3390 = vld [vmem:[%s3375 + $0x38] sm:$0xf]
      %v3391 = vld [vmem:[%s3375 + $0x3c] sm:$0xf]
      %v3424 = vunpack.c.l.b16 %v3343
      %v3425 = vunpack.c.l.b16 %v3344
      %v3426 = vunpack.c.l.b16 %v3345
      %v3427 = vunpack.c.l.b16 %v3346
      %v3428 = vunpack.c.l.b16 %v3347
      %v3429 = vunpack.c.l.b16 %v3348
      %v3430 = vunpack.c.l.b16 %v3349
      %v3431 = vunpack.c.l.b16 %v3350
      %v3432 = vunpack.c.l.b16 %v3351
      %v3433 = vunpack.c.l.b16 %v3352
      %v3434 = vunpack.c.l.b16 %v3353
      %v3435 = vunpack.c.l.b16 %v3354
      %v3436 = vunpack.c.l.b16 %v3355
      %v3437 = vunpack.c.l.b16 %v3356
      %v3438 = vunpack.c.l.b16 %v3357
      %v3439 = vunpack.c.l.b16 %v3358
      %v3440 = vunpack.c.l.b16 %v3359
      %v3441 = vunpack.c.l.b16 %v3360
      %v3442 = vunpack.c.l.b16 %v3361
      %v3443 = vunpack.c.l.b16 %v3362
      %v3444 = vunpack.c.l.b16 %v3363
      %v3445 = vunpack.c.l.b16 %v3364
      %v3446 = vunpack.c.l.b16 %v3365
      %v3447 = vunpack.c.l.b16 %v3366
      %v3448 = vunpack.c.l.b16 %v3367
      %v3449 = vunpack.c.l.b16 %v3368
      %v3450 = vunpack.c.l.b16 %v3369
      %v3451 = vunpack.c.l.b16 %v3370
      %v3452 = vunpack.c.l.b16 %v3371
      %v3453 = vunpack.c.l.b16 %v3372
      %v3454 = vunpack.c.l.b16 %v3373
      %v3455 = vunpack.c.l.b16 %v3374
      %v3456 = vpack.c.b16 %v3425, %v3424
      %v3457 = vpack.c.b16 %v3427, %v3426
      %v3458 = vpack.c.b16 %v3429, %v3428
      %v3459 = vpack.c.b16 %v3431, %v3430
      %v3460 = vpack.c.b16 %v3433, %v3432
      %v3461 = vpack.c.b16 %v3435, %v3434
      %v3462 = vpack.c.b16 %v3437, %v3436
      %v3463 = vpack.c.b16 %v3439, %v3438
      %v3464 = vpack.c.b16 %v3441, %v3440
      %v3465 = vpack.c.b16 %v3443, %v3442
      %v3466 = vpack.c.b16 %v3445, %v3444
      %v3467 = vpack.c.b16 %v3447, %v3446
      %v3468 = vpack.c.b16 %v3449, %v3448
      %v3469 = vpack.c.b16 %v3451, %v3450
      %v3470 = vpack.c.b16 %v3453, %v3452
      %v3471 = vpack.c.b16 %v3455, %v3454
      %v3504 = vunpack.c.l.b16 %v3376
      %v3505 = vunpack.c.l.b16 %v3377
      %v3506 = vunpack.c.l.b16 %v3378
      %v3507 = vunpack.c.l.b16 %v3379
      %v3508 = vunpack.c.l.b16 %v3380
      %v3509 = vunpack.c.l.b16 %v3381
      %v3510 = vunpack.c.l.b16 %v3382
      %v3511 = vunpack.c.l.b16 %v3383
      %v3512 = vunpack.c.l.b16 %v3384
      %v3513 = vunpack.c.l.b16 %v3385
      %v3514 = vunpack.c.l.b16 %v3386
      %v3515 = vunpack.c.l.b16 %v3387
      %v3516 = vunpack.c.l.b16 %v3388
      %v3517 = vunpack.c.l.b16 %v3389
      %v3518 = vunpack.c.l.b16 %v3390
      %v3519 = vunpack.c.l.b16 %v3391
      %v3520 = vpack.c.b16 %v3505, %v3504
      %v3521 = vpack.c.b16 %v3507, %v3506
      %v3522 = vpack.c.b16 %v3509, %v3508
      %v3523 = vpack.c.b16 %v3511, %v3510
      %v3524 = vpack.c.b16 %v3513, %v3512
      %v3525 = vpack.c.b16 %v3515, %v3514
      %v3526 = vpack.c.b16 %v3517, %v3516
      %v3527 = vpack.c.b16 %v3519, %v3518
      %3536 = vmatprep.subr.bf16.mxu0 0
      %3537 = vmatpush1.bf16.msra.mxu0 %v3520
      %3538 = vmatprep.subr.bf16.mxu0 0
      %3539 = vmatpush1.bf16.msra.mxu0 %v3521
      %3540 = vmatprep.subr.bf16.mxu0 0
      %3541 = vmatpush1.bf16.msra.mxu0 %v3522
      %3542 = vmatprep.subr.bf16.mxu0 0
      %3543 = vmatpush1.bf16.msra.mxu0 %v3523
      %3544 = vmatprep.subr.bf16.mxu0 0
      %3545 = vmatpush1.bf16.msra.mxu0 %v3524
      %3546 = vmatprep.subr.bf16.mxu0 0
      %3547 = vmatpush1.bf16.msra.mxu0 %v3525
      %3548 = vmatprep.subr.bf16.mxu0 0
      %3549 = vmatpush1.bf16.msra.mxu0 %v3526
      %3550 = vmatprep.subr.bf16.mxu0 0
      %3551 = vmatpush1.bf16.msra.mxu0 %v3527
      %3552 = vmatprep.subr.bf16.mxu0 0
      %3553 = vmatpush1.bf16.msra.mxu0 0
      %3554 = vmatprep.subr.bf16.mxu0 0
      %3555 = vmatpush1.bf16.msra.mxu0 0
      %3556 = vmatprep.subr.bf16.mxu0 0
      %3557 = vmatpush1.bf16.msra.mxu0 0
      %3558 = vmatprep.subr.bf16.mxu0 0
      %3559 = vmatpush1.bf16.msra.mxu0 0
      %3560 = vmatprep.subr.bf16.mxu0 0
      %3561 = vmatpush1.bf16.msra.mxu0 0
      %3562 = vmatprep.subr.bf16.mxu0 0
      %3563 = vmatpush1.bf16.msra.mxu0 0
      %3564 = vmatprep.subr.bf16.mxu0 0
      %3565 = vmatpush1.bf16.msra.mxu0 0
      %3566 = vmatprep.subr.bf16.mxu0 0
      %3567 = vmatpush1.bf16.msra.mxu0 0
      %3568 = vmatprep.mubr.bf16.mxu0 0
      %3569 = vmatmul.mubr.bf16.gmra.mrb[0].mxu0 %v3456
      %v3570 = vpop.f32.mrb[0].mxu0
      %v3571 = vadd.f32 0.0, %v3570
      %v3572 = vpop.f32.mrb[0].mxu0
      %v3573 = vpop.f32.mrb[0].mxu0
      %v3574 = vadd.f32 0.0, %v3573
      %v3575 = vpop.f32.mrb[0].mxu0
      %3576 = vmatprep.mubr.bf16.mxu0 0
      %3577 = vmatmul.mubr.bf16.gmra.mrb[0].mxu0 %v3457
      %v3578 = vpop.f32.mrb[0].mxu0
      %v3579 = vadd.f32 0.0, %v3578
      %v3580 = vpop.f32.mrb[0].mxu0
      %v3581 = vpop.f32.mrb[0].mxu0
      %v3582 = vadd.f32 0.0, %v3581
      %v3583 = vpop.f32.mrb[0].mxu0
      %3584 = vmatprep.mubr.bf16.mxu0 0
      %3585 = vmatmul.mubr.bf16.gmra.mrb[0].mxu0 %v3458
      %v3586 = vpop.f32.mrb[0].mxu0
      %v3587 = vadd.f32 0.0, %v3586
      %v3588 = vpop.f32.mrb[0].mxu0
      %v3589 = vpop.f32.mrb[0].mxu0
      %v3590 = vadd.f32 0.0, %v3589
      %v3591 = vpop.f32.mrb[0].mxu0
      %3592 = vmatprep.mubr.bf16.mxu0 0
      %3593 = vmatmul.mubr.bf16.gmra.mrb[0].mxu0 %v3459
      %v3594 = vpop.f32.mrb[0].mxu0
      %v3595 = vadd.f32 0.0, %v3594
      %v3596 = vpop.f32.mrb[0].mxu0
      %v3597 = vpop.f32.mrb[0].mxu0
      %v3598 = vadd.f32 0.0, %v3597
      %v3599 = vpop.f32.mrb[0].mxu0
      %3600 = vmatprep.mubr.bf16.mxu0 0
      %3601 = vmatmul.mubr.bf16.gmra.mrb[0].mxu0 %v3460
      %v3602 = vpop.f32.mrb[0].mxu0
      %v3603 = vadd.f32 0.0, %v3602
      %v3604 = vpop.f32.mrb[0].mxu0
      %v3605 = vpop.f32.mrb[0].mxu0
      %v3606 = vadd.f32 0.0, %v3605
      %v3607 = vpop.f32.mrb[0].mxu0
      %3608 = vmatprep.mubr.bf16.mxu0 0
      %3609 = vmatmul.mubr.bf16.gmra.mrb[0].mxu0 %v3461
      %v3610 = vpop.f32.mrb[0].mxu0
      %v3611 = vadd.f32 0.0, %v3610
      %v3612 = vpop.f32.mrb[0].mxu0
      %v3613 = vpop.f32.mrb[0].mxu0
      %v3614 = vadd.f32 0.0, %v3613
      %v3615 = vpop.f32.mrb[0].mxu0
      %3616 = vmatprep.mubr.bf16.mxu0 0
      %3617 = vmatmul.mubr.bf16.gmra.mrb[0].mxu0 %v3462
      %v3618 = vpop.f32.mrb[0].mxu0
      %v3619 = vadd.f32 0.0, %v3618
      %v3620 = vpop.f32.mrb[0].mxu0
      %v3621 = vpop.f32.mrb[0].mxu0
      %v3622 = vadd.f32 0.0, %v3621
      %v3623 = vpop.f32.mrb[0].mxu0
      %3624 = vmatprep.mubr.bf16.mxu0 0
      %3625 = vmatmul.mubr.bf16.gmra.mrb[0].mxu0 %v3463
      %v3626 = vpop.f32.mrb[0].mxu0
      %v3627 = vadd.f32 0.0, %v3626
      %v3628 = vpop.f32.mrb[0].mxu0
      %v3629 = vpop.f32.mrb[0].mxu0
      %v3630 = vadd.f32 0.0, %v3629
      %v3631 = vpop.f32.mrb[0].mxu0
      %3632 = vmatprep.mubr.bf16.mxu0 0
      %3633 = vmatmul.mubr.bf16.gmra.mrb[0].mxu0 %v3464
      %v3634 = vpop.f32.mrb[0].mxu0
      %v3635 = vadd.f32 0.0, %v3634
      %v3636 = vpop.f32.mrb[0].mxu0
      %v3637 = vpop.f32.mrb[0].mxu0
      %v3638 = vadd.f32 0.0, %v3637
      %v3639 = vpop.f32.mrb[0].mxu0
      %3640 = vmatprep.mubr.bf16.mxu0 0
      %3641 = vmatmul.mubr.bf16.gmra.mrb[0].mxu0 %v3465
      %v3642 = vpop.f32.mrb[0].mxu0
      %v3643 = vadd.f32 0.0, %v3642
      %v3644 = vpop.f32.mrb[0].mxu0
      %v3645 = vpop.f32.mrb[0].mxu0
      %v3646 = vadd.f32 0.0, %v3645
      %v3647 = vpop.f32.mrb[0].mxu0
      %3648 = vmatprep.mubr.bf16.mxu0 0
      %3649 = vmatmul.mubr.bf16.gmra.mrb[0].mxu0 %v3466
      %v3650 = vpop.f32.mrb[0].mxu0
      %v3651 = vadd.f32 0.0, %v3650
      %v3652 = vpop.f32.mrb[0].mxu0
      %v3653 = vpop.f32.mrb[0].mxu0
      %v3654 = vadd.f32 0.0, %v3653
      %v3655 = vpop.f32.mrb[0].mxu0
      %3656 = vmatprep.mubr.bf16.mxu0 0
      %3657 = vmatmul.mubr.bf16.gmra.mrb[0].mxu0 %v3467
      %v3658 = vpop.f32.mrb[0].mxu0
      %v3659 = vadd.f32 0.0, %v3658
      %v3660 = vpop.f32.mrb[0].mxu0
      %v3661 = vpop.f32.mrb[0].mxu0
      %v3662 = vadd.f32 0.0, %v3661
      %v3663 = vpop.f32.mrb[0].mxu0
      %3664 = vmatprep.mubr.bf16.mxu0 0
      %3665 = vmatmul.mubr.bf16.gmra.mrb[0].mxu0 %v3468
      %v3666 = vpop.f32.mrb[0].mxu0
      %v3667 = vadd.f32 0.0, %v3666
      %v3668 = vpop.f32.mrb[0].mxu0
      %v3669 = vpop.f32.mrb[0].mxu0
      %v3670 = vadd.f32 0.0, %v3669
      %v3671 = vpop.f32.mrb[0].mxu0
      %3672 = vmatprep.mubr.bf16.mxu0 0
      %3673 = vmatmul.mubr.bf16.gmra.mrb[0].mxu0 %v3469
      %v3674 = vpop.f32.mrb[0].mxu0
      %v3675 = vadd.f32 0.0, %v3674
      %v3676 = vpop.f32.mrb[0].mxu0
      %v3677 = vpop.f32.mrb[0].mxu0
      %v3678 = vadd.f32 0.0, %v3677
      %v3679 = vpop.f32.mrb[0].mxu0
      %3680 = vmatprep.mubr.bf16.mxu0 0
      %3681 = vmatmul.mubr.bf16.gmra.mrb[0].mxu0 %v3470
      %v3682 = vpop.f32.mrb[0].mxu0
      %v3683 = vadd.f32 0.0, %v3682
      %v3684 = vpop.f32.mrb[0].mxu0
      %v3685 = vpop.f32.mrb[0].mxu0
      %v3686 = vadd.f32 0.0, %v3685
      %v3687 = vpop.f32.mrb[0].mxu0
      %3688 = vmatprep.mubr.bf16.mxu0 0
      %3689 = vmatmul.mubr.bf16.gmra.mrb[0].mxu0 %v3471
      %v3690 = vpop.f32.mrb[0].mxu0
      %v3691 = vadd.f32 0.0, %v3690
      %v3692 = vpop.f32.mrb[0].mxu0
      %v3693 = vpop.f32.mrb[0].mxu0
      %v3694 = vadd.f32 0.0, %v3693
      %v3695 = vpop.f32.mrb[0].mxu0
      %3696 = vdwg.mxu0
      %v3697 = vadd.f32 %v3310, %v3571
      %v3698 = vadd.f32 %v3311, %v3574
      %v3699 = vadd.f32 %v3312, %v3579
      %v3700 = vadd.f32 %v3313, %v3582
      %v3701 = vadd.f32 %v3314, %v3587
      %v3702 = vadd.f32 %v3315, %v3590
      %v3703 = vadd.f32 %v3316, %v3595
      %v3704 = vadd.f32 %v3317, %v3598
      %v3705 = vadd.f32 %v3318, %v3603
      %v3706 = vadd.f32 %v3319, %v3606
      %v3707 = vadd.f32 %v3320, %v3611
      %v3708 = vadd.f32 %v3321, %v3614
      %v3709 = vadd.f32 %v3322, %v3619
      %v3710 = vadd.f32 %v3323, %v3622
      %v3711 = vadd.f32 %v3324, %v3627
      %v3712 = vadd.f32 %v3325, %v3630
      %v3713 = vadd.f32 %v3326, %v3635
      %v3714 = vadd.f32 %v3327, %v3638
      %v3715 = vadd.f32 %v3328, %v3643
      %v3716 = vadd.f32 %v3329, %v3646
      %v3717 = vadd.f32 %v3330, %v3651
      %v3718 = vadd.f32 %v3331, %v3654
      %v3719 = vadd.f32 %v3332, %v3659
      %v3720 = vadd.f32 %v3333, %v3662
      %v3721 = vadd.f32 %v3334, %v3667
      %v3722 = vadd.f32 %v3335, %v3670
      %v3723 = vadd.f32 %v3336, %v3675
      %v3724 = vadd.f32 %v3337, %v3678
      %v3725 = vadd.f32 %v3338, %v3683
      %v3726 = vadd.f32 %v3339, %v3686
      %v3727 = vadd.f32 %v3340, %v3691
      %v3728 = vadd.f32 %v3341, %v3694
      %v3729 = vld [vmem:[%s3342] sm:$0xf]
      %v3730 = vld [vmem:[%s3342 + $0x4] sm:$0xf]
      %v3731 = vld [vmem:[%s3342 + $0x8] sm:$0x1]
      %v3732 = vld [vmem:[%s3342 + $0xc] sm:$0xf]
      %v3733 = vld [vmem:[%s3342 + $0x10] sm:$0xf]
      %v3734 = vld [vmem:[%s3342 + $0x14] sm:$0x1]
      %v3735 = vld [vmem:[%s3342 + $0x18] sm:$0xf]
      %v3736 = vld [vmem:[%s3342 + $0x1c] sm:$0xf]
      %v3737 = vld [vmem:[%s3342 + $0x20] sm:$0x1]
      %v3738 = vld [vmem:[%s3342 + $0x24] sm:$0xf]
      %v3739 = vld [vmem:[%s3342 + $0x28] sm:$0xf]
      %v3740 = vld [vmem:[%s3342 + $0x2c] sm:$0x1]
      %v3741 = vld [vmem:[%s3342 + $0x30] sm:$0xf]
      %v3742 = vld [vmem:[%s3342 + $0x34] sm:$0xf]
      %v3743 = vld [vmem:[%s3342 + $0x38] sm:$0x1]
      %v3744 = vld [vmem:[%s3342 + $0x3c] sm:$0xf]
      %v3745 = vld [vmem:[%s3342 + $0x40] sm:$0xf]
      %v3746 = vld [vmem:[%s3342 + $0x44] sm:$0x1]
      %v3747 = vld [vmem:[%s3342 + $0x48] sm:$0xf]
      %v3748 = vld [vmem:[%s3342 + $0x4c] sm:$0xf]
      %v3749 = vld [vmem:[%s3342 + $0x50] sm:$0x1]
      %v3750 = vld [vmem:[%s3342 + $0x54] sm:$0xf]
      %v3751 = vld [vmem:[%s3342 + $0x58] sm:$0xf]
      %v3752 = vld [vmem:[%s3342 + $0x5c] sm:$0x1]
      %v3753 = vld [vmem:[%s3342 + $0x60] sm:$0xf]
      %v3754 = vld [vmem:[%s3342 + $0x64] sm:$0xf]
      %v3755 = vld [vmem:[%s3342 + $0x68] sm:$0x1]
      %v3756 = vld [vmem:[%s3342 + $0x6c] sm:$0xf]
      %v3757 = vld [vmem:[%s3342 + $0x70] sm:$0xf]
      %v3758 = vld [vmem:[%s3342 + $0x74] sm:$0x1]
      %v3759 = vld [vmem:[%s3342 + $0x78] sm:$0xf]
      %v3760 = vld [vmem:[%s3342 + $0x7c] sm:$0xf]
      %v3761 = vld [vmem:[%s3342 + $0x80] sm:$0x1]
      %v3762 = vld [vmem:[%s3342 + $0x84] sm:$0xf]
      %v3763 = vld [vmem:[%s3342 + $0x88] sm:$0xf]
      %v3764 = vld [vmem:[%s3342 + $0x8c] sm:$0x1]
      %v3765 = vld [vmem:[%s3342 + $0x90] sm:$0xf]
      %v3766 = vld [vmem:[%s3342 + $0x94] sm:$0xf]
      %v3767 = vld [vmem:[%s3342 + $0x98] sm:$0x1]
      %v3768 = vld [vmem:[%s3342 + $0x9c] sm:$0xf]
      %v3769 = vld [vmem:[%s3342 + $0xa0] sm:$0xf]
      %v3770 = vld [vmem:[%s3342 + $0xa4] sm:$0x1]
      %v3771 = vld [vmem:[%s3342 + $0xa8] sm:$0xf]
      %v3772 = vld [vmem:[%s3342 + $0xac] sm:$0xf]
      %v3773 = vld [vmem:[%s3342 + $0xb0] sm:$0x1]
      %v3774 = vld [vmem:[%s3342 + $0xb4] sm:$0xf]
      %v3775 = vld [vmem:[%s3342 + $0xb8] sm:$0xf]
      %v3776 = vld [vmem:[%s3342 + $0xbc] sm:$0x1]
      %v3778 = vshrl.u32 %v3729, 16
      %v3780 = vrot.slane %v3778, 4
      %v3781 = vshll.u32 %v3729, 16
      %v3783 = vrot.slane %v3781, 5
      %v3784 = vor.u32 %v3780, %v3783
      %v3785 = vrot.slane %v3784, 4
      %v3787 = vshll.u32 %v3730, 16
      %v3789 = vrot.slane %v3787, 5
      %v3790 = vsel %vm238, %v3785, %v3789
      %v3791 = vshrl.u32 %v3730, 16
      %v3793 = vrot.slane %v3791, 4
      %v3794 = vor.u32 %v3793, %v3789
      %v3795 = vrot.slane %v3794, 4
      %v3797 = vshll.u32 %v3731, 16
      %v3799 = vrot.slane %v3797, 5
      %v3800 = vsel %vm238, %v3795, %v3799
      %v3802 = vshrl.u32 %v3732, 16
      %v3804 = vrot.slane %v3802, 4
      %v3805 = vshll.u32 %v3732, 16
      %v3807 = vrot.slane %v3805, 5
      %v3808 = vor.u32 %v3804, %v3807
      %v3809 = vrot.slane %v3808, 4
      %v3811 = vshll.u32 %v3733, 16
      %v3813 = vrot.slane %v3811, 5
      %v3814 = vsel %vm238, %v3809, %v3813
      %v3815 = vshrl.u32 %v3733, 16
      %v3817 = vrot.slane %v3815, 4
      %v3818 = vor.u32 %v3817, %v3813
      %v3819 = vrot.slane %v3818, 4
      %v3821 = vshll.u32 %v3734, 16
      %v3823 = vrot.slane %v3821, 5
      %v3824 = vsel %vm238, %v3819, %v3823
      %v3826 = vshrl.u32 %v3735, 16
      %v3828 = vrot.slane %v3826, 4
      %v3829 = vshll.u32 %v3735, 16
      %v3831 = vrot.slane %v3829, 5
      %v3832 = vor.u32 %v3828, %v3831
      %v3833 = vrot.slane %v3832, 4
      %v3835 = vshll.u32 %v3736, 16
      %v3837 = vrot.slane %v3835, 5
      %v3838 = vsel %vm238, %v3833, %v3837
      %v3839 = vshrl.u32 %v3736, 16
      %v3841 = vrot.slane %v3839, 4
      %v3842 = vor.u32 %v3841, %v3837
      %v3843 = vrot.slane %v3842, 4
      %v3845 = vshll.u32 %v3737, 16
      %v3847 = vrot.slane %v3845, 5
      %v3848 = vsel %vm238, %v3843, %v3847
      %v3850 = vshrl.u32 %v3738, 16
      %v3852 = vrot.slane %v3850, 4
      %v3853 = vshll.u32 %v3738, 16
      %v3855 = vrot.slane %v3853, 5
      %v3856 = vor.u32 %v3852, %v3855
      %v3857 = vrot.slane %v3856, 4
      %v3859 = vshll.u32 %v3739, 16
      %v3861 = vrot.slane %v3859, 5
      %v3862 = vsel %vm238, %v3857, %v3861
      %v3863 = vshrl.u32 %v3739, 16
      %v3865 = vrot.slane %v3863, 4
      %v3866 = vor.u32 %v3865, %v3861
      %v3867 = vrot.slane %v3866, 4
      %v3869 = vshll.u32 %v3740, 16
      %v3871 = vrot.slane %v3869, 5
      %v3872 = vsel %vm238, %v3867, %v3871
      %v3874 = vshrl.u32 %v3741, 16
      %v3876 = vrot.slane %v3874, 4
      %v3877 = vshll.u32 %v3741, 16
      %v3879 = vrot.slane %v3877, 5
      %v3880 = vor.u32 %v3876, %v3879
      %v3881 = vrot.slane %v3880, 4
      %v3883 = vshll.u32 %v3742, 16
      %v3885 = vrot.slane %v3883, 5
      %v3886 = vsel %vm238, %v3881, %v3885
      %v3887 = vshrl.u32 %v3742, 16
      %v3889 = vrot.slane %v3887, 4
      %v3890 = vor.u32 %v3889, %v3885
      %v3891 = vrot.slane %v3890, 4
      %v3893 = vshll.u32 %v3743, 16
      %v3895 = vrot.slane %v3893, 5
      %v3896 = vsel %vm238, %v3891, %v3895
      %v3898 = vshrl.u32 %v3744, 16
      %v3900 = vrot.slane %v3898, 4
      %v3901 = vshll.u32 %v3744, 16
      %v3903 = vrot.slane %v3901, 5
      %v3904 = vor.u32 %v3900, %v3903
      %v3905 = vrot.slane %v3904, 4
      %v3907 = vshll.u32 %v3745, 16
      %v3909 = vrot.slane %v3907, 5
      %v3910 = vsel %vm238, %v3905, %v3909
      %v3911 = vshrl.u32 %v3745, 16
      %v3913 = vrot.slane %v3911, 4
      %v3914 = vor.u32 %v3913, %v3909
      %v3915 = vrot.slane %v3914, 4
      %v3917 = vshll.u32 %v3746, 16
      %v3919 = vrot.slane %v3917, 5
      %v3920 = vsel %vm238, %v3915, %v3919
      %v3922 = vshrl.u32 %v3747, 16
      %v3924 = vrot.slane %v3922, 4
      %v3925 = vshll.u32 %v3747, 16
      %v3927 = vrot.slane %v3925, 5
      %v3928 = vor.u32 %v3924, %v3927
      %v3929 = vrot.slane %v3928, 4
      %v3931 = vshll.u32 %v3748, 16
      %v3933 = vrot.slane %v3931, 5
      %v3934 = vsel %vm238, %v3929, %v3933
      %v3935 = vshrl.u32 %v3748, 16
      %v3937 = vrot.slane %v3935, 4
      %v3938 = vor.u32 %v3937, %v3933
      %v3939 = vrot.slane %v3938, 4
      %v3941 = vshll.u32 %v3749, 16
      %v3943 = vrot.slane %v3941, 5
      %v3944 = vsel %vm238, %v3939, %v3943
      %v3946 = vshrl.u32 %v3750, 16
      %v3948 = vrot.slane %v3946, 4
      %v3949 = vshll.u32 %v3750, 16
      %v3951 = vrot.slane %v3949, 5
      %v3952 = vor.u32 %v3948, %v3951
      %v3953 = vrot.slane %v3952, 4
      %v3955 = vshll.u32 %v3751, 16
      %v3957 = vrot.slane %v3955, 5
      %v3958 = vsel %vm238, %v3953, %v3957
      %v3959 = vshrl.u32 %v3751, 16
      %v3961 = vrot.slane %v3959, 4
      %v3962 = vor.u32 %v3961, %v3957
      %v3963 = vrot.slane %v3962, 4
      %v3965 = vshll.u32 %v3752, 16
      %v3967 = vrot.slane %v3965, 5
      %v3968 = vsel %vm238, %v3963, %v3967
      %v3970 = vshrl.u32 %v3753, 16
      %v3972 = vrot.slane %v3970, 4
      %v3973 = vshll.u32 %v3753, 16
      %v3975 = vrot.slane %v3973, 5
      %v3976 = vor.u32 %v3972, %v3975
      %v3977 = vrot.slane %v3976, 4
      %v3979 = vshll.u32 %v3754, 16
      %v3981 = vrot.slane %v3979, 5
      %v3982 = vsel %vm238, %v3977, %v3981
      %v3983 = vshrl.u32 %v3754, 16
      %v3985 = vrot.slane %v3983, 4
      %v3986 = vor.u32 %v3985, %v3981
      %v3987 = vrot.slane %v3986, 4
      %v3989 = vshll.u32 %v3755, 16
      %v3991 = vrot.slane %v3989, 5
      %v3992 = vsel %vm238, %v3987, %v3991
      %v3994 = vshrl.u32 %v3756, 16
      %v3996 = vrot.slane %v3994, 4
      %v3997 = vshll.u32 %v3756, 16
      %v3999 = vrot.slane %v3997, 5
      %v4000 = vor.u32 %v3996, %v3999
      %v4001 = vrot.slane %v4000, 4
      %v4003 = vshll.u32 %v3757, 16
      %v4005 = vrot.slane %v4003, 5
      %v4006 = vsel %vm238, %v4001, %v4005
      %v4007 = vshrl.u32 %v3757, 16
      %v4009 = vrot.slane %v4007, 4
      %v4010 = vor.u32 %v4009, %v4005
      %v4011 = vrot.slane %v4010, 4
      %v4013 = vshll.u32 %v3758, 16
      %v4015 = vrot.slane %v4013, 5
      %v4016 = vsel %vm238, %v4011, %v4015
      %v4018 = vshrl.u32 %v3759, 16
      %v4020 = vrot.slane %v4018, 4
      %v4021 = vshll.u32 %v3759, 16
      %v4023 = vrot.slane %v4021, 5
      %v4024 = vor.u32 %v4020, %v4023
      %v4025 = vrot.slane %v4024, 4
      %v4027 = vshll.u32 %v3760, 16
      %v4029 = vrot.slane %v4027, 5
      %v4030 = vsel %vm238, %v4025, %v4029
      %v4031 = vshrl.u32 %v3760, 16
      %v4033 = vrot.slane %v4031, 4
      %v4034 = vor.u32 %v4033, %v4029
      %v4035 = vrot.slane %v4034, 4
      %v4037 = vshll.u32 %v3761, 16
      %v4039 = vrot.slane %v4037, 5
      %v4040 = vsel %vm238, %v4035, %v4039
      %v4042 = vshrl.u32 %v3762, 16
      %v4044 = vrot.slane %v4042, 4
      %v4045 = vshll.u32 %v3762, 16
      %v4047 = vrot.slane %v4045, 5
      %v4048 = vor.u32 %v4044, %v4047
      %v4049 = vrot.slane %v4048, 4
      %v4051 = vshll.u32 %v3763, 16
      %v4053 = vrot.slane %v4051, 5
      %v4054 = vsel %vm238, %v4049, %v4053
      %v4055 = vshrl.u32 %v3763, 16
      %v4057 = vrot.slane %v4055, 4
      %v4058 = vor.u32 %v4057, %v4053
      %v4059 = vrot.slane %v4058, 4
      %v4061 = vshll.u32 %v3764, 16
      %v4063 = vrot.slane %v4061, 5
      %v4064 = vsel %vm238, %v4059, %v4063
      %v4066 = vshrl.u32 %v3765, 16
      %v4068 = vrot.slane %v4066, 4
      %v4069 = vshll.u32 %v3765, 16
      %v4071 = vrot.slane %v4069, 5
      %v4072 = vor.u32 %v4068, %v4071
      %v4073 = vrot.slane %v4072, 4
      %v4075 = vshll.u32 %v3766, 16
      %v4077 = vrot.slane %v4075, 5
      %v4078 = vsel %vm238, %v4073, %v4077
      %v4079 = vshrl.u32 %v3766, 16
      %v4081 = vrot.slane %v4079, 4
      %v4082 = vor.u32 %v4081, %v4077
      %v4083 = vrot.slane %v4082, 4
      %v4085 = vshll.u32 %v3767, 16
      %v4087 = vrot.slane %v4085, 5
      %v4088 = vsel %vm238, %v4083, %v4087
      %v4090 = vshrl.u32 %v3768, 16
      %v4092 = vrot.slane %v4090, 4
      %v4093 = vshll.u32 %v3768, 16
      %v4095 = vrot.slane %v4093, 5
      %v4096 = vor.u32 %v4092, %v4095
      %v4097 = vrot.slane %v4096, 4
      %v4099 = vshll.u32 %v3769, 16
      %v4101 = vrot.slane %v4099, 5
      %v4102 = vsel %vm238, %v4097, %v4101
      %v4103 = vshrl.u32 %v3769, 16
      %v4105 = vrot.slane %v4103, 4
      %v4106 = vor.u32 %v4105, %v4101
      %v4107 = vrot.slane %v4106, 4
      %v4109 = vshll.u32 %v3770, 16
      %v4111 = vrot.slane %v4109, 5
      %v4112 = vsel %vm238, %v4107, %v4111
      %v4114 = vshrl.u32 %v3771, 16
      %v4116 = vrot.slane %v4114, 4
      %v4117 = vshll.u32 %v3771, 16
      %v4119 = vrot.slane %v4117, 5
      %v4120 = vor.u32 %v4116, %v4119
      %v4121 = vrot.slane %v4120, 4
      %v4123 = vshll.u32 %v3772, 16
      %v4125 = vrot.slane %v4123, 5
      %v4126 = vsel %vm238, %v4121, %v4125
      %v4127 = vshrl.u32 %v3772, 16
      %v4129 = vrot.slane %v4127, 4
      %v4130 = vor.u32 %v4129, %v4125
      %v4131 = vrot.slane %v4130, 4
      %v4133 = vshll.u32 %v3773, 16
      %v4135 = vrot.slane %v4133, 5
      %v4136 = vsel %vm238, %v4131, %v4135
      %v4138 = vshrl.u32 %v3774, 16
      %v4140 = vrot.slane %v4138, 4
      %v4141 = vshll.u32 %v3774, 16
      %v4143 = vrot.slane %v4141, 5
      %v4144 = vor.u32 %v4140, %v4143
      %v4145 = vrot.slane %v4144, 4
      %v4147 = vshll.u32 %v3775, 16
      %v4149 = vrot.slane %v4147, 5
      %v4150 = vsel %vm238, %v4145, %v4149
      %v4151 = vshrl.u32 %v3775, 16
      %v4153 = vrot.slane %v4151, 4
      %v4154 = vor.u32 %v4153, %v4149
      %v4155 = vrot.slane %v4154, 4
      %v4157 = vshll.u32 %v3776, 16
      %v4159 = vrot.slane %v4157, 5
      %v4160 = vsel %vm238, %v4155, %v4159
      %s4161 = scalar_lea.vmem %s1, 448
      %v4162 = vld [vmem:[%s4161] sm:$0xf]
      %v4163 = vld [vmem:[%s4161 + $0x4] sm:$0xf]
      %v4164 = vld [vmem:[%s4161 + $0x8] sm:$0xf]
      %v4165 = vld [vmem:[%s4161 + $0xc] sm:$0xf]
      %v4166 = vld [vmem:[%s4161 + $0x10] sm:$0xf]
      %v4167 = vld [vmem:[%s4161 + $0x14] sm:$0xf]
      %v4168 = vld [vmem:[%s4161 + $0x18] sm:$0xf]
      %v4169 = vld [vmem:[%s4161 + $0x1c] sm:$0xf]
      %v4170 = vld [vmem:[%s4161 + $0x20] sm:$0xf]
      %v4171 = vld [vmem:[%s4161 + $0x24] sm:$0xf]
      %v4172 = vld [vmem:[%s4161 + $0x28] sm:$0xf]
      %v4173 = vld [vmem:[%s4161 + $0x2c] sm:$0xf]
      %v4174 = vld [vmem:[%s4161 + $0x30] sm:$0xf]
      %v4175 = vld [vmem:[%s4161 + $0x34] sm:$0xf]
      %v4176 = vld [vmem:[%s4161 + $0x38] sm:$0xf]
      %v4177 = vld [vmem:[%s4161 + $0x3c] sm:$0xf]
      %v4178 = vunpack.c.l.b16 %v3790
      %v4179 = vunpack.c.l.b16 %v3800
      %v4180 = vunpack.c.l.b16 %v3814
      %v4181 = vunpack.c.l.b16 %v3824
      %v4182 = vunpack.c.l.b16 %v3838
      %v4183 = vunpack.c.l.b16 %v3848
      %v4184 = vunpack.c.l.b16 %v3862
      %v4185 = vunpack.c.l.b16 %v3872
      %v4186 = vunpack.c.l.b16 %v3886
      %v4187 = vunpack.c.l.b16 %v3896
      %v4188 = vunpack.c.l.b16 %v3910
      %v4189 = vunpack.c.l.b16 %v3920
      %v4190 = vunpack.c.l.b16 %v3934
      %v4191 = vunpack.c.l.b16 %v3944
      %v4192 = vunpack.c.l.b16 %v3958
      %v4193 = vunpack.c.l.b16 %v3968
      %v4194 = vunpack.c.l.b16 %v3982
      %v4195 = vunpack.c.l.b16 %v3992
      %v4196 = vunpack.c.l.b16 %v4006
      %v4197 = vunpack.c.l.b16 %v4016
      %v4198 = vunpack.c.l.b16 %v4030
      %v4199 = vunpack.c.l.b16 %v4040
      %v4200 = vunpack.c.l.b16 %v4054
      %v4201 = vunpack.c.l.b16 %v4064
      %v4202 = vunpack.c.l.b16 %v4078
      %v4203 = vunpack.c.l.b16 %v4088
      %v4204 = vunpack.c.l.b16 %v4102
      %v4205 = vunpack.c.l.b16 %v4112
      %v4206 = vunpack.c.l.b16 %v4126
      %v4207 = vunpack.c.l.b16 %v4136
      %v4208 = vunpack.c.l.b16 %v4150
      %v4209 = vunpack.c.l.b16 %v4160
      %v4210 = vpack.c.b16 %v4179, %v4178
      %v4211 = vpack.c.b16 %v4181, %v4180
      %v4212 = vpack.c.b16 %v4183, %v4182
      %v4213 = vpack.c.b16 %v4185, %v4184
      %v4214 = vpack.c.b16 %v4187, %v4186
      %v4215 = vpack.c.b16 %v4189, %v4188
      %v4216 = vpack.c.b16 %v4191, %v4190
      %v4217 = vpack.c.b16 %v4193, %v4192
      %v4218 = vpack.c.b16 %v4195, %v4194
      %v4219 = vpack.c.b16 %v4197, %v4196
      %v4220 = vpack.c.b16 %v4199, %v4198
      %v4221 = vpack.c.b16 %v4201, %v4200
      %v4222 = vpack.c.b16 %v4203, %v4202
      %v4223 = vpack.c.b16 %v4205, %v4204
      %v4224 = vpack.c.b16 %v4207, %v4206
      %v4225 = vpack.c.b16 %v4209, %v4208
      %v4258 = vunpack.c.l.b16 %v4162
      %v4259 = vunpack.c.l.b16 %v4163
      %v4260 = vunpack.c.l.b16 %v4164
      %v4261 = vunpack.c.l.b16 %v4165
      %v4262 = vunpack.c.l.b16 %v4166
      %v4263 = vunpack.c.l.b16 %v4167
      %v4264 = vunpack.c.l.b16 %v4168
      %v4265 = vunpack.c.l.b16 %v4169
      %v4266 = vunpack.c.l.b16 %v4170
      %v4267 = vunpack.c.l.b16 %v4171
      %v4268 = vunpack.c.l.b16 %v4172
      %v4269 = vunpack.c.l.b16 %v4173
      %v4270 = vunpack.c.l.b16 %v4174
      %v4271 = vunpack.c.l.b16 %v4175
      %v4272 = vunpack.c.l.b16 %v4176
      %v4273 = vunpack.c.l.b16 %v4177
      %v4274 = vpack.c.b16 %v4259, %v4258
      %v4275 = vpack.c.b16 %v4261, %v4260
      %v4276 = vpack.c.b16 %v4263, %v4262
      %v4277 = vpack.c.b16 %v4265, %v4264
      %v4278 = vpack.c.b16 %v4267, %v4266
      %v4279 = vpack.c.b16 %v4269, %v4268
      %v4280 = vpack.c.b16 %v4271, %v4270
      %v4281 = vpack.c.b16 %v4273, %v4272
      %4290 = vmatprep.subr.bf16.mxu0 0
      %4291 = vmatpush1.bf16.msra.mxu0 %v4274
      %4292 = vmatprep.subr.bf16.mxu0 0
      %4293 = vmatpush1.bf16.msra.mxu0 %v4275
      %4294 = vmatprep.subr.bf16.mxu0 0
      %4295 = vmatpush1.bf16.msra.mxu0 %v4276
      %4296 = vmatprep.subr.bf16.mxu0 0
      %4297 = vmatpush1.bf16.msra.mxu0 %v4277
      %4298 = vmatprep.subr.bf16.mxu0 0
      %4299 = vmatpush1.bf16.msra.mxu0 %v4278
      %4300 = vmatprep.subr.bf16.mxu0 0
      %4301 = vmatpush1.bf16.msra.mxu0 %v4279
      %4302 = vmatprep.subr.bf16.mxu0 0
      %4303 = vmatpush1.bf16.msra.mxu0 %v4280
      %4304 = vmatprep.subr.bf16.mxu0 0
      %4305 = vmatpush1.bf16.msra.mxu0 %v4281
      %4306 = vmatprep.subr.bf16.mxu0 0
      %4307 = vmatpush1.bf16.msra.mxu0 0
      %4308 = vmatprep.subr.bf16.mxu0 0
      %4309 = vmatpush1.bf16.msra.mxu0 0
      %4310 = vmatprep.subr.bf16.mxu0 0
      %4311 = vmatpush1.bf16.msra.mxu0 0
      %4312 = vmatprep.subr.bf16.mxu0 0
      %4313 = vmatpush1.bf16.msra.mxu0 0
      %4314 = vmatprep.subr.bf16.mxu0 0
      %4315 = vmatpush1.bf16.msra.mxu0 0
      %4316 = vmatprep.subr.bf16.mxu0 0
      %4317 = vmatpush1.bf16.msra.mxu0 0
      %4318 = vmatprep.subr.bf16.mxu0 0
      %4319 = vmatpush1.bf16.msra.mxu0 0
      %4320 = vmatprep.subr.bf16.mxu0 0
      %4321 = vmatpush1.bf16.msra.mxu0 0
      %4322 = vmatprep.mubr.bf16.mxu0 0
      %4323 = vmatmul.mubr.bf16.gmra.mrb[0].mxu0 %v4210
      %v4324 = vpop.f32.mrb[0].mxu0
      %v4325 = vadd.f32 0.0, %v4324
      %v4326 = vpop.f32.mrb[0].mxu0
      %v4327 = vpop.f32.mrb[0].mxu0
      %v4328 = vadd.f32 0.0, %v4327
      %v4329 = vpop.f32.mrb[0].mxu0
      %4330 = vmatprep.mubr.bf16.mxu0 0
      %4331 = vmatmul.mubr.bf16.gmra.mrb[0].mxu0 %v4211
      %v4332 = vpop.f32.mrb[0].mxu0
      %v4333 = vadd.f32 0.0, %v4332
      %v4334 = vpop.f32.mrb[0].mxu0
      %v4335 = vpop.f32.mrb[0].mxu0
      %v4336 = vadd.f32 0.0, %v4335
      %v4337 = vpop.f32.mrb[0].mxu0
      %4338 = vmatprep.mubr.bf16.mxu0 0
      %4339 = vmatmul.mubr.bf16.gmra.mrb[0].mxu0 %v4212
      %v4340 = vpop.f32.mrb[0].mxu0
      %v4341 = vadd.f32 0.0, %v4340
      %v4342 = vpop.f32.mrb[0].mxu0
      %v4343 = vpop.f32.mrb[0].mxu0
      %v4344 = vadd.f32 0.0, %v4343
      %v4345 = vpop.f32.mrb[0].mxu0
      %4346 = vmatprep.mubr.bf16.mxu0 0
      %4347 = vmatmul.mubr.bf16.gmra.mrb[0].mxu0 %v4213
      %v4348 = vpop.f32.mrb[0].mxu0
      %v4349 = vadd.f32 0.0, %v4348
      %v4350 = vpop.f32.mrb[0].mxu0
      %v4351 = vpop.f32.mrb[0].mxu0
      %v4352 = vadd.f32 0.0, %v4351
      %v4353 = vpop.f32.mrb[0].mxu0
      %4354 = vmatprep.mubr.bf16.mxu0 0
      %4355 = vmatmul.mubr.bf16.gmra.mrb[0].mxu0 %v4214
      %v4356 = vpop.f32.mrb[0].mxu0
      %v4357 = vadd.f32 0.0, %v4356
      %v4358 = vpop.f32.mrb[0].mxu0
      %v4359 = vpop.f32.mrb[0].mxu0
      %v4360 = vadd.f32 0.0, %v4359
      %v4361 = vpop.f32.mrb[0].mxu0
      %4362 = vmatprep.mubr.bf16.mxu0 0
      %4363 = vmatmul.mubr.bf16.gmra.mrb[0].mxu0 %v4215
      %v4364 = vpop.f32.mrb[0].mxu0
      %v4365 = vadd.f32 0.0, %v4364
      %v4366 = vpop.f32.mrb[0].mxu0
      %v4367 = vpop.f32.mrb[0].mxu0
      %v4368 = vadd.f32 0.0, %v4367
      %v4369 = vpop.f32.mrb[0].mxu0
      %4370 = vmatprep.mubr.bf16.mxu0 0
      %4371 = vmatmul.mubr.bf16.gmra.mrb[0].mxu0 %v4216
      %v4372 = vpop.f32.mrb[0].mxu0
      %v4373 = vadd.f32 0.0, %v4372
      %v4374 = vpop.f32.mrb[0].mxu0
      %v4375 = vpop.f32.mrb[0].mxu0
      %v4376 = vadd.f32 0.0, %v4375
      %v4377 = vpop.f32.mrb[0].mxu0
      %4378 = vmatprep.mubr.bf16.mxu0 0
      %4379 = vmatmul.mubr.bf16.gmra.mrb[0].mxu0 %v4217
      %v4380 = vpop.f32.mrb[0].mxu0
      %v4381 = vadd.f32 0.0, %v4380
      %v4382 = vpop.f32.mrb[0].mxu0
      %v4383 = vpop.f32.mrb[0].mxu0
      %v4384 = vadd.f32 0.0, %v4383
      %v4385 = vpop.f32.mrb[0].mxu0
      %4386 = vmatprep.mubr.bf16.mxu0 0
      %4387 = vmatmul.mubr.bf16.gmra.mrb[0].mxu0 %v4218
      %v4388 = vpop.f32.mrb[0].mxu0
      %v4389 = vadd.f32 0.0, %v4388
      %v4390 = vpop.f32.mrb[0].mxu0
      %v4391 = vpop.f32.mrb[0].mxu0
      %v4392 = vadd.f32 0.0, %v4391
      %v4393 = vpop.f32.mrb[0].mxu0
      %4394 = vmatprep.mubr.bf16.mxu0 0
      %4395 = vmatmul.mubr.bf16.gmra.mrb[0].mxu0 %v4219
      %v4396 = vpop.f32.mrb[0].mxu0
      %v4397 = vadd.f32 0.0, %v4396
      %v4398 = vpop.f32.mrb[0].mxu0
      %v4399 = vpop.f32.mrb[0].mxu0
      %v4400 = vadd.f32 0.0, %v4399
      %v4401 = vpop.f32.mrb[0].mxu0
      %4402 = vmatprep.mubr.bf16.mxu0 0
      %4403 = vmatmul.mubr.bf16.gmra.mrb[0].mxu0 %v4220
      %v4404 = vpop.f32.mrb[0].mxu0
      %v4405 = vadd.f32 0.0, %v4404
      %v4406 = vpop.f32.mrb[0].mxu0
      %v4407 = vpop.f32.mrb[0].mxu0
      %v4408 = vadd.f32 0.0, %v4407
      %v4409 = vpop.f32.mrb[0].mxu0
      %4410 = vmatprep.mubr.bf16.mxu0 0
      %4411 = vmatmul.mubr.bf16.gmra.mrb[0].mxu0 %v4221
      %v4412 = vpop.f32.mrb[0].mxu0
      %v4413 = vadd.f32 0.0, %v4412
      %v4414 = vpop.f32.mrb[0].mxu0
      %v4415 = vpop.f32.mrb[0].mxu0
      %v4416 = vadd.f32 0.0, %v4415
      %v4417 = vpop.f32.mrb[0].mxu0
      %4418 = vmatprep.mubr.bf16.mxu0 0
      %4419 = vmatmul.mubr.bf16.gmra.mrb[0].mxu0 %v4222
      %v4420 = vpop.f32.mrb[0].mxu0
      %v4421 = vadd.f32 0.0, %v4420
      %v4422 = vpop.f32.mrb[0].mxu0
      %v4423 = vpop.f32.mrb[0].mxu0
      %v4424 = vadd.f32 0.0, %v4423
      %v4425 = vpop.f32.mrb[0].mxu0
      %4426 = vmatprep.mubr.bf16.mxu0 0
      %4427 = vmatmul.mubr.bf16.gmra.mrb[0].mxu0 %v4223
      %v4428 = vpop.f32.mrb[0].mxu0
      %v4429 = vadd.f32 0.0, %v4428
      %v4430 = vpop.f32.mrb[0].mxu0
      %v4431 = vpop.f32.mrb[0].mxu0
      %v4432 = vadd.f32 0.0, %v4431
      %v4433 = vpop.f32.mrb[0].mxu0
      %4434 = vmatprep.mubr.bf16.mxu0 0
      %4435 = vmatmul.mubr.bf16.gmra.mrb[0].mxu0 %v4224
      %v4436 = vpop.f32.mrb[0].mxu0
      %v4437 = vadd.f32 0.0, %v4436
      %v4438 = vpop.f32.mrb[0].mxu0
      %v4439 = vpop.f32.mrb[0].mxu0
      %v4440 = vadd.f32 0.0, %v4439
      %v4441 = vpop.f32.mrb[0].mxu0
      %4442 = vmatprep.mubr.bf16.mxu0 0
      %4443 = vmatmul.mubr.bf16.gmra.mrb[0].mxu0 %v4225
      %v4444 = vpop.f32.mrb[0].mxu0
      %v4445 = vadd.f32 0.0, %v4444
      %v4446 = vpop.f32.mrb[0].mxu0
      %v4447 = vpop.f32.mrb[0].mxu0
      %v4448 = vadd.f32 0.0, %v4447
      %v4449 = vpop.f32.mrb[0].mxu0
      %4450 = vdwg.mxu0
      %v4451 = vadd.f32 %v3697, %v4325
      %v4452 = vadd.f32 %v3698, %v4328
      %v4453 = vadd.f32 %v3699, %v4333
      %v4454 = vadd.f32 %v3700, %v4336
      %v4455 = vadd.f32 %v3701, %v4341
      %v4456 = vadd.f32 %v3702, %v4344
      %v4457 = vadd.f32 %v3703, %v4349
      %v4458 = vadd.f32 %v3704, %v4352
      %v4459 = vadd.f32 %v3705, %v4357
      %v4460 = vadd.f32 %v3706, %v4360
      %v4461 = vadd.f32 %v3707, %v4365
      %v4462 = vadd.f32 %v3708, %v4368
      %v4463 = vadd.f32 %v3709, %v4373
      %v4464 = vadd.f32 %v3710, %v4376
      %v4465 = vadd.f32 %v3711, %v4381
      %v4466 = vadd.f32 %v3712, %v4384
      %v4467 = vadd.f32 %v3713, %v4389
      %v4468 = vadd.f32 %v3714, %v4392
      %v4469 = vadd.f32 %v3715, %v4397
      %v4470 = vadd.f32 %v3716, %v4400
      %v4471 = vadd.f32 %v3717, %v4405
      %v4472 = vadd.f32 %v3718, %v4408
      %v4473 = vadd.f32 %v3719, %v4413
      %v4474 = vadd.f32 %v3720, %v4416
      %v4475 = vadd.f32 %v3721, %v4421
      %v4476 = vadd.f32 %v3722, %v4424
      %v4477 = vadd.f32 %v3723, %v4429
      %v4478 = vadd.f32 %v3724, %v4432
      %v4479 = vadd.f32 %v3725, %v4437
      %v4480 = vadd.f32 %v3726, %v4440
      %v4481 = vadd.f32 %v3727, %v4445
      %v4482 = vadd.f32 %v3728, %v4448
      %v4483 = vld [vmem:[%s3342] sm:$0xe]
      %v4484 = vld [vmem:[%s3342 + $0xc] sm:$0xe]
      %v4485 = vld [vmem:[%s3342 + $0x18] sm:$0xe]
      %v4486 = vld [vmem:[%s3342 + $0x24] sm:$0xe]
      %v4487 = vld [vmem:[%s3342 + $0x30] sm:$0xe]
      %v4488 = vld [vmem:[%s3342 + $0x3c] sm:$0xe]
      %v4489 = vld [vmem:[%s3342 + $0x48] sm:$0xe]
      %v4490 = vld [vmem:[%s3342 + $0x54] sm:$0xe]
      %v4491 = vld [vmem:[%s3342 + $0x60] sm:$0xe]
      %v4492 = vld [vmem:[%s3342 + $0x6c] sm:$0xe]
      %v4493 = vld [vmem:[%s3342 + $0x78] sm:$0xe]
      %v4494 = vld [vmem:[%s3342 + $0x84] sm:$0xe]
      %v4495 = vld [vmem:[%s3342 + $0x90] sm:$0xe]
      %v4496 = vld [vmem:[%s3342 + $0x9c] sm:$0xe]
      %v4497 = vld [vmem:[%s3342 + $0xa8] sm:$0xe]
      %v4498 = vld [vmem:[%s3342 + $0xb4] sm:$0xe]
      %v4547 = vrot.slane %v4483, 5
      %v4548 = vrot.slane %v4547, 4
      %v4549 = vrot.slane %v3730, 5
      %v4550 = vsel %vm1268, %v4548, %v4549
      %v4551 = vrot.slane %v4549, 4
      %v4552 = vrot.slane %v3731, 5
      %v4553 = vsel %vm1268, %v4551, %v4552
      %v4554 = vrot.slane %v4484, 5
      %v4555 = vrot.slane %v4554, 4
      %v4556 = vrot.slane %v3733, 5
      %v4557 = vsel %vm1268, %v4555, %v4556
      %v4558 = vrot.slane %v4556, 4
      %v4559 = vrot.slane %v3734, 5
      %v4560 = vsel %vm1268, %v4558, %v4559
      %v4561 = vrot.slane %v4485, 5
      %v4562 = vrot.slane %v4561, 4
      %v4563 = vrot.slane %v3736, 5
      %v4564 = vsel %vm1268, %v4562, %v4563
      %v4565 = vrot.slane %v4563, 4
      %v4566 = vrot.slane %v3737, 5
      %v4567 = vsel %vm1268, %v4565, %v4566
      %v4568 = vrot.slane %v4486, 5
      %v4569 = vrot.slane %v4568, 4
      %v4570 = vrot.slane %v3739, 5
      %v4571 = vsel %vm1268, %v4569, %v4570
      %v4572 = vrot.slane %v4570, 4
      %v4573 = vrot.slane %v3740, 5
      %v4574 = vsel %vm1268, %v4572, %v4573
      %v4575 = vrot.slane %v4487, 5
      %v4576 = vrot.slane %v4575, 4
      %v4577 = vrot.slane %v3742, 5
      %v4578 = vsel %vm1268, %v4576, %v4577
      %v4579 = vrot.slane %v4577, 4
      %v4580 = vrot.slane %v3743, 5
      %v4581 = vsel %vm1268, %v4579, %v4580
      %v4582 = vrot.slane %v4488, 5
      %v4583 = vrot.slane %v4582, 4
      %v4584 = vrot.slane %v3745, 5
      %v4585 = vsel %vm1268, %v4583, %v4584
      %v4586 = vrot.slane %v4584, 4
      %v4587 = vrot.slane %v3746, 5
      %v4588 = vsel %vm1268, %v4586, %v4587
      %v4589 = vrot.slane %v4489, 5
      %v4590 = vrot.slane %v4589, 4
      %v4591 = vrot.slane %v3748, 5
      %v4592 = vsel %vm1268, %v4590, %v4591
      %v4593 = vrot.slane %v4591, 4
      %v4594 = vrot.slane %v3749, 5
      %v4595 = vsel %vm1268, %v4593, %v4594
      %v4596 = vrot.slane %v4490, 5
      %v4597 = vrot.slane %v4596, 4
      %v4598 = vrot.slane %v3751, 5
      %v4599 = vsel %vm1268, %v4597, %v4598
      %v4600 = vrot.slane %v4598, 4
      %v4601 = vrot.slane %v3752, 5
      %v4602 = vsel %vm1268, %v4600, %v4601
      %v4603 = vrot.slane %v4491, 5
      %v4604 = vrot.slane %v4603, 4
      %v4605 = vrot.slane %v3754, 5
      %v4606 = vsel %vm1268, %v4604, %v4605
      %v4607 = vrot.slane %v4605, 4
      %v4608 = vrot.slane %v3755, 5
      %v4609 = vsel %vm1268, %v4607, %v4608
      %v4610 = vrot.slane %v4492, 5
      %v4611 = vrot.slane %v4610, 4
      %v4612 = vrot.slane %v3757, 5
      %v4613 = vsel %vm1268, %v4611, %v4612
      %v4614 = vrot.slane %v4612, 4
      %v4615 = vrot.slane %v3758, 5
      %v4616 = vsel %vm1268, %v4614, %v4615
      %v4617 = vrot.slane %v4493, 5
      %v4618 = vrot.slane %v4617, 4
      %v4619 = vrot.slane %v3760, 5
      %v4620 = vsel %vm1268, %v4618, %v4619
      %v4621 = vrot.slane %v4619, 4
      %v4622 = vrot.slane %v3761, 5
      %v4623 = vsel %vm1268, %v4621, %v4622
      %v4624 = vrot.slane %v4494, 5
      %v4625 = vrot.slane %v4624, 4
      %v4626 = vrot.slane %v3763, 5
      %v4627 = vsel %vm1268, %v4625, %v4626
      %v4628 = vrot.slane %v4626, 4
      %v4629 = vrot.slane %v3764, 5
      %v4630 = vsel %vm1268, %v4628, %v4629
      %v4631 = vrot.slane %v4495, 5
      %v4632 = vrot.slane %v4631, 4
      %v4633 = vrot.slane %v3766, 5
      %v4634 = vsel %vm1268, %v4632, %v4633
      %v4635 = vrot.slane %v4633, 4
      %v4636 = vrot.slane %v3767, 5
      %v4637 = vsel %vm1268, %v4635, %v4636
      %v4638 = vrot.slane %v4496, 5
      %v4639 = vrot.slane %v4638, 4
      %v4640 = vrot.slane %v3769, 5
      %v4641 = vsel %vm1268, %v4639, %v4640
      %v4642 = vrot.slane %v4640, 4
      %v4643 = vrot.slane %v3770, 5
      %v4644 = vsel %vm1268, %v4642, %v4643
      %v4645 = vrot.slane %v4497, 5
      %v4646 = vrot.slane %v4645, 4
      %v4647 = vrot.slane %v3772, 5
      %v4648 = vsel %vm1268, %v4646, %v4647
      %v4649 = vrot.slane %v4647, 4
      %v4650 = vrot.slane %v3773, 5
      %v4651 = vsel %vm1268, %v4649, %v4650
      %v4652 = vrot.slane %v4498, 5
      %v4653 = vrot.slane %v4652, 4
      %v4654 = vrot.slane %v3775, 5
      %v4655 = vsel %vm1268, %v4653, %v4654
      %v4656 = vrot.slane %v4654, 4
      %v4657 = vrot.slane %v3776, 5
      %v4658 = vsel %vm1268, %v4656, %v4657
      %s4659 = scalar_lea.vmem %s1, 512
      %v4660 = vld [vmem:[%s4659] sm:$0xf]
      %v4661 = vld [vmem:[%s4659 + $0x4] sm:$0xf]
      %v4662 = vld [vmem:[%s4659 + $0x8] sm:$0xf]
      %v4663 = vld [vmem:[%s4659 + $0xc] sm:$0xf]
      %v4664 = vld [vmem:[%s4659 + $0x10] sm:$0xf]
      %v4665 = vld [vmem:[%s4659 + $0x14] sm:$0xf]
      %v4666 = vld [vmem:[%s4659 + $0x18] sm:$0xf]
      %v4667 = vld [vmem:[%s4659 + $0x1c] sm:$0xf]
      %v4668 = vld [vmem:[%s4659 + $0x20] sm:$0xf]
      %v4669 = vld [vmem:[%s4659 + $0x24] sm:$0xf]
      %v4670 = vld [vmem:[%s4659 + $0x28] sm:$0xf]
      %v4671 = vld [vmem:[%s4659 + $0x2c] sm:$0xf]
      %v4672 = vld [vmem:[%s4659 + $0x30] sm:$0xf]
      %v4673 = vld [vmem:[%s4659 + $0x34] sm:$0xf]
      %v4674 = vld [vmem:[%s4659 + $0x38] sm:$0xf]
      %v4675 = vld [vmem:[%s4659 + $0x3c] sm:$0xf]
      %v4676 = vunpack.c.l.b16 %v4550
      %v4677 = vunpack.c.l.b16 %v4553
      %v4678 = vunpack.c.l.b16 %v4557
      %v4679 = vunpack.c.l.b16 %v4560
      %v4680 = vunpack.c.l.b16 %v4564
      %v4681 = vunpack.c.l.b16 %v4567
      %v4682 = vunpack.c.l.b16 %v4571
      %v4683 = vunpack.c.l.b16 %v4574
      %v4684 = vunpack.c.l.b16 %v4578
      %v4685 = vunpack.c.l.b16 %v4581
      %v4686 = vunpack.c.l.b16 %v4585
      %v4687 = vunpack.c.l.b16 %v4588
      %v4688 = vunpack.c.l.b16 %v4592
      %v4689 = vunpack.c.l.b16 %v4595
      %v4690 = vunpack.c.l.b16 %v4599
      %v4691 = vunpack.c.l.b16 %v4602
      %v4692 = vunpack.c.l.b16 %v4606
      %v4693 = vunpack.c.l.b16 %v4609
      %v4694 = vunpack.c.l.b16 %v4613
      %v4695 = vunpack.c.l.b16 %v4616
      %v4696 = vunpack.c.l.b16 %v4620
      %v4697 = vunpack.c.l.b16 %v4623
      %v4698 = vunpack.c.l.b16 %v4627
      %v4699 = vunpack.c.l.b16 %v4630
      %v4700 = vunpack.c.l.b16 %v4634
      %v4701 = vunpack.c.l.b16 %v4637
      %v4702 = vunpack.c.l.b16 %v4641
      %v4703 = vunpack.c.l.b16 %v4644
      %v4704 = vunpack.c.l.b16 %v4648
      %v4705 = vunpack.c.l.b16 %v4651
      %v4706 = vunpack.c.l.b16 %v4655
      %v4707 = vunpack.c.l.b16 %v4658
      %v4708 = vpack.c.b16 %v4677, %v4676
      %v4709 = vpack.c.b16 %v4679, %v4678
      %v4710 = vpack.c.b16 %v4681, %v4680
      %v4711 = vpack.c.b16 %v4683, %v4682
      %v4712 = vpack.c.b16 %v4685, %v4684
      %v4713 = vpack.c.b16 %v4687, %v4686
      %v4714 = vpack.c.b16 %v4689, %v4688
      %v4715 = vpack.c.b16 %v4691, %v4690
      %v4716 = vpack.c.b16 %v4693, %v4692
      %v4717 = vpack.c.b16 %v4695, %v4694
      %v4718 = vpack.c.b16 %v4697, %v4696
      %v4719 = vpack.c.b16 %v4699, %v4698
      %v4720 = vpack.c.b16 %v4701, %v4700
      %v4721 = vpack.c.b16 %v4703, %v4702
      %v4722 = vpack.c.b16 %v4705, %v4704
      %v4723 = vpack.c.b16 %v4707, %v4706
      %v4756 = vunpack.c.l.b16 %v4660
      %v4757 = vunpack.c.l.b16 %v4661
      %v4758 = vunpack.c.l.b16 %v4662
      %v4759 = vunpack.c.l.b16 %v4663
      %v4760 = vunpack.c.l.b16 %v4664
      %v4761 = vunpack.c.l.b16 %v4665
      %v4762 = vunpack.c.l.b16 %v4666
      %v4763 = vunpack.c.l.b16 %v4667
      %v4764 = vunpack.c.l.b16 %v4668
      %v4765 = vunpack.c.l.b16 %v4669
      %v4766 = vunpack.c.l.b16 %v4670
      %v4767 = vunpack.c.l.b16 %v4671
      %v4768 = vunpack.c.l.b16 %v4672
      %v4769 = vunpack.c.l.b16 %v4673
      %v4770 = vunpack.c.l.b16 %v4674
      %v4771 = vunpack.c.l.b16 %v4675
      %v4772 = vpack.c.b16 %v4757, %v4756
      %v4773 = vpack.c.b16 %v4759, %v4758
      %v4774 = vpack.c.b16 %v4761, %v4760
      %v4775 = vpack.c.b16 %v4763, %v4762
      %v4776 = vpack.c.b16 %v4765, %v4764
      %v4777 = vpack.c.b16 %v4767, %v4766
      %v4778 = vpack.c.b16 %v4769, %v4768
      %v4779 = vpack.c.b16 %v4771, %v4770
      %4788 = vmatprep.subr.bf16.mxu0 0
      %4789 = vmatpush1.bf16.msra.mxu0 %v4772
      %4790 = vmatprep.subr.bf16.mxu0 0
      %4791 = vmatpush1.bf16.msra.mxu0 %v4773
      %4792 = vmatprep.subr.bf16.mxu0 0
      %4793 = vmatpush1.bf16.msra.mxu0 %v4774
      %4794 = vmatprep.subr.bf16.mxu0 0
      %4795 = vmatpush1.bf16.msra.mxu0 %v4775
      %4796 = vmatprep.subr.bf16.mxu0 0
      %4797 = vmatpush1.bf16.msra.mxu0 %v4776
      %4798 = vmatprep.subr.bf16.mxu0 0
      %4799 = vmatpush1.bf16.msra.mxu0 %v4777
      %4800 = vmatprep.subr.bf16.mxu0 0
      %4801 = vmatpush1.bf16.msra.mxu0 %v4778
      %4802 = vmatprep.subr.bf16.mxu0 0
      %4803 = vmatpush1.bf16.msra.mxu0 %v4779
      %4804 = vmatprep.subr.bf16.mxu0 0
      %4805 = vmatpush1.bf16.msra.mxu0 0
      %4806 = vmatprep.subr.bf16.mxu0 0
      %4807 = vmatpush1.bf16.msra.mxu0 0
      %4808 = vmatprep.subr.bf16.mxu0 0
      %4809 = vmatpush1.bf16.msra.mxu0 0
      %4810 = vmatprep.subr.bf16.mxu0 0
      %4811 = vmatpush1.bf16.msra.mxu0 0
      %4812 = vmatprep.subr.bf16.mxu0 0
      %4813 = vmatpush1.bf16.msra.mxu0 0
      %4814 = vmatprep.subr.bf16.mxu0 0
      %4815 = vmatpush1.bf16.msra.mxu0 0
      %4816 = vmatprep.subr.bf16.mxu0 0
      %4817 = vmatpush1.bf16.msra.mxu0 0
      %4818 = vmatprep.subr.bf16.mxu0 0
      %4819 = vmatpush1.bf16.msra.mxu0 0
      %4820 = vmatprep.mubr.bf16.mxu0 0
      %4821 = vmatmul.mubr.bf16.gmra.mrb[0].mxu0 %v4708
      %v4822 = vpop.f32.mrb[0].mxu0
      %v4823 = vadd.f32 0.0, %v4822
      %v4824 = vpop.f32.mrb[0].mxu0
      %v4825 = vpop.f32.mrb[0].mxu0
      %v4826 = vadd.f32 0.0, %v4825
      %v4827 = vpop.f32.mrb[0].mxu0
      %4828 = vmatprep.mubr.bf16.mxu0 0
      %4829 = vmatmul.mubr.bf16.gmra.mrb[0].mxu0 %v4709
      %v4830 = vpop.f32.mrb[0].mxu0
      %v4831 = vadd.f32 0.0, %v4830
      %v4832 = vpop.f32.mrb[0].mxu0
      %v4833 = vpop.f32.mrb[0].mxu0
      %v4834 = vadd.f32 0.0, %v4833
      %v4835 = vpop.f32.mrb[0].mxu0
      %4836 = vmatprep.mubr.bf16.mxu0 0
      %4837 = vmatmul.mubr.bf16.gmra.mrb[0].mxu0 %v4710
      %v4838 = vpop.f32.mrb[0].mxu0
      %v4839 = vadd.f32 0.0, %v4838
      %v4840 = vpop.f32.mrb[0].mxu0
      %v4841 = vpop.f32.mrb[0].mxu0
      %v4842 = vadd.f32 0.0, %v4841
      %v4843 = vpop.f32.mrb[0].mxu0
      %4844 = vmatprep.mubr.bf16.mxu0 0
      %4845 = vmatmul.mubr.bf16.gmra.mrb[0].mxu0 %v4711
      %v4846 = vpop.f32.mrb[0].mxu0
      %v4847 = vadd.f32 0.0, %v4846
      %v4848 = vpop.f32.mrb[0].mxu0
      %v4849 = vpop.f32.mrb[0].mxu0
      %v4850 = vadd.f32 0.0, %v4849
      %v4851 = vpop.f32.mrb[0].mxu0
      %4852 = vmatprep.mubr.bf16.mxu0 0
      %4853 = vmatmul.mubr.bf16.gmra.mrb[0].mxu0 %v4712
      %v4854 = vpop.f32.mrb[0].mxu0
      %v4855 = vadd.f32 0.0, %v4854
      %v4856 = vpop.f32.mrb[0].mxu0
      %v4857 = vpop.f32.mrb[0].mxu0
      %v4858 = vadd.f32 0.0, %v4857
      %v4859 = vpop.f32.mrb[0].mxu0
      %4860 = vmatprep.mubr.bf16.mxu0 0
      %4861 = vmatmul.mubr.bf16.gmra.mrb[0].mxu0 %v4713
      %v4862 = vpop.f32.mrb[0].mxu0
      %v4863 = vadd.f32 0.0, %v4862
      %v4864 = vpop.f32.mrb[0].mxu0
      %v4865 = vpop.f32.mrb[0].mxu0
      %v4866 = vadd.f32 0.0, %v4865
      %v4867 = vpop.f32.mrb[0].mxu0
      %4868 = vmatprep.mubr.bf16.mxu0 0
      %4869 = vmatmul.mubr.bf16.gmra.mrb[0].mxu0 %v4714
      %v4870 = vpop.f32.mrb[0].mxu0
      %v4871 = vadd.f32 0.0, %v4870
      %v4872 = vpop.f32.mrb[0].mxu0
      %v4873 = vpop.f32.mrb[0].mxu0
      %v4874 = vadd.f32 0.0, %v4873
      %v4875 = vpop.f32.mrb[0].mxu0
      %4876 = vmatprep.mubr.bf16.mxu0 0
      %4877 = vmatmul.mubr.bf16.gmra.mrb[0].mxu0 %v4715
      %v4878 = vpop.f32.mrb[0].mxu0
      %v4879 = vadd.f32 0.0, %v4878
      %v4880 = vpop.f32.mrb[0].mxu0
      %v4881 = vpop.f32.mrb[0].mxu0
      %v4882 = vadd.f32 0.0, %v4881
      %v4883 = vpop.f32.mrb[0].mxu0
      %4884 = vmatprep.mubr.bf16.mxu0 0
      %4885 = vmatmul.mubr.bf16.gmra.mrb[0].mxu0 %v4716
      %v4886 = vpop.f32.mrb[0].mxu0
      %v4887 = vadd.f32 0.0, %v4886
      %v4888 = vpop.f32.mrb[0].mxu0
      %v4889 = vpop.f32.mrb[0].mxu0
      %v4890 = vadd.f32 0.0, %v4889
      %v4891 = vpop.f32.mrb[0].mxu0
      %4892 = vmatprep.mubr.bf16.mxu0 0
      %4893 = vmatmul.mubr.bf16.gmra.mrb[0].mxu0 %v4717
      %v4894 = vpop.f32.mrb[0].mxu0
      %v4895 = vadd.f32 0.0, %v4894
      %v4896 = vpop.f32.mrb[0].mxu0
      %v4897 = vpop.f32.mrb[0].mxu0
      %v4898 = vadd.f32 0.0, %v4897
      %v4899 = vpop.f32.mrb[0].mxu0
      %4900 = vmatprep.mubr.bf16.mxu0 0
      %4901 = vmatmul.mubr.bf16.gmra.mrb[0].mxu0 %v4718
      %v4902 = vpop.f32.mrb[0].mxu0
      %v4903 = vadd.f32 0.0, %v4902
      %v4904 = vpop.f32.mrb[0].mxu0
      %v4905 = vpop.f32.mrb[0].mxu0
      %v4906 = vadd.f32 0.0, %v4905
      %v4907 = vpop.f32.mrb[0].mxu0
      %4908 = vmatprep.mubr.bf16.mxu0 0
      %4909 = vmatmul.mubr.bf16.gmra.mrb[0].mxu0 %v4719
      %v4910 = vpop.f32.mrb[0].mxu0
      %v4911 = vadd.f32 0.0, %v4910
      %v4912 = vpop.f32.mrb[0].mxu0
      %v4913 = vpop.f32.mrb[0].mxu0
      %v4914 = vadd.f32 0.0, %v4913
      %v4915 = vpop.f32.mrb[0].mxu0
      %4916 = vmatprep.mubr.bf16.mxu0 0
      %4917 = vmatmul.mubr.bf16.gmra.mrb[0].mxu0 %v4720
      %v4918 = vpop.f32.mrb[0].mxu0
      %v4919 = vadd.f32 0.0, %v4918
      %v4920 = vpop.f32.mrb[0].mxu0
      %v4921 = vpop.f32.mrb[0].mxu0
      %v4922 = vadd.f32 0.0, %v4921
      %v4923 = vpop.f32.mrb[0].mxu0
      %4924 = vmatprep.mubr.bf16.mxu0 0
      %4925 = vmatmul.mubr.bf16.gmra.mrb[0].mxu0 %v4721
      %v4926 = vpop.f32.mrb[0].mxu0
      %v4927 = vadd.f32 0.0, %v4926
      %v4928 = vpop.f32.mrb[0].mxu0
      %v4929 = vpop.f32.mrb[0].mxu0
      %v4930 = vadd.f32 0.0, %v4929
      %v4931 = vpop.f32.mrb[0].mxu0
      %4932 = vmatprep.mubr.bf16.mxu0 0
      %4933 = vmatmul.mubr.bf16.gmra.mrb[0].mxu0 %v4722
      %v4934 = vpop.f32.mrb[0].mxu0
      %v4935 = vadd.f32 0.0, %v4934
      %v4936 = vpop.f32.mrb[0].mxu0
      %v4937 = vpop.f32.mrb[0].mxu0
      %v4938 = vadd.f32 0.0, %v4937
      %v4939 = vpop.f32.mrb[0].mxu0
      %4940 = vmatprep.mubr.bf16.mxu0 0
      %4941 = vmatmul.mubr.bf16.gmra.mrb[0].mxu0 %v4723
      %v4942 = vpop.f32.mrb[0].mxu0
      %v4943 = vadd.f32 0.0, %v4942
      %v4944 = vpop.f32.mrb[0].mxu0
      %v4945 = vpop.f32.mrb[0].mxu0
      %v4946 = vadd.f32 0.0, %v4945
      %v4947 = vpop.f32.mrb[0].mxu0
      %4948 = vdwg.mxu0
      %v4949 = vadd.f32 %v4451, %v4823
      %v4950 = vadd.f32 %v4452, %v4826
      %v4951 = vadd.f32 %v4453, %v4831
      %v4952 = vadd.f32 %v4454, %v4834
      %v4953 = vadd.f32 %v4455, %v4839
      %v4954 = vadd.f32 %v4456, %v4842
      %v4955 = vadd.f32 %v4457, %v4847
      %v4956 = vadd.f32 %v4458, %v4850
      %v4957 = vadd.f32 %v4459, %v4855
      %v4958 = vadd.f32 %v4460, %v4858
      %v4959 = vadd.f32 %v4461, %v4863
      %v4960 = vadd.f32 %v4462, %v4866
      %v4961 = vadd.f32 %v4463, %v4871
      %v4962 = vadd.f32 %v4464, %v4874
      %v4963 = vadd.f32 %v4465, %v4879
      %v4964 = vadd.f32 %v4466, %v4882
      %v4965 = vadd.f32 %v4467, %v4887
      %v4966 = vadd.f32 %v4468, %v4890
      %v4967 = vadd.f32 %v4469, %v4895
      %v4968 = vadd.f32 %v4470, %v4898
      %v4969 = vadd.f32 %v4471, %v4903
      %v4970 = vadd.f32 %v4472, %v4906
      %v4971 = vadd.f32 %v4473, %v4911
      %v4972 = vadd.f32 %v4474, %v4914
      %v4973 = vadd.f32 %v4475, %v4919
      %v4974 = vadd.f32 %v4476, %v4922
      %v4975 = vadd.f32 %v4477, %v4927
      %v4976 = vadd.f32 %v4478, %v4930
      %v4977 = vadd.f32 %v4479, %v4935
      %v4978 = vadd.f32 %v4480, %v4938
      %v4979 = vadd.f32 %v4481, %v4943
      %v4980 = vadd.f32 %v4482, %v4946
      %v4981 = vld [vmem:[%s2] sm:$0x1]
      %v4983 = vlaneseq
      %v4984 = vshrl.u32 %v4983, 7
      %v4985 = vsub.s32 0, %v4984
      %v4986 = vrot.slane %v4981, %v4985
      %v4988 = vadd.f32 %v4949, %v4986
      %v4989 = vadd.f32 %v4950, %v4986
      %v4990 = vadd.f32 %v4951, %v4986
      %v4991 = vadd.f32 %v4952, %v4986
      %v4992 = vadd.f32 %v4953, %v4986
      %v4993 = vadd.f32 %v4954, %v4986
      %v4994 = vadd.f32 %v4955, %v4986
      %v4995 = vadd.f32 %v4956, %v4986
      %v4996 = vadd.f32 %v4957, %v4986
      %v4997 = vadd.f32 %v4958, %v4986
      %v4998 = vadd.f32 %v4959, %v4986
      %v4999 = vadd.f32 %v4960, %v4986
      %v5000 = vadd.f32 %v4961, %v4986
      %v5001 = vadd.f32 %v4962, %v4986
      %v5002 = vadd.f32 %v4963, %v4986
      %v5003 = vadd.f32 %v4964, %v4986
      %v5004 = vadd.f32 %v4965, %v4986
      %v5005 = vadd.f32 %v4966, %v4986
      %v5006 = vadd.f32 %v4967, %v4986
      %v5007 = vadd.f32 %v4968, %v4986
      %v5008 = vadd.f32 %v4969, %v4986
      %v5009 = vadd.f32 %v4970, %v4986
      %v5010 = vadd.f32 %v4971, %v4986
      %v5011 = vadd.f32 %v4972, %v4986
      %v5012 = vadd.f32 %v4973, %v4986
      %v5013 = vadd.f32 %v4974, %v4986
      %v5014 = vadd.f32 %v4975, %v4986
      %v5015 = vadd.f32 %v4976, %v4986
      %v5016 = vadd.f32 %v4977, %v4986
      %v5017 = vadd.f32 %v4978, %v4986
      %v5018 = vadd.f32 %v4979, %v4986
      %v5019 = vadd.f32 %v4980, %v4986
      %v5020 = vmax.f32 %v4988, 0.0
      %v5021 = vmax.f32 %v4989, 0.0
      %v5022 = vmax.f32 %v4990, 0.0
      %v5023 = vmax.f32 %v4991, 0.0
      %v5024 = vmax.f32 %v4992, 0.0
      %v5025 = vmax.f32 %v4993, 0.0
      %v5026 = vmax.f32 %v4994, 0.0
      %v5027 = vmax.f32 %v4995, 0.0
      %v5028 = vmax.f32 %v4996, 0.0
      %v5029 = vmax.f32 %v4997, 0.0
      %v5030 = vmax.f32 %v4998, 0.0
      %v5031 = vmax.f32 %v4999, 0.0
      %v5032 = vmax.f32 %v5000, 0.0
      %v5033 = vmax.f32 %v5001, 0.0
      %v5034 = vmax.f32 %v5002, 0.0
      %v5035 = vmax.f32 %v5003, 0.0
      %v5036 = vmax.f32 %v5004, 0.0
      %v5037 = vmax.f32 %v5005, 0.0
      %v5038 = vmax.f32 %v5006, 0.0
      %v5039 = vmax.f32 %v5007, 0.0
      %v5040 = vmax.f32 %v5008, 0.0
      %v5041 = vmax.f32 %v5009, 0.0
      %v5042 = vmax.f32 %v5010, 0.0
      %v5043 = vmax.f32 %v5011, 0.0
      %v5044 = vmax.f32 %v5012, 0.0
      %v5045 = vmax.f32 %v5013, 0.0
      %v5046 = vmax.f32 %v5014, 0.0
      %v5047 = vmax.f32 %v5015, 0.0
      %v5048 = vmax.f32 %v5016, 0.0
      %v5049 = vmax.f32 %v5017, 0.0
      %v5050 = vmax.f32 %v5018, 0.0
      %v5051 = vmax.f32 %v5019, 0.0
      %5052 = vst [vmem:[%s170] sm:$0xff] 0.0
      %5053 = vst [vmem:[%s170 + $0x8] sm:$0xff] 0.0
      %5054 = vst [vmem:[%s170 + $0x10] sm:$0x3] 0.0
      %5055 = vst [vmem:[%s170 + $0x18] sm:$0xff] 0.0
      %5056 = vst [vmem:[%s170 + $0x20] sm:$0xff] 0.0
      %5057 = vst [vmem:[%s170 + $0x28] sm:$0x3] 0.0
      %5058 = vst [vmem:[%s170 + $0x30] sm:$0xff] 0.0
      %5059 = vst [vmem:[%s170 + $0x38] sm:$0xff] 0.0
      %5060 = vst [vmem:[%s170 + $0x40] sm:$0x3] 0.0
      %5061 = vst [vmem:[%s170 + $0x48] sm:$0xff] 0.0
      %5062 = vst [vmem:[%s170 + $0x50] sm:$0xff] 0.0
      %5063 = vst [vmem:[%s170 + $0x58] sm:$0x3] 0.0
      %5064 = vst [vmem:[%s170 + $0x60] sm:$0xff] 0.0
      %5065 = vst [vmem:[%s170 + $0x68] sm:$0xff] 0.0
      %5066 = vst [vmem:[%s170 + $0x70] sm:$0x3] 0.0
      %5067 = vst [vmem:[%s170 + $0x78] sm:$0xff] 0.0
      %5068 = vst [vmem:[%s170 + $0x80] sm:$0xff] 0.0
      %5069 = vst [vmem:[%s170 + $0x88] sm:$0x3] 0.0
      %5070 = vst [vmem:[%s170 + $0x90] sm:$0xff] 0.0
      %5071 = vst [vmem:[%s170 + $0x98] sm:$0xff] 0.0
      %5072 = vst [vmem:[%s170 + $0xa0] sm:$0x3] 0.0
      %5073 = vst [vmem:[%s170 + $0xa8] sm:$0xff] 0.0
      %5074 = vst [vmem:[%s170 + $0xb0] sm:$0xff] 0.0
      %5075 = vst [vmem:[%s170 + $0xb8] sm:$0x3] 0.0
      %5076 = vst [vmem:[%s170 + $0xc0] sm:$0xff] 0.0
      %5077 = vst [vmem:[%s170 + $0xc8] sm:$0xff] 0.0
      %5078 = vst [vmem:[%s170 + $0xd0] sm:$0x3] 0.0
      %5079 = vst [vmem:[%s170 + $0xd8] sm:$0xff] 0.0
      %5080 = vst [vmem:[%s170 + $0xe0] sm:$0xff] 0.0
      %5081 = vst [vmem:[%s170 + $0xe8] sm:$0x3] 0.0
      %5082 = vst [vmem:[%s170 + $0xf0] sm:$0xff] 0.0
      %5083 = vst [vmem:[%s170 + $0xf8] sm:$0xff] 0.0
      %5084 = vst [vmem:[%s170 + $0x100] sm:$0x3] 0.0
      %5085 = vst [vmem:[%s170 + $0x108] sm:$0xff] 0.0
      %5086 = vst [vmem:[%s170 + $0x110] sm:$0xff] 0.0
      %5087 = vst [vmem:[%s170 + $0x118] sm:$0x3] 0.0
      %5088 = vst [vmem:[%s170 + $0x120] sm:$0xff] 0.0
      %5089 = vst [vmem:[%s170 + $0x128] sm:$0xff] 0.0
      %5090 = vst [vmem:[%s170 + $0x130] sm:$0x3] 0.0
      %5091 = vst [vmem:[%s170 + $0x138] sm:$0xff] 0.0
      %5092 = vst [vmem:[%s170 + $0x140] sm:$0xff] 0.0
      %5093 = vst [vmem:[%s170 + $0x148] sm:$0x3] 0.0
      %5094 = vst [vmem:[%s170 + $0x150] sm:$0xff] 0.0
      %5095 = vst [vmem:[%s170 + $0x158] sm:$0xff] 0.0
      %5096 = vst [vmem:[%s170 + $0x160] sm:$0x3] 0.0
      %5097 = vst [vmem:[%s170 + $0x168] sm:$0xff] 0.0
      %5098 = vst [vmem:[%s170 + $0x170] sm:$0xff] 0.0
      %5099 = vst [vmem:[%s170 + $0x178] sm:$0x3] 0.0
      %5100 = vst [vmem:[%s170 + $0x180] sm:$0xff] 0.0
      %5101 = vst [vmem:[%s170 + $0x188] sm:$0xff] 0.0
      %5102 = vst [vmem:[%s170 + $0x190] sm:$0x3] 0.0
      %5103 = vst [vmem:[%s170 + $0x198] sm:$0xff] 0.0
      %5104 = vst [vmem:[%s170 + $0x1a0] sm:$0xff] 0.0
      %5105 = vst [vmem:[%s170 + $0x1a8] sm:$0x3] 0.0
      %s5106 = scalar_lea.vmem %s170, 24
      %5107 = vst [vmem:[%s5106 + $0x1] sm:$0xff] %v5020
      %5108 = vst [vmem:[%s5106 + $0x9] sm:$0xff] %v5021
      %5109 = vst [vmem:[%s5106 + $0x19] sm:$0xff] %v5022
      %5110 = vst [vmem:[%s5106 + $0x21] sm:$0xff] %v5023
      %5111 = vst [vmem:[%s5106 + $0x31] sm:$0xff] %v5024
      %5112 = vst [vmem:[%s5106 + $0x39] sm:$0xff] %v5025
      %5113 = vst [vmem:[%s5106 + $0x49] sm:$0xff] %v5026
      %5114 = vst [vmem:[%s5106 + $0x51] sm:$0xff] %v5027
      %5115 = vst [vmem:[%s5106 + $0x61] sm:$0xff] %v5028
      %5116 = vst [vmem:[%s5106 + $0x69] sm:$0xff] %v5029
      %5117 = vst [vmem:[%s5106 + $0x79] sm:$0xff] %v5030
      %5118 = vst [vmem:[%s5106 + $0x81] sm:$0xff] %v5031
      %5119 = vst [vmem:[%s5106 + $0x91] sm:$0xff] %v5032
      %5120 = vst [vmem:[%s5106 + $0x99] sm:$0xff] %v5033
      %5121 = vst [vmem:[%s5106 + $0xa9] sm:$0xff] %v5034
      %5122 = vst [vmem:[%s5106 + $0xb1] sm:$0xff] %v5035
      %5123 = vst [vmem:[%s5106 + $0xc1] sm:$0xff] %v5036
      %5124 = vst [vmem:[%s5106 + $0xc9] sm:$0xff] %v5037
      %5125 = vst [vmem:[%s5106 + $0xd9] sm:$0xff] %v5038
      %5126 = vst [vmem:[%s5106 + $0xe1] sm:$0xff] %v5039
      %5127 = vst [vmem:[%s5106 + $0xf1] sm:$0xff] %v5040
      %5128 = vst [vmem:[%s5106 + $0xf9] sm:$0xff] %v5041
      %5129 = vst [vmem:[%s5106 + $0x109] sm:$0xff] %v5042
      %5130 = vst [vmem:[%s5106 + $0x111] sm:$0xff] %v5043
      %5131 = vst [vmem:[%s5106 + $0x121] sm:$0xff] %v5044
      %5132 = vst [vmem:[%s5106 + $0x129] sm:$0xff] %v5045
      %5133 = vst [vmem:[%s5106 + $0x139] sm:$0xff] %v5046
      %5134 = vst [vmem:[%s5106 + $0x141] sm:$0xff] %v5047
      %5135 = vst [vmem:[%s5106 + $0x151] sm:$0xff] %v5048
      %5136 = vst [vmem:[%s5106 + $0x159] sm:$0xff] %v5049
      %5137 = vst [vmem:[%s5106 + $0x169] sm:$0xff] %v5050
      %5138 = vst [vmem:[%s5106 + $0x171] sm:$0xff] %v5051
      %p5139 = scmp.lt.s32.totalorder %s14, 1
      %s5140 = scalar_select %p5139, %s14, 1
      %s5141 = smul.addr %s5140, 54
      %s5142 = smul.addr %s5141, 8
      %s5143 = scalar_lea.vmem %s3, %s5142
      // Predicated region
      $region33: #{up_block_forward.5} parent=31 // pred_check
        %p5144 = pneg %p100
      $region34: #{up_block_forward.5} parent=31 // pred_check_branch
        %5146 = sbr.rel (%p5144) target = $region36
      $region35: #{up_block_forward.5} parent=31 // pred_region
        _
      $region36: #{up_block_forward.5} parent=31 // pred_fallthru
        _
    $region32: #{up_block_forward.5} parent=5 // pred_fallthru
      _
    %p5147 = scmp.le.s32.totalorder 2, %s9
    // Predicated region
    $region37: #{up_block_forward.5} parent=5 // pred_check
      %p5148 = pneg %p5147
    $region38: #{up_block_forward.5} parent=5 // pred_check_branch
      %5150 = sbr.rel (%p5148) target = $region40
    $region39: #{up_block_forward.5} parent=5 // pred_region
      %s5151 = ssub.s32 %s9, 2
      // Predicated region
      $region41: #{up_block_forward.5} parent=39 // pred_check
        %p5152 = pneg %p106
      $region42: #{up_block_forward.5} parent=39 // pred_check_branch
        %5154 = sbr.rel (%p5152) target = $region44
      $region43: #{up_block_forward.5} parent=39 // pred_region
        %p5155 = scmp.lt.s32.totalorder %s15, 1
        %s5156 = scalar_select %p5155, %s15, 1
        %s5157 = smul.addr %s5156, 54
        %s5158 = smul.addr %s5157, 8
        %s5159 = scalar_lea.vmem %s3, %s5158
      $region44: #{up_block_forward.5} parent=39 // pred_fallthru
        _
    $region40: #{up_block_forward.5} parent=5 // pred_fallthru
      _
  $region6: #{up_block_forward.5} parent=0 // loop_footer
    %s13 = sadd.s32 1, %s9
  $region7: #{up_block_forward.5} parent=0 // loop_footer_branch
    %8 = sbr.rel target = $region3
  $region8: #{up_block_forward.5} parent=0 // loop_exit
    _

// kernel: up_block_forward.4
$region0: #{up_block_forward.4}
  #allocation0 [shape = 'u32[]', space=smem, size = 0x4, offset = 0x4, fixed_abs, tag = 'smem constant byte address 0x4 - core index']
  #allocation1 [shape = 'u32[144,128]{1,0:T(1,128)}', space=vmem, size = 0x12000, scoped, tag = 'internal scratch']
  %s0 = inlined_call_operand.vmem [shape: bf16[2,18,18,128], index: 0, kind: input, shape index: {}]
  %s1 = inlined_call_operand.vmem [shape: bf16[9,128,128], index: 1, kind: input, shape index: {}]
  %s2 = inlined_call_operand.vmem [shape: f32[1,128], index: 2, kind: input, shape index: {}]
  %s3 = inlined_call_operand.vmem [shape: bf16[2,18,18,128], index: 3, kind: output, shape index: {}]
  %s4 = sld [smem:[#allocation0]]
  $region45: #{up_block_forward.4} parent=0
    _
  %s6 = ssub.s32 1, %s4
  %s7 = scalar_select 0, %s6, %s4
  loop: start=0, step=1, limit=4
  $region2: #{up_block_forward.4} parent=0 // loop_pre_header
    _
  $region3: #{up_block_forward.4} parent=0 // loop_header
    %s9 = sphi 0, %s13
    %p10 = scmp.ge.s32.totalorder %s9, 4
    %s19 = sphi 0, %s21
    %s22 = sphi 0, %s19
    %s23 = sphi 0, %s22
    %s39 = sphi 0, %s23
    %s43 = sphi 0, %s43
    %s45 = sphi 0, %s43
    %s46 = sphi 0, %s45
    %s60 = sphi 0, %s46
    %s64 = sphi 0, %s64
    %s66 = sphi 0, %s64
    %s67 = sphi 0, %s66
    %s81 = sphi 0, %s67
    %s87 = sphi 0, %s89
    %s90 = sphi 0, %s87
    %s91 = sphi 0, %s90
    %s107 = sphi 0, %s91
  $region4: #{up_block_forward.4} parent=0 // loop_header_branch
    %12 = sbr.rel (%p10) target = $region8
  $region5: #{up_block_forward.4} parent=0 // loop_body
    %s14 = ssub.s32 %s9, 1
    %s15 = ssub.s32 %s9, 2
    %s16 = sadd.s32 %s9, 1
    %s17 = ssub.s32 %s9, %s16
    %p18 = scmp.eq.s32.totalorder %s17, 0
    %s20 = sadd.s32 %s19, 1
    %s21 = scalar_select %p18, %s19, %s20
    %p24 = pneg %p18
    %p25 = scmp.eq.s32.totalorder %s9, 1
    %p26 = por %p24, %p25
    %p27 = scmp.ne.s32.totalorder %s19, %s22
    %p28 = scmp.eq.s32.totalorder %s9, 0
    %p29 = por %p27, %p28
    %p30 = scmp.ne.s32.totalorder %s19, %s22
    %p31 = scmp.eq.s32.totalorder %s14, 1
    %p32 = por %p30, %p31
    %p33 = scmp.ne.s32.totalorder %s22, %s23
    %p34 = scmp.eq.s32.totalorder %s14, 0
    %p35 = por %p33, %p34
    %p36 = scmp.ne.s32.totalorder %s22, %s23
    %p37 = scmp.eq.s32.totalorder %s15, 1
    %p38 = por %p36, %p37
    %p40 = scmp.ne.s32.totalorder %s23, %s39
    %p41 = scmp.eq.s32.totalorder %s15, 0
    %p42 = por %p40, %p41
    %s44 = sadd.s32 %s43, 1
    %p47 = scmp.eq.s32.totalorder %s9, 1
    %p48 = scmp.ne.s32.totalorder %s43, %s45
    %p49 = scmp.eq.s32.totalorder %s9, 0
    %p50 = por %p48, %p49
    %p51 = scmp.ne.s32.totalorder %s43, %s45
    %p52 = scmp.eq.s32.totalorder %s14, 1
    %p53 = por %p51, %p52
    %p54 = scmp.ne.s32.totalorder %s45, %s46
    %p55 = scmp.eq.s32.totalorder %s14, 0
    %p56 = por %p54, %p55
    %p57 = scmp.ne.s32.totalorder %s45, %s46
    %p58 = scmp.eq.s32.totalorder %s15, 1
    %p59 = por %p57, %p58
    %p61 = scmp.ne.s32.totalorder %s46, %s60
    %p62 = scmp.eq.s32.totalorder %s15, 0
    %p63 = por %p61, %p62
    %s65 = sadd.s32 %s64, 1
    %p68 = scmp.eq.s32.totalorder %s9, 1
    %p69 = scmp.ne.s32.totalorder %s64, %s66
    %p70 = scmp.eq.s32.totalorder %s9, 0
    %p71 = por %p69, %p70
    %p72 = scmp.ne.s32.totalorder %s64, %s66
    %p73 = scmp.eq.s32.totalorder %s14, 1
    %p74 = por %p72, %p73
    %p75 = scmp.ne.s32.totalorder %s66, %s67
    %p76 = scmp.eq.s32.totalorder %s14, 0
    %p77 = por %p75, %p76
    %p78 = scmp.ne.s32.totalorder %s66, %s67
    %p79 = scmp.eq.s32.totalorder %s15, 1
    %p80 = por %p78, %p79
    %p82 = scmp.ne.s32.totalorder %s67, %s81
    %p83 = scmp.eq.s32.totalorder %s15, 0
    %p84 = por %p82, %p83
    %s85 = ssub.s32 %s9, %s16
    %p86 = scmp.eq.s32.totalorder %s85, 0
    %s88 = sadd.s32 %s87, 1
    %s89 = scalar_select %p86, %s87, %s88
    %p92 = pneg %p86
    %p93 = scmp.eq.s32.totalorder %s9, 1
    %p94 = por %p92, %p93
    %p95 = scmp.ne.s32.totalorder %s87, %s90
    %p96 = scmp.eq.s32.totalorder %s9, 0
    %p97 = por %p95, %p96
    %p98 = scmp.ne.s32.totalorder %s87, %s90
    %p99 = scmp.eq.s32.totalorder %s14, 1
    %p100 = por %p98, %p99
    %p101 = scmp.ne.s32.totalorder %s90, %s91
    %p102 = scmp.eq.s32.totalorder %s14, 0
    %p103 = por %p101, %p102
    %p104 = scmp.ne.s32.totalorder %s90, %s91
    %p105 = scmp.eq.s32.totalorder %s15, 1
    %p106 = por %p104, %p105
    %p108 = scmp.ne.s32.totalorder %s91, %s107
    %p109 = scmp.eq.s32.totalorder %s15, 0
    %p110 = por %p108, %p109
    %p111 = scmp.le.s32.totalorder 1, %s9
    %p112 = scmp.lt.s32.totalorder %s9, 3
    %p113 = pnand %p111, %p112
    %p114 = pneg %p113
    // Predicated region
    $region9: #{up_block_forward.4} parent=5 // pred_check
      _
    $region10: #{up_block_forward.4} parent=5 // pred_check_branch
      %116 = sbr.rel (%p113) target = $region12
    $region11: #{up_block_forward.4} parent=5 // pred_region
      %s117 = ssub.s32 %s9, 1
      // Predicated region
      $region13: #{up_block_forward.4} parent=11 // pred_check
        %p118 = pneg %p56
      $region14: #{up_block_forward.4} parent=11 // pred_check_branch
        %120 = sbr.rel (%p118) target = $region16
      $region15: #{up_block_forward.4} parent=11 // pred_region
        _
      $region16: #{up_block_forward.4} parent=11 // pred_fallthru
        _
      // Predicated region
      $region17: #{up_block_forward.4} parent=11 // pred_check
        %p121 = pneg %p77
      $region18: #{up_block_forward.4} parent=11 // pred_check_branch
        %123 = sbr.rel (%p121) target = $region20
      $region19: #{up_block_forward.4} parent=11 // pred_region
        _
      $region20: #{up_block_forward.4} parent=11 // pred_fallthru
        _
    $region12: #{up_block_forward.4} parent=5 // pred_fallthru
      _
    %p124 = scmp.lt.s32.totalorder %s9, 2
    // Predicated region
    $region21: #{up_block_forward.4} parent=5 // pred_check
      %p125 = pneg %p124
    $region22: #{up_block_forward.4} parent=5 // pred_check_branch
      %127 = sbr.rel (%p125) target = $region24
    $region23: #{up_block_forward.4} parent=5 // pred_region
      // Predicated region
      $region25: #{up_block_forward.4} parent=23 // pred_check
        %p128 = pneg %p29
      $region26: #{up_block_forward.4} parent=23 // pred_check_branch
        %130 = sbr.rel (%p128) target = $region28
      $region27: #{up_block_forward.4} parent=23 // pred_region
        %p131 = scmp.lt.s32.totalorder %s9, 1
        %s132 = scalar_select %p131, %s9, 1
        %s133 = smul.addr %s132, 54
        %s134 = smul.addr %s133, 4
        %s135 = scalar_lea.vmem %s0, %s134
      $region28: #{up_block_forward.4} parent=23 // pred_fallthru
        _
    $region24: #{up_block_forward.4} parent=5 // pred_fallthru
      _
    %p136 = scmp.le.s32.totalorder 1, %s9
    %p137 = scmp.lt.s32.totalorder %s9, 3
    %p138 = pnand %p136, %p137
    %p139 = pneg %p138
    // Predicated region
    $region29: #{up_block_forward.4} parent=5 // pred_check
      _
    $region30: #{up_block_forward.4} parent=5 // pred_check_branch
      %141 = sbr.rel (%p138) target = $region32
    $region31: #{up_block_forward.4} parent=5 // pred_region
      %s142 = ssub.s32 %s9, 1
      %p143 = scmp.lt.s32.totalorder %s14, 1
      %s144 = scalar_select %p143, %s14, 1
      %s145 = smul.addr %s144, 54
      %s146 = smul.addr %s145, 4
      %s147 = scalar_lea.vmem %s0, %s146
      %p148 = pneg %p35
      %p149 = pneg %p32
      %p150 = pneg %p56
      %p151 = pneg %p53
      %p152 = pneg %p77
      %p153 = pneg %p74
      %p154 = pneg %p103
      %p155 = pneg %p100
      %p156 = scmp.lt.s32.totalorder %s14, 1
      %s157 = scalar_select %p156, %s14, 1
      %s158 = smul.addr %s157, 54
      %s159 = smul.addr %s158, 4
      %s160 = scalar_lea.vmem %s3, %s159
      %p161 = scmp.lt.s32.totalorder %s14, 1
      %s162 = scalar_select %p161, %s14, 1
      %s163 = smul.addr %s162, 54
      %s164 = smul.addr %s163, 4
      %s165 = scalar_lea.vmem %s0, %s164
      %p166 = scmp.lt.s32.totalorder %s14, 1
      %s167 = scalar_select %p166, %s14, 1
      %s168 = smul.addr %s167, 54
      %s169 = smul.addr %s168, 4
      %s170 = scalar_lea.vmem %s3, %s169
      %v172 = vld [vmem:[%s165] sm:$0xf]
      %v173 = vld [vmem:[%s165 + $0x4] sm:$0xf]
      %v174 = vld [vmem:[%s165 + $0xc] sm:$0xf]
      %v175 = vld [vmem:[%s165 + $0x10] sm:$0xf]
      %v176 = vld [vmem:[%s165 + $0x18] sm:$0xf]
      %v177 = vld [vmem:[%s165 + $0x1c] sm:$0xf]
      %v178 = vld [vmem:[%s165 + $0x24] sm:$0xf]
      %v179 = vld [vmem:[%s165 + $0x28] sm:$0xf]
      %v180 = vld [vmem:[%s165 + $0x30] sm:$0xf]
      %v181 = vld [vmem:[%s165 + $0x34] sm:$0xf]
      %v182 = vld [vmem:[%s165 + $0x3c] sm:$0xf]
      %v183 = vld [vmem:[%s165 + $0x40] sm:$0xf]
      %v184 = vld [vmem:[%s165 + $0x48] sm:$0xf]
      %v185 = vld [vmem:[%s165 + $0x4c] sm:$0xf]
      %v186 = vld [vmem:[%s165 + $0x54] sm:$0xf]
      %v187 = vld [vmem:[%s165 + $0x58] sm:$0xf]
      %v188 = vld [vmem:[%s165 + $0x60] sm:$0xf]
      %v189 = vld [vmem:[%s165 + $0x64] sm:$0xf]
      %v190 = vld [vmem:[%s165 + $0x6c] sm:$0xf]
      %v191 = vld [vmem:[%s165 + $0x70] sm:$0xf]
      %v192 = vld [vmem:[%s165 + $0x78] sm:$0xf]
      %v193 = vld [vmem:[%s165 + $0x7c] sm:$0xf]
      %v194 = vld [vmem:[%s165 + $0x84] sm:$0xf]
      %v195 = vld [vmem:[%s165 + $0x88] sm:$0xf]
      %v196 = vld [vmem:[%s165 + $0x90] sm:$0xf]
      %v197 = vld [vmem:[%s165 + $0x94] sm:$0xf]
      %v198 = vld [vmem:[%s165 + $0x9c] sm:$0xf]
      %v199 = vld [vmem:[%s165 + $0xa0] sm:$0xf]
      %v200 = vld [vmem:[%s165 + $0xa8] sm:$0xf]
      %v201 = vld [vmem:[%s165 + $0xac] sm:$0xf]
      %v202 = vld [vmem:[%s165 + $0xb4] sm:$0xf]
      %v203 = vld [vmem:[%s165 + $0xb8] sm:$0xf]
      %v204 = vld [vmem:[%s1] sm:$0xf]
      %v205 = vld [vmem:[%s1 + $0x4] sm:$0xf]
      %v206 = vld [vmem:[%s1 + $0x8] sm:$0xf]
      %v207 = vld [vmem:[%s1 + $0xc] sm:$0xf]
      %v208 = vld [vmem:[%s1 + $0x10] sm:$0xf]
      %v209 = vld [vmem:[%s1 + $0x14] sm:$0xf]
      %v210 = vld [vmem:[%s1 + $0x18] sm:$0xf]
      %v211 = vld [vmem:[%s1 + $0x1c] sm:$0xf]
      %v212 = vld [vmem:[%s1 + $0x20] sm:$0xf]
      %v213 = vld [vmem:[%s1 + $0x24] sm:$0xf]
      %v214 = vld [vmem:[%s1 + $0x28] sm:$0xf]
      %v215 = vld [vmem:[%s1 + $0x2c] sm:$0xf]
      %v216 = vld [vmem:[%s1 + $0x30] sm:$0xf]
      %v217 = vld [vmem:[%s1 + $0x34] sm:$0xf]
      %v218 = vld [vmem:[%s1 + $0x38] sm:$0xf]
      %v219 = vld [vmem:[%s1 + $0x3c] sm:$0xf]
      %v220 = vld [vmem:[%s165 + $0x8] sm:$0x1]
      %v221 = vld [vmem:[%s165 + $0x14] sm:$0x1]
      %v222 = vld [vmem:[%s165 + $0x20] sm:$0x1]
      %v223 = vld [vmem:[%s165 + $0x2c] sm:$0x1]
      %v224 = vld [vmem:[%s165 + $0x38] sm:$0x1]
      %v225 = vld [vmem:[%s165 + $0x44] sm:$0x1]
      %v226 = vld [vmem:[%s165 + $0x50] sm:$0x1]
      %v227 = vld [vmem:[%s165 + $0x5c] sm:$0x1]
      %v228 = vld [vmem:[%s165 + $0x68] sm:$0x1]
      %v229 = vld [vmem:[%s165 + $0x74] sm:$0x1]
      %v230 = vld [vmem:[%s165 + $0x80] sm:$0x1]
      %v231 = vld [vmem:[%s165 + $0x8c] sm:$0x1]
      %v232 = vld [vmem:[%s165 + $0x98] sm:$0x1]
      %v233 = vld [vmem:[%s165 + $0xa4] sm:$0x1]
      %v234 = vld [vmem:[%s165 + $0xb0] sm:$0x1]
      %v235 = vld [vmem:[%s165 + $0xbc] sm:$0x1]
      %vm236 = vsmask.f32 3328
      %vm237 = vsmask.f32 7440
      %vm238 = vmor %vm236, %vm237
      %v240 = vshrl.u32 %v172, 16
      %v242 = vrot.slane %v240, 4
      %v243 = vshll.u32 %v172, 16
      %v245 = vrot.slane %v243, 5
      %v246 = vor.u32 %v242, %v245
      %v247 = vrot.slane %v246, 4
      %v249 = vshll.u32 %v173, 16
      %v251 = vrot.slane %v249, 5
      %v252 = vsel %vm238, %v247, %v251
      %v253 = vshrl.u32 %v173, 16
      %v255 = vrot.slane %v253, 4
      %v256 = vor.u32 %v255, %v251
      %v257 = vrot.slane %v256, 4
      %v259 = vshll.u32 %v220, 16
      %v261 = vrot.slane %v259, 5
      %v262 = vsel %vm238, %v257, %v261
      %v264 = vshrl.u32 %v174, 16
      %v266 = vrot.slane %v264, 4
      %v267 = vshll.u32 %v174, 16
      %v269 = vrot.slane %v267, 5
      %v270 = vor.u32 %v266, %v269
      %v271 = vrot.slane %v270, 4
      %v273 = vshll.u32 %v175, 16
      %v275 = vrot.slane %v273, 5
      %v276 = vsel %vm238, %v271, %v275
      %v277 = vshrl.u32 %v175, 16
      %v279 = vrot.slane %v277, 4
      %v280 = vor.u32 %v279, %v275
      %v281 = vrot.slane %v280, 4
      %v283 = vshll.u32 %v221, 16
      %v285 = vrot.slane %v283, 5
      %v286 = vsel %vm238, %v281, %v285
      %v288 = vshrl.u32 %v176, 16
      %v290 = vrot.slane %v288, 4
      %v291 = vshll.u32 %v176, 16
      %v293 = vrot.slane %v291, 5
      %v294 = vor.u32 %v290, %v293
      %v295 = vrot.slane %v294, 4
      %v297 = vshll.u32 %v177, 16
      %v299 = vrot.slane %v297, 5
      %v300 = vsel %vm238, %v295, %v299
      %v301 = vshrl.u32 %v177, 16
      %v303 = vrot.slane %v301, 4
      %v304 = vor.u32 %v303, %v299
      %v305 = vrot.slane %v304, 4
      %v307 = vshll.u32 %v222, 16
      %v309 = vrot.slane %v307, 5
      %v310 = vsel %vm238, %v305, %v309
      %v312 = vshrl.u32 %v178, 16
      %v314 = vrot.slane %v312, 4
      %v315 = vshll.u32 %v178, 16
      %v317 = vrot.slane %v315, 5
      %v318 = vor.u32 %v314, %v317
      %v319 = vrot.slane %v318, 4
      %v321 = vshll.u32 %v179, 16
      %v323 = vrot.slane %v321, 5
      %v324 = vsel %vm238, %v319, %v323
      %v325 = vshrl.u32 %v179, 16
      %v327 = vrot.slane %v325, 4
      %v328 = vor.u32 %v327, %v323
      %v329 = vrot.slane %v328, 4
      %v331 = vshll.u32 %v223, 16
      %v333 = vrot.slane %v331, 5
      %v334 = vsel %vm238, %v329, %v333
      %v336 = vshrl.u32 %v180, 16
      %v338 = vrot.slane %v336, 4
      %v339 = vshll.u32 %v180, 16
      %v341 = vrot.slane %v339, 5
      %v342 = vor.u32 %v338, %v341
      %v343 = vrot.slane %v342, 4
      %v345 = vshll.u32 %v181, 16
      %v347 = vrot.slane %v345, 5
      %v348 = vsel %vm238, %v343, %v347
      %v349 = vshrl.u32 %v181, 16
      %v351 = vrot.slane %v349, 4
      %v352 = vor.u32 %v351, %v347
      %v353 = vrot.slane %v352, 4
      %v355 = vshll.u32 %v224, 16
      %v357 = vrot.slane %v355, 5
      %v358 = vsel %vm238, %v353, %v357
      %v360 = vshrl.u32 %v182, 16
      %v362 = vrot.slane %v360, 4
      %v363 = vshll.u32 %v182, 16
      %v365 = vrot.slane %v363, 5
      %v366 = vor.u32 %v362, %v365
      %v367 = vrot.slane %v366, 4
      %v369 = vshll.u32 %v183, 16
      %v371 = vrot.slane %v369, 5
      %v372 = vsel %vm238, %v367, %v371
      %v373 = vshrl.u32 %v183, 16
      %v375 = vrot.slane %v373, 4
      %v376 = vor.u32 %v375, %v371
      %v377 = vrot.slane %v376, 4
      %v379 = vshll.u32 %v225, 16
      %v381 = vrot.slane %v379, 5
      %v382 = vsel %vm238, %v377, %v381
      %v384 = vshrl.u32 %v184, 16
      %v386 = vrot.slane %v384, 4
      %v387 = vshll.u32 %v184, 16
      %v389 = vrot.slane %v387, 5
      %v390 = vor.u32 %v386, %v389
      %v391 = vrot.slane %v390, 4
      %v393 = vshll.u32 %v185, 16
      %v395 = vrot.slane %v393, 5
      %v396 = vsel %vm238, %v391, %v395
      %v397 = vshrl.u32 %v185, 16
      %v399 = vrot.slane %v397, 4
      %v400 = vor.u32 %v399, %v395
      %v401 = vrot.slane %v400, 4
      %v403 = vshll.u32 %v226, 16
      %v405 = vrot.slane %v403, 5
      %v406 = vsel %vm238, %v401, %v405
      %v408 = vshrl.u32 %v186, 16
      %v410 = vrot.slane %v408, 4
      %v411 = vshll.u32 %v186, 16
      %v413 = vrot.slane %v411, 5
      %v414 = vor.u32 %v410, %v413
      %v415 = vrot.slane %v414, 4
      %v417 = vshll.u32 %v187, 16
      %v419 = vrot.slane %v417, 5
      %v420 = vsel %vm238, %v415, %v419
      %v421 = vshrl.u32 %v187, 16
      %v423 = vrot.slane %v421, 4
      %v424 = vor.u32 %v423, %v419
      %v425 = vrot.slane %v424, 4
      %v427 = vshll.u32 %v227, 16
      %v429 = vrot.slane %v427, 5
      %v430 = vsel %vm238, %v425, %v429
      %v432 = vshrl.u32 %v188, 16
      %v434 = vrot.slane %v432, 4
      %v435 = vshll.u32 %v188, 16
      %v437 = vrot.slane %v435, 5
      %v438 = vor.u32 %v434, %v437
      %v439 = vrot.slane %v438, 4
      %v441 = vshll.u32 %v189, 16
      %v443 = vrot.slane %v441, 5
      %v444 = vsel %vm238, %v439, %v443
      %v445 = vshrl.u32 %v189, 16
      %v447 = vrot.slane %v445, 4
      %v448 = vor.u32 %v447, %v443
      %v449 = vrot.slane %v448, 4
      %v451 = vshll.u32 %v228, 16
      %v453 = vrot.slane %v451, 5
      %v454 = vsel %vm238, %v449, %v453
      %v456 = vshrl.u32 %v190, 16
      %v458 = vrot.slane %v456, 4
      %v459 = vshll.u32 %v190, 16
      %v461 = vrot.slane %v459, 5
      %v462 = vor.u32 %v458, %v461
      %v463 = vrot.slane %v462, 4
      %v465 = vshll.u32 %v191, 16
      %v467 = vrot.slane %v465, 5
      %v468 = vsel %vm238, %v463, %v467
      %v469 = vshrl.u32 %v191, 16
      %v471 = vrot.slane %v469, 4
      %v472 = vor.u32 %v471, %v467
      %v473 = vrot.slane %v472, 4
      %v475 = vshll.u32 %v229, 16
      %v477 = vrot.slane %v475, 5
      %v478 = vsel %vm238, %v473, %v477
      %v480 = vshrl.u32 %v192, 16
      %v482 = vrot.slane %v480, 4
      %v483 = vshll.u32 %v192, 16
      %v485 = vrot.slane %v483, 5
      %v486 = vor.u32 %v482, %v485
      %v487 = vrot.slane %v486, 4
      %v489 = vshll.u32 %v193, 16
      %v491 = vrot.slane %v489, 5
      %v492 = vsel %vm238, %v487, %v491
      %v493 = vshrl.u32 %v193, 16
      %v495 = vrot.slane %v493, 4
      %v496 = vor.u32 %v495, %v491
      %v497 = vrot.slane %v496, 4
      %v499 = vshll.u32 %v230, 16
      %v501 = vrot.slane %v499, 5
      %v502 = vsel %vm238, %v497, %v501
      %v504 = vshrl.u32 %v194, 16
      %v506 = vrot.slane %v504, 4
      %v507 = vshll.u32 %v194, 16
      %v509 = vrot.slane %v507, 5
      %v510 = vor.u32 %v506, %v509
      %v511 = vrot.slane %v510, 4
      %v513 = vshll.u32 %v195, 16
      %v515 = vrot.slane %v513, 5
      %v516 = vsel %vm238, %v511, %v515
      %v517 = vshrl.u32 %v195, 16
      %v519 = vrot.slane %v517, 4
      %v520 = vor.u32 %v519, %v515
      %v521 = vrot.slane %v520, 4
      %v523 = vshll.u32 %v231, 16
      %v525 = vrot.slane %v523, 5
      %v526 = vsel %vm238, %v521, %v525
      %v528 = vshrl.u32 %v196, 16
      %v530 = vrot.slane %v528, 4
      %v531 = vshll.u32 %v196, 16
      %v533 = vrot.slane %v531, 5
      %v534 = vor.u32 %v530, %v533
      %v535 = vrot.slane %v534, 4
      %v537 = vshll.u32 %v197, 16
      %v539 = vrot.slane %v537, 5
      %v540 = vsel %vm238, %v535, %v539
      %v541 = vshrl.u32 %v197, 16
      %v543 = vrot.slane %v541, 4
      %v544 = vor.u32 %v543, %v539
      %v545 = vrot.slane %v544, 4
      %v547 = vshll.u32 %v232, 16
      %v549 = vrot.slane %v547, 5
      %v550 = vsel %vm238, %v545, %v549
      %v552 = vshrl.u32 %v198, 16
      %v554 = vrot.slane %v552, 4
      %v555 = vshll.u32 %v198, 16
      %v557 = vrot.slane %v555, 5
      %v558 = vor.u32 %v554, %v557
      %v559 = vrot.slane %v558, 4
      %v561 = vshll.u32 %v199, 16
      %v563 = vrot.slane %v561, 5
      %v564 = vsel %vm238, %v559, %v563
      %v565 = vshrl.u32 %v199, 16
      %v567 = vrot.slane %v565, 4
      %v568 = vor.u32 %v567, %v563
      %v569 = vrot.slane %v568, 4
      %v571 = vshll.u32 %v233, 16
      %v573 = vrot.slane %v571, 5
      %v574 = vsel %vm238, %v569, %v573
      %v576 = vshrl.u32 %v200, 16
      %v578 = vrot.slane %v576, 4
      %v579 = vshll.u32 %v200, 16
      %v581 = vrot.slane %v579, 5
      %v582 = vor.u32 %v578, %v581
      %v583 = vrot.slane %v582, 4
      %v585 = vshll.u32 %v201, 16
      %v587 = vrot.slane %v585, 5
      %v588 = vsel %vm238, %v583, %v587
      %v589 = vshrl.u32 %v201, 16
      %v591 = vrot.slane %v589, 4
      %v592 = vor.u32 %v591, %v587
      %v593 = vrot.slane %v592, 4
      %v595 = vshll.u32 %v234, 16
      %v597 = vrot.slane %v595, 5
      %v598 = vsel %vm238, %v593, %v597
      %v600 = vshrl.u32 %v202, 16
      %v602 = vrot.slane %v600, 4
      %v603 = vshll.u32 %v202, 16
      %v605 = vrot.slane %v603, 5
      %v606 = vor.u32 %v602, %v605
      %v607 = vrot.slane %v606, 4
      %v609 = vshll.u32 %v203, 16
      %v611 = vrot.slane %v609, 5
      %v612 = vsel %vm238, %v607, %v611
      %v613 = vshrl.u32 %v203, 16
      %v615 = vrot.slane %v613, 4
      %v616 = vor.u32 %v615, %v611
      %v617 = vrot.slane %v616, 4
      %v619 = vshll.u32 %v235, 16
      %v621 = vrot.slane %v619, 5
      %v622 = vsel %vm238, %v617, %v621
      %s623 = scalar_lea.vmem %s1, 64
      %v624 = vld [vmem:[%s623] sm:$0xf]
      %v625 = vld [vmem:[%s623 + $0x4] sm:$0xf]
      %v626 = vld [vmem:[%s623 + $0x8] sm:$0xf]
      %v627 = vld [vmem:[%s623 + $0xc] sm:$0xf]
      %v628 = vld [vmem:[%s623 + $0x10] sm:$0xf]
      %v629 = vld [vmem:[%s623 + $0x14] sm:$0xf]
      %v630 = vld [vmem:[%s623 + $0x18] sm:$0xf]
      %v631 = vld [vmem:[%s623 + $0x1c] sm:$0xf]
      %v632 = vld [vmem:[%s623 + $0x20] sm:$0xf]
      %v633 = vld [vmem:[%s623 + $0x24] sm:$0xf]
      %v634 = vld [vmem:[%s623 + $0x28] sm:$0xf]
      %v635 = vld [vmem:[%s623 + $0x2c] sm:$0xf]
      %v636 = vld [vmem:[%s623 + $0x30] sm:$0xf]
      %v637 = vld [vmem:[%s623 + $0x34] sm:$0xf]
      %v638 = vld [vmem:[%s623 + $0x38] sm:$0xf]
      %v639 = vld [vmem:[%s623 + $0x3c] sm:$0xf]
      %v640 = vunpack.c.l.b16 %v252
      %v641 = vunpack.c.l.b16 %v262
      %v642 = vunpack.c.l.b16 %v276
      %v643 = vunpack.c.l.b16 %v286
      %v644 = vunpack.c.l.b16 %v300
      %v645 = vunpack.c.l.b16 %v310
      %v646 = vunpack.c.l.b16 %v324
      %v647 = vunpack.c.l.b16 %v334
      %v648 = vunpack.c.l.b16 %v348
      %v649 = vunpack.c.l.b16 %v358
      %v650 = vunpack.c.l.b16 %v372
      %v651 = vunpack.c.l.b16 %v382
      %v652 = vunpack.c.l.b16 %v396
      %v653 = vunpack.c.l.b16 %v406
      %v654 = vunpack.c.l.b16 %v420
      %v655 = vunpack.c.l.b16 %v430
      %v656 = vunpack.c.l.b16 %v444
      %v657 = vunpack.c.l.b16 %v454
      %v658 = vunpack.c.l.b16 %v468
      %v659 = vunpack.c.l.b16 %v478
      %v660 = vunpack.c.l.b16 %v492
      %v661 = vunpack.c.l.b16 %v502
      %v662 = vunpack.c.l.b16 %v516
      %v663 = vunpack.c.l.b16 %v526
      %v664 = vunpack.c.l.b16 %v540
      %v665 = vunpack.c.l.b16 %v550
      %v666 = vunpack.c.l.b16 %v564
      %v667 = vunpack.c.l.b16 %v574
      %v668 = vunpack.c.l.b16 %v588
      %v669 = vunpack.c.l.b16 %v598
      %v670 = vunpack.c.l.b16 %v612
      %v671 = vunpack.c.l.b16 %v622
      %v672 = vpack.c.b16 %v641, %v640
      %v673 = vpack.c.b16 %v643, %v642
      %v674 = vpack.c.b16 %v645, %v644
      %v675 = vpack.c.b16 %v647, %v646
      %v676 = vpack.c.b16 %v649, %v648
      %v677 = vpack.c.b16 %v651, %v650
      %v678 = vpack.c.b16 %v653, %v652
      %v679 = vpack.c.b16 %v655, %v654
      %v680 = vpack.c.b16 %v657, %v656
      %v681 = vpack.c.b16 %v659, %v658
      %v682 = vpack.c.b16 %v661, %v660
      %v683 = vpack.c.b16 %v663, %v662
      %v684 = vpack.c.b16 %v665, %v664
      %v685 = vpack.c.b16 %v667, %v666
      %v686 = vpack.c.b16 %v669, %v668
      %v687 = vpack.c.b16 %v671, %v670
      %v720 = vunpack.c.l.b16 %v624
      %v721 = vunpack.c.l.b16 %v625
      %v722 = vunpack.c.l.b16 %v626
      %v723 = vunpack.c.l.b16 %v627
      %v724 = vunpack.c.l.b16 %v628
      %v725 = vunpack.c.l.b16 %v629
      %v726 = vunpack.c.l.b16 %v630
      %v727 = vunpack.c.l.b16 %v631
      %v728 = vunpack.c.l.b16 %v632
      %v729 = vunpack.c.l.b16 %v633
      %v730 = vunpack.c.l.b16 %v634
      %v731 = vunpack.c.l.b16 %v635
      %v732 = vunpack.c.l.b16 %v636
      %v733 = vunpack.c.l.b16 %v637
      %v734 = vunpack.c.l.b16 %v638
      %v735 = vunpack.c.l.b16 %v639
      %v736 = vpack.c.b16 %v721, %v720
      %v737 = vpack.c.b16 %v723, %v722
      %v738 = vpack.c.b16 %v725, %v724
      %v739 = vpack.c.b16 %v727, %v726
      %v740 = vpack.c.b16 %v729, %v728
      %v741 = vpack.c.b16 %v731, %v730
      %v742 = vpack.c.b16 %v733, %v732
      %v743 = vpack.c.b16 %v735, %v734
      %752 = vmatprep.subr.bf16.mxu0 0
      %753 = vmatpush1.bf16.msra.mxu0 %v736
      %754 = vmatprep.subr.bf16.mxu0 0
      %755 = vmatpush1.bf16.msra.mxu0 %v737
      %756 = vmatprep.subr.bf16.mxu0 0
      %757 = vmatpush1.bf16.msra.mxu0 %v738
      %758 = vmatprep.subr.bf16.mxu0 0
      %759 = vmatpush1.bf16.msra.mxu0 %v739
      %760 = vmatprep.subr.bf16.mxu0 0
      %761 = vmatpush1.bf16.msra.mxu0 %v740
      %762 = vmatprep.subr.bf16.mxu0 0
      %763 = vmatpush1.bf16.msra.mxu0 %v741
      %764 = vmatprep.subr.bf16.mxu0 0
      %765 = vmatpush1.bf16.msra.mxu0 %v742
      %766 = vmatprep.subr.bf16.mxu0 0
      %767 = vmatpush1.bf16.msra.mxu0 %v743
      %768 = vmatprep.subr.bf16.mxu0 0
      %769 = vmatpush1.bf16.msra.mxu0 0
      %770 = vmatprep.subr.bf16.mxu0 0
      %771 = vmatpush1.bf16.msra.mxu0 0
      %772 = vmatprep.subr.bf16.mxu0 0
      %773 = vmatpush1.bf16.msra.mxu0 0
      %774 = vmatprep.subr.bf16.mxu0 0
      %775 = vmatpush1.bf16.msra.mxu0 0
      %776 = vmatprep.subr.bf16.mxu0 0
      %777 = vmatpush1.bf16.msra.mxu0 0
      %778 = vmatprep.subr.bf16.mxu0 0
      %779 = vmatpush1.bf16.msra.mxu0 0
      %780 = vmatprep.subr.bf16.mxu0 0
      %781 = vmatpush1.bf16.msra.mxu0 0
      %782 = vmatprep.subr.bf16.mxu0 0
      %783 = vmatpush1.bf16.msra.mxu0 0
      %784 = vmatprep.mubr.bf16.mxu0 0
      %785 = vmatmul.mubr.bf16.gmra.mrb[0].mxu0 %v672
      %v786 = vpop.f32.mrb[0].mxu0
      %v787 = vadd.f32 0.0, %v786
      %v788 = vpop.f32.mrb[0].mxu0
      %v789 = vpop.f32.mrb[0].mxu0
      %v790 = vadd.f32 0.0, %v789
      %v791 = vpop.f32.mrb[0].mxu0
      %792 = vmatprep.mubr.bf16.mxu0 0
      %793 = vmatmul.mubr.bf16.gmra.mrb[0].mxu0 %v673
      %v794 = vpop.f32.mrb[0].mxu0
      %v795 = vadd.f32 0.0, %v794
      %v796 = vpop.f32.mrb[0].mxu0
      %v797 = vpop.f32.mrb[0].mxu0
      %v798 = vadd.f32 0.0, %v797
      %v799 = vpop.f32.mrb[0].mxu0
      %800 = vmatprep.mubr.bf16.mxu0 0
      %801 = vmatmul.mubr.bf16.gmra.mrb[0].mxu0 %v674
      %v802 = vpop.f32.mrb[0].mxu0
      %v803 = vadd.f32 0.0, %v802
      %v804 = vpop.f32.mrb[0].mxu0
      %v805 = vpop.f32.mrb[0].mxu0
      %v806 = vadd.f32 0.0, %v805
      %v807 = vpop.f32.mrb[0].mxu0
      %808 = vmatprep.mubr.bf16.mxu0 0
      %809 = vmatmul.mubr.bf16.gmra.mrb[0].mxu0 %v675
      %v810 = vpop.f32.mrb[0].mxu0
      %v811 = vadd.f32 0.0, %v810
      %v812 = vpop.f32.mrb[0].mxu0
      %v813 = vpop.f32.mrb[0].mxu0
      %v814 = vadd.f32 0.0, %v813
      %v815 = vpop.f32.mrb[0].mxu0
      %816 = vmatprep.mubr.bf16.mxu0 0
      %817 = vmatmul.mubr.bf16.gmra.mrb[0].mxu0 %v676
      %v818 = vpop.f32.mrb[0].mxu0
      %v819 = vadd.f32 0.0, %v818
      %v820 = vpop.f32.mrb[0].mxu0
      %v821 = vpop.f32.mrb[0].mxu0
      %v822 = vadd.f32 0.0, %v821
      %v823 = vpop.f32.mrb[0].mxu0
      %824 = vmatprep.mubr.bf16.mxu0 0
      %825 = vmatmul.mubr.bf16.gmra.mrb[0].mxu0 %v677
      %v826 = vpop.f32.mrb[0].mxu0
      %v827 = vadd.f32 0.0, %v826
      %v828 = vpop.f32.mrb[0].mxu0
      %v829 = vpop.f32.mrb[0].mxu0
      %v830 = vadd.f32 0.0, %v829
      %v831 = vpop.f32.mrb[0].mxu0
      %832 = vmatprep.mubr.bf16.mxu0 0
      %833 = vmatmul.mubr.bf16.gmra.mrb[0].mxu0 %v678
      %v834 = vpop.f32.mrb[0].mxu0
      %v835 = vadd.f32 0.0, %v834
      %v836 = vpop.f32.mrb[0].mxu0
      %v837 = vpop.f32.mrb[0].mxu0
      %v838 = vadd.f32 0.0, %v837
      %v839 = vpop.f32.mrb[0].mxu0
      %840 = vmatprep.mubr.bf16.mxu0 0
      %841 = vmatmul.mubr.bf16.gmra.mrb[0].mxu0 %v679
      %v842 = vpop.f32.mrb[0].mxu0
      %v843 = vadd.f32 0.0, %v842
      %v844 = vpop.f32.mrb[0].mxu0
      %v845 = vpop.f32.mrb[0].mxu0
      %v846 = vadd.f32 0.0, %v845
      %v847 = vpop.f32.mrb[0].mxu0
      %848 = vmatprep.mubr.bf16.mxu0 0
      %849 = vmatmul.mubr.bf16.gmra.mrb[0].mxu0 %v680
      %v850 = vpop.f32.mrb[0].mxu0
      %v851 = vadd.f32 0.0, %v850
      %v852 = vpop.f32.mrb[0].mxu0
      %v853 = vpop.f32.mrb[0].mxu0
      %v854 = vadd.f32 0.0, %v853
      %v855 = vpop.f32.mrb[0].mxu0
      %856 = vmatprep.mubr.bf16.mxu0 0
      %857 = vmatmul.mubr.bf16.gmra.mrb[0].mxu0 %v681
      %v858 = vpop.f32.mrb[0].mxu0
      %v859 = vadd.f32 0.0, %v858
      %v860 = vpop.f32.mrb[0].mxu0
      %v861 = vpop.f32.mrb[0].mxu0
      %v862 = vadd.f32 0.0, %v861
      %v863 = vpop.f32.mrb[0].mxu0
      %864 = vmatprep.mubr.bf16.mxu0 0
      %865 = vmatmul.mubr.bf16.gmra.mrb[0].mxu0 %v682
      %v866 = vpop.f32.mrb[0].mxu0
      %v867 = vadd.f32 0.0, %v866
      %v868 = vpop.f32.mrb[0].mxu0
      %v869 = vpop.f32.mrb[0].mxu0
      %v870 = vadd.f32 0.0, %v869
      %v871 = vpop.f32.mrb[0].mxu0
      %872 = vmatprep.mubr.bf16.mxu0 0
      %873 = vmatmul.mubr.bf16.gmra.mrb[0].mxu0 %v683
      %v874 = vpop.f32.mrb[0].mxu0
      %v875 = vadd.f32 0.0, %v874
      %v876 = vpop.f32.mrb[0].mxu0
      %v877 = vpop.f32.mrb[0].mxu0
      %v878 = vadd.f32 0.0, %v877
      %v879 = vpop.f32.mrb[0].mxu0
      %880 = vmatprep.mubr.bf16.mxu0 0
      %881 = vmatmul.mubr.bf16.gmra.mrb[0].mxu0 %v684
      %v882 = vpop.f32.mrb[0].mxu0
      %v883 = vadd.f32 0.0, %v882
      %v884 = vpop.f32.mrb[0].mxu0
      %v885 = vpop.f32.mrb[0].mxu0
      %v886 = vadd.f32 0.0, %v885
      %v887 = vpop.f32.mrb[0].mxu0
      %888 = vmatprep.mubr.bf16.mxu0 0
      %889 = vmatmul.mubr.bf16.gmra.mrb[0].mxu0 %v685
      %v890 = vpop.f32.mrb[0].mxu0
      %v891 = vadd.f32 0.0, %v890
      %v892 = vpop.f32.mrb[0].mxu0
      %v893 = vpop.f32.mrb[0].mxu0
      %v894 = vadd.f32 0.0, %v893
      %v895 = vpop.f32.mrb[0].mxu0
      %896 = vmatprep.mubr.bf16.mxu0 0
      %897 = vmatmul.mubr.bf16.gmra.mrb[0].mxu0 %v686
      %v898 = vpop.f32.mrb[0].mxu0
      %v899 = vadd.f32 0.0, %v898
      %v900 = vpop.f32.mrb[0].mxu0
      %v901 = vpop.f32.mrb[0].mxu0
      %v902 = vadd.f32 0.0, %v901
      %v903 = vpop.f32.mrb[0].mxu0
      %904 = vmatprep.mubr.bf16.mxu0 0
      %905 = vmatmul.mubr.bf16.gmra.mrb[0].mxu0 %v687
      %v906 = vpop.f32.mrb[0].mxu0
      %v907 = vadd.f32 0.0, %v906
      %v908 = vpop.f32.mrb[0].mxu0
      %v909 = vpop.f32.mrb[0].mxu0
      %v910 = vadd.f32 0.0, %v909
      %v911 = vpop.f32.mrb[0].mxu0
      %912 = vdwg.mxu0
      %v945 = vunpack.c.l.b16 %v172
      %v946 = vunpack.c.l.b16 %v173
      %v947 = vunpack.c.l.b16 %v174
      %v948 = vunpack.c.l.b16 %v175
      %v949 = vunpack.c.l.b16 %v176
      %v950 = vunpack.c.l.b16 %v177
      %v951 = vunpack.c.l.b16 %v178
      %v952 = vunpack.c.l.b16 %v179
      %v953 = vunpack.c.l.b16 %v180
      %v954 = vunpack.c.l.b16 %v181
      %v955 = vunpack.c.l.b16 %v182
      %v956 = vunpack.c.l.b16 %v183
      %v957 = vunpack.c.l.b16 %v184
      %v958 = vunpack.c.l.b16 %v185
      %v959 = vunpack.c.l.b16 %v186
      %v960 = vunpack.c.l.b16 %v187
      %v961 = vunpack.c.l.b16 %v188
      %v962 = vunpack.c.l.b16 %v189
      %v963 = vunpack.c.l.b16 %v190
      %v964 = vunpack.c.l.b16 %v191
      %v965 = vunpack.c.l.b16 %v192
      %v966 = vunpack.c.l.b16 %v193
      %v967 = vunpack.c.l.b16 %v194
      %v968 = vunpack.c.l.b16 %v195
      %v969 = vunpack.c.l.b16 %v196
      %v970 = vunpack.c.l.b16 %v197
      %v971 = vunpack.c.l.b16 %v198
      %v972 = vunpack.c.l.b16 %v199
      %v973 = vunpack.c.l.b16 %v200
      %v974 = vunpack.c.l.b16 %v201
      %v975 = vunpack.c.l.b16 %v202
      %v976 = vunpack.c.l.b16 %v203
      %v977 = vpack.c.b16 %v946, %v945
      %v978 = vpack.c.b16 %v948, %v947
      %v979 = vpack.c.b16 %v950, %v949
      %v980 = vpack.c.b16 %v952, %v951
      %v981 = vpack.c.b16 %v954, %v953
      %v982 = vpack.c.b16 %v956, %v955
      %v983 = vpack.c.b16 %v958, %v957
      %v984 = vpack.c.b16 %v960, %v959
      %v985 = vpack.c.b16 %v962, %v961
      %v986 = vpack.c.b16 %v964, %v963
      %v987 = vpack.c.b16 %v966, %v965
      %v988 = vpack.c.b16 %v968, %v967
      %v989 = vpack.c.b16 %v970, %v969
      %v990 = vpack.c.b16 %v972, %v971
      %v991 = vpack.c.b16 %v974, %v973
      %v992 = vpack.c.b16 %v976, %v975
      %v1025 = vunpack.c.l.b16 %v204
      %v1026 = vunpack.c.l.b16 %v205
      %v1027 = vunpack.c.l.b16 %v206
      %v1028 = vunpack.c.l.b16 %v207
      %v1029 = vunpack.c.l.b16 %v208
      %v1030 = vunpack.c.l.b16 %v209
      %v1031 = vunpack.c.l.b16 %v210
      %v1032 = vunpack.c.l.b16 %v211
      %v1033 = vunpack.c.l.b16 %v212
      %v1034 = vunpack.c.l.b16 %v213
      %v1035 = vunpack.c.l.b16 %v214
      %v1036 = vunpack.c.l.b16 %v215
      %v1037 = vunpack.c.l.b16 %v216
      %v1038 = vunpack.c.l.b16 %v217
      %v1039 = vunpack.c.l.b16 %v218
      %v1040 = vunpack.c.l.b16 %v219
      %v1041 = vpack.c.b16 %v1026, %v1025
      %v1042 = vpack.c.b16 %v1028, %v1027
      %v1043 = vpack.c.b16 %v1030, %v1029
      %v1044 = vpack.c.b16 %v1032, %v1031
      %v1045 = vpack.c.b16 %v1034, %v1033
      %v1046 = vpack.c.b16 %v1036, %v1035
      %v1047 = vpack.c.b16 %v1038, %v1037
      %v1048 = vpack.c.b16 %v1040, %v1039
      %1057 = vmatprep.subr.bf16.mxu0 0
      %1058 = vmatpush1.bf16.msra.mxu0 %v1041
      %1059 = vmatprep.subr.bf16.mxu0 0
      %1060 = vmatpush1.bf16.msra.mxu0 %v1042
      %1061 = vmatprep.subr.bf16.mxu0 0
      %1062 = vmatpush1.bf16.msra.mxu0 %v1043
      %1063 = vmatprep.subr.bf16.mxu0 0
      %1064 = vmatpush1.bf16.msra.mxu0 %v1044
      %1065 = vmatprep.subr.bf16.mxu0 0
      %1066 = vmatpush1.bf16.msra.mxu0 %v1045
      %1067 = vmatprep.subr.bf16.mxu0 0
      %1068 = vmatpush1.bf16.msra.mxu0 %v1046
      %1069 = vmatprep.subr.bf16.mxu0 0
      %1070 = vmatpush1.bf16.msra.mxu0 %v1047
      %1071 = vmatprep.subr.bf16.mxu0 0
      %1072 = vmatpush1.bf16.msra.mxu0 %v1048
      %1073 = vmatprep.subr.bf16.mxu0 0
      %1074 = vmatpush1.bf16.msra.mxu0 0
      %1075 = vmatprep.subr.bf16.mxu0 0
      %1076 = vmatpush1.bf16.msra.mxu0 0
      %1077 = vmatprep.subr.bf16.mxu0 0
      %1078 = vmatpush1.bf16.msra.mxu0 0
      %1079 = vmatprep.subr.bf16.mxu0 0
      %1080 = vmatpush1.bf16.msra.mxu0 0
      %1081 = vmatprep.subr.bf16.mxu0 0
      %1082 = vmatpush1.bf16.msra.mxu0 0
      %1083 = vmatprep.subr.bf16.mxu0 0
      %1084 = vmatpush1.bf16.msra.mxu0 0
      %1085 = vmatprep.subr.bf16.mxu0 0
      %1086 = vmatpush1.bf16.msra.mxu0 0
      %1087 = vmatprep.subr.bf16.mxu0 0
      %1088 = vmatpush1.bf16.msra.mxu0 0
      %1089 = vmatprep.mubr.bf16.mxu0 0
      %1090 = vmatmul.mubr.bf16.gmra.mrb[0].mxu0 %v977
      %v1091 = vpop.f32.mrb[0].mxu0
      %v1092 = vadd.f32 %v787, %v1091
      %v1093 = vpop.f32.mrb[0].mxu0
      %v1094 = vpop.f32.mrb[0].mxu0
      %v1095 = vadd.f32 %v790, %v1094
      %v1096 = vpop.f32.mrb[0].mxu0
      %1097 = vmatprep.mubr.bf16.mxu0 0
      %1098 = vmatmul.mubr.bf16.gmra.mrb[0].mxu0 %v978
      %v1099 = vpop.f32.mrb[0].mxu0
      %v1100 = vadd.f32 %v795, %v1099
      %v1101 = vpop.f32.mrb[0].mxu0
      %v1102 = vpop.f32.mrb[0].mxu0
      %v1103 = vadd.f32 %v798, %v1102
      %v1104 = vpop.f32.mrb[0].mxu0
      %1105 = vmatprep.mubr.bf16.mxu0 0
      %1106 = vmatmul.mubr.bf16.gmra.mrb[0].mxu0 %v979
      %v1107 = vpop.f32.mrb[0].mxu0
      %v1108 = vadd.f32 %v803, %v1107
      %v1109 = vpop.f32.mrb[0].mxu0
      %v1110 = vpop.f32.mrb[0].mxu0
      %v1111 = vadd.f32 %v806, %v1110
      %v1112 = vpop.f32.mrb[0].mxu0
      %1113 = vmatprep.mubr.bf16.mxu0 0
      %1114 = vmatmul.mubr.bf16.gmra.mrb[0].mxu0 %v980
      %v1115 = vpop.f32.mrb[0].mxu0
      %v1116 = vadd.f32 %v811, %v1115
      %v1117 = vpop.f32.mrb[0].mxu0
      %v1118 = vpop.f32.mrb[0].mxu0
      %v1119 = vadd.f32 %v814, %v1118
      %v1120 = vpop.f32.mrb[0].mxu0
      %1121 = vmatprep.mubr.bf16.mxu0 0
      %1122 = vmatmul.mubr.bf16.gmra.mrb[0].mxu0 %v981
      %v1123 = vpop.f32.mrb[0].mxu0
      %v1124 = vadd.f32 %v819, %v1123
      %v1125 = vpop.f32.mrb[0].mxu0
      %v1126 = vpop.f32.mrb[0].mxu0
      %v1127 = vadd.f32 %v822, %v1126
      %v1128 = vpop.f32.mrb[0].mxu0
      %1129 = vmatprep.mubr.bf16.mxu0 0
      %1130 = vmatmul.mubr.bf16.gmra.mrb[0].mxu0 %v982
      %v1131 = vpop.f32.mrb[0].mxu0
      %v1132 = vadd.f32 %v827, %v1131
      %v1133 = vpop.f32.mrb[0].mxu0
      %v1134 = vpop.f32.mrb[0].mxu0
      %v1135 = vadd.f32 %v830, %v1134
      %v1136 = vpop.f32.mrb[0].mxu0
      %1137 = vmatprep.mubr.bf16.mxu0 0
      %1138 = vmatmul.mubr.bf16.gmra.mrb[0].mxu0 %v983
      %v1139 = vpop.f32.mrb[0].mxu0
      %v1140 = vadd.f32 %v835, %v1139
      %v1141 = vpop.f32.mrb[0].mxu0
      %v1142 = vpop.f32.mrb[0].mxu0
      %v1143 = vadd.f32 %v838, %v1142
      %v1144 = vpop.f32.mrb[0].mxu0
      %1145 = vmatprep.mubr.bf16.mxu0 0
      %1146 = vmatmul.mubr.bf16.gmra.mrb[0].mxu0 %v984
      %v1147 = vpop.f32.mrb[0].mxu0
      %v1148 = vadd.f32 %v843, %v1147
      %v1149 = vpop.f32.mrb[0].mxu0
      %v1150 = vpop.f32.mrb[0].mxu0
      %v1151 = vadd.f32 %v846, %v1150
      %v1152 = vpop.f32.mrb[0].mxu0
      %1153 = vmatprep.mubr.bf16.mxu0 0
      %1154 = vmatmul.mubr.bf16.gmra.mrb[0].mxu0 %v985
      %v1155 = vpop.f32.mrb[0].mxu0
      %v1156 = vadd.f32 %v851, %v1155
      %v1157 = vpop.f32.mrb[0].mxu0
      %v1158 = vpop.f32.mrb[0].mxu0
      %v1159 = vadd.f32 %v854, %v1158
      %v1160 = vpop.f32.mrb[0].mxu0
      %1161 = vmatprep.mubr.bf16.mxu0 0
      %1162 = vmatmul.mubr.bf16.gmra.mrb[0].mxu0 %v986
      %v1163 = vpop.f32.mrb[0].mxu0
      %v1164 = vadd.f32 %v859, %v1163
      %v1165 = vpop.f32.mrb[0].mxu0
      %v1166 = vpop.f32.mrb[0].mxu0
      %v1167 = vadd.f32 %v862, %v1166
      %v1168 = vpop.f32.mrb[0].mxu0
      %1169 = vmatprep.mubr.bf16.mxu0 0
      %1170 = vmatmul.mubr.bf16.gmra.mrb[0].mxu0 %v987
      %v1171 = vpop.f32.mrb[0].mxu0
      %v1172 = vadd.f32 %v867, %v1171
      %v1173 = vpop.f32.mrb[0].mxu0
      %v1174 = vpop.f32.mrb[0].mxu0
      %v1175 = vadd.f32 %v870, %v1174
      %v1176 = vpop.f32.mrb[0].mxu0
      %1177 = vmatprep.mubr.bf16.mxu0 0
      %1178 = vmatmul.mubr.bf16.gmra.mrb[0].mxu0 %v988
      %v1179 = vpop.f32.mrb[0].mxu0
      %v1180 = vadd.f32 %v875, %v1179
      %v1181 = vpop.f32.mrb[0].mxu0
      %v1182 = vpop.f32.mrb[0].mxu0
      %v1183 = vadd.f32 %v878, %v1182
      %v1184 = vpop.f32.mrb[0].mxu0
      %1185 = vmatprep.mubr.bf16.mxu0 0
      %1186 = vmatmul.mubr.bf16.gmra.mrb[0].mxu0 %v989
      %v1187 = vpop.f32.mrb[0].mxu0
      %v1188 = vadd.f32 %v883, %v1187
      %v1189 = vpop.f32.mrb[0].mxu0
      %v1190 = vpop.f32.mrb[0].mxu0
      %v1191 = vadd.f32 %v886, %v1190
      %v1192 = vpop.f32.mrb[0].mxu0
      %1193 = vmatprep.mubr.bf16.mxu0 0
      %1194 = vmatmul.mubr.bf16.gmra.mrb[0].mxu0 %v990
      %v1195 = vpop.f32.mrb[0].mxu0
      %v1196 = vadd.f32 %v891, %v1195
      %v1197 = vpop.f32.mrb[0].mxu0
      %v1198 = vpop.f32.mrb[0].mxu0
      %v1199 = vadd.f32 %v894, %v1198
      %v1200 = vpop.f32.mrb[0].mxu0
      %1201 = vmatprep.mubr.bf16.mxu0 0
      %1202 = vmatmul.mubr.bf16.gmra.mrb[0].mxu0 %v991
      %v1203 = vpop.f32.mrb[0].mxu0
      %v1204 = vadd.f32 %v899, %v1203
      %v1205 = vpop.f32.mrb[0].mxu0
      %v1206 = vpop.f32.mrb[0].mxu0
      %v1207 = vadd.f32 %v902, %v1206
      %v1208 = vpop.f32.mrb[0].mxu0
      %1209 = vmatprep.mubr.bf16.mxu0 0
      %1210 = vmatmul.mubr.bf16.gmra.mrb[0].mxu0 %v992
      %v1211 = vpop.f32.mrb[0].mxu0
      %v1212 = vadd.f32 %v907, %v1211
      %v1213 = vpop.f32.mrb[0].mxu0
      %v1214 = vpop.f32.mrb[0].mxu0
      %v1215 = vadd.f32 %v910, %v1214
      %v1216 = vpop.f32.mrb[0].mxu0
      %1217 = vdwg.mxu0
      %v1218 = vld [vmem:[%s165] sm:$0xe]
      %v1219 = vld [vmem:[%s165 + $0xc] sm:$0xe]
      %v1220 = vld [vmem:[%s165 + $0x18] sm:$0xe]
      %v1221 = vld [vmem:[%s165 + $0x24] sm:$0xe]
      %v1222 = vld [vmem:[%s165 + $0x30] sm:$0xe]
      %v1223 = vld [vmem:[%s165 + $0x3c] sm:$0xe]
      %v1224 = vld [vmem:[%s165 + $0x48] sm:$0xe]
      %v1225 = vld [vmem:[%s165 + $0x54] sm:$0xe]
      %v1226 = vld [vmem:[%s165 + $0x60] sm:$0xe]
      %v1227 = vld [vmem:[%s165 + $0x6c] sm:$0xe]
      %v1228 = vld [vmem:[%s165 + $0x78] sm:$0xe]
      %v1229 = vld [vmem:[%s165 + $0x84] sm:$0xe]
      %v1230 = vld [vmem:[%s165 + $0x90] sm:$0xe]
      %v1231 = vld [vmem:[%s165 + $0x9c] sm:$0xe]
      %v1232 = vld [vmem:[%s165 + $0xa8] sm:$0xe]
      %v1233 = vld [vmem:[%s165 + $0xb4] sm:$0xe]
      %vm1266 = vcmask 1042432
      %vm1267 = vcmask 1046532
      %vm1268 = vmor %vm1266, %vm1267
      %v1269 = vrot.slane %v1218, 5
      %v1270 = vrot.slane %v1269, 4
      %v1271 = vrot.slane %v173, 5
      %v1272 = vsel %vm1268, %v1270, %v1271
      %v1273 = vrot.slane %v1271, 4
      %v1274 = vrot.slane %v220, 5
      %v1275 = vsel %vm1268, %v1273, %v1274
      %v1276 = vrot.slane %v1219, 5
      %v1277 = vrot.slane %v1276, 4
      %v1278 = vrot.slane %v175, 5
      %v1279 = vsel %vm1268, %v1277, %v1278
      %v1280 = vrot.slane %v1278, 4
      %v1281 = vrot.slane %v221, 5
      %v1282 = vsel %vm1268, %v1280, %v1281
      %v1283 = vrot.slane %v1220, 5
      %v1284 = vrot.slane %v1283, 4
      %v1285 = vrot.slane %v177, 5
      %v1286 = vsel %vm1268, %v1284, %v1285
      %v1287 = vrot.slane %v1285, 4
      %v1288 = vrot.slane %v222, 5
      %v1289 = vsel %vm1268, %v1287, %v1288
      %v1290 = vrot.slane %v1221, 5
      %v1291 = vrot.slane %v1290, 4
      %v1292 = vrot.slane %v179, 5
      %v1293 = vsel %vm1268, %v1291, %v1292
      %v1294 = vrot.slane %v1292, 4
      %v1295 = vrot.slane %v223, 5
      %v1296 = vsel %vm1268, %v1294, %v1295
      %v1297 = vrot.slane %v1222, 5
      %v1298 = vrot.slane %v1297, 4
      %v1299 = vrot.slane %v181, 5
      %v1300 = vsel %vm1268, %v1298, %v1299
      %v1301 = vrot.slane %v1299, 4
      %v1302 = vrot.slane %v224, 5
      %v1303 = vsel %vm1268, %v1301, %v1302
      %v1304 = vrot.slane %v1223, 5
      %v1305 = vrot.slane %v1304, 4
      %v1306 = vrot.slane %v183, 5
      %v1307 = vsel %vm1268, %v1305, %v1306
      %v1308 = vrot.slane %v1306, 4
      %v1309 = vrot.slane %v225, 5
      %v1310 = vsel %vm1268, %v1308, %v1309
      %v1311 = vrot.slane %v1224, 5
      %v1312 = vrot.slane %v1311, 4
      %v1313 = vrot.slane %v185, 5
      %v1314 = vsel %vm1268, %v1312, %v1313
      %v1315 = vrot.slane %v1313, 4
      %v1316 = vrot.slane %v226, 5
      %v1317 = vsel %vm1268, %v1315, %v1316
      %v1318 = vrot.slane %v1225, 5
      %v1319 = vrot.slane %v1318, 4
      %v1320 = vrot.slane %v187, 5
      %v1321 = vsel %vm1268, %v1319, %v1320
      %v1322 = vrot.slane %v1320, 4
      %v1323 = vrot.slane %v227, 5
      %v1324 = vsel %vm1268, %v1322, %v1323
      %v1325 = vrot.slane %v1226, 5
      %v1326 = vrot.slane %v1325, 4
      %v1327 = vrot.slane %v189, 5
      %v1328 = vsel %vm1268, %v1326, %v1327
      %v1329 = vrot.slane %v1327, 4
      %v1330 = vrot.slane %v228, 5
      %v1331 = vsel %vm1268, %v1329, %v1330
      %v1332 = vrot.slane %v1227, 5
      %v1333 = vrot.slane %v1332, 4
      %v1334 = vrot.slane %v191, 5
      %v1335 = vsel %vm1268, %v1333, %v1334
      %v1336 = vrot.slane %v1334, 4
      %v1337 = vrot.slane %v229, 5
      %v1338 = vsel %vm1268, %v1336, %v1337
      %v1339 = vrot.slane %v1228, 5
      %v1340 = vrot.slane %v1339, 4
      %v1341 = vrot.slane %v193, 5
      %v1342 = vsel %vm1268, %v1340, %v1341
      %v1343 = vrot.slane %v1341, 4
      %v1344 = vrot.slane %v230, 5
      %v1345 = vsel %vm1268, %v1343, %v1344
      %v1346 = vrot.slane %v1229, 5
      %v1347 = vrot.slane %v1346, 4
      %v1348 = vrot.slane %v195, 5
      %v1349 = vsel %vm1268, %v1347, %v1348
      %v1350 = vrot.slane %v1348, 4
      %v1351 = vrot.slane %v231, 5
      %v1352 = vsel %vm1268, %v1350, %v1351
      %v1353 = vrot.slane %v1230, 5
      %v1354 = vrot.slane %v1353, 4
      %v1355 = vrot.slane %v197, 5
      %v1356 = vsel %vm1268, %v1354, %v1355
      %v1357 = vrot.slane %v1355, 4
      %v1358 = vrot.slane %v232, 5
      %v1359 = vsel %vm1268, %v1357, %v1358
      %v1360 = vrot.slane %v1231, 5
      %v1361 = vrot.slane %v1360, 4
      %v1362 = vrot.slane %v199, 5
      %v1363 = vsel %vm1268, %v1361, %v1362
      %v1364 = vrot.slane %v1362, 4
      %v1365 = vrot.slane %v233, 5
      %v1366 = vsel %vm1268, %v1364, %v1365
      %v1367 = vrot.slane %v1232, 5
      %v1368 = vrot.slane %v1367, 4
      %v1369 = vrot.slane %v201, 5
      %v1370 = vsel %vm1268, %v1368, %v1369
      %v1371 = vrot.slane %v1369, 4
      %v1372 = vrot.slane %v234, 5
      %v1373 = vsel %vm1268, %v1371, %v1372
      %v1374 = vrot.slane %v1233, 5
      %v1375 = vrot.slane %v1374, 4
      %v1376 = vrot.slane %v203, 5
      %v1377 = vsel %vm1268, %v1375, %v1376
      %v1378 = vrot.slane %v1376, 4
      %v1379 = vrot.slane %v235, 5
      %v1380 = vsel %vm1268, %v1378, %v1379
      %s1381 = scalar_lea.vmem %s1, 128
      %v1382 = vld [vmem:[%s1381] sm:$0xf]
      %v1383 = vld [vmem:[%s1381 + $0x4] sm:$0xf]
      %v1384 = vld [vmem:[%s1381 + $0x8] sm:$0xf]
      %v1385 = vld [vmem:[%s1381 + $0xc] sm:$0xf]
      %v1386 = vld [vmem:[%s1381 + $0x10] sm:$0xf]
      %v1387 = vld [vmem:[%s1381 + $0x14] sm:$0xf]
      %v1388 = vld [vmem:[%s1381 + $0x18] sm:$0xf]
      %v1389 = vld [vmem:[%s1381 + $0x1c] sm:$0xf]
      %v1390 = vld [vmem:[%s1381 + $0x20] sm:$0xf]
      %v1391 = vld [vmem:[%s1381 + $0x24] sm:$0xf]
      %v1392 = vld [vmem:[%s1381 + $0x28] sm:$0xf]
      %v1393 = vld [vmem:[%s1381 + $0x2c] sm:$0xf]
      %v1394 = vld [vmem:[%s1381 + $0x30] sm:$0xf]
      %v1395 = vld [vmem:[%s1381 + $0x34] sm:$0xf]
      %v1396 = vld [vmem:[%s1381 + $0x38] sm:$0xf]
      %v1397 = vld [vmem:[%s1381 + $0x3c] sm:$0xf]
      %v1398 = vunpack.c.l.b16 %v1272
      %v1399 = vunpack.c.l.b16 %v1275
      %v1400 = vunpack.c.l.b16 %v1279
      %v1401 = vunpack.c.l.b16 %v1282
      %v1402 = vunpack.c.l.b16 %v1286
      %v1403 = vunpack.c.l.b16 %v1289
      %v1404 = vunpack.c.l.b16 %v1293
      %v1405 = vunpack.c.l.b16 %v1296
      %v1406 = vunpack.c.l.b16 %v1300
      %v1407 = vunpack.c.l.b16 %v1303
      %v1408 = vunpack.c.l.b16 %v1307
      %v1409 = vunpack.c.l.b16 %v1310
      %v1410 = vunpack.c.l.b16 %v1314
      %v1411 = vunpack.c.l.b16 %v1317
      %v1412 = vunpack.c.l.b16 %v1321
      %v1413 = vunpack.c.l.b16 %v1324
      %v1414 = vunpack.c.l.b16 %v1328
      %v1415 = vunpack.c.l.b16 %v1331
      %v1416 = vunpack.c.l.b16 %v1335
      %v1417 = vunpack.c.l.b16 %v1338
      %v1418 = vunpack.c.l.b16 %v1342
      %v1419 = vunpack.c.l.b16 %v1345
      %v1420 = vunpack.c.l.b16 %v1349
      %v1421 = vunpack.c.l.b16 %v1352
      %v1422 = vunpack.c.l.b16 %v1356
      %v1423 = vunpack.c.l.b16 %v1359
      %v1424 = vunpack.c.l.b16 %v1363
      %v1425 = vunpack.c.l.b16 %v1366
      %v1426 = vunpack.c.l.b16 %v1370
      %v1427 = vunpack.c.l.b16 %v1373
      %v1428 = vunpack.c.l.b16 %v1377
      %v1429 = vunpack.c.l.b16 %v1380
      %v1430 = vpack.c.b16 %v1399, %v1398
      %v1431 = vpack.c.b16 %v1401, %v1400
      %v1432 = vpack.c.b16 %v1403, %v1402
      %v1433 = vpack.c.b16 %v1405, %v1404
      %v1434 = vpack.c.b16 %v1407, %v1406
      %v1435 = vpack.c.b16 %v1409, %v1408
      %v1436 = vpack.c.b16 %v1411, %v1410
      %v1437 = vpack.c.b16 %v1413, %v1412
      %v1438 = vpack.c.b16 %v1415, %v1414
      %v1439 = vpack.c.b16 %v1417, %v1416
      %v1440 = vpack.c.b16 %v1419, %v1418
      %v1441 = vpack.c.b16 %v1421, %v1420
      %v1442 = vpack.c.b16 %v1423, %v1422
      %v1443 = vpack.c.b16 %v1425, %v1424
      %v1444 = vpack.c.b16 %v1427, %v1426
      %v1445 = vpack.c.b16 %v1429, %v1428
      %v1478 = vunpack.c.l.b16 %v1382
      %v1479 = vunpack.c.l.b16 %v1383
      %v1480 = vunpack.c.l.b16 %v1384
      %v1481 = vunpack.c.l.b16 %v1385
      %v1482 = vunpack.c.l.b16 %v1386
      %v1483 = vunpack.c.l.b16 %v1387
      %v1484 = vunpack.c.l.b16 %v1388
      %v1485 = vunpack.c.l.b16 %v1389
      %v1486 = vunpack.c.l.b16 %v1390
      %v1487 = vunpack.c.l.b16 %v1391
      %v1488 = vunpack.c.l.b16 %v1392
      %v1489 = vunpack.c.l.b16 %v1393
      %v1490 = vunpack.c.l.b16 %v1394
      %v1491 = vunpack.c.l.b16 %v1395
      %v1492 = vunpack.c.l.b16 %v1396
      %v1493 = vunpack.c.l.b16 %v1397
      %v1494 = vpack.c.b16 %v1479, %v1478
      %v1495 = vpack.c.b16 %v1481, %v1480
      %v1496 = vpack.c.b16 %v1483, %v1482
      %v1497 = vpack.c.b16 %v1485, %v1484
      %v1498 = vpack.c.b16 %v1487, %v1486
      %v1499 = vpack.c.b16 %v1489, %v1488
      %v1500 = vpack.c.b16 %v1491, %v1490
      %v1501 = vpack.c.b16 %v1493, %v1492
      %1510 = vmatprep.subr.bf16.mxu0 0
      %1511 = vmatpush1.bf16.msra.mxu0 %v1494
      %1512 = vmatprep.subr.bf16.mxu0 0
      %1513 = vmatpush1.bf16.msra.mxu0 %v1495
      %1514 = vmatprep.subr.bf16.mxu0 0
      %1515 = vmatpush1.bf16.msra.mxu0 %v1496
      %1516 = vmatprep.subr.bf16.mxu0 0
      %1517 = vmatpush1.bf16.msra.mxu0 %v1497
      %1518 = vmatprep.subr.bf16.mxu0 0
      %1519 = vmatpush1.bf16.msra.mxu0 %v1498
      %1520 = vmatprep.subr.bf16.mxu0 0
      %1521 = vmatpush1.bf16.msra.mxu0 %v1499
      %1522 = vmatprep.subr.bf16.mxu0 0
      %1523 = vmatpush1.bf16.msra.mxu0 %v1500
      %1524 = vmatprep.subr.bf16.mxu0 0
      %1525 = vmatpush1.bf16.msra.mxu0 %v1501
      %1526 = vmatprep.subr.bf16.mxu0 0
      %1527 = vmatpush1.bf16.msra.mxu0 0
      %1528 = vmatprep.subr.bf16.mxu0 0
      %1529 = vmatpush1.bf16.msra.mxu0 0
      %1530 = vmatprep.subr.bf16.mxu0 0
      %1531 = vmatpush1.bf16.msra.mxu0 0
      %1532 = vmatprep.subr.bf16.mxu0 0
      %1533 = vmatpush1.bf16.msra.mxu0 0
      %1534 = vmatprep.subr.bf16.mxu0 0
      %1535 = vmatpush1.bf16.msra.mxu0 0
      %1536 = vmatprep.subr.bf16.mxu0 0
      %1537 = vmatpush1.bf16.msra.mxu0 0
      %1538 = vmatprep.subr.bf16.mxu0 0
      %1539 = vmatpush1.bf16.msra.mxu0 0
      %1540 = vmatprep.subr.bf16.mxu0 0
      %1541 = vmatpush1.bf16.msra.mxu0 0
      %1542 = vmatprep.mubr.bf16.mxu0 0
      %1543 = vmatmul.mubr.bf16.gmra.mrb[0].mxu0 %v1430
      %v1544 = vpop.f32.mrb[0].mxu0
      %v1545 = vadd.f32 0.0, %v1544
      %v1546 = vpop.f32.mrb[0].mxu0
      %v1547 = vpop.f32.mrb[0].mxu0
      %v1548 = vadd.f32 0.0, %v1547
      %v1549 = vpop.f32.mrb[0].mxu0
      %1550 = vmatprep.mubr.bf16.mxu0 0
      %1551 = vmatmul.mubr.bf16.gmra.mrb[0].mxu0 %v1431
      %v1552 = vpop.f32.mrb[0].mxu0
      %v1553 = vadd.f32 0.0, %v1552
      %v1554 = vpop.f32.mrb[0].mxu0
      %v1555 = vpop.f32.mrb[0].mxu0
      %v1556 = vadd.f32 0.0, %v1555
      %v1557 = vpop.f32.mrb[0].mxu0
      %1558 = vmatprep.mubr.bf16.mxu0 0
      %1559 = vmatmul.mubr.bf16.gmra.mrb[0].mxu0 %v1432
      %v1560 = vpop.f32.mrb[0].mxu0
      %v1561 = vadd.f32 0.0, %v1560
      %v1562 = vpop.f32.mrb[0].mxu0
      %v1563 = vpop.f32.mrb[0].mxu0
      %v1564 = vadd.f32 0.0, %v1563
      %v1565 = vpop.f32.mrb[0].mxu0
      %1566 = vmatprep.mubr.bf16.mxu0 0
      %1567 = vmatmul.mubr.bf16.gmra.mrb[0].mxu0 %v1433
      %v1568 = vpop.f32.mrb[0].mxu0
      %v1569 = vadd.f32 0.0, %v1568
      %v1570 = vpop.f32.mrb[0].mxu0
      %v1571 = vpop.f32.mrb[0].mxu0
      %v1572 = vadd.f32 0.0, %v1571
      %v1573 = vpop.f32.mrb[0].mxu0
      %1574 = vmatprep.mubr.bf16.mxu0 0
      %1575 = vmatmul.mubr.bf16.gmra.mrb[0].mxu0 %v1434
      %v1576 = vpop.f32.mrb[0].mxu0
      %v1577 = vadd.f32 0.0, %v1576
      %v1578 = vpop.f32.mrb[0].mxu0
      %v1579 = vpop.f32.mrb[0].mxu0
      %v1580 = vadd.f32 0.0, %v1579
      %v1581 = vpop.f32.mrb[0].mxu0
      %1582 = vmatprep.mubr.bf16.mxu0 0
      %1583 = vmatmul.mubr.bf16.gmra.mrb[0].mxu0 %v1435
      %v1584 = vpop.f32.mrb[0].mxu0
      %v1585 = vadd.f32 0.0, %v1584
      %v1586 = vpop.f32.mrb[0].mxu0
      %v1587 = vpop.f32.mrb[0].mxu0
      %v1588 = vadd.f32 0.0, %v1587
      %v1589 = vpop.f32.mrb[0].mxu0
      %1590 = vmatprep.mubr.bf16.mxu0 0
      %1591 = vmatmul.mubr.bf16.gmra.mrb[0].mxu0 %v1436
      %v1592 = vpop.f32.mrb[0].mxu0
      %v1593 = vadd.f32 0.0, %v1592
      %v1594 = vpop.f32.mrb[0].mxu0
      %v1595 = vpop.f32.mrb[0].mxu0
      %v1596 = vadd.f32 0.0, %v1595
      %v1597 = vpop.f32.mrb[0].mxu0
      %1598 = vmatprep.mubr.bf16.mxu0 0
      %1599 = vmatmul.mubr.bf16.gmra.mrb[0].mxu0 %v1437
      %v1600 = vpop.f32.mrb[0].mxu0
      %v1601 = vadd.f32 0.0, %v1600
      %v1602 = vpop.f32.mrb[0].mxu0
      %v1603 = vpop.f32.mrb[0].mxu0
      %v1604 = vadd.f32 0.0, %v1603
      %v1605 = vpop.f32.mrb[0].mxu0
      %1606 = vmatprep.mubr.bf16.mxu0 0
      %1607 = vmatmul.mubr.bf16.gmra.mrb[0].mxu0 %v1438
      %v1608 = vpop.f32.mrb[0].mxu0
      %v1609 = vadd.f32 0.0, %v1608
      %v1610 = vpop.f32.mrb[0].mxu0
      %v1611 = vpop.f32.mrb[0].mxu0
      %v1612 = vadd.f32 0.0, %v1611
      %v1613 = vpop.f32.mrb[0].mxu0
      %1614 = vmatprep.mubr.bf16.mxu0 0
      %1615 = vmatmul.mubr.bf16.gmra.mrb[0].mxu0 %v1439
      %v1616 = vpop.f32.mrb[0].mxu0
      %v1617 = vadd.f32 0.0, %v1616
      %v1618 = vpop.f32.mrb[0].mxu0
      %v1619 = vpop.f32.mrb[0].mxu0
      %v1620 = vadd.f32 0.0, %v1619
      %v1621 = vpop.f32.mrb[0].mxu0
      %1622 = vmatprep.mubr.bf16.mxu0 0
      %1623 = vmatmul.mubr.bf16.gmra.mrb[0].mxu0 %v1440
      %v1624 = vpop.f32.mrb[0].mxu0
      %v1625 = vadd.f32 0.0, %v1624
      %v1626 = vpop.f32.mrb[0].mxu0
      %v1627 = vpop.f32.mrb[0].mxu0
      %v1628 = vadd.f32 0.0, %v1627
      %v1629 = vpop.f32.mrb[0].mxu0
      %1630 = vmatprep.mubr.bf16.mxu0 0
      %1631 = vmatmul.mubr.bf16.gmra.mrb[0].mxu0 %v1441
      %v1632 = vpop.f32.mrb[0].mxu0
      %v1633 = vadd.f32 0.0, %v1632
      %v1634 = vpop.f32.mrb[0].mxu0
      %v1635 = vpop.f32.mrb[0].mxu0
      %v1636 = vadd.f32 0.0, %v1635
      %v1637 = vpop.f32.mrb[0].mxu0
      %1638 = vmatprep.mubr.bf16.mxu0 0
      %1639 = vmatmul.mubr.bf16.gmra.mrb[0].mxu0 %v1442
      %v1640 = vpop.f32.mrb[0].mxu0
      %v1641 = vadd.f32 0.0, %v1640
      %v1642 = vpop.f32.mrb[0].mxu0
      %v1643 = vpop.f32.mrb[0].mxu0
      %v1644 = vadd.f32 0.0, %v1643
      %v1645 = vpop.f32.mrb[0].mxu0
      %1646 = vmatprep.mubr.bf16.mxu0 0
      %1647 = vmatmul.mubr.bf16.gmra.mrb[0].mxu0 %v1443
      %v1648 = vpop.f32.mrb[0].mxu0
      %v1649 = vadd.f32 0.0, %v1648
      %v1650 = vpop.f32.mrb[0].mxu0
      %v1651 = vpop.f32.mrb[0].mxu0
      %v1652 = vadd.f32 0.0, %v1651
      %v1653 = vpop.f32.mrb[0].mxu0
      %1654 = vmatprep.mubr.bf16.mxu0 0
      %1655 = vmatmul.mubr.bf16.gmra.mrb[0].mxu0 %v1444
      %v1656 = vpop.f32.mrb[0].mxu0
      %v1657 = vadd.f32 0.0, %v1656
      %v1658 = vpop.f32.mrb[0].mxu0
      %v1659 = vpop.f32.mrb[0].mxu0
      %v1660 = vadd.f32 0.0, %v1659
      %v1661 = vpop.f32.mrb[0].mxu0
      %1662 = vmatprep.mubr.bf16.mxu0 0
      %1663 = vmatmul.mubr.bf16.gmra.mrb[0].mxu0 %v1445
      %v1664 = vpop.f32.mrb[0].mxu0
      %v1665 = vadd.f32 0.0, %v1664
      %v1666 = vpop.f32.mrb[0].mxu0
      %v1667 = vpop.f32.mrb[0].mxu0
      %v1668 = vadd.f32 0.0, %v1667
      %v1669 = vpop.f32.mrb[0].mxu0
      %1670 = vdwg.mxu0
      %v1671 = vadd.f32 %v1092, %v1545
      %v1672 = vadd.f32 %v1095, %v1548
      %v1673 = vadd.f32 %v1100, %v1553
      %v1674 = vadd.f32 %v1103, %v1556
      %v1675 = vadd.f32 %v1108, %v1561
      %v1676 = vadd.f32 %v1111, %v1564
      %v1677 = vadd.f32 %v1116, %v1569
      %v1678 = vadd.f32 %v1119, %v1572
      %v1679 = vadd.f32 %v1124, %v1577
      %v1680 = vadd.f32 %v1127, %v1580
      %v1681 = vadd.f32 %v1132, %v1585
      %v1682 = vadd.f32 %v1135, %v1588
      %v1683 = vadd.f32 %v1140, %v1593
      %v1684 = vadd.f32 %v1143, %v1596
      %v1685 = vadd.f32 %v1148, %v1601
      %v1686 = vadd.f32 %v1151, %v1604
      %v1687 = vadd.f32 %v1156, %v1609
      %v1688 = vadd.f32 %v1159, %v1612
      %v1689 = vadd.f32 %v1164, %v1617
      %v1690 = vadd.f32 %v1167, %v1620
      %v1691 = vadd.f32 %v1172, %v1625
      %v1692 = vadd.f32 %v1175, %v1628
      %v1693 = vadd.f32 %v1180, %v1633
      %v1694 = vadd.f32 %v1183, %v1636
      %v1695 = vadd.f32 %v1188, %v1641
      %v1696 = vadd.f32 %v1191, %v1644
      %v1697 = vadd.f32 %v1196, %v1649
      %v1698 = vadd.f32 %v1199, %v1652
      %v1699 = vadd.f32 %v1204, %v1657
      %v1700 = vadd.f32 %v1207, %v1660
      %v1701 = vadd.f32 %v1212, %v1665
      %v1702 = vadd.f32 %v1215, %v1668
      %s1703 = scalar_lea.vmem %s165, 12
      %v1704 = vld [vmem:[%s1703] sm:$0xf]
      %v1705 = vld [vmem:[%s1703 + $0x4] sm:$0xf]
      %v1706 = vld [vmem:[%s1703 + $0xc] sm:$0xf]
      %v1707 = vld [vmem:[%s1703 + $0x10] sm:$0xf]
      %v1708 = vld [vmem:[%s1703 + $0x18] sm:$0xf]
      %v1709 = vld [vmem:[%s1703 + $0x1c] sm:$0xf]
      %v1710 = vld [vmem:[%s1703 + $0x24] sm:$0xf]
      %v1711 = vld [vmem:[%s1703 + $0x28] sm:$0xf]
      %v1712 = vld [vmem:[%s1703 + $0x30] sm:$0xf]
      %v1713 = vld [vmem:[%s1703 + $0x34] sm:$0xf]
      %v1714 = vld [vmem:[%s1703 + $0x3c] sm:$0xf]
      %v1715 = vld [vmem:[%s1703 + $0x40] sm:$0xf]
      %v1716 = vld [vmem:[%s1703 + $0x48] sm:$0xf]
      %v1717 = vld [vmem:[%s1703 + $0x4c] sm:$0xf]
      %v1718 = vld [vmem:[%s1703 + $0x54] sm:$0xf]
      %v1719 = vld [vmem:[%s1703 + $0x58] sm:$0xf]
      %v1720 = vld [vmem:[%s1703 + $0x60] sm:$0xf]
      %v1721 = vld [vmem:[%s1703 + $0x64] sm:$0xf]
      %v1722 = vld [vmem:[%s1703 + $0x6c] sm:$0xf]
      %v1723 = vld [vmem:[%s1703 + $0x70] sm:$0xf]
      %v1724 = vld [vmem:[%s1703 + $0x78] sm:$0xf]
      %v1725 = vld [vmem:[%s1703 + $0x7c] sm:$0xf]
      %v1726 = vld [vmem:[%s1703 + $0x84] sm:$0xf]
      %v1727 = vld [vmem:[%s1703 + $0x88] sm:$0xf]
      %v1728 = vld [vmem:[%s1703 + $0x90] sm:$0xf]
      %v1729 = vld [vmem:[%s1703 + $0x94] sm:$0xf]
      %v1730 = vld [vmem:[%s1703 + $0x9c] sm:$0xf]
      %v1731 = vld [vmem:[%s1703 + $0xa0] sm:$0xf]
      %v1732 = vld [vmem:[%s1703 + $0xa8] sm:$0xf]
      %v1733 = vld [vmem:[%s1703 + $0xac] sm:$0xf]
      %v1734 = vld [vmem:[%s1703 + $0xb4] sm:$0xf]
      %v1735 = vld [vmem:[%s1703 + $0xb8] sm:$0xf]
      %s1736 = scalar_lea.vmem %s1, 192
      %v1737 = vld [vmem:[%s1736] sm:$0xf]
      %v1738 = vld [vmem:[%s1736 + $0x4] sm:$0xf]
      %v1739 = vld [vmem:[%s1736 + $0x8] sm:$0xf]
      %v1740 = vld [vmem:[%s1736 + $0xc] sm:$0xf]
      %v1741 = vld [vmem:[%s1736 + $0x10] sm:$0xf]
      %v1742 = vld [vmem:[%s1736 + $0x14] sm:$0xf]
      %v1743 = vld [vmem:[%s1736 + $0x18] sm:$0xf]
      %v1744 = vld [vmem:[%s1736 + $0x1c] sm:$0xf]
      %v1745 = vld [vmem:[%s1736 + $0x20] sm:$0xf]
      %v1746 = vld [vmem:[%s1736 + $0x24] sm:$0xf]
      %v1747 = vld [vmem:[%s1736 + $0x28] sm:$0xf]
      %v1748 = vld [vmem:[%s1736 + $0x2c] sm:$0xf]
      %v1749 = vld [vmem:[%s1736 + $0x30] sm:$0xf]
      %v1750 = vld [vmem:[%s1736 + $0x34] sm:$0xf]
      %v1751 = vld [vmem:[%s1736 + $0x38] sm:$0xf]
      %v1752 = vld [vmem:[%s1736 + $0x3c] sm:$0xf]
      %v1785 = vunpack.c.l.b16 %v1704
      %v1786 = vunpack.c.l.b16 %v1705
      %v1787 = vunpack.c.l.b16 %v1706
      %v1788 = vunpack.c.l.b16 %v1707
      %v1789 = vunpack.c.l.b16 %v1708
      %v1790 = vunpack.c.l.b16 %v1709
      %v1791 = vunpack.c.l.b16 %v1710
      %v1792 = vunpack.c.l.b16 %v1711
      %v1793 = vunpack.c.l.b16 %v1712
      %v1794 = vunpack.c.l.b16 %v1713
      %v1795 = vunpack.c.l.b16 %v1714
      %v1796 = vunpack.c.l.b16 %v1715
      %v1797 = vunpack.c.l.b16 %v1716
      %v1798 = vunpack.c.l.b16 %v1717
      %v1799 = vunpack.c.l.b16 %v1718
      %v1800 = vunpack.c.l.b16 %v1719
      %v1801 = vunpack.c.l.b16 %v1720
      %v1802 = vunpack.c.l.b16 %v1721
      %v1803 = vunpack.c.l.b16 %v1722
      %v1804 = vunpack.c.l.b16 %v1723
      %v1805 = vunpack.c.l.b16 %v1724
      %v1806 = vunpack.c.l.b16 %v1725
      %v1807 = vunpack.c.l.b16 %v1726
      %v1808 = vunpack.c.l.b16 %v1727
      %v1809 = vunpack.c.l.b16 %v1728
      %v1810 = vunpack.c.l.b16 %v1729
      %v1811 = vunpack.c.l.b16 %v1730
      %v1812 = vunpack.c.l.b16 %v1731
      %v1813 = vunpack.c.l.b16 %v1732
      %v1814 = vunpack.c.l.b16 %v1733
      %v1815 = vunpack.c.l.b16 %v1734
      %v1816 = vunpack.c.l.b16 %v1735
      %v1817 = vpack.c.b16 %v1786, %v1785
      %v1818 = vpack.c.b16 %v1788, %v1787
      %v1819 = vpack.c.b16 %v1790, %v1789
      %v1820 = vpack.c.b16 %v1792, %v1791
      %v1821 = vpack.c.b16 %v1794, %v1793
      %v1822 = vpack.c.b16 %v1796, %v1795
      %v1823 = vpack.c.b16 %v1798, %v1797
      %v1824 = vpack.c.b16 %v1800, %v1799
      %v1825 = vpack.c.b16 %v1802, %v1801
      %v1826 = vpack.c.b16 %v1804, %v1803
      %v1827 = vpack.c.b16 %v1806, %v1805
      %v1828 = vpack.c.b16 %v1808, %v1807
      %v1829 = vpack.c.b16 %v1810, %v1809
      %v1830 = vpack.c.b16 %v1812, %v1811
      %v1831 = vpack.c.b16 %v1814, %v1813
      %v1832 = vpack.c.b16 %v1816, %v1815
      %v1865 = vunpack.c.l.b16 %v1737
      %v1866 = vunpack.c.l.b16 %v1738
      %v1867 = vunpack.c.l.b16 %v1739
      %v1868 = vunpack.c.l.b16 %v1740
      %v1869 = vunpack.c.l.b16 %v1741
      %v1870 = vunpack.c.l.b16 %v1742
      %v1871 = vunpack.c.l.b16 %v1743
      %v1872 = vunpack.c.l.b16 %v1744
      %v1873 = vunpack.c.l.b16 %v1745
      %v1874 = vunpack.c.l.b16 %v1746
      %v1875 = vunpack.c.l.b16 %v1747
      %v1876 = vunpack.c.l.b16 %v1748
      %v1877 = vunpack.c.l.b16 %v1749
      %v1878 = vunpack.c.l.b16 %v1750
      %v1879 = vunpack.c.l.b16 %v1751
      %v1880 = vunpack.c.l.b16 %v1752
      %v1881 = vpack.c.b16 %v1866, %v1865
      %v1882 = vpack.c.b16 %v1868, %v1867
      %v1883 = vpack.c.b16 %v1870, %v1869
      %v1884 = vpack.c.b16 %v1872, %v1871
      %v1885 = vpack.c.b16 %v1874, %v1873
      %v1886 = vpack.c.b16 %v1876, %v1875
      %v1887 = vpack.c.b16 %v1878, %v1877
      %v1888 = vpack.c.b16 %v1880, %v1879
      %1897 = vmatprep.subr.bf16.mxu0 0
      %1898 = vmatpush1.bf16.msra.mxu0 %v1881
      %1899 = vmatprep.subr.bf16.mxu0 0
      %1900 = vmatpush1.bf16.msra.mxu0 %v1882
      %1901 = vmatprep.subr.bf16.mxu0 0
      %1902 = vmatpush1.bf16.msra.mxu0 %v1883
      %1903 = vmatprep.subr.bf16.mxu0 0
      %1904 = vmatpush1.bf16.msra.mxu0 %v1884
      %1905 = vmatprep.subr.bf16.mxu0 0
      %1906 = vmatpush1.bf16.msra.mxu0 %v1885
      %1907 = vmatprep.subr.bf16.mxu0 0
      %1908 = vmatpush1.bf16.msra.mxu0 %v1886
      %1909 = vmatprep.subr.bf16.mxu0 0
      %1910 = vmatpush1.bf16.msra.mxu0 %v1887
      %1911 = vmatprep.subr.bf16.mxu0 0
      %1912 = vmatpush1.bf16.msra.mxu0 %v1888
      %1913 = vmatprep.subr.bf16.mxu0 0
      %1914 = vmatpush1.bf16.msra.mxu0 0
      %1915 = vmatprep.subr.bf16.mxu0 0
      %1916 = vmatpush1.bf16.msra.mxu0 0
      %1917 = vmatprep.subr.bf16.mxu0 0
      %1918 = vmatpush1.bf16.msra.mxu0 0
      %1919 = vmatprep.subr.bf16.mxu0 0
      %1920 = vmatpush1.bf16.msra.mxu0 0
      %1921 = vmatprep.subr.bf16.mxu0 0
      %1922 = vmatpush1.bf16.msra.mxu0 0
      %1923 = vmatprep.subr.bf16.mxu0 0
      %1924 = vmatpush1.bf16.msra.mxu0 0
      %1925 = vmatprep.subr.bf16.mxu0 0
      %1926 = vmatpush1.bf16.msra.mxu0 0
      %1927 = vmatprep.subr.bf16.mxu0 0
      %1928 = vmatpush1.bf16.msra.mxu0 0
      %1929 = vmatprep.mubr.bf16.mxu0 0
      %1930 = vmatmul.mubr.bf16.gmra.mrb[0].mxu0 %v1817
      %v1931 = vpop.f32.mrb[0].mxu0
      %v1932 = vadd.f32 0.0, %v1931
      %v1933 = vpop.f32.mrb[0].mxu0
      %v1934 = vpop.f32.mrb[0].mxu0
      %v1935 = vadd.f32 0.0, %v1934
      %v1936 = vpop.f32.mrb[0].mxu0
      %1937 = vmatprep.mubr.bf16.mxu0 0
      %1938 = vmatmul.mubr.bf16.gmra.mrb[0].mxu0 %v1818
      %v1939 = vpop.f32.mrb[0].mxu0
      %v1940 = vadd.f32 0.0, %v1939
      %v1941 = vpop.f32.mrb[0].mxu0
      %v1942 = vpop.f32.mrb[0].mxu0
      %v1943 = vadd.f32 0.0, %v1942
      %v1944 = vpop.f32.mrb[0].mxu0
      %1945 = vmatprep.mubr.bf16.mxu0 0
      %1946 = vmatmul.mubr.bf16.gmra.mrb[0].mxu0 %v1819
      %v1947 = vpop.f32.mrb[0].mxu0
      %v1948 = vadd.f32 0.0, %v1947
      %v1949 = vpop.f32.mrb[0].mxu0
      %v1950 = vpop.f32.mrb[0].mxu0
      %v1951 = vadd.f32 0.0, %v1950
      %v1952 = vpop.f32.mrb[0].mxu0
      %1953 = vmatprep.mubr.bf16.mxu0 0
      %1954 = vmatmul.mubr.bf16.gmra.mrb[0].mxu0 %v1820
      %v1955 = vpop.f32.mrb[0].mxu0
      %v1956 = vadd.f32 0.0, %v1955
      %v1957 = vpop.f32.mrb[0].mxu0
      %v1958 = vpop.f32.mrb[0].mxu0
      %v1959 = vadd.f32 0.0, %v1958
      %v1960 = vpop.f32.mrb[0].mxu0
      %1961 = vmatprep.mubr.bf16.mxu0 0
      %1962 = vmatmul.mubr.bf16.gmra.mrb[0].mxu0 %v1821
      %v1963 = vpop.f32.mrb[0].mxu0
      %v1964 = vadd.f32 0.0, %v1963
      %v1965 = vpop.f32.mrb[0].mxu0
      %v1966 = vpop.f32.mrb[0].mxu0
      %v1967 = vadd.f32 0.0, %v1966
      %v1968 = vpop.f32.mrb[0].mxu0
      %1969 = vmatprep.mubr.bf16.mxu0 0
      %1970 = vmatmul.mubr.bf16.gmra.mrb[0].mxu0 %v1822
      %v1971 = vpop.f32.mrb[0].mxu0
      %v1972 = vadd.f32 0.0, %v1971
      %v1973 = vpop.f32.mrb[0].mxu0
      %v1974 = vpop.f32.mrb[0].mxu0
      %v1975 = vadd.f32 0.0, %v1974
      %v1976 = vpop.f32.mrb[0].mxu0
      %1977 = vmatprep.mubr.bf16.mxu0 0
      %1978 = vmatmul.mubr.bf16.gmra.mrb[0].mxu0 %v1823
      %v1979 = vpop.f32.mrb[0].mxu0
      %v1980 = vadd.f32 0.0, %v1979
      %v1981 = vpop.f32.mrb[0].mxu0
      %v1982 = vpop.f32.mrb[0].mxu0
      %v1983 = vadd.f32 0.0, %v1982
      %v1984 = vpop.f32.mrb[0].mxu0
      %1985 = vmatprep.mubr.bf16.mxu0 0
      %1986 = vmatmul.mubr.bf16.gmra.mrb[0].mxu0 %v1824
      %v1987 = vpop.f32.mrb[0].mxu0
      %v1988 = vadd.f32 0.0, %v1987
      %v1989 = vpop.f32.mrb[0].mxu0
      %v1990 = vpop.f32.mrb[0].mxu0
      %v1991 = vadd.f32 0.0, %v1990
      %v1992 = vpop.f32.mrb[0].mxu0
      %1993 = vmatprep.mubr.bf16.mxu0 0
      %1994 = vmatmul.mubr.bf16.gmra.mrb[0].mxu0 %v1825
      %v1995 = vpop.f32.mrb[0].mxu0
      %v1996 = vadd.f32 0.0, %v1995
      %v1997 = vpop.f32.mrb[0].mxu0
      %v1998 = vpop.f32.mrb[0].mxu0
      %v1999 = vadd.f32 0.0, %v1998
      %v2000 = vpop.f32.mrb[0].mxu0
      %2001 = vmatprep.mubr.bf16.mxu0 0
      %2002 = vmatmul.mubr.bf16.gmra.mrb[0].mxu0 %v1826
      %v2003 = vpop.f32.mrb[0].mxu0
      %v2004 = vadd.f32 0.0, %v2003
      %v2005 = vpop.f32.mrb[0].mxu0
      %v2006 = vpop.f32.mrb[0].mxu0
      %v2007 = vadd.f32 0.0, %v2006
      %v2008 = vpop.f32.mrb[0].mxu0
      %2009 = vmatprep.mubr.bf16.mxu0 0
      %2010 = vmatmul.mubr.bf16.gmra.mrb[0].mxu0 %v1827
      %v2011 = vpop.f32.mrb[0].mxu0
      %v2012 = vadd.f32 0.0, %v2011
      %v2013 = vpop.f32.mrb[0].mxu0
      %v2014 = vpop.f32.mrb[0].mxu0
      %v2015 = vadd.f32 0.0, %v2014
      %v2016 = vpop.f32.mrb[0].mxu0
      %2017 = vmatprep.mubr.bf16.mxu0 0
      %2018 = vmatmul.mubr.bf16.gmra.mrb[0].mxu0 %v1828
      %v2019 = vpop.f32.mrb[0].mxu0
      %v2020 = vadd.f32 0.0, %v2019
      %v2021 = vpop.f32.mrb[0].mxu0
      %v2022 = vpop.f32.mrb[0].mxu0
      %v2023 = vadd.f32 0.0, %v2022
      %v2024 = vpop.f32.mrb[0].mxu0
      %2025 = vmatprep.mubr.bf16.mxu0 0
      %2026 = vmatmul.mubr.bf16.gmra.mrb[0].mxu0 %v1829
      %v2027 = vpop.f32.mrb[0].mxu0
      %v2028 = vadd.f32 0.0, %v2027
      %v2029 = vpop.f32.mrb[0].mxu0
      %v2030 = vpop.f32.mrb[0].mxu0
      %v2031 = vadd.f32 0.0, %v2030
      %v2032 = vpop.f32.mrb[0].mxu0
      %2033 = vmatprep.mubr.bf16.mxu0 0
      %2034 = vmatmul.mubr.bf16.gmra.mrb[0].mxu0 %v1830
      %v2035 = vpop.f32.mrb[0].mxu0
      %v2036 = vadd.f32 0.0, %v2035
      %v2037 = vpop.f32.mrb[0].mxu0
      %v2038 = vpop.f32.mrb[0].mxu0
      %v2039 = vadd.f32 0.0, %v2038
      %v2040 = vpop.f32.mrb[0].mxu0
      %2041 = vmatprep.mubr.bf16.mxu0 0
      %2042 = vmatmul.mubr.bf16.gmra.mrb[0].mxu0 %v1831
      %v2043 = vpop.f32.mrb[0].mxu0
      %v2044 = vadd.f32 0.0, %v2043
      %v2045 = vpop.f32.mrb[0].mxu0
      %v2046 = vpop.f32.mrb[0].mxu0
      %v2047 = vadd.f32 0.0, %v2046
      %v2048 = vpop.f32.mrb[0].mxu0
      %2049 = vmatprep.mubr.bf16.mxu0 0
      %2050 = vmatmul.mubr.bf16.gmra.mrb[0].mxu0 %v1832
      %v2051 = vpop.f32.mrb[0].mxu0
      %v2052 = vadd.f32 0.0, %v2051
      %v2053 = vpop.f32.mrb[0].mxu0
      %v2054 = vpop.f32.mrb[0].mxu0
      %v2055 = vadd.f32 0.0, %v2054
      %v2056 = vpop.f32.mrb[0].mxu0
      %2057 = vdwg.mxu0
      %v2058 = vadd.f32 %v1671, %v1932
      %v2059 = vadd.f32 %v1672, %v1935
      %v2060 = vadd.f32 %v1673, %v1940
      %v2061 = vadd.f32 %v1674, %v1943
      %v2062 = vadd.f32 %v1675, %v1948
      %v2063 = vadd.f32 %v1676, %v1951
      %v2064 = vadd.f32 %v1677, %v1956
      %v2065 = vadd.f32 %v1678, %v1959
      %v2066 = vadd.f32 %v1679, %v1964
      %v2067 = vadd.f32 %v1680, %v1967
      %v2068 = vadd.f32 %v1681, %v1972
      %v2069 = vadd.f32 %v1682, %v1975
      %v2070 = vadd.f32 %v1683, %v1980
      %v2071 = vadd.f32 %v1684, %v1983
      %v2072 = vadd.f32 %v1685, %v1988
      %v2073 = vadd.f32 %v1686, %v1991
      %v2074 = vadd.f32 %v1687, %v1996
      %v2075 = vadd.f32 %v1688, %v1999
      %v2076 = vadd.f32 %v1689, %v2004
      %v2077 = vadd.f32 %v1690, %v2007
      %v2078 = vadd.f32 %v1691, %v2012
      %v2079 = vadd.f32 %v1692, %v2015
      %v2080 = vadd.f32 %v1693, %v2020
      %v2081 = vadd.f32 %v1694, %v2023
      %v2082 = vadd.f32 %v1695, %v2028
      %v2083 = vadd.f32 %v1696, %v2031
      %v2084 = vadd.f32 %v1697, %v2036
      %v2085 = vadd.f32 %v1698, %v2039
      %v2086 = vadd.f32 %v1699, %v2044
      %v2087 = vadd.f32 %v1700, %v2047
      %v2088 = vadd.f32 %v1701, %v2052
      %v2089 = vadd.f32 %v1702, %v2055
      %v2090 = vld [vmem:[%s1703] sm:$0xf]
      %v2091 = vld [vmem:[%s1703 + $0x4] sm:$0xf]
      %v2092 = vld [vmem:[%s1703 + $0x8] sm:$0x1]
      %v2093 = vld [vmem:[%s1703 + $0xc] sm:$0xf]
      %v2094 = vld [vmem:[%s1703 + $0x10] sm:$0xf]
      %v2095 = vld [vmem:[%s1703 + $0x14] sm:$0x1]
      %v2096 = vld [vmem:[%s1703 + $0x18] sm:$0xf]
      %v2097 = vld [vmem:[%s1703 + $0x1c] sm:$0xf]
      %v2098 = vld [vmem:[%s1703 + $0x20] sm:$0x1]
      %v2099 = vld [vmem:[%s1703 + $0x24] sm:$0xf]
      %v2100 = vld [vmem:[%s1703 + $0x28] sm:$0xf]
      %v2101 = vld [vmem:[%s1703 + $0x2c] sm:$0x1]
      %v2102 = vld [vmem:[%s1703 + $0x30] sm:$0xf]
      %v2103 = vld [vmem:[%s1703 + $0x34] sm:$0xf]
      %v2104 = vld [vmem:[%s1703 + $0x38] sm:$0x1]
      %v2105 = vld [vmem:[%s1703 + $0x3c] sm:$0xf]
      %v2106 = vld [vmem:[%s1703 + $0x40] sm:$0xf]
      %v2107 = vld [vmem:[%s1703 + $0x44] sm:$0x1]
      %v2108 = vld [vmem:[%s1703 + $0x48] sm:$0xf]
      %v2109 = vld [vmem:[%s1703 + $0x4c] sm:$0xf]
      %v2110 = vld [vmem:[%s1703 + $0x50] sm:$0x1]
      %v2111 = vld [vmem:[%s1703 + $0x54] sm:$0xf]
      %v2112 = vld [vmem:[%s1703 + $0x58] sm:$0xf]
      %v2113 = vld [vmem:[%s1703 + $0x5c] sm:$0x1]
      %v2114 = vld [vmem:[%s1703 + $0x60] sm:$0xf]
      %v2115 = vld [vmem:[%s1703 + $0x64] sm:$0xf]
      %v2116 = vld [vmem:[%s1703 + $0x68] sm:$0x1]
      %v2117 = vld [vmem:[%s1703 + $0x6c] sm:$0xf]
      %v2118 = vld [vmem:[%s1703 + $0x70] sm:$0xf]
      %v2119 = vld [vmem:[%s1703 + $0x74] sm:$0x1]
      %v2120 = vld [vmem:[%s1703 + $0x78] sm:$0xf]
      %v2121 = vld [vmem:[%s1703 + $0x7c] sm:$0xf]
      %v2122 = vld [vmem:[%s1703 + $0x80] sm:$0x1]
      %v2123 = vld [vmem:[%s1703 + $0x84] sm:$0xf]
      %v2124 = vld [vmem:[%s1703 + $0x88] sm:$0xf]
      %v2125 = vld [vmem:[%s1703 + $0x8c] sm:$0x1]
      %v2126 = vld [vmem:[%s1703 + $0x90] sm:$0xf]
      %v2127 = vld [vmem:[%s1703 + $0x94] sm:$0xf]
      %v2128 = vld [vmem:[%s1703 + $0x98] sm:$0x1]
      %v2129 = vld [vmem:[%s1703 + $0x9c] sm:$0xf]
      %v2130 = vld [vmem:[%s1703 + $0xa0] sm:$0xf]
      %v2131 = vld [vmem:[%s1703 + $0xa4] sm:$0x1]
      %v2132 = vld [vmem:[%s1703 + $0xa8] sm:$0xf]
      %v2133 = vld [vmem:[%s1703 + $0xac] sm:$0xf]
      %v2134 = vld [vmem:[%s1703 + $0xb0] sm:$0x1]
      %v2135 = vld [vmem:[%s1703 + $0xb4] sm:$0xf]
      %v2136 = vld [vmem:[%s1703 + $0xb8] sm:$0xf]
      %v2137 = vld [vmem:[%s1703 + $0xbc] sm:$0x1]
      %v2139 = vshrl.u32 %v2090, 16
      %v2141 = vrot.slane %v2139, 4
      %v2142 = vshll.u32 %v2090, 16
      %v2144 = vrot.slane %v2142, 5
      %v2145 = vor.u32 %v2141, %v2144
      %v2146 = vrot.slane %v2145, 4
      %v2148 = vshll.u32 %v2091, 16
      %v2150 = vrot.slane %v2148, 5
      %v2151 = vsel %vm238, %v2146, %v2150
      %v2152 = vshrl.u32 %v2091, 16
      %v2154 = vrot.slane %v2152, 4
      %v2155 = vor.u32 %v2154, %v2150
      %v2156 = vrot.slane %v2155, 4
      %v2158 = vshll.u32 %v2092, 16
      %v2160 = vrot.slane %v2158, 5
      %v2161 = vsel %vm238, %v2156, %v2160
      %v2163 = vshrl.u32 %v2093, 16
      %v2165 = vrot.slane %v2163, 4
      %v2166 = vshll.u32 %v2093, 16
      %v2168 = vrot.slane %v2166, 5
      %v2169 = vor.u32 %v2165, %v2168
      %v2170 = vrot.slane %v2169, 4
      %v2172 = vshll.u32 %v2094, 16
      %v2174 = vrot.slane %v2172, 5
      %v2175 = vsel %vm238, %v2170, %v2174
      %v2176 = vshrl.u32 %v2094, 16
      %v2178 = vrot.slane %v2176, 4
      %v2179 = vor.u32 %v2178, %v2174
      %v2180 = vrot.slane %v2179, 4
      %v2182 = vshll.u32 %v2095, 16
      %v2184 = vrot.slane %v2182, 5
      %v2185 = vsel %vm238, %v2180, %v2184
      %v2187 = vshrl.u32 %v2096, 16
      %v2189 = vrot.slane %v2187, 4
      %v2190 = vshll.u32 %v2096, 16
      %v2192 = vrot.slane %v2190, 5
      %v2193 = vor.u32 %v2189, %v2192
      %v2194 = vrot.slane %v2193, 4
      %v2196 = vshll.u32 %v2097, 16
      %v2198 = vrot.slane %v2196, 5
      %v2199 = vsel %vm238, %v2194, %v2198
      %v2200 = vshrl.u32 %v2097, 16
      %v2202 = vrot.slane %v2200, 4
      %v2203 = vor.u32 %v2202, %v2198
      %v2204 = vrot.slane %v2203, 4
      %v2206 = vshll.u32 %v2098, 16
      %v2208 = vrot.slane %v2206, 5
      %v2209 = vsel %vm238, %v2204, %v2208
      %v2211 = vshrl.u32 %v2099, 16
      %v2213 = vrot.slane %v2211, 4
      %v2214 = vshll.u32 %v2099, 16
      %v2216 = vrot.slane %v2214, 5
      %v2217 = vor.u32 %v2213, %v2216
      %v2218 = vrot.slane %v2217, 4
      %v2220 = vshll.u32 %v2100, 16
      %v2222 = vrot.slane %v2220, 5
      %v2223 = vsel %vm238, %v2218, %v2222
      %v2224 = vshrl.u32 %v2100, 16
      %v2226 = vrot.slane %v2224, 4
      %v2227 = vor.u32 %v2226, %v2222
      %v2228 = vrot.slane %v2227, 4
      %v2230 = vshll.u32 %v2101, 16
      %v2232 = vrot.slane %v2230, 5
      %v2233 = vsel %vm238, %v2228, %v2232
      %v2235 = vshrl.u32 %v2102, 16
      %v2237 = vrot.slane %v2235, 4
      %v2238 = vshll.u32 %v2102, 16
      %v2240 = vrot.slane %v2238, 5
      %v2241 = vor.u32 %v2237, %v2240
      %v2242 = vrot.slane %v2241, 4
      %v2244 = vshll.u32 %v2103, 16
      %v2246 = vrot.slane %v2244, 5
      %v2247 = vsel %vm238, %v2242, %v2246
      %v2248 = vshrl.u32 %v2103, 16
      %v2250 = vrot.slane %v2248, 4
      %v2251 = vor.u32 %v2250, %v2246
      %v2252 = vrot.slane %v2251, 4
      %v2254 = vshll.u32 %v2104, 16
      %v2256 = vrot.slane %v2254, 5
      %v2257 = vsel %vm238, %v2252, %v2256
      %v2259 = vshrl.u32 %v2105, 16
      %v2261 = vrot.slane %v2259, 4
      %v2262 = vshll.u32 %v2105, 16
      %v2264 = vrot.slane %v2262, 5
      %v2265 = vor.u32 %v2261, %v2264
      %v2266 = vrot.slane %v2265, 4
      %v2268 = vshll.u32 %v2106, 16
      %v2270 = vrot.slane %v2268, 5
      %v2271 = vsel %vm238, %v2266, %v2270
      %v2272 = vshrl.u32 %v2106, 16
      %v2274 = vrot.slane %v2272, 4
      %v2275 = vor.u32 %v2274, %v2270
      %v2276 = vrot.slane %v2275, 4
      %v2278 = vshll.u32 %v2107, 16
      %v2280 = vrot.slane %v2278, 5
      %v2281 = vsel %vm238, %v2276, %v2280
      %v2283 = vshrl.u32 %v2108, 16
      %v2285 = vrot.slane %v2283, 4
      %v2286 = vshll.u32 %v2108, 16
      %v2288 = vrot.slane %v2286, 5
      %v2289 = vor.u32 %v2285, %v2288
      %v2290 = vrot.slane %v2289, 4
      %v2292 = vshll.u32 %v2109, 16
      %v2294 = vrot.slane %v2292, 5
      %v2295 = vsel %vm238, %v2290, %v2294
      %v2296 = vshrl.u32 %v2109, 16
      %v2298 = vrot.slane %v2296, 4
      %v2299 = vor.u32 %v2298, %v2294
      %v2300 = vrot.slane %v2299, 4
      %v2302 = vshll.u32 %v2110, 16
      %v2304 = vrot.slane %v2302, 5
      %v2305 = vsel %vm238, %v2300, %v2304
      %v2307 = vshrl.u32 %v2111, 16
      %v2309 = vrot.slane %v2307, 4
      %v2310 = vshll.u32 %v2111, 16
      %v2312 = vrot.slane %v2310, 5
      %v2313 = vor.u32 %v2309, %v2312
      %v2314 = vrot.slane %v2313, 4
      %v2316 = vshll.u32 %v2112, 16
      %v2318 = vrot.slane %v2316, 5
      %v2319 = vsel %vm238, %v2314, %v2318
      %v2320 = vshrl.u32 %v2112, 16
      %v2322 = vrot.slane %v2320, 4
      %v2323 = vor.u32 %v2322, %v2318
      %v2324 = vrot.slane %v2323, 4
      %v2326 = vshll.u32 %v2113, 16
      %v2328 = vrot.slane %v2326, 5
      %v2329 = vsel %vm238, %v2324, %v2328
      %v2331 = vshrl.u32 %v2114, 16
      %v2333 = vrot.slane %v2331, 4
      %v2334 = vshll.u32 %v2114, 16
      %v2336 = vrot.slane %v2334, 5
      %v2337 = vor.u32 %v2333, %v2336
      %v2338 = vrot.slane %v2337, 4
      %v2340 = vshll.u32 %v2115, 16
      %v2342 = vrot.slane %v2340, 5
      %v2343 = vsel %vm238, %v2338, %v2342
      %v2344 = vshrl.u32 %v2115, 16
      %v2346 = vrot.slane %v2344, 4
      %v2347 = vor.u32 %v2346, %v2342
      %v2348 = vrot.slane %v2347, 4
      %v2350 = vshll.u32 %v2116, 16
      %v2352 = vrot.slane %v2350, 5
      %v2353 = vsel %vm238, %v2348, %v2352
      %v2355 = vshrl.u32 %v2117, 16
      %v2357 = vrot.slane %v2355, 4
      %v2358 = vshll.u32 %v2117, 16
      %v2360 = vrot.slane %v2358, 5
      %v2361 = vor.u32 %v2357, %v2360
      %v2362 = vrot.slane %v2361, 4
      %v2364 = vshll.u32 %v2118, 16
      %v2366 = vrot.slane %v2364, 5
      %v2367 = vsel %vm238, %v2362, %v2366
      %v2368 = vshrl.u32 %v2118, 16
      %v2370 = vrot.slane %v2368, 4
      %v2371 = vor.u32 %v2370, %v2366
      %v2372 = vrot.slane %v2371, 4
      %v2374 = vshll.u32 %v2119, 16
      %v2376 = vrot.slane %v2374, 5
      %v2377 = vsel %vm238, %v2372, %v2376
      %v2379 = vshrl.u32 %v2120, 16
      %v2381 = vrot.slane %v2379, 4
      %v2382 = vshll.u32 %v2120, 16
      %v2384 = vrot.slane %v2382, 5
      %v2385 = vor.u32 %v2381, %v2384
      %v2386 = vrot.slane %v2385, 4
      %v2388 = vshll.u32 %v2121, 16
      %v2390 = vrot.slane %v2388, 5
      %v2391 = vsel %vm238, %v2386, %v2390
      %v2392 = vshrl.u32 %v2121, 16
      %v2394 = vrot.slane %v2392, 4
      %v2395 = vor.u32 %v2394, %v2390
      %v2396 = vrot.slane %v2395, 4
      %v2398 = vshll.u32 %v2122, 16
      %v2400 = vrot.slane %v2398, 5
      %v2401 = vsel %vm238, %v2396, %v2400
      %v2403 = vshrl.u32 %v2123, 16
      %v2405 = vrot.slane %v2403, 4
      %v2406 = vshll.u32 %v2123, 16
      %v2408 = vrot.slane %v2406, 5
      %v2409 = vor.u32 %v2405, %v2408
      %v2410 = vrot.slane %v2409, 4
      %v2412 = vshll.u32 %v2124, 16
      %v2414 = vrot.slane %v2412, 5
      %v2415 = vsel %vm238, %v2410, %v2414
      %v2416 = vshrl.u32 %v2124, 16
      %v2418 = vrot.slane %v2416, 4
      %v2419 = vor.u32 %v2418, %v2414
      %v2420 = vrot.slane %v2419, 4
      %v2422 = vshll.u32 %v2125, 16
      %v2424 = vrot.slane %v2422, 5
      %v2425 = vsel %vm238, %v2420, %v2424
      %v2427 = vshrl.u32 %v2126, 16
      %v2429 = vrot.slane %v2427, 4
      %v2430 = vshll.u32 %v2126, 16
      %v2432 = vrot.slane %v2430, 5
      %v2433 = vor.u32 %v2429, %v2432
      %v2434 = vrot.slane %v2433, 4
      %v2436 = vshll.u32 %v2127, 16
      %v2438 = vrot.slane %v2436, 5
      %v2439 = vsel %vm238, %v2434, %v2438
      %v2440 = vshrl.u32 %v2127, 16
      %v2442 = vrot.slane %v2440, 4
      %v2443 = vor.u32 %v2442, %v2438
      %v2444 = vrot.slane %v2443, 4
      %v2446 = vshll.u32 %v2128, 16
      %v2448 = vrot.slane %v2446, 5
      %v2449 = vsel %vm238, %v2444, %v2448
      %v2451 = vshrl.u32 %v2129, 16
      %v2453 = vrot.slane %v2451, 4
      %v2454 = vshll.u32 %v2129, 16
      %v2456 = vrot.slane %v2454, 5
      %v2457 = vor.u32 %v2453, %v2456
      %v2458 = vrot.slane %v2457, 4
      %v2460 = vshll.u32 %v2130, 16
      %v2462 = vrot.slane %v2460, 5
      %v2463 = vsel %vm238, %v2458, %v2462
      %v2464 = vshrl.u32 %v2130, 16
      %v2466 = vrot.slane %v2464, 4
      %v2467 = vor.u32 %v2466, %v2462
      %v2468 = vrot.slane %v2467, 4
      %v2470 = vshll.u32 %v2131, 16
      %v2472 = vrot.slane %v2470, 5
      %v2473 = vsel %vm238, %v2468, %v2472
      %v2475 = vshrl.u32 %v2132, 16
      %v2477 = vrot.slane %v2475, 4
      %v2478 = vshll.u32 %v2132, 16
      %v2480 = vrot.slane %v2478, 5
      %v2481 = vor.u32 %v2477, %v2480
      %v2482 = vrot.slane %v2481, 4
      %v2484 = vshll.u32 %v2133, 16
      %v2486 = vrot.slane %v2484, 5
      %v2487 = vsel %vm238, %v2482, %v2486
      %v2488 = vshrl.u32 %v2133, 16
      %v2490 = vrot.slane %v2488, 4
      %v2491 = vor.u32 %v2490, %v2486
      %v2492 = vrot.slane %v2491, 4
      %v2494 = vshll.u32 %v2134, 16
      %v2496 = vrot.slane %v2494, 5
      %v2497 = vsel %vm238, %v2492, %v2496
      %v2499 = vshrl.u32 %v2135, 16
      %v2501 = vrot.slane %v2499, 4
      %v2502 = vshll.u32 %v2135, 16
      %v2504 = vrot.slane %v2502, 5
      %v2505 = vor.u32 %v2501, %v2504
      %v2506 = vrot.slane %v2505, 4
      %v2508 = vshll.u32 %v2136, 16
      %v2510 = vrot.slane %v2508, 5
      %v2511 = vsel %vm238, %v2506, %v2510
      %v2512 = vshrl.u32 %v2136, 16
      %v2514 = vrot.slane %v2512, 4
      %v2515 = vor.u32 %v2514, %v2510
      %v2516 = vrot.slane %v2515, 4
      %v2518 = vshll.u32 %v2137, 16
      %v2520 = vrot.slane %v2518, 5
      %v2521 = vsel %vm238, %v2516, %v2520
      %s2522 = scalar_lea.vmem %s1, 256
      %v2523 = vld [vmem:[%s2522] sm:$0xf]
      %v2524 = vld [vmem:[%s2522 + $0x4] sm:$0xf]
      %v2525 = vld [vmem:[%s2522 + $0x8] sm:$0xf]
      %v2526 = vld [vmem:[%s2522 + $0xc] sm:$0xf]
      %v2527 = vld [vmem:[%s2522 + $0x10] sm:$0xf]
      %v2528 = vld [vmem:[%s2522 + $0x14] sm:$0xf]
      %v2529 = vld [vmem:[%s2522 + $0x18] sm:$0xf]
      %v2530 = vld [vmem:[%s2522 + $0x1c] sm:$0xf]
      %v2531 = vld [vmem:[%s2522 + $0x20] sm:$0xf]
      %v2532 = vld [vmem:[%s2522 + $0x24] sm:$0xf]
      %v2533 = vld [vmem:[%s2522 + $0x28] sm:$0xf]
      %v2534 = vld [vmem:[%s2522 + $0x2c] sm:$0xf]
      %v2535 = vld [vmem:[%s2522 + $0x30] sm:$0xf]
      %v2536 = vld [vmem:[%s2522 + $0x34] sm:$0xf]
      %v2537 = vld [vmem:[%s2522 + $0x38] sm:$0xf]
      %v2538 = vld [vmem:[%s2522 + $0x3c] sm:$0xf]
      %v2539 = vunpack.c.l.b16 %v2151
      %v2540 = vunpack.c.l.b16 %v2161
      %v2541 = vunpack.c.l.b16 %v2175
      %v2542 = vunpack.c.l.b16 %v2185
      %v2543 = vunpack.c.l.b16 %v2199
      %v2544 = vunpack.c.l.b16 %v2209
      %v2545 = vunpack.c.l.b16 %v2223
      %v2546 = vunpack.c.l.b16 %v2233
      %v2547 = vunpack.c.l.b16 %v2247
      %v2548 = vunpack.c.l.b16 %v2257
      %v2549 = vunpack.c.l.b16 %v2271
      %v2550 = vunpack.c.l.b16 %v2281
      %v2551 = vunpack.c.l.b16 %v2295
      %v2552 = vunpack.c.l.b16 %v2305
      %v2553 = vunpack.c.l.b16 %v2319
      %v2554 = vunpack.c.l.b16 %v2329
      %v2555 = vunpack.c.l.b16 %v2343
      %v2556 = vunpack.c.l.b16 %v2353
      %v2557 = vunpack.c.l.b16 %v2367
      %v2558 = vunpack.c.l.b16 %v2377
      %v2559 = vunpack.c.l.b16 %v2391
      %v2560 = vunpack.c.l.b16 %v2401
      %v2561 = vunpack.c.l.b16 %v2415
      %v2562 = vunpack.c.l.b16 %v2425
      %v2563 = vunpack.c.l.b16 %v2439
      %v2564 = vunpack.c.l.b16 %v2449
      %v2565 = vunpack.c.l.b16 %v2463
      %v2566 = vunpack.c.l.b16 %v2473
      %v2567 = vunpack.c.l.b16 %v2487
      %v2568 = vunpack.c.l.b16 %v2497
      %v2569 = vunpack.c.l.b16 %v2511
      %v2570 = vunpack.c.l.b16 %v2521
      %v2571 = vpack.c.b16 %v2540, %v2539
      %v2572 = vpack.c.b16 %v2542, %v2541
      %v2573 = vpack.c.b16 %v2544, %v2543
      %v2574 = vpack.c.b16 %v2546, %v2545
      %v2575 = vpack.c.b16 %v2548, %v2547
      %v2576 = vpack.c.b16 %v2550, %v2549
      %v2577 = vpack.c.b16 %v2552, %v2551
      %v2578 = vpack.c.b16 %v2554, %v2553
      %v2579 = vpack.c.b16 %v2556, %v2555
      %v2580 = vpack.c.b16 %v2558, %v2557
      %v2581 = vpack.c.b16 %v2560, %v2559
      %v2582 = vpack.c.b16 %v2562, %v2561
      %v2583 = vpack.c.b16 %v2564, %v2563
      %v2584 = vpack.c.b16 %v2566, %v2565
      %v2585 = vpack.c.b16 %v2568, %v2567
      %v2586 = vpack.c.b16 %v2570, %v2569
      %v2619 = vunpack.c.l.b16 %v2523
      %v2620 = vunpack.c.l.b16 %v2524
      %v2621 = vunpack.c.l.b16 %v2525
      %v2622 = vunpack.c.l.b16 %v2526
      %v2623 = vunpack.c.l.b16 %v2527
      %v2624 = vunpack.c.l.b16 %v2528
      %v2625 = vunpack.c.l.b16 %v2529
      %v2626 = vunpack.c.l.b16 %v2530
      %v2627 = vunpack.c.l.b16 %v2531
      %v2628 = vunpack.c.l.b16 %v2532
      %v2629 = vunpack.c.l.b16 %v2533
      %v2630 = vunpack.c.l.b16 %v2534
      %v2631 = vunpack.c.l.b16 %v2535
      %v2632 = vunpack.c.l.b16 %v2536
      %v2633 = vunpack.c.l.b16 %v2537
      %v2634 = vunpack.c.l.b16 %v2538
      %v2635 = vpack.c.b16 %v2620, %v2619
      %v2636 = vpack.c.b16 %v2622, %v2621
      %v2637 = vpack.c.b16 %v2624, %v2623
      %v2638 = vpack.c.b16 %v2626, %v2625
      %v2639 = vpack.c.b16 %v2628, %v2627
      %v2640 = vpack.c.b16 %v2630, %v2629
      %v2641 = vpack.c.b16 %v2632, %v2631
      %v2642 = vpack.c.b16 %v2634, %v2633
      %2651 = vmatprep.subr.bf16.mxu0 0
      %2652 = vmatpush1.bf16.msra.mxu0 %v2635
      %2653 = vmatprep.subr.bf16.mxu0 0
      %2654 = vmatpush1.bf16.msra.mxu0 %v2636
      %2655 = vmatprep.subr.bf16.mxu0 0
      %2656 = vmatpush1.bf16.msra.mxu0 %v2637
      %2657 = vmatprep.subr.bf16.mxu0 0
      %2658 = vmatpush1.bf16.msra.mxu0 %v2638
      %2659 = vmatprep.subr.bf16.mxu0 0
      %2660 = vmatpush1.bf16.msra.mxu0 %v2639
      %2661 = vmatprep.subr.bf16.mxu0 0
      %2662 = vmatpush1.bf16.msra.mxu0 %v2640
      %2663 = vmatprep.subr.bf16.mxu0 0
      %2664 = vmatpush1.bf16.msra.mxu0 %v2641
      %2665 = vmatprep.subr.bf16.mxu0 0
      %2666 = vmatpush1.bf16.msra.mxu0 %v2642
      %2667 = vmatprep.subr.bf16.mxu0 0
      %2668 = vmatpush1.bf16.msra.mxu0 0
      %2669 = vmatprep.subr.bf16.mxu0 0
      %2670 = vmatpush1.bf16.msra.mxu0 0
      %2671 = vmatprep.subr.bf16.mxu0 0
      %2672 = vmatpush1.bf16.msra.mxu0 0
      %2673 = vmatprep.subr.bf16.mxu0 0
      %2674 = vmatpush1.bf16.msra.mxu0 0
      %2675 = vmatprep.subr.bf16.mxu0 0
      %2676 = vmatpush1.bf16.msra.mxu0 0
      %2677 = vmatprep.subr.bf16.mxu0 0
      %2678 = vmatpush1.bf16.msra.mxu0 0
      %2679 = vmatprep.subr.bf16.mxu0 0
      %2680 = vmatpush1.bf16.msra.mxu0 0
      %2681 = vmatprep.subr.bf16.mxu0 0
      %2682 = vmatpush1.bf16.msra.mxu0 0
      %2683 = vmatprep.mubr.bf16.mxu0 0
      %2684 = vmatmul.mubr.bf16.gmra.mrb[0].mxu0 %v2571
      %v2685 = vpop.f32.mrb[0].mxu0
      %v2686 = vadd.f32 0.0, %v2685
      %v2687 = vpop.f32.mrb[0].mxu0
      %v2688 = vpop.f32.mrb[0].mxu0
      %v2689 = vadd.f32 0.0, %v2688
      %v2690 = vpop.f32.mrb[0].mxu0
      %2691 = vmatprep.mubr.bf16.mxu0 0
      %2692 = vmatmul.mubr.bf16.gmra.mrb[0].mxu0 %v2572
      %v2693 = vpop.f32.mrb[0].mxu0
      %v2694 = vadd.f32 0.0, %v2693
      %v2695 = vpop.f32.mrb[0].mxu0
      %v2696 = vpop.f32.mrb[0].mxu0
      %v2697 = vadd.f32 0.0, %v2696
      %v2698 = vpop.f32.mrb[0].mxu0
      %2699 = vmatprep.mubr.bf16.mxu0 0
      %2700 = vmatmul.mubr.bf16.gmra.mrb[0].mxu0 %v2573
      %v2701 = vpop.f32.mrb[0].mxu0
      %v2702 = vadd.f32 0.0, %v2701
      %v2703 = vpop.f32.mrb[0].mxu0
      %v2704 = vpop.f32.mrb[0].mxu0
      %v2705 = vadd.f32 0.0, %v2704
      %v2706 = vpop.f32.mrb[0].mxu0
      %2707 = vmatprep.mubr.bf16.mxu0 0
      %2708 = vmatmul.mubr.bf16.gmra.mrb[0].mxu0 %v2574
      %v2709 = vpop.f32.mrb[0].mxu0
      %v2710 = vadd.f32 0.0, %v2709
      %v2711 = vpop.f32.mrb[0].mxu0
      %v2712 = vpop.f32.mrb[0].mxu0
      %v2713 = vadd.f32 0.0, %v2712
      %v2714 = vpop.f32.mrb[0].mxu0
      %2715 = vmatprep.mubr.bf16.mxu0 0
      %2716 = vmatmul.mubr.bf16.gmra.mrb[0].mxu0 %v2575
      %v2717 = vpop.f32.mrb[0].mxu0
      %v2718 = vadd.f32 0.0, %v2717
      %v2719 = vpop.f32.mrb[0].mxu0
      %v2720 = vpop.f32.mrb[0].mxu0
      %v2721 = vadd.f32 0.0, %v2720
      %v2722 = vpop.f32.mrb[0].mxu0
      %2723 = vmatprep.mubr.bf16.mxu0 0
      %2724 = vmatmul.mubr.bf16.gmra.mrb[0].mxu0 %v2576
      %v2725 = vpop.f32.mrb[0].mxu0
      %v2726 = vadd.f32 0.0, %v2725
      %v2727 = vpop.f32.mrb[0].mxu0
      %v2728 = vpop.f32.mrb[0].mxu0
      %v2729 = vadd.f32 0.0, %v2728
      %v2730 = vpop.f32.mrb[0].mxu0
      %2731 = vmatprep.mubr.bf16.mxu0 0
      %2732 = vmatmul.mubr.bf16.gmra.mrb[0].mxu0 %v2577
      %v2733 = vpop.f32.mrb[0].mxu0
      %v2734 = vadd.f32 0.0, %v2733
      %v2735 = vpop.f32.mrb[0].mxu0
      %v2736 = vpop.f32.mrb[0].mxu0
      %v2737 = vadd.f32 0.0, %v2736
      %v2738 = vpop.f32.mrb[0].mxu0
      %2739 = vmatprep.mubr.bf16.mxu0 0
      %2740 = vmatmul.mubr.bf16.gmra.mrb[0].mxu0 %v2578
      %v2741 = vpop.f32.mrb[0].mxu0
      %v2742 = vadd.f32 0.0, %v2741
      %v2743 = vpop.f32.mrb[0].mxu0
      %v2744 = vpop.f32.mrb[0].mxu0
      %v2745 = vadd.f32 0.0, %v2744
      %v2746 = vpop.f32.mrb[0].mxu0
      %2747 = vmatprep.mubr.bf16.mxu0 0
      %2748 = vmatmul.mubr.bf16.gmra.mrb[0].mxu0 %v2579
      %v2749 = vpop.f32.mrb[0].mxu0
      %v2750 = vadd.f32 0.0, %v2749
      %v2751 = vpop.f32.mrb[0].mxu0
      %v2752 = vpop.f32.mrb[0].mxu0
      %v2753 = vadd.f32 0.0, %v2752
      %v2754 = vpop.f32.mrb[0].mxu0
      %2755 = vmatprep.mubr.bf16.mxu0 0
      %2756 = vmatmul.mubr.bf16.gmra.mrb[0].mxu0 %v2580
      %v2757 = vpop.f32.mrb[0].mxu0
      %v2758 = vadd.f32 0.0, %v2757
      %v2759 = vpop.f32.mrb[0].mxu0
      %v2760 = vpop.f32.mrb[0].mxu0
      %v2761 = vadd.f32 0.0, %v2760
      %v2762 = vpop.f32.mrb[0].mxu0
      %2763 = vmatprep.mubr.bf16.mxu0 0
      %2764 = vmatmul.mubr.bf16.gmra.mrb[0].mxu0 %v2581
      %v2765 = vpop.f32.mrb[0].mxu0
      %v2766 = vadd.f32 0.0, %v2765
      %v2767 = vpop.f32.mrb[0].mxu0
      %v2768 = vpop.f32.mrb[0].mxu0
      %v2769 = vadd.f32 0.0, %v2768
      %v2770 = vpop.f32.mrb[0].mxu0
      %2771 = vmatprep.mubr.bf16.mxu0 0
      %2772 = vmatmul.mubr.bf16.gmra.mrb[0].mxu0 %v2582
      %v2773 = vpop.f32.mrb[0].mxu0
      %v2774 = vadd.f32 0.0, %v2773
      %v2775 = vpop.f32.mrb[0].mxu0
      %v2776 = vpop.f32.mrb[0].mxu0
      %v2777 = vadd.f32 0.0, %v2776
      %v2778 = vpop.f32.mrb[0].mxu0
      %2779 = vmatprep.mubr.bf16.mxu0 0
      %2780 = vmatmul.mubr.bf16.gmra.mrb[0].mxu0 %v2583
      %v2781 = vpop.f32.mrb[0].mxu0
      %v2782 = vadd.f32 0.0, %v2781
      %v2783 = vpop.f32.mrb[0].mxu0
      %v2784 = vpop.f32.mrb[0].mxu0
      %v2785 = vadd.f32 0.0, %v2784
      %v2786 = vpop.f32.mrb[0].mxu0
      %2787 = vmatprep.mubr.bf16.mxu0 0
      %2788 = vmatmul.mubr.bf16.gmra.mrb[0].mxu0 %v2584
      %v2789 = vpop.f32.mrb[0].mxu0
      %v2790 = vadd.f32 0.0, %v2789
      %v2791 = vpop.f32.mrb[0].mxu0
      %v2792 = vpop.f32.mrb[0].mxu0
      %v2793 = vadd.f32 0.0, %v2792
      %v2794 = vpop.f32.mrb[0].mxu0
      %2795 = vmatprep.mubr.bf16.mxu0 0
      %2796 = vmatmul.mubr.bf16.gmra.mrb[0].mxu0 %v2585
      %v2797 = vpop.f32.mrb[0].mxu0
      %v2798 = vadd.f32 0.0, %v2797
      %v2799 = vpop.f32.mrb[0].mxu0
      %v2800 = vpop.f32.mrb[0].mxu0
      %v2801 = vadd.f32 0.0, %v2800
      %v2802 = vpop.f32.mrb[0].mxu0
      %2803 = vmatprep.mubr.bf16.mxu0 0
      %2804 = vmatmul.mubr.bf16.gmra.mrb[0].mxu0 %v2586
      %v2805 = vpop.f32.mrb[0].mxu0
      %v2806 = vadd.f32 0.0, %v2805
      %v2807 = vpop.f32.mrb[0].mxu0
      %v2808 = vpop.f32.mrb[0].mxu0
      %v2809 = vadd.f32 0.0, %v2808
      %v2810 = vpop.f32.mrb[0].mxu0
      %2811 = vdwg.mxu0
      %v2812 = vadd.f32 %v2058, %v2686
      %v2813 = vadd.f32 %v2059, %v2689
      %v2814 = vadd.f32 %v2060, %v2694
      %v2815 = vadd.f32 %v2061, %v2697
      %v2816 = vadd.f32 %v2062, %v2702
      %v2817 = vadd.f32 %v2063, %v2705
      %v2818 = vadd.f32 %v2064, %v2710
      %v2819 = vadd.f32 %v2065, %v2713
      %v2820 = vadd.f32 %v2066, %v2718
      %v2821 = vadd.f32 %v2067, %v2721
      %v2822 = vadd.f32 %v2068, %v2726
      %v2823 = vadd.f32 %v2069, %v2729
      %v2824 = vadd.f32 %v2070, %v2734
      %v2825 = vadd.f32 %v2071, %v2737
      %v2826 = vadd.f32 %v2072, %v2742
      %v2827 = vadd.f32 %v2073, %v2745
      %v2828 = vadd.f32 %v2074, %v2750
      %v2829 = vadd.f32 %v2075, %v2753
      %v2830 = vadd.f32 %v2076, %v2758
      %v2831 = vadd.f32 %v2077, %v2761
      %v2832 = vadd.f32 %v2078, %v2766
      %v2833 = vadd.f32 %v2079, %v2769
      %v2834 = vadd.f32 %v2080, %v2774
      %v2835 = vadd.f32 %v2081, %v2777
      %v2836 = vadd.f32 %v2082, %v2782
      %v2837 = vadd.f32 %v2083, %v2785
      %v2838 = vadd.f32 %v2084, %v2790
      %v2839 = vadd.f32 %v2085, %v2793
      %v2840 = vadd.f32 %v2086, %v2798
      %v2841 = vadd.f32 %v2087, %v2801
      %v2842 = vadd.f32 %v2088, %v2806
      %v2843 = vadd.f32 %v2089, %v2809
      %v2844 = vld [vmem:[%s1703] sm:$0xe]
      %v2845 = vld [vmem:[%s1703 + $0xc] sm:$0xe]
      %v2846 = vld [vmem:[%s1703 + $0x18] sm:$0xe]
      %v2847 = vld [vmem:[%s1703 + $0x24] sm:$0xe]
      %v2848 = vld [vmem:[%s1703 + $0x30] sm:$0xe]
      %v2849 = vld [vmem:[%s1703 + $0x3c] sm:$0xe]
      %v2850 = vld [vmem:[%s1703 + $0x48] sm:$0xe]
      %v2851 = vld [vmem:[%s1703 + $0x54] sm:$0xe]
      %v2852 = vld [vmem:[%s1703 + $0x60] sm:$0xe]
      %v2853 = vld [vmem:[%s1703 + $0x6c] sm:$0xe]
      %v2854 = vld [vmem:[%s1703 + $0x78] sm:$0xe]
      %v2855 = vld [vmem:[%s1703 + $0x84] sm:$0xe]
      %v2856 = vld [vmem:[%s1703 + $0x90] sm:$0xe]
      %v2857 = vld [vmem:[%s1703 + $0x9c] sm:$0xe]
      %v2858 = vld [vmem:[%s1703 + $0xa8] sm:$0xe]
      %v2859 = vld [vmem:[%s1703 + $0xb4] sm:$0xe]
      %v2908 = vrot.slane %v2844, 5
      %v2909 = vrot.slane %v2908, 4
      %v2910 = vrot.slane %v2091, 5
      %v2911 = vsel %vm1268, %v2909, %v2910
      %v2912 = vrot.slane %v2910, 4
      %v2913 = vrot.slane %v2092, 5
      %v2914 = vsel %vm1268, %v2912, %v2913
      %v2915 = vrot.slane %v2845, 5
      %v2916 = vrot.slane %v2915, 4
      %v2917 = vrot.slane %v2094, 5
      %v2918 = vsel %vm1268, %v2916, %v2917
      %v2919 = vrot.slane %v2917, 4
      %v2920 = vrot.slane %v2095, 5
      %v2921 = vsel %vm1268, %v2919, %v2920
      %v2922 = vrot.slane %v2846, 5
      %v2923 = vrot.slane %v2922, 4
      %v2924 = vrot.slane %v2097, 5
      %v2925 = vsel %vm1268, %v2923, %v2924
      %v2926 = vrot.slane %v2924, 4
      %v2927 = vrot.slane %v2098, 5
      %v2928 = vsel %vm1268, %v2926, %v2927
      %v2929 = vrot.slane %v2847, 5
      %v2930 = vrot.slane %v2929, 4
      %v2931 = vrot.slane %v2100, 5
      %v2932 = vsel %vm1268, %v2930, %v2931
      %v2933 = vrot.slane %v2931, 4
      %v2934 = vrot.slane %v2101, 5
      %v2935 = vsel %vm1268, %v2933, %v2934
      %v2936 = vrot.slane %v2848, 5
      %v2937 = vrot.slane %v2936, 4
      %v2938 = vrot.slane %v2103, 5
      %v2939 = vsel %vm1268, %v2937, %v2938
      %v2940 = vrot.slane %v2938, 4
      %v2941 = vrot.slane %v2104, 5
      %v2942 = vsel %vm1268, %v2940, %v2941
      %v2943 = vrot.slane %v2849, 5
      %v2944 = vrot.slane %v2943, 4
      %v2945 = vrot.slane %v2106, 5
      %v2946 = vsel %vm1268, %v2944, %v2945
      %v2947 = vrot.slane %v2945, 4
      %v2948 = vrot.slane %v2107, 5
      %v2949 = vsel %vm1268, %v2947, %v2948
      %v2950 = vrot.slane %v2850, 5
      %v2951 = vrot.slane %v2950, 4
      %v2952 = vrot.slane %v2109, 5
      %v2953 = vsel %vm1268, %v2951, %v2952
      %v2954 = vrot.slane %v2952, 4
      %v2955 = vrot.slane %v2110, 5
      %v2956 = vsel %vm1268, %v2954, %v2955
      %v2957 = vrot.slane %v2851, 5
      %v2958 = vrot.slane %v2957, 4
      %v2959 = vrot.slane %v2112, 5
      %v2960 = vsel %vm1268, %v2958, %v2959
      %v2961 = vrot.slane %v2959, 4
      %v2962 = vrot.slane %v2113, 5
      %v2963 = vsel %vm1268, %v2961, %v2962
      %v2964 = vrot.slane %v2852, 5
      %v2965 = vrot.slane %v2964, 4
      %v2966 = vrot.slane %v2115, 5
      %v2967 = vsel %vm1268, %v2965, %v2966
      %v2968 = vrot.slane %v2966, 4
      %v2969 = vrot.slane %v2116, 5
      %v2970 = vsel %vm1268, %v2968, %v2969
      %v2971 = vrot.slane %v2853, 5
      %v2972 = vrot.slane %v2971, 4
      %v2973 = vrot.slane %v2118, 5
      %v2974 = vsel %vm1268, %v2972, %v2973
      %v2975 = vrot.slane %v2973, 4
      %v2976 = vrot.slane %v2119, 5
      %v2977 = vsel %vm1268, %v2975, %v2976
      %v2978 = vrot.slane %v2854, 5
      %v2979 = vrot.slane %v2978, 4
      %v2980 = vrot.slane %v2121, 5
      %v2981 = vsel %vm1268, %v2979, %v2980
      %v2982 = vrot.slane %v2980, 4
      %v2983 = vrot.slane %v2122, 5
      %v2984 = vsel %vm1268, %v2982, %v2983
      %v2985 = vrot.slane %v2855, 5
      %v2986 = vrot.slane %v2985, 4
      %v2987 = vrot.slane %v2124, 5
      %v2988 = vsel %vm1268, %v2986, %v2987
      %v2989 = vrot.slane %v2987, 4
      %v2990 = vrot.slane %v2125, 5
      %v2991 = vsel %vm1268, %v2989, %v2990
      %v2992 = vrot.slane %v2856, 5
      %v2993 = vrot.slane %v2992, 4
      %v2994 = vrot.slane %v2127, 5
      %v2995 = vsel %vm1268, %v2993, %v2994
      %v2996 = vrot.slane %v2994, 4
      %v2997 = vrot.slane %v2128, 5
      %v2998 = vsel %vm1268, %v2996, %v2997
      %v2999 = vrot.slane %v2857, 5
      %v3000 = vrot.slane %v2999, 4
      %v3001 = vrot.slane %v2130, 5
      %v3002 = vsel %vm1268, %v3000, %v3001
      %v3003 = vrot.slane %v3001, 4
      %v3004 = vrot.slane %v2131, 5
      %v3005 = vsel %vm1268, %v3003, %v3004
      %v3006 = vrot.slane %v2858, 5
      %v3007 = vrot.slane %v3006, 4
      %v3008 = vrot.slane %v2133, 5
      %v3009 = vsel %vm1268, %v3007, %v3008
      %v3010 = vrot.slane %v3008, 4
      %v3011 = vrot.slane %v2134, 5
      %v3012 = vsel %vm1268, %v3010, %v3011
      %v3013 = vrot.slane %v2859, 5
      %v3014 = vrot.slane %v3013, 4
      %v3015 = vrot.slane %v2136, 5
      %v3016 = vsel %vm1268, %v3014, %v3015
      %v3017 = vrot.slane %v3015, 4
      %v3018 = vrot.slane %v2137, 5
      %v3019 = vsel %vm1268, %v3017, %v3018
      %s3020 = scalar_lea.vmem %s1, 320
      %v3021 = vld [vmem:[%s3020] sm:$0xf]
      %v3022 = vld [vmem:[%s3020 + $0x4] sm:$0xf]
      %v3023 = vld [vmem:[%s3020 + $0x8] sm:$0xf]
      %v3024 = vld [vmem:[%s3020 + $0xc] sm:$0xf]
      %v3025 = vld [vmem:[%s3020 + $0x10] sm:$0xf]
      %v3026 = vld [vmem:[%s3020 + $0x14] sm:$0xf]
      %v3027 = vld [vmem:[%s3020 + $0x18] sm:$0xf]
      %v3028 = vld [vmem:[%s3020 + $0x1c] sm:$0xf]
      %v3029 = vld [vmem:[%s3020 + $0x20] sm:$0xf]
      %v3030 = vld [vmem:[%s3020 + $0x24] sm:$0xf]
      %v3031 = vld [vmem:[%s3020 + $0x28] sm:$0xf]
      %v3032 = vld [vmem:[%s3020 + $0x2c] sm:$0xf]
      %v3033 = vld [vmem:[%s3020 + $0x30] sm:$0xf]
      %v3034 = vld [vmem:[%s3020 + $0x34] sm:$0xf]
      %v3035 = vld [vmem:[%s3020 + $0x38] sm:$0xf]
      %v3036 = vld [vmem:[%s3020 + $0x3c] sm:$0xf]
      %v3037 = vunpack.c.l.b16 %v2911
      %v3038 = vunpack.c.l.b16 %v2914
      %v3039 = vunpack.c.l.b16 %v2918
      %v3040 = vunpack.c.l.b16 %v2921
      %v3041 = vunpack.c.l.b16 %v2925
      %v3042 = vunpack.c.l.b16 %v2928
      %v3043 = vunpack.c.l.b16 %v2932
      %v3044 = vunpack.c.l.b16 %v2935
      %v3045 = vunpack.c.l.b16 %v2939
      %v3046 = vunpack.c.l.b16 %v2942
      %v3047 = vunpack.c.l.b16 %v2946
      %v3048 = vunpack.c.l.b16 %v2949
      %v3049 = vunpack.c.l.b16 %v2953
      %v3050 = vunpack.c.l.b16 %v2956
      %v3051 = vunpack.c.l.b16 %v2960
      %v3052 = vunpack.c.l.b16 %v2963
      %v3053 = vunpack.c.l.b16 %v2967
      %v3054 = vunpack.c.l.b16 %v2970
      %v3055 = vunpack.c.l.b16 %v2974
      %v3056 = vunpack.c.l.b16 %v2977
      %v3057 = vunpack.c.l.b16 %v2981
      %v3058 = vunpack.c.l.b16 %v2984
      %v3059 = vunpack.c.l.b16 %v2988
      %v3060 = vunpack.c.l.b16 %v2991
      %v3061 = vunpack.c.l.b16 %v2995
      %v3062 = vunpack.c.l.b16 %v2998
      %v3063 = vunpack.c.l.b16 %v3002
      %v3064 = vunpack.c.l.b16 %v3005
      %v3065 = vunpack.c.l.b16 %v3009
      %v3066 = vunpack.c.l.b16 %v3012
      %v3067 = vunpack.c.l.b16 %v3016
      %v3068 = vunpack.c.l.b16 %v3019
      %v3069 = vpack.c.b16 %v3038, %v3037
      %v3070 = vpack.c.b16 %v3040, %v3039
      %v3071 = vpack.c.b16 %v3042, %v3041
      %v3072 = vpack.c.b16 %v3044, %v3043
      %v3073 = vpack.c.b16 %v3046, %v3045
      %v3074 = vpack.c.b16 %v3048, %v3047
      %v3075 = vpack.c.b16 %v3050, %v3049
      %v3076 = vpack.c.b16 %v3052, %v3051
      %v3077 = vpack.c.b16 %v3054, %v3053
      %v3078 = vpack.c.b16 %v3056, %v3055
      %v3079 = vpack.c.b16 %v3058, %v3057
      %v3080 = vpack.c.b16 %v3060, %v3059
      %v3081 = vpack.c.b16 %v3062, %v3061
      %v3082 = vpack.c.b16 %v3064, %v3063
      %v3083 = vpack.c.b16 %v3066, %v3065
      %v3084 = vpack.c.b16 %v3068, %v3067
      %v3117 = vunpack.c.l.b16 %v3021
      %v3118 = vunpack.c.l.b16 %v3022
      %v3119 = vunpack.c.l.b16 %v3023
      %v3120 = vunpack.c.l.b16 %v3024
      %v3121 = vunpack.c.l.b16 %v3025
      %v3122 = vunpack.c.l.b16 %v3026
      %v3123 = vunpack.c.l.b16 %v3027
      %v3124 = vunpack.c.l.b16 %v3028
      %v3125 = vunpack.c.l.b16 %v3029
      %v3126 = vunpack.c.l.b16 %v3030
      %v3127 = vunpack.c.l.b16 %v3031
      %v3128 = vunpack.c.l.b16 %v3032
      %v3129 = vunpack.c.l.b16 %v3033
      %v3130 = vunpack.c.l.b16 %v3034
      %v3131 = vunpack.c.l.b16 %v3035
      %v3132 = vunpack.c.l.b16 %v3036
      %v3133 = vpack.c.b16 %v3118, %v3117
      %v3134 = vpack.c.b16 %v3120, %v3119
      %v3135 = vpack.c.b16 %v3122, %v3121
      %v3136 = vpack.c.b16 %v3124, %v3123
      %v3137 = vpack.c.b16 %v3126, %v3125
      %v3138 = vpack.c.b16 %v3128, %v3127
      %v3139 = vpack.c.b16 %v3130, %v3129
      %v3140 = vpack.c.b16 %v3132, %v3131
      %3149 = vmatprep.subr.bf16.mxu0 0
      %3150 = vmatpush1.bf16.msra.mxu0 %v3133
      %3151 = vmatprep.subr.bf16.mxu0 0
      %3152 = vmatpush1.bf16.msra.mxu0 %v3134
      %3153 = vmatprep.subr.bf16.mxu0 0
      %3154 = vmatpush1.bf16.msra.mxu0 %v3135
      %3155 = vmatprep.subr.bf16.mxu0 0
      %3156 = vmatpush1.bf16.msra.mxu0 %v3136
      %3157 = vmatprep.subr.bf16.mxu0 0
      %3158 = vmatpush1.bf16.msra.mxu0 %v3137
      %3159 = vmatprep.subr.bf16.mxu0 0
      %3160 = vmatpush1.bf16.msra.mxu0 %v3138
      %3161 = vmatprep.subr.bf16.mxu0 0
      %3162 = vmatpush1.bf16.msra.mxu0 %v3139
      %3163 = vmatprep.subr.bf16.mxu0 0
      %3164 = vmatpush1.bf16.msra.mxu0 %v3140
      %3165 = vmatprep.subr.bf16.mxu0 0
      %3166 = vmatpush1.bf16.msra.mxu0 0
      %3167 = vmatprep.subr.bf16.mxu0 0
      %3168 = vmatpush1.bf16.msra.mxu0 0
      %3169 = vmatprep.subr.bf16.mxu0 0
      %3170 = vmatpush1.bf16.msra.mxu0 0
      %3171 = vmatprep.subr.bf16.mxu0 0
      %3172 = vmatpush1.bf16.msra.mxu0 0
      %3173 = vmatprep.subr.bf16.mxu0 0
      %3174 = vmatpush1.bf16.msra.mxu0 0
      %3175 = vmatprep.subr.bf16.mxu0 0
      %3176 = vmatpush1.bf16.msra.mxu0 0
      %3177 = vmatprep.subr.bf16.mxu0 0
      %3178 = vmatpush1.bf16.msra.mxu0 0
      %3179 = vmatprep.subr.bf16.mxu0 0
      %3180 = vmatpush1.bf16.msra.mxu0 0
      %3181 = vmatprep.mubr.bf16.mxu0 0
      %3182 = vmatmul.mubr.bf16.gmra.mrb[0].mxu0 %v3069
      %v3183 = vpop.f32.mrb[0].mxu0
      %v3184 = vadd.f32 0.0, %v3183
      %v3185 = vpop.f32.mrb[0].mxu0
      %v3186 = vpop.f32.mrb[0].mxu0
      %v3187 = vadd.f32 0.0, %v3186
      %v3188 = vpop.f32.mrb[0].mxu0
      %3189 = vmatprep.mubr.bf16.mxu0 0
      %3190 = vmatmul.mubr.bf16.gmra.mrb[0].mxu0 %v3070
      %v3191 = vpop.f32.mrb[0].mxu0
      %v3192 = vadd.f32 0.0, %v3191
      %v3193 = vpop.f32.mrb[0].mxu0
      %v3194 = vpop.f32.mrb[0].mxu0
      %v3195 = vadd.f32 0.0, %v3194
      %v3196 = vpop.f32.mrb[0].mxu0
      %3197 = vmatprep.mubr.bf16.mxu0 0
      %3198 = vmatmul.mubr.bf16.gmra.mrb[0].mxu0 %v3071
      %v3199 = vpop.f32.mrb[0].mxu0
      %v3200 = vadd.f32 0.0, %v3199
      %v3201 = vpop.f32.mrb[0].mxu0
      %v3202 = vpop.f32.mrb[0].mxu0
      %v3203 = vadd.f32 0.0, %v3202
      %v3204 = vpop.f32.mrb[0].mxu0
      %3205 = vmatprep.mubr.bf16.mxu0 0
      %3206 = vmatmul.mubr.bf16.gmra.mrb[0].mxu0 %v3072
      %v3207 = vpop.f32.mrb[0].mxu0
      %v3208 = vadd.f32 0.0, %v3207
      %v3209 = vpop.f32.mrb[0].mxu0
      %v3210 = vpop.f32.mrb[0].mxu0
      %v3211 = vadd.f32 0.0, %v3210
      %v3212 = vpop.f32.mrb[0].mxu0
      %3213 = vmatprep.mubr.bf16.mxu0 0
      %3214 = vmatmul.mubr.bf16.gmra.mrb[0].mxu0 %v3073
      %v3215 = vpop.f32.mrb[0].mxu0
      %v3216 = vadd.f32 0.0, %v3215
      %v3217 = vpop.f32.mrb[0].mxu0
      %v3218 = vpop.f32.mrb[0].mxu0
      %v3219 = vadd.f32 0.0, %v3218
      %v3220 = vpop.f32.mrb[0].mxu0
      %3221 = vmatprep.mubr.bf16.mxu0 0
      %3222 = vmatmul.mubr.bf16.gmra.mrb[0].mxu0 %v3074
      %v3223 = vpop.f32.mrb[0].mxu0
      %v3224 = vadd.f32 0.0, %v3223
      %v3225 = vpop.f32.mrb[0].mxu0
      %v3226 = vpop.f32.mrb[0].mxu0
      %v3227 = vadd.f32 0.0, %v3226
      %v3228 = vpop.f32.mrb[0].mxu0
      %3229 = vmatprep.mubr.bf16.mxu0 0
      %3230 = vmatmul.mubr.bf16.gmra.mrb[0].mxu0 %v3075
      %v3231 = vpop.f32.mrb[0].mxu0
      %v3232 = vadd.f32 0.0, %v3231
      %v3233 = vpop.f32.mrb[0].mxu0
      %v3234 = vpop.f32.mrb[0].mxu0
      %v3235 = vadd.f32 0.0, %v3234
      %v3236 = vpop.f32.mrb[0].mxu0
      %3237 = vmatprep.mubr.bf16.mxu0 0
      %3238 = vmatmul.mubr.bf16.gmra.mrb[0].mxu0 %v3076
      %v3239 = vpop.f32.mrb[0].mxu0
      %v3240 = vadd.f32 0.0, %v3239
      %v3241 = vpop.f32.mrb[0].mxu0
      %v3242 = vpop.f32.mrb[0].mxu0
      %v3243 = vadd.f32 0.0, %v3242
      %v3244 = vpop.f32.mrb[0].mxu0
      %3245 = vmatprep.mubr.bf16.mxu0 0
      %3246 = vmatmul.mubr.bf16.gmra.mrb[0].mxu0 %v3077
      %v3247 = vpop.f32.mrb[0].mxu0
      %v3248 = vadd.f32 0.0, %v3247
      %v3249 = vpop.f32.mrb[0].mxu0
      %v3250 = vpop.f32.mrb[0].mxu0
      %v3251 = vadd.f32 0.0, %v3250
      %v3252 = vpop.f32.mrb[0].mxu0
      %3253 = vmatprep.mubr.bf16.mxu0 0
      %3254 = vmatmul.mubr.bf16.gmra.mrb[0].mxu0 %v3078
      %v3255 = vpop.f32.mrb[0].mxu0
      %v3256 = vadd.f32 0.0, %v3255
      %v3257 = vpop.f32.mrb[0].mxu0
      %v3258 = vpop.f32.mrb[0].mxu0
      %v3259 = vadd.f32 0.0, %v3258
      %v3260 = vpop.f32.mrb[0].mxu0
      %3261 = vmatprep.mubr.bf16.mxu0 0
      %3262 = vmatmul.mubr.bf16.gmra.mrb[0].mxu0 %v3079
      %v3263 = vpop.f32.mrb[0].mxu0
      %v3264 = vadd.f32 0.0, %v3263
      %v3265 = vpop.f32.mrb[0].mxu0
      %v3266 = vpop.f32.mrb[0].mxu0
      %v3267 = vadd.f32 0.0, %v3266
      %v3268 = vpop.f32.mrb[0].mxu0
      %3269 = vmatprep.mubr.bf16.mxu0 0
      %3270 = vmatmul.mubr.bf16.gmra.mrb[0].mxu0 %v3080
      %v3271 = vpop.f32.mrb[0].mxu0
      %v3272 = vadd.f32 0.0, %v3271
      %v3273 = vpop.f32.mrb[0].mxu0
      %v3274 = vpop.f32.mrb[0].mxu0
      %v3275 = vadd.f32 0.0, %v3274
      %v3276 = vpop.f32.mrb[0].mxu0
      %3277 = vmatprep.mubr.bf16.mxu0 0
      %3278 = vmatmul.mubr.bf16.gmra.mrb[0].mxu0 %v3081
      %v3279 = vpop.f32.mrb[0].mxu0
      %v3280 = vadd.f32 0.0, %v3279
      %v3281 = vpop.f32.mrb[0].mxu0
      %v3282 = vpop.f32.mrb[0].mxu0
      %v3283 = vadd.f32 0.0, %v3282
      %v3284 = vpop.f32.mrb[0].mxu0
      %3285 = vmatprep.mubr.bf16.mxu0 0
      %3286 = vmatmul.mubr.bf16.gmra.mrb[0].mxu0 %v3082
      %v3287 = vpop.f32.mrb[0].mxu0
      %v3288 = vadd.f32 0.0, %v3287
      %v3289 = vpop.f32.mrb[0].mxu0
      %v3290 = vpop.f32.mrb[0].mxu0
      %v3291 = vadd.f32 0.0, %v3290
      %v3292 = vpop.f32.mrb[0].mxu0
      %3293 = vmatprep.mubr.bf16.mxu0 0
      %3294 = vmatmul.mubr.bf16.gmra.mrb[0].mxu0 %v3083
      %v3295 = vpop.f32.mrb[0].mxu0
      %v3296 = vadd.f32 0.0, %v3295
      %v3297 = vpop.f32.mrb[0].mxu0
      %v3298 = vpop.f32.mrb[0].mxu0
      %v3299 = vadd.f32 0.0, %v3298
      %v3300 = vpop.f32.mrb[0].mxu0
      %3301 = vmatprep.mubr.bf16.mxu0 0
      %3302 = vmatmul.mubr.bf16.gmra.mrb[0].mxu0 %v3084
      %v3303 = vpop.f32.mrb[0].mxu0
      %v3304 = vadd.f32 0.0, %v3303
      %v3305 = vpop.f32.mrb[0].mxu0
      %v3306 = vpop.f32.mrb[0].mxu0
      %v3307 = vadd.f32 0.0, %v3306
      %v3308 = vpop.f32.mrb[0].mxu0
      %3309 = vdwg.mxu0
      %v3310 = vadd.f32 %v2812, %v3184
      %v3311 = vadd.f32 %v2813, %v3187
      %v3312 = vadd.f32 %v2814, %v3192
      %v3313 = vadd.f32 %v2815, %v3195
      %v3314 = vadd.f32 %v2816, %v3200
      %v3315 = vadd.f32 %v2817, %v3203
      %v3316 = vadd.f32 %v2818, %v3208
      %v3317 = vadd.f32 %v2819, %v3211
      %v3318 = vadd.f32 %v2820, %v3216
      %v3319 = vadd.f32 %v2821, %v3219
      %v3320 = vadd.f32 %v2822, %v3224
      %v3321 = vadd.f32 %v2823, %v3227
      %v3322 = vadd.f32 %v2824, %v3232
      %v3323 = vadd.f32 %v2825, %v3235
      %v3324 = vadd.f32 %v2826, %v3240
      %v3325 = vadd.f32 %v2827, %v3243
      %v3326 = vadd.f32 %v2828, %v3248
      %v3327 = vadd.f32 %v2829, %v3251
      %v3328 = vadd.f32 %v2830, %v3256
      %v3329 = vadd.f32 %v2831, %v3259
      %v3330 = vadd.f32 %v2832, %v3264
      %v3331 = vadd.f32 %v2833, %v3267
      %v3332 = vadd.f32 %v2834, %v3272
      %v3333 = vadd.f32 %v2835, %v3275
      %v3334 = vadd.f32 %v2836, %v3280
      %v3335 = vadd.f32 %v2837, %v3283
      %v3336 = vadd.f32 %v2838, %v3288
      %v3337 = vadd.f32 %v2839, %v3291
      %v3338 = vadd.f32 %v2840, %v3296
      %v3339 = vadd.f32 %v2841, %v3299
      %v3340 = vadd.f32 %v2842, %v3304
      %v3341 = vadd.f32 %v2843, %v3307
      %s3342 = scalar_lea.vmem %s165, 24
      %v3343 = vld [vmem:[%s3342] sm:$0xf]
      %v3344 = vld [vmem:[%s3342 + $0x4] sm:$0xf]
      %v3345 = vld [vmem:[%s3342 + $0xc] sm:$0xf]
      %v3346 = vld [vmem:[%s3342 + $0x10] sm:$0xf]
      %v3347 = vld [vmem:[%s3342 + $0x18] sm:$0xf]
      %v3348 = vld [vmem:[%s3342 + $0x1c] sm:$0xf]
      %v3349 = vld [vmem:[%s3342 + $0x24] sm:$0xf]
      %v3350 = vld [vmem:[%s3342 + $0x28] sm:$0xf]
      %v3351 = vld [vmem:[%s3342 + $0x30] sm:$0xf]
      %v3352 = vld [vmem:[%s3342 + $0x34] sm:$0xf]
      %v3353 = vld [vmem:[%s3342 + $0x3c] sm:$0xf]
      %v3354 = vld [vmem:[%s3342 + $0x40] sm:$0xf]
      %v3355 = vld [vmem:[%s3342 + $0x48] sm:$0xf]
      %v3356 = vld [vmem:[%s3342 + $0x4c] sm:$0xf]
      %v3357 = vld [vmem:[%s3342 + $0x54] sm:$0xf]
      %v3358 = vld [vmem:[%s3342 + $0x58] sm:$0xf]
      %v3359 = vld [vmem:[%s3342 + $0x60] sm:$0xf]
      %v3360 = vld [vmem:[%s3342 + $0x64] sm:$0xf]
      %v3361 = vld [vmem:[%s3342 + $0x6c] sm:$0xf]
      %v3362 = vld [vmem:[%s3342 + $0x70] sm:$0xf]
      %v3363 = vld [vmem:[%s3342 + $0x78] sm:$0xf]
      %v3364 = vld [vmem:[%s3342 + $0x7c] sm:$0xf]
      %v3365 = vld [vmem:[%s3342 + $0x84] sm:$0xf]
      %v3366 = vld [vmem:[%s3342 + $0x88] sm:$0xf]
      %v3367 = vld [vmem:[%s3342 + $0x90] sm:$0xf]
      %v3368 = vld [vmem:[%s3342 + $0x94] sm:$0xf]
      %v3369 = vld [vmem:[%s3342 + $0x9c] sm:$0xf]
      %v3370 = vld [vmem:[%s3342 + $0xa0] sm:$0xf]
      %v3371 = vld [vmem:[%s3342 + $0xa8] sm:$0xf]
      %v3372 = vld [vmem:[%s3342 + $0xac] sm:$0xf]
      %v3373 = vld [vmem:[%s3342 + $0xb4] sm:$0xf]
      %v3374 = vld [vmem:[%s3342 + $0xb8] sm:$0xf]
      %s3375 = scalar_lea.vmem %s1, 384
      %v3376 = vld [vmem:[%s3375] sm:$0xf]
      %v3377 = vld [vmem:[%s3375 + $0x4] sm:$0xf]
      %v3378 = vld [vmem:[%s3375 + $0x8] sm:$0xf]
      %v3379 = vld [vmem:[%s3375 + $0xc] sm:$0xf]
      %v3380 = vld [vmem:[%s3375 + $0x10] sm:$0xf]
      %v3381 = vld [vmem:[%s3375 + $0x14] sm:$0xf]
      %v3382 = vld [vmem:[%s3375 + $0x18] sm:$0xf]
      %v3383 = vld [vmem:[%s3375 + $0x1c] sm:$0xf]
      %v3384 = vld [vmem:[%s3375 + $0x20] sm:$0xf]
      %v3385 = vld [vmem:[%s3375 + $0x24] sm:$0xf]
      %v3386 = vld [vmem:[%s3375 + $0x28] sm:$0xf]
      %v3387 = vld [vmem:[%s3375 + $0x2c] sm:$0xf]
      %v3388 = vld [vmem:[%s3375 + $0x30] sm:$0xf]
      %v3389 = vld [vmem:[%s3375 + $0x34] sm:$0xf]
      %v3390 = vld [vmem:[%s3375 + $0x38] sm:$0xf]
      %v3391 = vld [vmem:[%s3375 + $0x3c] sm:$0xf]
      %v3424 = vunpack.c.l.b16 %v3343
      %v3425 = vunpack.c.l.b16 %v3344
      %v3426 = vunpack.c.l.b16 %v3345
      %v3427 = vunpack.c.l.b16 %v3346
      %v3428 = vunpack.c.l.b16 %v3347
      %v3429 = vunpack.c.l.b16 %v3348
      %v3430 = vunpack.c.l.b16 %v3349
      %v3431 = vunpack.c.l.b16 %v3350
      %v3432 = vunpack.c.l.b16 %v3351
      %v3433 = vunpack.c.l.b16 %v3352
      %v3434 = vunpack.c.l.b16 %v3353
      %v3435 = vunpack.c.l.b16 %v3354
      %v3436 = vunpack.c.l.b16 %v3355
      %v3437 = vunpack.c.l.b16 %v3356
      %v3438 = vunpack.c.l.b16 %v3357
      %v3439 = vunpack.c.l.b16 %v3358
      %v3440 = vunpack.c.l.b16 %v3359
      %v3441 = vunpack.c.l.b16 %v3360
      %v3442 = vunpack.c.l.b16 %v3361
      %v3443 = vunpack.c.l.b16 %v3362
      %v3444 = vunpack.c.l.b16 %v3363
      %v3445 = vunpack.c.l.b16 %v3364
      %v3446 = vunpack.c.l.b16 %v3365
      %v3447 = vunpack.c.l.b16 %v3366
      %v3448 = vunpack.c.l.b16 %v3367
      %v3449 = vunpack.c.l.b16 %v3368
      %v3450 = vunpack.c.l.b16 %v3369
      %v3451 = vunpack.c.l.b16 %v3370
      %v3452 = vunpack.c.l.b16 %v3371
      %v3453 = vunpack.c.l.b16 %v3372
      %v3454 = vunpack.c.l.b16 %v3373
      %v3455 = vunpack.c.l.b16 %v3374
      %v3456 = vpack.c.b16 %v3425, %v3424
      %v3457 = vpack.c.b16 %v3427, %v3426
      %v3458 = vpack.c.b16 %v3429, %v3428
      %v3459 = vpack.c.b16 %v3431, %v3430
      %v3460 = vpack.c.b16 %v3433, %v3432
      %v3461 = vpack.c.b16 %v3435, %v3434
      %v3462 = vpack.c.b16 %v3437, %v3436
      %v3463 = vpack.c.b16 %v3439, %v3438
      %v3464 = vpack.c.b16 %v3441, %v3440
      %v3465 = vpack.c.b16 %v3443, %v3442
      %v3466 = vpack.c.b16 %v3445, %v3444
      %v3467 = vpack.c.b16 %v3447, %v3446
      %v3468 = vpack.c.b16 %v3449, %v3448
      %v3469 = vpack.c.b16 %v3451, %v3450
      %v3470 = vpack.c.b16 %v3453, %v3452
      %v3471 = vpack.c.b16 %v3455, %v3454
      %v3504 = vunpack.c.l.b16 %v3376
      %v3505 = vunpack.c.l.b16 %v3377
      %v3506 = vunpack.c.l.b16 %v3378
      %v3507 = vunpack.c.l.b16 %v3379
      %v3508 = vunpack.c.l.b16 %v3380
      %v3509 = vunpack.c.l.b16 %v3381
      %v3510 = vunpack.c.l.b16 %v3382
      %v3511 = vunpack.c.l.b16 %v3383
      %v3512 = vunpack.c.l.b16 %v3384
      %v3513 = vunpack.c.l.b16 %v3385
      %v3514 = vunpack.c.l.b16 %v3386
      %v3515 = vunpack.c.l.b16 %v3387
      %v3516 = vunpack.c.l.b16 %v3388
      %v3517 = vunpack.c.l.b16 %v3389
      %v3518 = vunpack.c.l.b16 %v3390
      %v3519 = vunpack.c.l.b16 %v3391
      %v3520 = vpack.c.b16 %v3505, %v3504
      %v3521 = vpack.c.b16 %v3507, %v3506
      %v3522 = vpack.c.b16 %v3509, %v3508
      %v3523 = vpack.c.b16 %v3511, %v3510
      %v3524 = vpack.c.b16 %v3513, %v3512
      %v3525 = vpack.c.b16 %v3515, %v3514
      %v3526 = vpack.c.b16 %v3517, %v3516
      %v3527 = vpack.c.b16 %v3519, %v3518
      %3536 = vmatprep.subr.bf16.mxu0 0
      %3537 = vmatpush1.bf16.msra.mxu0 %v3520
      %3538 = vmatprep.subr.bf16.mxu0 0
      %3539 = vmatpush1.bf16.msra.mxu0 %v3521
      %3540 = vmatprep.subr.bf16.mxu0 0
      %3541 = vmatpush1.bf16.msra.mxu0 %v3522
      %3542 = vmatprep.subr.bf16.mxu0 0
      %3543 = vmatpush1.bf16.msra.mxu0 %v3523
      %3544 = vmatprep.subr.bf16.mxu0 0
      %3545 = vmatpush1.bf16.msra.mxu0 %v3524
      %3546 = vmatprep.subr.bf16.mxu0 0
      %3547 = vmatpush1.bf16.msra.mxu0 %v3525
      %3548 = vmatprep.subr.bf16.mxu0 0
      %3549 = vmatpush1.bf16.msra.mxu0 %v3526
      %3550 = vmatprep.subr.bf16.mxu0 0
      %3551 = vmatpush1.bf16.msra.mxu0 %v3527
      %3552 = vmatprep.subr.bf16.mxu0 0
      %3553 = vmatpush1.bf16.msra.mxu0 0
      %3554 = vmatprep.subr.bf16.mxu0 0
      %3555 = vmatpush1.bf16.msra.mxu0 0
      %3556 = vmatprep.subr.bf16.mxu0 0
      %3557 = vmatpush1.bf16.msra.mxu0 0
      %3558 = vmatprep.subr.bf16.mxu0 0
      %3559 = vmatpush1.bf16.msra.mxu0 0
      %3560 = vmatprep.subr.bf16.mxu0 0
      %3561 = vmatpush1.bf16.msra.mxu0 0
      %3562 = vmatprep.subr.bf16.mxu0 0
      %3563 = vmatpush1.bf16.msra.mxu0 0
      %3564 = vmatprep.subr.bf16.mxu0 0
      %3565 = vmatpush1.bf16.msra.mxu0 0
      %3566 = vmatprep.subr.bf16.mxu0 0
      %3567 = vmatpush1.bf16.msra.mxu0 0
      %3568 = vmatprep.mubr.bf16.mxu0 0
      %3569 = vmatmul.mubr.bf16.gmra.mrb[0].mxu0 %v3456
      %v3570 = vpop.f32.mrb[0].mxu0
      %v3571 = vadd.f32 0.0, %v3570
      %v3572 = vpop.f32.mrb[0].mxu0
      %v3573 = vpop.f32.mrb[0].mxu0
      %v3574 = vadd.f32 0.0, %v3573
      %v3575 = vpop.f32.mrb[0].mxu0
      %3576 = vmatprep.mubr.bf16.mxu0 0
      %3577 = vmatmul.mubr.bf16.gmra.mrb[0].mxu0 %v3457
      %v3578 = vpop.f32.mrb[0].mxu0
      %v3579 = vadd.f32 0.0, %v3578
      %v3580 = vpop.f32.mrb[0].mxu0
      %v3581 = vpop.f32.mrb[0].mxu0
      %v3582 = vadd.f32 0.0, %v3581
      %v3583 = vpop.f32.mrb[0].mxu0
      %3584 = vmatprep.mubr.bf16.mxu0 0
      %3585 = vmatmul.mubr.bf16.gmra.mrb[0].mxu0 %v3458
      %v3586 = vpop.f32.mrb[0].mxu0
      %v3587 = vadd.f32 0.0, %v3586
      %v3588 = vpop.f32.mrb[0].mxu0
      %v3589 = vpop.f32.mrb[0].mxu0
      %v3590 = vadd.f32 0.0, %v3589
      %v3591 = vpop.f32.mrb[0].mxu0
      %3592 = vmatprep.mubr.bf16.mxu0 0
      %3593 = vmatmul.mubr.bf16.gmra.mrb[0].mxu0 %v3459
      %v3594 = vpop.f32.mrb[0].mxu0
      %v3595 = vadd.f32 0.0, %v3594
      %v3596 = vpop.f32.mrb[0].mxu0
      %v3597 = vpop.f32.mrb[0].mxu0
      %v3598 = vadd.f32 0.0, %v3597
      %v3599 = vpop.f32.mrb[0].mxu0
      %3600 = vmatprep.mubr.bf16.mxu0 0
      %3601 = vmatmul.mubr.bf16.gmra.mrb[0].mxu0 %v3460
      %v3602 = vpop.f32.mrb[0].mxu0
      %v3603 = vadd.f32 0.0, %v3602
      %v3604 = vpop.f32.mrb[0].mxu0
      %v3605 = vpop.f32.mrb[0].mxu0
      %v3606 = vadd.f32 0.0, %v3605
      %v3607 = vpop.f32.mrb[0].mxu0
      %3608 = vmatprep.mubr.bf16.mxu0 0
      %3609 = vmatmul.mubr.bf16.gmra.mrb[0].mxu0 %v3461
      %v3610 = vpop.f32.mrb[0].mxu0
      %v3611 = vadd.f32 0.0, %v3610
      %v3612 = vpop.f32.mrb[0].mxu0
      %v3613 = vpop.f32.mrb[0].mxu0
      %v3614 = vadd.f32 0.0, %v3613
      %v3615 = vpop.f32.mrb[0].mxu0
      %3616 = vmatprep.mubr.bf16.mxu0 0
      %3617 = vmatmul.mubr.bf16.gmra.mrb[0].mxu0 %v3462
      %v3618 = vpop.f32.mrb[0].mxu0
      %v3619 = vadd.f32 0.0, %v3618
      %v3620 = vpop.f32.mrb[0].mxu0
      %v3621 = vpop.f32.mrb[0].mxu0
      %v3622 = vadd.f32 0.0, %v3621
      %v3623 = vpop.f32.mrb[0].mxu0
      %3624 = vmatprep.mubr.bf16.mxu0 0
      %3625 = vmatmul.mubr.bf16.gmra.mrb[0].mxu0 %v3463
      %v3626 = vpop.f32.mrb[0].mxu0
      %v3627 = vadd.f32 0.0, %v3626
      %v3628 = vpop.f32.mrb[0].mxu0
      %v3629 = vpop.f32.mrb[0].mxu0
      %v3630 = vadd.f32 0.0, %v3629
      %v3631 = vpop.f32.mrb[0].mxu0
      %3632 = vmatprep.mubr.bf16.mxu0 0
      %3633 = vmatmul.mubr.bf16.gmra.mrb[0].mxu0 %v3464
      %v3634 = vpop.f32.mrb[0].mxu0
      %v3635 = vadd.f32 0.0, %v3634
      %v3636 = vpop.f32.mrb[0].mxu0
      %v3637 = vpop.f32.mrb[0].mxu0
      %v3638 = vadd.f32 0.0, %v3637
      %v3639 = vpop.f32.mrb[0].mxu0
      %3640 = vmatprep.mubr.bf16.mxu0 0
      %3641 = vmatmul.mubr.bf16.gmra.mrb[0].mxu0 %v3465
      %v3642 = vpop.f32.mrb[0].mxu0
      %v3643 = vadd.f32 0.0, %v3642
      %v3644 = vpop.f32.mrb[0].mxu0
      %v3645 = vpop.f32.mrb[0].mxu0
      %v3646 = vadd.f32 0.0, %v3645
      %v3647 = vpop.f32.mrb[0].mxu0
      %3648 = vmatprep.mubr.bf16.mxu0 0
      %3649 = vmatmul.mubr.bf16.gmra.mrb[0].mxu0 %v3466
      %v3650 = vpop.f32.mrb[0].mxu0
      %v3651 = vadd.f32 0.0, %v3650
      %v3652 = vpop.f32.mrb[0].mxu0
      %v3653 = vpop.f32.mrb[0].mxu0
      %v3654 = vadd.f32 0.0, %v3653
      %v3655 = vpop.f32.mrb[0].mxu0
      %3656 = vmatprep.mubr.bf16.mxu0 0
      %3657 = vmatmul.mubr.bf16.gmra.mrb[0].mxu0 %v3467
      %v3658 = vpop.f32.mrb[0].mxu0
      %v3659 = vadd.f32 0.0, %v3658
      %v3660 = vpop.f32.mrb[0].mxu0
      %v3661 = vpop.f32.mrb[0].mxu0
      %v3662 = vadd.f32 0.0, %v3661
      %v3663 = vpop.f32.mrb[0].mxu0
      %3664 = vmatprep.mubr.bf16.mxu0 0
      %3665 = vmatmul.mubr.bf16.gmra.mrb[0].mxu0 %v3468
      %v3666 = vpop.f32.mrb[0].mxu0
      %v3667 = vadd.f32 0.0, %v3666
      %v3668 = vpop.f32.mrb[0].mxu0
      %v3669 = vpop.f32.mrb[0].mxu0
      %v3670 = vadd.f32 0.0, %v3669
      %v3671 = vpop.f32.mrb[0].mxu0
      %3672 = vmatprep.mubr.bf16.mxu0 0
      %3673 = vmatmul.mubr.bf16.gmra.mrb[0].mxu0 %v3469
      %v3674 = vpop.f32.mrb[0].mxu0
      %v3675 = vadd.f32 0.0, %v3674
      %v3676 = vpop.f32.mrb[0].mxu0
      %v3677 = vpop.f32.mrb[0].mxu0
      %v3678 = vadd.f32 0.0, %v3677
      %v3679 = vpop.f32.mrb[0].mxu0
      %3680 = vmatprep.mubr.bf16.mxu0 0
      %3681 = vmatmul.mubr.bf16.gmra.mrb[0].mxu0 %v3470
      %v3682 = vpop.f32.mrb[0].mxu0
      %v3683 = vadd.f32 0.0, %v3682
      %v3684 = vpop.f32.mrb[0].mxu0
      %v3685 = vpop.f32.mrb[0].mxu0
      %v3686 = vadd.f32 0.0, %v3685
      %v3687 = vpop.f32.mrb[0].mxu0
      %3688 = vmatprep.mubr.bf16.mxu0 0
      %3689 = vmatmul.mubr.bf16.gmra.mrb[0].mxu0 %v3471
      %v3690 = vpop.f32.mrb[0].mxu0
      %v3691 = vadd.f32 0.0, %v3690
      %v3692 = vpop.f32.mrb[0].mxu0
      %v3693 = vpop.f32.mrb[0].mxu0
      %v3694 = vadd.f32 0.0, %v3693
      %v3695 = vpop.f32.mrb[0].mxu0
      %3696 = vdwg.mxu0
      %v3697 = vadd.f32 %v3310, %v3571
      %v3698 = vadd.f32 %v3311, %v3574
      %v3699 = vadd.f32 %v3312, %v3579
      %v3700 = vadd.f32 %v3313, %v3582
      %v3701 = vadd.f32 %v3314, %v3587
      %v3702 = vadd.f32 %v3315, %v3590
      %v3703 = vadd.f32 %v3316, %v3595
      %v3704 = vadd.f32 %v3317, %v3598
      %v3705 = vadd.f32 %v3318, %v3603
      %v3706 = vadd.f32 %v3319, %v3606
      %v3707 = vadd.f32 %v3320, %v3611
      %v3708 = vadd.f32 %v3321, %v3614
      %v3709 = vadd.f32 %v3322, %v3619
      %v3710 = vadd.f32 %v3323, %v3622
      %v3711 = vadd.f32 %v3324, %v3627
      %v3712 = vadd.f32 %v3325, %v3630
      %v3713 = vadd.f32 %v3326, %v3635
      %v3714 = vadd.f32 %v3327, %v3638
      %v3715 = vadd.f32 %v3328, %v3643
      %v3716 = vadd.f32 %v3329, %v3646
      %v3717 = vadd.f32 %v3330, %v3651
      %v3718 = vadd.f32 %v3331, %v3654
      %v3719 = vadd.f32 %v3332, %v3659
      %v3720 = vadd.f32 %v3333, %v3662
      %v3721 = vadd.f32 %v3334, %v3667
      %v3722 = vadd.f32 %v3335, %v3670
      %v3723 = vadd.f32 %v3336, %v3675
      %v3724 = vadd.f32 %v3337, %v3678
      %v3725 = vadd.f32 %v3338, %v3683
      %v3726 = vadd.f32 %v3339, %v3686
      %v3727 = vadd.f32 %v3340, %v3691
      %v3728 = vadd.f32 %v3341, %v3694
      %v3729 = vld [vmem:[%s3342] sm:$0xf]
      %v3730 = vld [vmem:[%s3342 + $0x4] sm:$0xf]
      %v3731 = vld [vmem:[%s3342 + $0x8] sm:$0x1]
      %v3732 = vld [vmem:[%s3342 + $0xc] sm:$0xf]
      %v3733 = vld [vmem:[%s3342 + $0x10] sm:$0xf]
      %v3734 = vld [vmem:[%s3342 + $0x14] sm:$0x1]
      %v3735 = vld [vmem:[%s3342 + $0x18] sm:$0xf]
      %v3736 = vld [vmem:[%s3342 + $0x1c] sm:$0xf]
      %v3737 = vld [vmem:[%s3342 + $0x20] sm:$0x1]
      %v3738 = vld [vmem:[%s3342 + $0x24] sm:$0xf]
      %v3739 = vld [vmem:[%s3342 + $0x28] sm:$0xf]
      %v3740 = vld [vmem:[%s3342 + $0x2c] sm:$0x1]
      %v3741 = vld [vmem:[%s3342 + $0x30] sm:$0xf]
      %v3742 = vld [vmem:[%s3342 + $0x34] sm:$0xf]
      %v3743 = vld [vmem:[%s3342 + $0x38] sm:$0x1]
      %v3744 = vld [vmem:[%s3342 + $0x3c] sm:$0xf]
      %v3745 = vld [vmem:[%s3342 + $0x40] sm:$0xf]
      %v3746 = vld [vmem:[%s3342 + $0x44] sm:$0x1]
      %v3747 = vld [vmem:[%s3342 + $0x48] sm:$0xf]
      %v3748 = vld [vmem:[%s3342 + $0x4c] sm:$0xf]
      %v3749 = vld [vmem:[%s3342 + $0x50] sm:$0x1]
      %v3750 = vld [vmem:[%s3342 + $0x54] sm:$0xf]
      %v3751 = vld [vmem:[%s3342 + $0x58] sm:$0xf]
      %v3752 = vld [vmem:[%s3342 + $0x5c] sm:$0x1]
      %v3753 = vld [vmem:[%s3342 + $0x60] sm:$0xf]
      %v3754 = vld [vmem:[%s3342 + $0x64] sm:$0xf]
      %v3755 = vld [vmem:[%s3342 + $0x68] sm:$0x1]
      %v3756 = vld [vmem:[%s3342 + $0x6c] sm:$0xf]
      %v3757 = vld [vmem:[%s3342 + $0x70] sm:$0xf]
      %v3758 = vld [vmem:[%s3342 + $0x74] sm:$0x1]
      %v3759 = vld [vmem:[%s3342 + $0x78] sm:$0xf]
      %v3760 = vld [vmem:[%s3342 + $0x7c] sm:$0xf]
      %v3761 = vld [vmem:[%s3342 + $0x80] sm:$0x1]
      %v3762 = vld [vmem:[%s3342 + $0x84] sm:$0xf]
      %v3763 = vld [vmem:[%s3342 + $0x88] sm:$0xf]
      %v3764 = vld [vmem:[%s3342 + $0x8c] sm:$0x1]
      %v3765 = vld [vmem:[%s3342 + $0x90] sm:$0xf]
      %v3766 = vld [vmem:[%s3342 + $0x94] sm:$0xf]
      %v3767 = vld [vmem:[%s3342 + $0x98] sm:$0x1]
      %v3768 = vld [vmem:[%s3342 + $0x9c] sm:$0xf]
      %v3769 = vld [vmem:[%s3342 + $0xa0] sm:$0xf]
      %v3770 = vld [vmem:[%s3342 + $0xa4] sm:$0x1]
      %v3771 = vld [vmem:[%s3342 + $0xa8] sm:$0xf]
      %v3772 = vld [vmem:[%s3342 + $0xac] sm:$0xf]
      %v3773 = vld [vmem:[%s3342 + $0xb0] sm:$0x1]
      %v3774 = vld [vmem:[%s3342 + $0xb4] sm:$0xf]
      %v3775 = vld [vmem:[%s3342 + $0xb8] sm:$0xf]
      %v3776 = vld [vmem:[%s3342 + $0xbc] sm:$0x1]
      %v3778 = vshrl.u32 %v3729, 16
      %v3780 = vrot.slane %v3778, 4
      %v3781 = vshll.u32 %v3729, 16
      %v3783 = vrot.slane %v3781, 5
      %v3784 = vor.u32 %v3780, %v3783
      %v3785 = vrot.slane %v3784, 4
      %v3787 = vshll.u32 %v3730, 16
      %v3789 = vrot.slane %v3787, 5
      %v3790 = vsel %vm238, %v3785, %v3789
      %v3791 = vshrl.u32 %v3730, 16
      %v3793 = vrot.slane %v3791, 4
      %v3794 = vor.u32 %v3793, %v3789
      %v3795 = vrot.slane %v3794, 4
      %v3797 = vshll.u32 %v3731, 16
      %v3799 = vrot.slane %v3797, 5
      %v3800 = vsel %vm238, %v3795, %v3799
      %v3802 = vshrl.u32 %v3732, 16
      %v3804 = vrot.slane %v3802, 4
      %v3805 = vshll.u32 %v3732, 16
      %v3807 = vrot.slane %v3805, 5
      %v3808 = vor.u32 %v3804, %v3807
      %v3809 = vrot.slane %v3808, 4
      %v3811 = vshll.u32 %v3733, 16
      %v3813 = vrot.slane %v3811, 5
      %v3814 = vsel %vm238, %v3809, %v3813
      %v3815 = vshrl.u32 %v3733, 16
      %v3817 = vrot.slane %v3815, 4
      %v3818 = vor.u32 %v3817, %v3813
      %v3819 = vrot.slane %v3818, 4
      %v3821 = vshll.u32 %v3734, 16
      %v3823 = vrot.slane %v3821, 5
      %v3824 = vsel %vm238, %v3819, %v3823
      %v3826 = vshrl.u32 %v3735, 16
      %v3828 = vrot.slane %v3826, 4
      %v3829 = vshll.u32 %v3735, 16
      %v3831 = vrot.slane %v3829, 5
      %v3832 = vor.u32 %v3828, %v3831
      %v3833 = vrot.slane %v3832, 4
      %v3835 = vshll.u32 %v3736, 16
      %v3837 = vrot.slane %v3835, 5
      %v3838 = vsel %vm238, %v3833, %v3837
      %v3839 = vshrl.u32 %v3736, 16
      %v3841 = vrot.slane %v3839, 4
      %v3842 = vor.u32 %v3841, %v3837
      %v3843 = vrot.slane %v3842, 4
      %v3845 = vshll.u32 %v3737, 16
      %v3847 = vrot.slane %v3845, 5
      %v3848 = vsel %vm238, %v3843, %v3847
      %v3850 = vshrl.u32 %v3738, 16
      %v3852 = vrot.slane %v3850, 4
      %v3853 = vshll.u32 %v3738, 16
      %v3855 = vrot.slane %v3853, 5
      %v3856 = vor.u32 %v3852, %v3855
      %v3857 = vrot.slane %v3856, 4
      %v3859 = vshll.u32 %v3739, 16
      %v3861 = vrot.slane %v3859, 5
      %v3862 = vsel %vm238, %v3857, %v3861
      %v3863 = vshrl.u32 %v3739, 16
      %v3865 = vrot.slane %v3863, 4
      %v3866 = vor.u32 %v3865, %v3861
      %v3867 = vrot.slane %v3866, 4
      %v3869 = vshll.u32 %v3740, 16
      %v3871 = vrot.slane %v3869, 5
      %v3872 = vsel %vm238, %v3867, %v3871
      %v3874 = vshrl.u32 %v3741, 16
      %v3876 = vrot.slane %v3874, 4
      %v3877 = vshll.u32 %v3741, 16
      %v3879 = vrot.slane %v3877, 5
      %v3880 = vor.u32 %v3876, %v3879
      %v3881 = vrot.slane %v3880, 4
      %v3883 = vshll.u32 %v3742, 16
      %v3885 = vrot.slane %v3883, 5
      %v3886 = vsel %vm238, %v3881, %v3885
      %v3887 = vshrl.u32 %v3742, 16
      %v3889 = vrot.slane %v3887, 4
      %v3890 = vor.u32 %v3889, %v3885
      %v3891 = vrot.slane %v3890, 4
      %v3893 = vshll.u32 %v3743, 16
      %v3895 = vrot.slane %v3893, 5
      %v3896 = vsel %vm238, %v3891, %v3895
      %v3898 = vshrl.u32 %v3744, 16
      %v3900 = vrot.slane %v3898, 4
      %v3901 = vshll.u32 %v3744, 16
      %v3903 = vrot.slane %v3901, 5
      %v3904 = vor.u32 %v3900, %v3903
      %v3905 = vrot.slane %v3904, 4
      %v3907 = vshll.u32 %v3745, 16
      %v3909 = vrot.slane %v3907, 5
      %v3910 = vsel %vm238, %v3905, %v3909
      %v3911 = vshrl.u32 %v3745, 16
      %v3913 = vrot.slane %v3911, 4
      %v3914 = vor.u32 %v3913, %v3909
      %v3915 = vrot.slane %v3914, 4
      %v3917 = vshll.u32 %v3746, 16
      %v3919 = vrot.slane %v3917, 5
      %v3920 = vsel %vm238, %v3915, %v3919
      %v3922 = vshrl.u32 %v3747, 16
      %v3924 = vrot.slane %v3922, 4
      %v3925 = vshll.u32 %v3747, 16
      %v3927 = vrot.slane %v3925, 5
      %v3928 = vor.u32 %v3924, %v3927
      %v3929 = vrot.slane %v3928, 4
      %v3931 = vshll.u32 %v3748, 16
      %v3933 = vrot.slane %v3931, 5
      %v3934 = vsel %vm238, %v3929, %v3933
      %v3935 = vshrl.u32 %v3748, 16
      %v3937 = vrot.slane %v3935, 4
      %v3938 = vor.u32 %v3937, %v3933
      %v3939 = vrot.slane %v3938, 4
      %v3941 = vshll.u32 %v3749, 16
      %v3943 = vrot.slane %v3941, 5
      %v3944 = vsel %vm238, %v3939, %v3943
      %v3946 = vshrl.u32 %v3750, 16
      %v3948 = vrot.slane %v3946, 4
      %v3949 = vshll.u32 %v3750, 16
      %v3951 = vrot.slane %v3949, 5
      %v3952 = vor.u32 %v3948, %v3951
      %v3953 = vrot.slane %v3952, 4
      %v3955 = vshll.u32 %v3751, 16
      %v3957 = vrot.slane %v3955, 5
      %v3958 = vsel %vm238, %v3953, %v3957
      %v3959 = vshrl.u32 %v3751, 16
      %v3961 = vrot.slane %v3959, 4
      %v3962 = vor.u32 %v3961, %v3957
      %v3963 = vrot.slane %v3962, 4
      %v3965 = vshll.u32 %v3752, 16
      %v3967 = vrot.slane %v3965, 5
      %v3968 = vsel %vm238, %v3963, %v3967
      %v3970 = vshrl.u32 %v3753, 16
      %v3972 = vrot.slane %v3970, 4
      %v3973 = vshll.u32 %v3753, 16
      %v3975 = vrot.slane %v3973, 5
      %v3976 = vor.u32 %v3972, %v3975
      %v3977 = vrot.slane %v3976, 4
      %v3979 = vshll.u32 %v3754, 16
      %v3981 = vrot.slane %v3979, 5
      %v3982 = vsel %vm238, %v3977, %v3981
      %v3983 = vshrl.u32 %v3754, 16
      %v3985 = vrot.slane %v3983, 4
      %v3986 = vor.u32 %v3985, %v3981
      %v3987 = vrot.slane %v3986, 4
      %v3989 = vshll.u32 %v3755, 16
      %v3991 = vrot.slane %v3989, 5
      %v3992 = vsel %vm238, %v3987, %v3991
      %v3994 = vshrl.u32 %v3756, 16
      %v3996 = vrot.slane %v3994, 4
      %v3997 = vshll.u32 %v3756, 16
      %v3999 = vrot.slane %v3997, 5
      %v4000 = vor.u32 %v3996, %v3999
      %v4001 = vrot.slane %v4000, 4
      %v4003 = vshll.u32 %v3757, 16
      %v4005 = vrot.slane %v4003, 5
      %v4006 = vsel %vm238, %v4001, %v4005
      %v4007 = vshrl.u32 %v3757, 16
      %v4009 = vrot.slane %v4007, 4
      %v4010 = vor.u32 %v4009, %v4005
      %v4011 = vrot.slane %v4010, 4
      %v4013 = vshll.u32 %v3758, 16
      %v4015 = vrot.slane %v4013, 5
      %v4016 = vsel %vm238, %v4011, %v4015
      %v4018 = vshrl.u32 %v3759, 16
      %v4020 = vrot.slane %v4018, 4
      %v4021 = vshll.u32 %v3759, 16
      %v4023 = vrot.slane %v4021, 5
      %v4024 = vor.u32 %v4020, %v4023
      %v4025 = vrot.slane %v4024, 4
      %v4027 = vshll.u32 %v3760, 16
      %v4029 = vrot.slane %v4027, 5
      %v4030 = vsel %vm238, %v4025, %v4029
      %v4031 = vshrl.u32 %v3760, 16
      %v4033 = vrot.slane %v4031, 4
      %v4034 = vor.u32 %v4033, %v4029
      %v4035 = vrot.slane %v4034, 4
      %v4037 = vshll.u32 %v3761, 16
      %v4039 = vrot.slane %v4037, 5
      %v4040 = vsel %vm238, %v4035, %v4039
      %v4042 = vshrl.u32 %v3762, 16
      %v4044 = vrot.slane %v4042, 4
      %v4045 = vshll.u32 %v3762, 16
      %v4047 = vrot.slane %v4045, 5
      %v4048 = vor.u32 %v4044, %v4047
      %v4049 = vrot.slane %v4048, 4
      %v4051 = vshll.u32 %v3763, 16
      %v4053 = vrot.slane %v4051, 5
      %v4054 = vsel %vm238, %v4049, %v4053
      %v4055 = vshrl.u32 %v3763, 16
      %v4057 = vrot.slane %v4055, 4
      %v4058 = vor.u32 %v4057, %v4053
      %v4059 = vrot.slane %v4058, 4
      %v4061 = vshll.u32 %v3764, 16
      %v4063 = vrot.slane %v4061, 5
      %v4064 = vsel %vm238, %v4059, %v4063
      %v4066 = vshrl.u32 %v3765, 16
      %v4068 = vrot.slane %v4066, 4
      %v4069 = vshll.u32 %v3765, 16
      %v4071 = vrot.slane %v4069, 5
      %v4072 = vor.u32 %v4068, %v4071
      %v4073 = vrot.slane %v4072, 4
      %v4075 = vshll.u32 %v3766, 16
      %v4077 = vrot.slane %v4075, 5
      %v4078 = vsel %vm238, %v4073, %v4077
      %v4079 = vshrl.u32 %v3766, 16
      %v4081 = vrot.slane %v4079, 4
      %v4082 = vor.u32 %v4081, %v4077
      %v4083 = vrot.slane %v4082, 4
      %v4085 = vshll.u32 %v3767, 16
      %v4087 = vrot.slane %v4085, 5
      %v4088 = vsel %vm238, %v4083, %v4087
      %v4090 = vshrl.u32 %v3768, 16
      %v4092 = vrot.slane %v4090, 4
      %v4093 = vshll.u32 %v3768, 16
      %v4095 = vrot.slane %v4093, 5
      %v4096 = vor.u32 %v4092, %v4095
      %v4097 = vrot.slane %v4096, 4
      %v4099 = vshll.u32 %v3769, 16
      %v4101 = vrot.slane %v4099, 5
      %v4102 = vsel %vm238, %v4097, %v4101
      %v4103 = vshrl.u32 %v3769, 16
      %v4105 = vrot.slane %v4103, 4
      %v4106 = vor.u32 %v4105, %v4101
      %v4107 = vrot.slane %v4106, 4
      %v4109 = vshll.u32 %v3770, 16
      %v4111 = vrot.slane %v4109, 5
      %v4112 = vsel %vm238, %v4107, %v4111
      %v4114 = vshrl.u32 %v3771, 16
      %v4116 = vrot.slane %v4114, 4
      %v4117 = vshll.u32 %v3771, 16
      %v4119 = vrot.slane %v4117, 5
      %v4120 = vor.u32 %v4116, %v4119
      %v4121 = vrot.slane %v4120, 4
      %v4123 = vshll.u32 %v3772, 16
      %v4125 = vrot.slane %v4123, 5
      %v4126 = vsel %vm238, %v4121, %v4125
      %v4127 = vshrl.u32 %v3772, 16
      %v4129 = vrot.slane %v4127, 4
      %v4130 = vor.u32 %v4129, %v4125
      %v4131 = vrot.slane %v4130, 4
      %v4133 = vshll.u32 %v3773, 16
      %v4135 = vrot.slane %v4133, 5
      %v4136 = vsel %vm238, %v4131, %v4135
      %v4138 = vshrl.u32 %v3774, 16
      %v4140 = vrot.slane %v4138, 4
      %v4141 = vshll.u32 %v3774, 16
      %v4143 = vrot.slane %v4141, 5
      %v4144 = vor.u32 %v4140, %v4143
      %v4145 = vrot.slane %v4144, 4
      %v4147 = vshll.u32 %v3775, 16
      %v4149 = vrot.slane %v4147, 5
      %v4150 = vsel %vm238, %v4145, %v4149
      %v4151 = vshrl.u32 %v3775, 16
      %v4153 = vrot.slane %v4151, 4
      %v4154 = vor.u32 %v4153, %v4149
      %v4155 = vrot.slane %v4154, 4
      %v4157 = vshll.u32 %v3776, 16
      %v4159 = vrot.slane %v4157, 5
      %v4160 = vsel %vm238, %v4155, %v4159
      %s4161 = scalar_lea.vmem %s1, 448
      %v4162 = vld [vmem:[%s4161] sm:$0xf]
      %v4163 = vld [vmem:[%s4161 + $0x4] sm:$0xf]
      %v4164 = vld [vmem:[%s4161 + $0x8] sm:$0xf]
      %v4165 = vld [vmem:[%s4161 + $0xc] sm:$0xf]
      %v4166 = vld [vmem:[%s4161 + $0x10] sm:$0xf]
      %v4167 = vld [vmem:[%s4161 + $0x14] sm:$0xf]
      %v4168 = vld [vmem:[%s4161 + $0x18] sm:$0xf]
      %v4169 = vld [vmem:[%s4161 + $0x1c] sm:$0xf]
      %v4170 = vld [vmem:[%s4161 + $0x20] sm:$0xf]
      %v4171 = vld [vmem:[%s4161 + $0x24] sm:$0xf]
      %v4172 = vld [vmem:[%s4161 + $0x28] sm:$0xf]
      %v4173 = vld [vmem:[%s4161 + $0x2c] sm:$0xf]
      %v4174 = vld [vmem:[%s4161 + $0x30] sm:$0xf]
      %v4175 = vld [vmem:[%s4161 + $0x34] sm:$0xf]
      %v4176 = vld [vmem:[%s4161 + $0x38] sm:$0xf]
      %v4177 = vld [vmem:[%s4161 + $0x3c] sm:$0xf]
      %v4178 = vunpack.c.l.b16 %v3790
      %v4179 = vunpack.c.l.b16 %v3800
      %v4180 = vunpack.c.l.b16 %v3814
      %v4181 = vunpack.c.l.b16 %v3824
      %v4182 = vunpack.c.l.b16 %v3838
      %v4183 = vunpack.c.l.b16 %v3848
      %v4184 = vunpack.c.l.b16 %v3862
      %v4185 = vunpack.c.l.b16 %v3872
      %v4186 = vunpack.c.l.b16 %v3886
      %v4187 = vunpack.c.l.b16 %v3896
      %v4188 = vunpack.c.l.b16 %v3910
      %v4189 = vunpack.c.l.b16 %v3920
      %v4190 = vunpack.c.l.b16 %v3934
      %v4191 = vunpack.c.l.b16 %v3944
      %v4192 = vunpack.c.l.b16 %v3958
      %v4193 = vunpack.c.l.b16 %v3968
      %v4194 = vunpack.c.l.b16 %v3982
      %v4195 = vunpack.c.l.b16 %v3992
      %v4196 = vunpack.c.l.b16 %v4006
      %v4197 = vunpack.c.l.b16 %v4016
      %v4198 = vunpack.c.l.b16 %v4030
      %v4199 = vunpack.c.l.b16 %v4040
      %v4200 = vunpack.c.l.b16 %v4054
      %v4201 = vunpack.c.l.b16 %v4064
      %v4202 = vunpack.c.l.b16 %v4078
      %v4203 = vunpack.c.l.b16 %v4088
      %v4204 = vunpack.c.l.b16 %v4102
      %v4205 = vunpack.c.l.b16 %v4112
      %v4206 = vunpack.c.l.b16 %v4126
      %v4207 = vunpack.c.l.b16 %v4136
      %v4208 = vunpack.c.l.b16 %v4150
      %v4209 = vunpack.c.l.b16 %v4160
      %v4210 = vpack.c.b16 %v4179, %v4178
      %v4211 = vpack.c.b16 %v4181, %v4180
      %v4212 = vpack.c.b16 %v4183, %v4182
      %v4213 = vpack.c.b16 %v4185, %v4184
      %v4214 = vpack.c.b16 %v4187, %v4186
      %v4215 = vpack.c.b16 %v4189, %v4188
      %v4216 = vpack.c.b16 %v4191, %v4190
      %v4217 = vpack.c.b16 %v4193, %v4192
      %v4218 = vpack.c.b16 %v4195, %v4194
      %v4219 = vpack.c.b16 %v4197, %v4196
      %v4220 = vpack.c.b16 %v4199, %v4198
      %v4221 = vpack.c.b16 %v4201, %v4200
      %v4222 = vpack.c.b16 %v4203, %v4202
      %v4223 = vpack.c.b16 %v4205, %v4204
      %v4224 = vpack.c.b16 %v4207, %v4206
      %v4225 = vpack.c.b16 %v4209, %v4208
      %v4258 = vunpack.c.l.b16 %v4162
      %v4259 = vunpack.c.l.b16 %v4163
      %v4260 = vunpack.c.l.b16 %v4164
      %v4261 = vunpack.c.l.b16 %v4165
      %v4262 = vunpack.c.l.b16 %v4166
      %v4263 = vunpack.c.l.b16 %v4167
      %v4264 = vunpack.c.l.b16 %v4168
      %v4265 = vunpack.c.l.b16 %v4169
      %v4266 = vunpack.c.l.b16 %v4170
      %v4267 = vunpack.c.l.b16 %v4171
      %v4268 = vunpack.c.l.b16 %v4172
      %v4269 = vunpack.c.l.b16 %v4173
      %v4270 = vunpack.c.l.b16 %v4174
      %v4271 = vunpack.c.l.b16 %v4175
      %v4272 = vunpack.c.l.b16 %v4176
      %v4273 = vunpack.c.l.b16 %v4177
      %v4274 = vpack.c.b16 %v4259, %v4258
      %v4275 = vpack.c.b16 %v4261, %v4260
      %v4276 = vpack.c.b16 %v4263, %v4262
      %v4277 = vpack.c.b16 %v4265, %v4264
      %v4278 = vpack.c.b16 %v4267, %v4266
      %v4279 = vpack.c.b16 %v4269, %v4268
      %v4280 = vpack.c.b16 %v4271, %v4270
      %v4281 = vpack.c.b16 %v4273, %v4272
      %4290 = vmatprep.subr.bf16.mxu0 0
      %4291 = vmatpush1.bf16.msra.mxu0 %v4274
      %4292 = vmatprep.subr.bf16.mxu0 0
      %4293 = vmatpush1.bf16.msra.mxu0 %v4275
      %4294 = vmatprep.subr.bf16.mxu0 0
      %4295 = vmatpush1.bf16.msra.mxu0 %v4276
      %4296 = vmatprep.subr.bf16.mxu0 0
      %4297 = vmatpush1.bf16.msra.mxu0 %v4277
      %4298 = vmatprep.subr.bf16.mxu0 0
      %4299 = vmatpush1.bf16.msra.mxu0 %v4278
      %4300 = vmatprep.subr.bf16.mxu0 0
      %4301 = vmatpush1.bf16.msra.mxu0 %v4279
      %4302 = vmatprep.subr.bf16.mxu0 0
      %4303 = vmatpush1.bf16.msra.mxu0 %v4280
      %4304 = vmatprep.subr.bf16.mxu0 0
      %4305 = vmatpush1.bf16.msra.mxu0 %v4281
      %4306 = vmatprep.subr.bf16.mxu0 0
      %4307 = vmatpush1.bf16.msra.mxu0 0
      %4308 = vmatprep.subr.bf16.mxu0 0
      %4309 = vmatpush1.bf16.msra.mxu0 0
      %4310 = vmatprep.subr.bf16.mxu0 0
      %4311 = vmatpush1.bf16.msra.mxu0 0
      %4312 = vmatprep.subr.bf16.mxu0 0
      %4313 = vmatpush1.bf16.msra.mxu0 0
      %4314 = vmatprep.subr.bf16.mxu0 0
      %4315 = vmatpush1.bf16.msra.mxu0 0
      %4316 = vmatprep.subr.bf16.mxu0 0
      %4317 = vmatpush1.bf16.msra.mxu0 0
      %4318 = vmatprep.subr.bf16.mxu0 0
      %4319 = vmatpush1.bf16.msra.mxu0 0
      %4320 = vmatprep.subr.bf16.mxu0 0
      %4321 = vmatpush1.bf16.msra.mxu0 0
      %4322 = vmatprep.mubr.bf16.mxu0 0
      %4323 = vmatmul.mubr.bf16.gmra.mrb[0].mxu0 %v4210
      %v4324 = vpop.f32.mrb[0].mxu0
      %v4325 = vadd.f32 0.0, %v4324
      %v4326 = vpop.f32.mrb[0].mxu0
      %v4327 = vpop.f32.mrb[0].mxu0
      %v4328 = vadd.f32 0.0, %v4327
      %v4329 = vpop.f32.mrb[0].mxu0
      %4330 = vmatprep.mubr.bf16.mxu0 0
      %4331 = vmatmul.mubr.bf16.gmra.mrb[0].mxu0 %v4211
      %v4332 = vpop.f32.mrb[0].mxu0
      %v4333 = vadd.f32 0.0, %v4332
      %v4334 = vpop.f32.mrb[0].mxu0
      %v4335 = vpop.f32.mrb[0].mxu0
      %v4336 = vadd.f32 0.0, %v4335
      %v4337 = vpop.f32.mrb[0].mxu0
      %4338 = vmatprep.mubr.bf16.mxu0 0
      %4339 = vmatmul.mubr.bf16.gmra.mrb[0].mxu0 %v4212
      %v4340 = vpop.f32.mrb[0].mxu0
      %v4341 = vadd.f32 0.0, %v4340
      %v4342 = vpop.f32.mrb[0].mxu0
      %v4343 = vpop.f32.mrb[0].mxu0
      %v4344 = vadd.f32 0.0, %v4343
      %v4345 = vpop.f32.mrb[0].mxu0
      %4346 = vmatprep.mubr.bf16.mxu0 0
      %4347 = vmatmul.mubr.bf16.gmra.mrb[0].mxu0 %v4213
      %v4348 = vpop.f32.mrb[0].mxu0
      %v4349 = vadd.f32 0.0, %v4348
      %v4350 = vpop.f32.mrb[0].mxu0
      %v4351 = vpop.f32.mrb[0].mxu0
      %v4352 = vadd.f32 0.0, %v4351
      %v4353 = vpop.f32.mrb[0].mxu0
      %4354 = vmatprep.mubr.bf16.mxu0 0
      %4355 = vmatmul.mubr.bf16.gmra.mrb[0].mxu0 %v4214
      %v4356 = vpop.f32.mrb[0].mxu0
      %v4357 = vadd.f32 0.0, %v4356
      %v4358 = vpop.f32.mrb[0].mxu0
      %v4359 = vpop.f32.mrb[0].mxu0
      %v4360 = vadd.f32 0.0, %v4359
      %v4361 = vpop.f32.mrb[0].mxu0
      %4362 = vmatprep.mubr.bf16.mxu0 0
      %4363 = vmatmul.mubr.bf16.gmra.mrb[0].mxu0 %v4215
      %v4364 = vpop.f32.mrb[0].mxu0
      %v4365 = vadd.f32 0.0, %v4364
      %v4366 = vpop.f32.mrb[0].mxu0
      %v4367 = vpop.f32.mrb[0].mxu0
      %v4368 = vadd.f32 0.0, %v4367
      %v4369 = vpop.f32.mrb[0].mxu0
      %4370 = vmatprep.mubr.bf16.mxu0 0
      %4371 = vmatmul.mubr.bf16.gmra.mrb[0].mxu0 %v4216
      %v4372 = vpop.f32.mrb[0].mxu0
      %v4373 = vadd.f32 0.0, %v4372
      %v4374 = vpop.f32.mrb[0].mxu0
      %v4375 = vpop.f32.mrb[0].mxu0
      %v4376 = vadd.f32 0.0, %v4375
      %v4377 = vpop.f32.mrb[0].mxu0
      %4378 = vmatprep.mubr.bf16.mxu0 0
      %4379 = vmatmul.mubr.bf16.gmra.mrb[0].mxu0 %v4217
      %v4380 = vpop.f32.mrb[0].mxu0
      %v4381 = vadd.f32 0.0, %v4380
      %v4382 = vpop.f32.mrb[0].mxu0
      %v4383 = vpop.f32.mrb[0].mxu0
      %v4384 = vadd.f32 0.0, %v4383
      %v4385 = vpop.f32.mrb[0].mxu0
      %4386 = vmatprep.mubr.bf16.mxu0 0
      %4387 = vmatmul.mubr.bf16.gmra.mrb[0].mxu0 %v4218
      %v4388 = vpop.f32.mrb[0].mxu0
      %v4389 = vadd.f32 0.0, %v4388
      %v4390 = vpop.f32.mrb[0].mxu0
      %v4391 = vpop.f32.mrb[0].mxu0
      %v4392 = vadd.f32 0.0, %v4391
      %v4393 = vpop.f32.mrb[0].mxu0
      %4394 = vmatprep.mubr.bf16.mxu0 0
      %4395 = vmatmul.mubr.bf16.gmra.mrb[0].mxu0 %v4219
      %v4396 = vpop.f32.mrb[0].mxu0
      %v4397 = vadd.f32 0.0, %v4396
      %v4398 = vpop.f32.mrb[0].mxu0
      %v4399 = vpop.f32.mrb[0].mxu0
      %v4400 = vadd.f32 0.0, %v4399
      %v4401 = vpop.f32.mrb[0].mxu0
      %4402 = vmatprep.mubr.bf16.mxu0 0
      %4403 = vmatmul.mubr.bf16.gmra.mrb[0].mxu0 %v4220
      %v4404 = vpop.f32.mrb[0].mxu0
      %v4405 = vadd.f32 0.0, %v4404
      %v4406 = vpop.f32.mrb[0].mxu0
      %v4407 = vpop.f32.mrb[0].mxu0
      %v4408 = vadd.f32 0.0, %v4407
      %v4409 = vpop.f32.mrb[0].mxu0
      %4410 = vmatprep.mubr.bf16.mxu0 0
      %4411 = vmatmul.mubr.bf16.gmra.mrb[0].mxu0 %v4221
      %v4412 = vpop.f32.mrb[0].mxu0
      %v4413 = vadd.f32 0.0, %v4412
      %v4414 = vpop.f32.mrb[0].mxu0
      %v4415 = vpop.f32.mrb[0].mxu0
      %v4416 = vadd.f32 0.0, %v4415
      %v4417 = vpop.f32.mrb[0].mxu0
      %4418 = vmatprep.mubr.bf16.mxu0 0
      %4419 = vmatmul.mubr.bf16.gmra.mrb[0].mxu0 %v4222
      %v4420 = vpop.f32.mrb[0].mxu0
      %v4421 = vadd.f32 0.0, %v4420
      %v4422 = vpop.f32.mrb[0].mxu0
      %v4423 = vpop.f32.mrb[0].mxu0
      %v4424 = vadd.f32 0.0, %v4423
      %v4425 = vpop.f32.mrb[0].mxu0
      %4426 = vmatprep.mubr.bf16.mxu0 0
      %4427 = vmatmul.mubr.bf16.gmra.mrb[0].mxu0 %v4223
      %v4428 = vpop.f32.mrb[0].mxu0
      %v4429 = vadd.f32 0.0, %v4428
      %v4430 = vpop.f32.mrb[0].mxu0
      %v4431 = vpop.f32.mrb[0].mxu0
      %v4432 = vadd.f32 0.0, %v4431
      %v4433 = vpop.f32.mrb[0].mxu0
      %4434 = vmatprep.mubr.bf16.mxu0 0
      %4435 = vmatmul.mubr.bf16.gmra.mrb[0].mxu0 %v4224
      %v4436 = vpop.f32.mrb[0].mxu0
      %v4437 = vadd.f32 0.0, %v4436
      %v4438 = vpop.f32.mrb[0].mxu0
      %v4439 = vpop.f32.mrb[0].mxu0
      %v4440 = vadd.f32 0.0, %v4439
      %v4441 = vpop.f32.mrb[0].mxu0
      %4442 = vmatprep.mubr.bf16.mxu0 0
      %4443 = vmatmul.mubr.bf16.gmra.mrb[0].mxu0 %v4225
      %v4444 = vpop.f32.mrb[0].mxu0
      %v4445 = vadd.f32 0.0, %v4444
      %v4446 = vpop.f32.mrb[0].mxu0
      %v4447 = vpop.f32.mrb[0].mxu0
      %v4448 = vadd.f32 0.0, %v4447
      %v4449 = vpop.f32.mrb[0].mxu0
      %4450 = vdwg.mxu0
      %v4451 = vadd.f32 %v3697, %v4325
      %v4452 = vadd.f32 %v3698, %v4328
      %v4453 = vadd.f32 %v3699, %v4333
      %v4454 = vadd.f32 %v3700, %v4336
      %v4455 = vadd.f32 %v3701, %v4341
      %v4456 = vadd.f32 %v3702, %v4344
      %v4457 = vadd.f32 %v3703, %v4349
      %v4458 = vadd.f32 %v3704, %v4352
      %v4459 = vadd.f32 %v3705, %v4357
      %v4460 = vadd.f32 %v3706, %v4360
      %v4461 = vadd.f32 %v3707, %v4365
      %v4462 = vadd.f32 %v3708, %v4368
      %v4463 = vadd.f32 %v3709, %v4373
      %v4464 = vadd.f32 %v3710, %v4376
      %v4465 = vadd.f32 %v3711, %v4381
      %v4466 = vadd.f32 %v3712, %v4384
      %v4467 = vadd.f32 %v3713, %v4389
      %v4468 = vadd.f32 %v3714, %v4392
      %v4469 = vadd.f32 %v3715, %v4397
      %v4470 = vadd.f32 %v3716, %v4400
      %v4471 = vadd.f32 %v3717, %v4405
      %v4472 = vadd.f32 %v3718, %v4408
      %v4473 = vadd.f32 %v3719, %v4413
      %v4474 = vadd.f32 %v3720, %v4416
      %v4475 = vadd.f32 %v3721, %v4421
      %v4476 = vadd.f32 %v3722, %v4424
      %v4477 = vadd.f32 %v3723, %v4429
      %v4478 = vadd.f32 %v3724, %v4432
      %v4479 = vadd.f32 %v3725, %v4437
      %v4480 = vadd.f32 %v3726, %v4440
      %v4481 = vadd.f32 %v3727, %v4445
      %v4482 = vadd.f32 %v3728, %v4448
      %v4483 = vld [vmem:[%s3342] sm:$0xe]
      %v4484 = vld [vmem:[%s3342 + $0xc] sm:$0xe]
      %v4485 = vld [vmem:[%s3342 + $0x18] sm:$0xe]
      %v4486 = vld [vmem:[%s3342 + $0x24] sm:$0xe]
      %v4487 = vld [vmem:[%s3342 + $0x30] sm:$0xe]
      %v4488 = vld [vmem:[%s3342 + $0x3c] sm:$0xe]
      %v4489 = vld [vmem:[%s3342 + $0x48] sm:$0xe]
      %v4490 = vld [vmem:[%s3342 + $0x54] sm:$0xe]
      %v4491 = vld [vmem:[%s3342 + $0x60] sm:$0xe]
      %v4492 = vld [vmem:[%s3342 + $0x6c] sm:$0xe]
      %v4493 = vld [vmem:[%s3342 + $0x78] sm:$0xe]
      %v4494 = vld [vmem:[%s3342 + $0x84] sm:$0xe]
      %v4495 = vld [vmem:[%s3342 + $0x90] sm:$0xe]
      %v4496 = vld [vmem:[%s3342 + $0x9c] sm:$0xe]
      %v4497 = vld [vmem:[%s3342 + $0xa8] sm:$0xe]
      %v4498 = vld [vmem:[%s3342 + $0xb4] sm:$0xe]
      %v4547 = vrot.slane %v4483, 5
      %v4548 = vrot.slane %v4547, 4
      %v4549 = vrot.slane %v3730, 5
      %v4550 = vsel %vm1268, %v4548, %v4549
      %v4551 = vrot.slane %v4549, 4
      %v4552 = vrot.slane %v3731, 5
      %v4553 = vsel %vm1268, %v4551, %v4552
      %v4554 = vrot.slane %v4484, 5
      %v4555 = vrot.slane %v4554, 4
      %v4556 = vrot.slane %v3733, 5
      %v4557 = vsel %vm1268, %v4555, %v4556
      %v4558 = vrot.slane %v4556, 4
      %v4559 = vrot.slane %v3734, 5
      %v4560 = vsel %vm1268, %v4558, %v4559
      %v4561 = vrot.slane %v4485, 5
      %v4562 = vrot.slane %v4561, 4
      %v4563 = vrot.slane %v3736, 5
      %v4564 = vsel %vm1268, %v4562, %v4563
      %v4565 = vrot.slane %v4563, 4
      %v4566 = vrot.slane %v3737, 5
      %v4567 = vsel %vm1268, %v4565, %v4566
      %v4568 = vrot.slane %v4486, 5
      %v4569 = vrot.slane %v4568, 4
      %v4570 = vrot.slane %v3739, 5
      %v4571 = vsel %vm1268, %v4569, %v4570
      %v4572 = vrot.slane %v4570, 4
      %v4573 = vrot.slane %v3740, 5
      %v4574 = vsel %vm1268, %v4572, %v4573
      %v4575 = vrot.slane %v4487, 5
      %v4576 = vrot.slane %v4575, 4
      %v4577 = vrot.slane %v3742, 5
      %v4578 = vsel %vm1268, %v4576, %v4577
      %v4579 = vrot.slane %v4577, 4
      %v4580 = vrot.slane %v3743, 5
      %v4581 = vsel %vm1268, %v4579, %v4580
      %v4582 = vrot.slane %v4488, 5
      %v4583 = vrot.slane %v4582, 4
      %v4584 = vrot.slane %v3745, 5
      %v4585 = vsel %vm1268, %v4583, %v4584
      %v4586 = vrot.slane %v4584, 4
      %v4587 = vrot.slane %v3746, 5
      %v4588 = vsel %vm1268, %v4586, %v4587
      %v4589 = vrot.slane %v4489, 5
      %v4590 = vrot.slane %v4589, 4
      %v4591 = vrot.slane %v3748, 5
      %v4592 = vsel %vm1268, %v4590, %v4591
      %v4593 = vrot.slane %v4591, 4
      %v4594 = vrot.slane %v3749, 5
      %v4595 = vsel %vm1268, %v4593, %v4594
      %v4596 = vrot.slane %v4490, 5
      %v4597 = vrot.slane %v4596, 4
      %v4598 = vrot.slane %v3751, 5
      %v4599 = vsel %vm1268, %v4597, %v4598
      %v4600 = vrot.slane %v4598, 4
      %v4601 = vrot.slane %v3752, 5
      %v4602 = vsel %vm1268, %v4600, %v4601
      %v4603 = vrot.slane %v4491, 5
      %v4604 = vrot.slane %v4603, 4
      %v4605 = vrot.slane %v3754, 5
      %v4606 = vsel %vm1268, %v4604, %v4605
      %v4607 = vrot.slane %v4605, 4
      %v4608 = vrot.slane %v3755, 5
      %v4609 = vsel %vm1268, %v4607, %v4608
      %v4610 = vrot.slane %v4492, 5
      %v4611 = vrot.slane %v4610, 4
      %v4612 = vrot.slane %v3757, 5
      %v4613 = vsel %vm1268, %v4611, %v4612
      %v4614 = vrot.slane %v4612, 4
      %v4615 = vrot.slane %v3758, 5
      %v4616 = vsel %vm1268, %v4614, %v4615
      %v4617 = vrot.slane %v4493, 5
      %v4618 = vrot.slane %v4617, 4
      %v4619 = vrot.slane %v3760, 5
      %v4620 = vsel %vm1268, %v4618, %v4619
      %v4621 = vrot.slane %v4619, 4
      %v4622 = vrot.slane %v3761, 5
      %v4623 = vsel %vm1268, %v4621, %v4622
      %v4624 = vrot.slane %v4494, 5
      %v4625 = vrot.slane %v4624, 4
      %v4626 = vrot.slane %v3763, 5
      %v4627 = vsel %vm1268, %v4625, %v4626
      %v4628 = vrot.slane %v4626, 4
      %v4629 = vrot.slane %v3764, 5
      %v4630 = vsel %vm1268, %v4628, %v4629
      %v4631 = vrot.slane %v4495, 5
      %v4632 = vrot.slane %v4631, 4
      %v4633 = vrot.slane %v3766, 5
      %v4634 = vsel %vm1268, %v4632, %v4633
      %v4635 = vrot.slane %v4633, 4
      %v4636 = vrot.slane %v3767, 5
      %v4637 = vsel %vm1268, %v4635, %v4636
      %v4638 = vrot.slane %v4496, 5
      %v4639 = vrot.slane %v4638, 4
      %v4640 = vrot.slane %v3769, 5
      %v4641 = vsel %vm1268, %v4639, %v4640
      %v4642 = vrot.slane %v4640, 4
      %v4643 = vrot.slane %v3770, 5
      %v4644 = vsel %vm1268, %v4642, %v4643
      %v4645 = vrot.slane %v4497, 5
      %v4646 = vrot.slane %v4645, 4
      %v4647 = vrot.slane %v3772, 5
      %v4648 = vsel %vm1268, %v4646, %v4647
      %v4649 = vrot.slane %v4647, 4
      %v4650 = vrot.slane %v3773, 5
      %v4651 = vsel %vm1268, %v4649, %v4650
      %v4652 = vrot.slane %v4498, 5
      %v4653 = vrot.slane %v4652, 4
      %v4654 = vrot.slane %v3775, 5
      %v4655 = vsel %vm1268, %v4653, %v4654
      %v4656 = vrot.slane %v4654, 4
      %v4657 = vrot.slane %v3776, 5
      %v4658 = vsel %vm1268, %v4656, %v4657
      %s4659 = scalar_lea.vmem %s1, 512
      %v4660 = vld [vmem:[%s4659] sm:$0xf]
      %v4661 = vld [vmem:[%s4659 + $0x4] sm:$0xf]
      %v4662 = vld [vmem:[%s4659 + $0x8] sm:$0xf]
      %v4663 = vld [vmem:[%s4659 + $0xc] sm:$0xf]
      %v4664 = vld [vmem:[%s4659 + $0x10] sm:$0xf]
      %v4665 = vld [vmem:[%s4659 + $0x14] sm:$0xf]
      %v4666 = vld [vmem:[%s4659 + $0x18] sm:$0xf]
      %v4667 = vld [vmem:[%s4659 + $0x1c] sm:$0xf]
      %v4668 = vld [vmem:[%s4659 + $0x20] sm:$0xf]
      %v4669 = vld [vmem:[%s4659 + $0x24] sm:$0xf]
      %v4670 = vld [vmem:[%s4659 + $0x28] sm:$0xf]
      %v4671 = vld [vmem:[%s4659 + $0x2c] sm:$0xf]
      %v4672 = vld [vmem:[%s4659 + $0x30] sm:$0xf]
      %v4673 = vld [vmem:[%s4659 + $0x34] sm:$0xf]
      %v4674 = vld [vmem:[%s4659 + $0x38] sm:$0xf]
      %v4675 = vld [vmem:[%s4659 + $0x3c] sm:$0xf]
      %v4676 = vunpack.c.l.b16 %v4550
      %v4677 = vunpack.c.l.b16 %v4553
      %v4678 = vunpack.c.l.b16 %v4557
      %v4679 = vunpack.c.l.b16 %v4560
      %v4680 = vunpack.c.l.b16 %v4564
      %v4681 = vunpack.c.l.b16 %v4567
      %v4682 = vunpack.c.l.b16 %v4571
      %v4683 = vunpack.c.l.b16 %v4574
      %v4684 = vunpack.c.l.b16 %v4578
      %v4685 = vunpack.c.l.b16 %v4581
      %v4686 = vunpack.c.l.b16 %v4585
      %v4687 = vunpack.c.l.b16 %v4588
      %v4688 = vunpack.c.l.b16 %v4592
      %v4689 = vunpack.c.l.b16 %v4595
      %v4690 = vunpack.c.l.b16 %v4599
      %v4691 = vunpack.c.l.b16 %v4602
      %v4692 = vunpack.c.l.b16 %v4606
      %v4693 = vunpack.c.l.b16 %v4609
      %v4694 = vunpack.c.l.b16 %v4613
      %v4695 = vunpack.c.l.b16 %v4616
      %v4696 = vunpack.c.l.b16 %v4620
      %v4697 = vunpack.c.l.b16 %v4623
      %v4698 = vunpack.c.l.b16 %v4627
      %v4699 = vunpack.c.l.b16 %v4630
      %v4700 = vunpack.c.l.b16 %v4634
      %v4701 = vunpack.c.l.b16 %v4637
      %v4702 = vunpack.c.l.b16 %v4641
      %v4703 = vunpack.c.l.b16 %v4644
      %v4704 = vunpack.c.l.b16 %v4648
      %v4705 = vunpack.c.l.b16 %v4651
      %v4706 = vunpack.c.l.b16 %v4655
      %v4707 = vunpack.c.l.b16 %v4658
      %v4708 = vpack.c.b16 %v4677, %v4676
      %v4709 = vpack.c.b16 %v4679, %v4678
      %v4710 = vpack.c.b16 %v4681, %v4680
      %v4711 = vpack.c.b16 %v4683, %v4682
      %v4712 = vpack.c.b16 %v4685, %v4684
      %v4713 = vpack.c.b16 %v4687, %v4686
      %v4714 = vpack.c.b16 %v4689, %v4688
      %v4715 = vpack.c.b16 %v4691, %v4690
      %v4716 = vpack.c.b16 %v4693, %v4692
      %v4717 = vpack.c.b16 %v4695, %v4694
      %v4718 = vpack.c.b16 %v4697, %v4696
      %v4719 = vpack.c.b16 %v4699, %v4698
      %v4720 = vpack.c.b16 %v4701, %v4700
      %v4721 = vpack.c.b16 %v4703, %v4702
      %v4722 = vpack.c.b16 %v4705, %v4704
      %v4723 = vpack.c.b16 %v4707, %v4706
      %v4756 = vunpack.c.l.b16 %v4660
      %v4757 = vunpack.c.l.b16 %v4661
      %v4758 = vunpack.c.l.b16 %v4662
      %v4759 = vunpack.c.l.b16 %v4663
      %v4760 = vunpack.c.l.b16 %v4664
      %v4761 = vunpack.c.l.b16 %v4665
      %v4762 = vunpack.c.l.b16 %v4666
      %v4763 = vunpack.c.l.b16 %v4667
      %v4764 = vunpack.c.l.b16 %v4668
      %v4765 = vunpack.c.l.b16 %v4669
      %v4766 = vunpack.c.l.b16 %v4670
      %v4767 = vunpack.c.l.b16 %v4671
      %v4768 = vunpack.c.l.b16 %v4672
      %v4769 = vunpack.c.l.b16 %v4673
      %v4770 = vunpack.c.l.b16 %v4674
      %v4771 = vunpack.c.l.b16 %v4675
      %v4772 = vpack.c.b16 %v4757, %v4756
      %v4773 = vpack.c.b16 %v4759, %v4758
      %v4774 = vpack.c.b16 %v4761, %v4760
      %v4775 = vpack.c.b16 %v4763, %v4762
      %v4776 = vpack.c.b16 %v4765, %v4764
      %v4777 = vpack.c.b16 %v4767, %v4766
      %v4778 = vpack.c.b16 %v4769, %v4768
      %v4779 = vpack.c.b16 %v4771, %v4770
      %4788 = vmatprep.subr.bf16.mxu0 0
      %4789 = vmatpush1.bf16.msra.mxu0 %v4772
      %4790 = vmatprep.subr.bf16.mxu0 0
      %4791 = vmatpush1.bf16.msra.mxu0 %v4773
      %4792 = vmatprep.subr.bf16.mxu0 0
      %4793 = vmatpush1.bf16.msra.mxu0 %v4774
      %4794 = vmatprep.subr.bf16.mxu0 0
      %4795 = vmatpush1.bf16.msra.mxu0 %v4775
      %4796 = vmatprep.subr.bf16.mxu0 0
      %4797 = vmatpush1.bf16.msra.mxu0 %v4776
      %4798 = vmatprep.subr.bf16.mxu0 0
      %4799 = vmatpush1.bf16.msra.mxu0 %v4777
      %4800 = vmatprep.subr.bf16.mxu0 0
      %4801 = vmatpush1.bf16.msra.mxu0 %v4778
      %4802 = vmatprep.subr.bf16.mxu0 0
      %4803 = vmatpush1.bf16.msra.mxu0 %v4779
      %4804 = vmatprep.subr.bf16.mxu0 0
      %4805 = vmatpush1.bf16.msra.mxu0 0
      %4806 = vmatprep.subr.bf16.mxu0 0
      %4807 = vmatpush1.bf16.msra.mxu0 0
      %4808 = vmatprep.subr.bf16.mxu0 0
      %4809 = vmatpush1.bf16.msra.mxu0 0
      %4810 = vmatprep.subr.bf16.mxu0 0
      %4811 = vmatpush1.bf16.msra.mxu0 0
      %4812 = vmatprep.subr.bf16.mxu0 0
      %4813 = vmatpush1.bf16.msra.mxu0 0
      %4814 = vmatprep.subr.bf16.mxu0 0
      %4815 = vmatpush1.bf16.msra.mxu0 0
      %4816 = vmatprep.subr.bf16.mxu0 0
      %4817 = vmatpush1.bf16.msra.mxu0 0
      %4818 = vmatprep.subr.bf16.mxu0 0
      %4819 = vmatpush1.bf16.msra.mxu0 0
      %4820 = vmatprep.mubr.bf16.mxu0 0
      %4821 = vmatmul.mubr.bf16.gmra.mrb[0].mxu0 %v4708
      %v4822 = vpop.f32.mrb[0].mxu0
      %v4823 = vadd.f32 0.0, %v4822
      %v4824 = vpop.f32.mrb[0].mxu0
      %v4825 = vpop.f32.mrb[0].mxu0
      %v4826 = vadd.f32 0.0, %v4825
      %v4827 = vpop.f32.mrb[0].mxu0
      %4828 = vmatprep.mubr.bf16.mxu0 0
      %4829 = vmatmul.mubr.bf16.gmra.mrb[0].mxu0 %v4709
      %v4830 = vpop.f32.mrb[0].mxu0
      %v4831 = vadd.f32 0.0, %v4830
      %v4832 = vpop.f32.mrb[0].mxu0
      %v4833 = vpop.f32.mrb[0].mxu0
      %v4834 = vadd.f32 0.0, %v4833
      %v4835 = vpop.f32.mrb[0].mxu0
      %4836 = vmatprep.mubr.bf16.mxu0 0
      %4837 = vmatmul.mubr.bf16.gmra.mrb[0].mxu0 %v4710
      %v4838 = vpop.f32.mrb[0].mxu0
      %v4839 = vadd.f32 0.0, %v4838
      %v4840 = vpop.f32.mrb[0].mxu0
      %v4841 = vpop.f32.mrb[0].mxu0
      %v4842 = vadd.f32 0.0, %v4841
      %v4843 = vpop.f32.mrb[0].mxu0
      %4844 = vmatprep.mubr.bf16.mxu0 0
      %4845 = vmatmul.mubr.bf16.gmra.mrb[0].mxu0 %v4711
      %v4846 = vpop.f32.mrb[0].mxu0
      %v4847 = vadd.f32 0.0, %v4846
      %v4848 = vpop.f32.mrb[0].mxu0
      %v4849 = vpop.f32.mrb[0].mxu0
      %v4850 = vadd.f32 0.0, %v4849
      %v4851 = vpop.f32.mrb[0].mxu0
      %4852 = vmatprep.mubr.bf16.mxu0 0
      %4853 = vmatmul.mubr.bf16.gmra.mrb[0].mxu0 %v4712
      %v4854 = vpop.f32.mrb[0].mxu0
      %v4855 = vadd.f32 0.0, %v4854
      %v4856 = vpop.f32.mrb[0].mxu0
      %v4857 = vpop.f32.mrb[0].mxu0
      %v4858 = vadd.f32 0.0, %v4857
      %v4859 = vpop.f32.mrb[0].mxu0
      %4860 = vmatprep.mubr.bf16.mxu0 0
      %4861 = vmatmul.mubr.bf16.gmra.mrb[0].mxu0 %v4713
      %v4862 = vpop.f32.mrb[0].mxu0
      %v4863 = vadd.f32 0.0, %v4862
      %v4864 = vpop.f32.mrb[0].mxu0
      %v4865 = vpop.f32.mrb[0].mxu0
      %v4866 = vadd.f32 0.0, %v4865
      %v4867 = vpop.f32.mrb[0].mxu0
      %4868 = vmatprep.mubr.bf16.mxu0 0
      %4869 = vmatmul.mubr.bf16.gmra.mrb[0].mxu0 %v4714
      %v4870 = vpop.f32.mrb[0].mxu0
      %v4871 = vadd.f32 0.0, %v4870
      %v4872 = vpop.f32.mrb[0].mxu0
      %v4873 = vpop.f32.mrb[0].mxu0
      %v4874 = vadd.f32 0.0, %v4873
      %v4875 = vpop.f32.mrb[0].mxu0
      %4876 = vmatprep.mubr.bf16.mxu0 0
      %4877 = vmatmul.mubr.bf16.gmra.mrb[0].mxu0 %v4715
      %v4878 = vpop.f32.mrb[0].mxu0
      %v4879 = vadd.f32 0.0, %v4878
      %v4880 = vpop.f32.mrb[0].mxu0
      %v4881 = vpop.f32.mrb[0].mxu0
      %v4882 = vadd.f32 0.0, %v4881
      %v4883 = vpop.f32.mrb[0].mxu0
      %4884 = vmatprep.mubr.bf16.mxu0 0
      %4885 = vmatmul.mubr.bf16.gmra.mrb[0].mxu0 %v4716
      %v4886 = vpop.f32.mrb[0].mxu0
      %v4887 = vadd.f32 0.0, %v4886
      %v4888 = vpop.f32.mrb[0].mxu0
      %v4889 = vpop.f32.mrb[0].mxu0
      %v4890 = vadd.f32 0.0, %v4889
      %v4891 = vpop.f32.mrb[0].mxu0
      %4892 = vmatprep.mubr.bf16.mxu0 0
      %4893 = vmatmul.mubr.bf16.gmra.mrb[0].mxu0 %v4717
      %v4894 = vpop.f32.mrb[0].mxu0
      %v4895 = vadd.f32 0.0, %v4894
      %v4896 = vpop.f32.mrb[0].mxu0
      %v4897 = vpop.f32.mrb[0].mxu0
      %v4898 = vadd.f32 0.0, %v4897
      %v4899 = vpop.f32.mrb[0].mxu0
      %4900 = vmatprep.mubr.bf16.mxu0 0
      %4901 = vmatmul.mubr.bf16.gmra.mrb[0].mxu0 %v4718
      %v4902 = vpop.f32.mrb[0].mxu0
      %v4903 = vadd.f32 0.0, %v4902
      %v4904 = vpop.f32.mrb[0].mxu0
      %v4905 = vpop.f32.mrb[0].mxu0
      %v4906 = vadd.f32 0.0, %v4905
      %v4907 = vpop.f32.mrb[0].mxu0
      %4908 = vmatprep.mubr.bf16.mxu0 0
      %4909 = vmatmul.mubr.bf16.gmra.mrb[0].mxu0 %v4719
      %v4910 = vpop.f32.mrb[0].mxu0
      %v4911 = vadd.f32 0.0, %v4910
      %v4912 = vpop.f32.mrb[0].mxu0
      %v4913 = vpop.f32.mrb[0].mxu0
      %v4914 = vadd.f32 0.0, %v4913
      %v4915 = vpop.f32.mrb[0].mxu0
      %4916 = vmatprep.mubr.bf16.mxu0 0
      %4917 = vmatmul.mubr.bf16.gmra.mrb[0].mxu0 %v4720
      %v4918 = vpop.f32.mrb[0].mxu0
      %v4919 = vadd.f32 0.0, %v4918
      %v4920 = vpop.f32.mrb[0].mxu0
      %v4921 = vpop.f32.mrb[0].mxu0
      %v4922 = vadd.f32 0.0, %v4921
      %v4923 = vpop.f32.mrb[0].mxu0
      %4924 = vmatprep.mubr.bf16.mxu0 0
      %4925 = vmatmul.mubr.bf16.gmra.mrb[0].mxu0 %v4721
      %v4926 = vpop.f32.mrb[0].mxu0
      %v4927 = vadd.f32 0.0, %v4926
      %v4928 = vpop.f32.mrb[0].mxu0
      %v4929 = vpop.f32.mrb[0].mxu0
      %v4930 = vadd.f32 0.0, %v4929
      %v4931 = vpop.f32.mrb[0].mxu0
      %4932 = vmatprep.mubr.bf16.mxu0 0
      %4933 = vmatmul.mubr.bf16.gmra.mrb[0].mxu0 %v4722
      %v4934 = vpop.f32.mrb[0].mxu0
      %v4935 = vadd.f32 0.0, %v4934
      %v4936 = vpop.f32.mrb[0].mxu0
      %v4937 = vpop.f32.mrb[0].mxu0
      %v4938 = vadd.f32 0.0, %v4937
      %v4939 = vpop.f32.mrb[0].mxu0
      %4940 = vmatprep.mubr.bf16.mxu0 0
      %4941 = vmatmul.mubr.bf16.gmra.mrb[0].mxu0 %v4723
      %v4942 = vpop.f32.mrb[0].mxu0
      %v4943 = vadd.f32 0.0, %v4942
      %v4944 = vpop.f32.mrb[0].mxu0
      %v4945 = vpop.f32.mrb[0].mxu0
      %v4946 = vadd.f32 0.0, %v4945
      %v4947 = vpop.f32.mrb[0].mxu0
      %4948 = vdwg.mxu0
      %v4949 = vadd.f32 %v4451, %v4823
      %v4950 = vadd.f32 %v4452, %v4826
      %v4951 = vadd.f32 %v4453, %v4831
      %v4952 = vadd.f32 %v4454, %v4834
      %v4953 = vadd.f32 %v4455, %v4839
      %v4954 = vadd.f32 %v4456, %v4842
      %v4955 = vadd.f32 %v4457, %v4847
      %v4956 = vadd.f32 %v4458, %v4850
      %v4957 = vadd.f32 %v4459, %v4855
      %v4958 = vadd.f32 %v4460, %v4858
      %v4959 = vadd.f32 %v4461, %v4863
      %v4960 = vadd.f32 %v4462, %v4866
      %v4961 = vadd.f32 %v4463, %v4871
      %v4962 = vadd.f32 %v4464, %v4874
      %v4963 = vadd.f32 %v4465, %v4879
      %v4964 = vadd.f32 %v4466, %v4882
      %v4965 = vadd.f32 %v4467, %v4887
      %v4966 = vadd.f32 %v4468, %v4890
      %v4967 = vadd.f32 %v4469, %v4895
      %v4968 = vadd.f32 %v4470, %v4898
      %v4969 = vadd.f32 %v4471, %v4903
      %v4970 = vadd.f32 %v4472, %v4906
      %v4971 = vadd.f32 %v4473, %v4911
      %v4972 = vadd.f32 %v4474, %v4914
      %v4973 = vadd.f32 %v4475, %v4919
      %v4974 = vadd.f32 %v4476, %v4922
      %v4975 = vadd.f32 %v4477, %v4927
      %v4976 = vadd.f32 %v4478, %v4930
      %v4977 = vadd.f32 %v4479, %v4935
      %v4978 = vadd.f32 %v4480, %v4938
      %v4979 = vadd.f32 %v4481, %v4943
      %v4980 = vadd.f32 %v4482, %v4946
      %v4981 = vld [vmem:[%s2] sm:$0x1]
      %v4983 = vlaneseq
      %v4984 = vshrl.u32 %v4983, 7
      %v4985 = vsub.s32 0, %v4984
      %v4986 = vrot.slane %v4981, %v4985
      %v4988 = vadd.f32 %v4949, %v4986
      %v4989 = vadd.f32 %v4950, %v4986
      %v4990 = vadd.f32 %v4951, %v4986
      %v4991 = vadd.f32 %v4952, %v4986
      %v4992 = vadd.f32 %v4953, %v4986
      %v4993 = vadd.f32 %v4954, %v4986
      %v4994 = vadd.f32 %v4955, %v4986
      %v4995 = vadd.f32 %v4956, %v4986
      %v4996 = vadd.f32 %v4957, %v4986
      %v4997 = vadd.f32 %v4958, %v4986
      %v4998 = vadd.f32 %v4959, %v4986
      %v4999 = vadd.f32 %v4960, %v4986
      %v5000 = vadd.f32 %v4961, %v4986
      %v5001 = vadd.f32 %v4962, %v4986
      %v5002 = vadd.f32 %v4963, %v4986
      %v5003 = vadd.f32 %v4964, %v4986
      %v5004 = vadd.f32 %v4965, %v4986
      %v5005 = vadd.f32 %v4966, %v4986
      %v5006 = vadd.f32 %v4967, %v4986
      %v5007 = vadd.f32 %v4968, %v4986
      %v5008 = vadd.f32 %v4969, %v4986
      %v5009 = vadd.f32 %v4970, %v4986
      %v5010 = vadd.f32 %v4971, %v4986
      %v5011 = vadd.f32 %v4972, %v4986
      %v5012 = vadd.f32 %v4973, %v4986
      %v5013 = vadd.f32 %v4974, %v4986
      %v5014 = vadd.f32 %v4975, %v4986
      %v5015 = vadd.f32 %v4976, %v4986
      %v5016 = vadd.f32 %v4977, %v4986
      %v5017 = vadd.f32 %v4978, %v4986
      %v5018 = vadd.f32 %v4979, %v4986
      %v5019 = vadd.f32 %v4980, %v4986
      %v5020 = vmax.f32 %v4988, 0.0
      %v5021 = vmax.f32 %v4989, 0.0
      %v5022 = vmax.f32 %v4990, 0.0
      %v5023 = vmax.f32 %v4991, 0.0
      %v5024 = vmax.f32 %v4992, 0.0
      %v5025 = vmax.f32 %v4993, 0.0
      %v5026 = vmax.f32 %v4994, 0.0
      %v5027 = vmax.f32 %v4995, 0.0
      %v5028 = vmax.f32 %v4996, 0.0
      %v5029 = vmax.f32 %v4997, 0.0
      %v5030 = vmax.f32 %v4998, 0.0
      %v5031 = vmax.f32 %v4999, 0.0
      %v5032 = vmax.f32 %v5000, 0.0
      %v5033 = vmax.f32 %v5001, 0.0
      %v5034 = vmax.f32 %v5002, 0.0
      %v5035 = vmax.f32 %v5003, 0.0
      %v5036 = vmax.f32 %v5004, 0.0
      %v5037 = vmax.f32 %v5005, 0.0
      %v5038 = vmax.f32 %v5006, 0.0
      %v5039 = vmax.f32 %v5007, 0.0
      %v5040 = vmax.f32 %v5008, 0.0
      %v5041 = vmax.f32 %v5009, 0.0
      %v5042 = vmax.f32 %v5010, 0.0
      %v5043 = vmax.f32 %v5011, 0.0
      %v5044 = vmax.f32 %v5012, 0.0
      %v5045 = vmax.f32 %v5013, 0.0
      %v5046 = vmax.f32 %v5014, 0.0
      %v5047 = vmax.f32 %v5015, 0.0
      %v5048 = vmax.f32 %v5016, 0.0
      %v5049 = vmax.f32 %v5017, 0.0
      %v5050 = vmax.f32 %v5018, 0.0
      %v5051 = vmax.f32 %v5019, 0.0
      %v5052 = vpack.c.bf16 %v5021, %v5020
      %v5053 = vpack.c.bf16 %v5023, %v5022
      %v5054 = vpack.c.bf16 %v5025, %v5024
      %v5055 = vpack.c.bf16 %v5027, %v5026
      %v5056 = vpack.c.bf16 %v5029, %v5028
      %v5057 = vpack.c.bf16 %v5031, %v5030
      %v5058 = vpack.c.bf16 %v5033, %v5032
      %v5059 = vpack.c.bf16 %v5035, %v5034
      %v5060 = vpack.c.bf16 %v5037, %v5036
      %v5061 = vpack.c.bf16 %v5039, %v5038
      %v5062 = vpack.c.bf16 %v5041, %v5040
      %v5063 = vpack.c.bf16 %v5043, %v5042
      %v5064 = vpack.c.bf16 %v5045, %v5044
      %v5065 = vpack.c.bf16 %v5047, %v5046
      %v5066 = vpack.c.bf16 %v5049, %v5048
      %v5067 = vpack.c.bf16 %v5051, %v5050
      %5068 = vst [vmem:[%s170] sm:$0xf] 0
      %5069 = vst [vmem:[%s170 + $0x4] sm:$0xf] 0
      %5070 = vst [vmem:[%s170 + $0x8] sm:$0x1] 0
      %5071 = vst [vmem:[%s170 + $0xc] sm:$0xf] 0
      %5072 = vst [vmem:[%s170 + $0x10] sm:$0xf] 0
      %5073 = vst [vmem:[%s170 + $0x14] sm:$0x1] 0
      %5074 = vst [vmem:[%s170 + $0x18] sm:$0xf] 0
      %5075 = vst [vmem:[%s170 + $0x1c] sm:$0xf] 0
      %5076 = vst [vmem:[%s170 + $0x20] sm:$0x1] 0
      %5077 = vst [vmem:[%s170 + $0x24] sm:$0xf] 0
      %5078 = vst [vmem:[%s170 + $0x28] sm:$0xf] 0
      %5079 = vst [vmem:[%s170 + $0x2c] sm:$0x1] 0
      %5080 = vst [vmem:[%s170 + $0x30] sm:$0xf] 0
      %5081 = vst [vmem:[%s170 + $0x34] sm:$0xf] 0
      %5082 = vst [vmem:[%s170 + $0x38] sm:$0x1] 0
      %5083 = vst [vmem:[%s170 + $0x3c] sm:$0xf] 0
      %5084 = vst [vmem:[%s170 + $0x40] sm:$0xf] 0
      %5085 = vst [vmem:[%s170 + $0x44] sm:$0x1] 0
      %5086 = vst [vmem:[%s170 + $0x48] sm:$0xf] 0
      %5087 = vst [vmem:[%s170 + $0x4c] sm:$0xf] 0
      %5088 = vst [vmem:[%s170 + $0x50] sm:$0x1] 0
      %5089 = vst [vmem:[%s170 + $0x54] sm:$0xf] 0
      %5090 = vst [vmem:[%s170 + $0x58] sm:$0xf] 0
      %5091 = vst [vmem:[%s170 + $0x5c] sm:$0x1] 0
      %5092 = vst [vmem:[%s170 + $0x60] sm:$0xf] 0
      %5093 = vst [vmem:[%s170 + $0x64] sm:$0xf] 0
      %5094 = vst [vmem:[%s170 + $0x68] sm:$0x1] 0
      %5095 = vst [vmem:[%s170 + $0x6c] sm:$0xf] 0
      %5096 = vst [vmem:[%s170 + $0x70] sm:$0xf] 0
      %5097 = vst [vmem:[%s170 + $0x74] sm:$0x1] 0
      %5098 = vst [vmem:[%s170 + $0x78] sm:$0xf] 0
      %5099 = vst [vmem:[%s170 + $0x7c] sm:$0xf] 0
      %5100 = vst [vmem:[%s170 + $0x80] sm:$0x1] 0
      %5101 = vst [vmem:[%s170 + $0x84] sm:$0xf] 0
      %5102 = vst [vmem:[%s170 + $0x88] sm:$0xf] 0
      %5103 = vst [vmem:[%s170 + $0x8c] sm:$0x1] 0
      %5104 = vst [vmem:[%s170 + $0x90] sm:$0xf] 0
      %5105 = vst [vmem:[%s170 + $0x94] sm:$0xf] 0
      %5106 = vst [vmem:[%s170 + $0x98] sm:$0x1] 0
      %5107 = vst [vmem:[%s170 + $0x9c] sm:$0xf] 0
      %5108 = vst [vmem:[%s170 + $0xa0] sm:$0xf] 0
      %5109 = vst [vmem:[%s170 + $0xa4] sm:$0x1] 0
      %5110 = vst [vmem:[%s170 + $0xa8] sm:$0xf] 0
      %5111 = vst [vmem:[%s170 + $0xac] sm:$0xf] 0
      %5112 = vst [vmem:[%s170 + $0xb0] sm:$0x1] 0
      %5113 = vst [vmem:[%s170 + $0xb4] sm:$0xf] 0
      %5114 = vst [vmem:[%s170 + $0xb8] sm:$0xf] 0
      %5115 = vst [vmem:[%s170 + $0xbc] sm:$0x1] 0
      %5116 = vst [vmem:[%s170 + $0xc0] sm:$0xf] 0
      %5117 = vst [vmem:[%s170 + $0xc4] sm:$0xf] 0
      %5118 = vst [vmem:[%s170 + $0xc8] sm:$0x1] 0
      %5119 = vst [vmem:[%s170 + $0xcc] sm:$0xf] 0
      %5120 = vst [vmem:[%s170 + $0xd0] sm:$0xf] 0
      %5121 = vst [vmem:[%s170 + $0xd4] sm:$0x1] 0
      %v5138 = vunpack.c.l.b16 %v5052
      %v5139 = vunpack.c.h.b16 %v5052
      %v5140 = vunpack.c.l.b16 %v5053
      %v5141 = vunpack.c.h.b16 %v5053
      %v5142 = vunpack.c.l.b16 %v5054
      %v5143 = vunpack.c.h.b16 %v5054
      %v5144 = vunpack.c.l.b16 %v5055
      %v5145 = vunpack.c.h.b16 %v5055
      %v5146 = vunpack.c.l.b16 %v5056
      %v5147 = vunpack.c.h.b16 %v5056
      %v5148 = vunpack.c.l.b16 %v5057
      %v5149 = vunpack.c.h.b16 %v5057
      %v5150 = vunpack.c.l.b16 %v5058
      %v5151 = vunpack.c.h.b16 %v5058
      %v5152 = vunpack.c.l.b16 %v5059
      %v5153 = vunpack.c.h.b16 %v5059
      %v5154 = vunpack.c.l.b16 %v5060
      %v5155 = vunpack.c.h.b16 %v5060
      %v5156 = vunpack.c.l.b16 %v5061
      %v5157 = vunpack.c.h.b16 %v5061
      %v5158 = vunpack.c.l.b16 %v5062
      %v5159 = vunpack.c.h.b16 %v5062
      %v5160 = vunpack.c.l.b16 %v5063
      %v5161 = vunpack.c.h.b16 %v5063
      %v5162 = vunpack.c.l.b16 %v5064
      %v5163 = vunpack.c.h.b16 %v5064
      %v5164 = vunpack.c.l.b16 %v5065
      %v5165 = vunpack.c.h.b16 %v5065
      %v5166 = vunpack.c.l.b16 %v5066
      %v5167 = vunpack.c.h.b16 %v5066
      %v5168 = vunpack.c.l.b16 %v5067
      %v5169 = vunpack.c.h.b16 %v5067
      %v5170 = vpack.c.b16 %v5138, %v5138
      %v5171 = vpack.c.b16 %v5139, %v5139
      %v5172 = vpack.c.b16 %v5140, %v5140
      %v5173 = vpack.c.b16 %v5141, %v5141
      %v5174 = vpack.c.b16 %v5142, %v5142
      %v5175 = vpack.c.b16 %v5143, %v5143
      %v5176 = vpack.c.b16 %v5144, %v5144
      %v5177 = vpack.c.b16 %v5145, %v5145
      %v5178 = vpack.c.b16 %v5146, %v5146
      %v5179 = vpack.c.b16 %v5147, %v5147
      %v5180 = vpack.c.b16 %v5148, %v5148
      %v5181 = vpack.c.b16 %v5149, %v5149
      %v5182 = vpack.c.b16 %v5150, %v5150
      %v5183 = vpack.c.b16 %v5151, %v5151
      %v5184 = vpack.c.b16 %v5152, %v5152
      %v5185 = vpack.c.b16 %v5153, %v5153
      %v5186 = vpack.c.b16 %v5154, %v5154
      %v5187 = vpack.c.b16 %v5155, %v5155
      %v5188 = vpack.c.b16 %v5156, %v5156
      %v5189 = vpack.c.b16 %v5157, %v5157
      %v5190 = vpack.c.b16 %v5158, %v5158
      %v5191 = vpack.c.b16 %v5159, %v5159
      %v5192 = vpack.c.b16 %v5160, %v5160
      %v5193 = vpack.c.b16 %v5161, %v5161
      %v5194 = vpack.c.b16 %v5162, %v5162
      %v5195 = vpack.c.b16 %v5163, %v5163
      %v5196 = vpack.c.b16 %v5164, %v5164
      %v5197 = vpack.c.b16 %v5165, %v5165
      %v5198 = vpack.c.b16 %v5166, %v5166
      %v5199 = vpack.c.b16 %v5167, %v5167
      %v5200 = vpack.c.b16 %v5168, %v5168
      %v5201 = vpack.c.b16 %v5169, %v5169
      %vm5202 = vsmask.f32 256
      %vm5203 = vsmask.f32 4368
      %vm5204 = vmor %vm5202, %vm5203
      %v5206 = vshrl.u32 %v5170, 16
      %v5208 = vrot.slane %v5206, 7
      %v5209 = vshll.u32 %v5170, 16
      %v5211 = vor.u32 %v5208, %v5209
      %v5212 = vrot.slane %v5208, 4
      %v5214 = vshrl.u32 %v5171, 16
      %v5216 = vrot.slane %v5214, 7
      %v5217 = vshll.u32 %v5171, 16
      %v5219 = vor.u32 %v5216, %v5217
      %v5220 = vsel %vm5204, %v5212, %v5219
      %v5221 = vrot.slane %v5216, 4
      %v5223 = vshrl.u32 %v5172, 16
      %v5225 = vrot.slane %v5223, 7
      %v5226 = vshll.u32 %v5172, 16
      %v5228 = vor.u32 %v5225, %v5226
      %v5229 = vrot.slane %v5225, 4
      %v5231 = vshrl.u32 %v5173, 16
      %v5233 = vrot.slane %v5231, 7
      %v5234 = vshll.u32 %v5173, 16
      %v5236 = vor.u32 %v5233, %v5234
      %v5237 = vsel %vm5204, %v5229, %v5236
      %v5238 = vrot.slane %v5233, 4
      %v5240 = vshrl.u32 %v5174, 16
      %v5242 = vrot.slane %v5240, 7
      %v5243 = vshll.u32 %v5174, 16
      %v5245 = vor.u32 %v5242, %v5243
      %v5246 = vrot.slane %v5242, 4
      %v5248 = vshrl.u32 %v5175, 16
      %v5250 = vrot.slane %v5248, 7
      %v5251 = vshll.u32 %v5175, 16
      %v5253 = vor.u32 %v5250, %v5251
      %v5254 = vsel %vm5204, %v5246, %v5253
      %v5255 = vrot.slane %v5250, 4
      %v5257 = vshrl.u32 %v5176, 16
      %v5259 = vrot.slane %v5257, 7
      %v5260 = vshll.u32 %v5176, 16
      %v5262 = vor.u32 %v5259, %v5260
      %v5263 = vrot.slane %v5259, 4
      %v5265 = vshrl.u32 %v5177, 16
      %v5267 = vrot.slane %v5265, 7
      %v5268 = vshll.u32 %v5177, 16
      %v5270 = vor.u32 %v5267, %v5268
      %v5271 = vsel %vm5204, %v5263, %v5270
      %v5272 = vrot.slane %v5267, 4
      %v5274 = vshrl.u32 %v5178, 16
      %v5276 = vrot.slane %v5274, 7
      %v5277 = vshll.u32 %v5178, 16
      %v5279 = vor.u32 %v5276, %v5277
      %v5280 = vrot.slane %v5276, 4
      %v5282 = vshrl.u32 %v5179, 16
      %v5284 = vrot.slane %v5282, 7
      %v5285 = vshll.u32 %v5179, 16
      %v5287 = vor.u32 %v5284, %v5285
      %v5288 = vsel %vm5204, %v5280, %v5287
      %v5289 = vrot.slane %v5284, 4
      %v5291 = vshrl.u32 %v5180, 16
      %v5293 = vrot.slane %v5291, 7
      %v5294 = vshll.u32 %v5180, 16
      %v5296 = vor.u32 %v5293, %v5294
      %v5297 = vrot.slane %v5293, 4
      %v5299 = vshrl.u32 %v5181, 16
      %v5301 = vrot.slane %v5299, 7
      %v5302 = vshll.u32 %v5181, 16
      %v5304 = vor.u32 %v5301, %v5302
      %v5305 = vsel %vm5204, %v5297, %v5304
      %v5306 = vrot.slane %v5301, 4
      %v5308 = vshrl.u32 %v5182, 16
      %v5310 = vrot.slane %v5308, 7
      %v5311 = vshll.u32 %v5182, 16
      %v5313 = vor.u32 %v5310, %v5311
      %v5314 = vrot.slane %v5310, 4
      %v5316 = vshrl.u32 %v5183, 16
      %v5318 = vrot.slane %v5316, 7
      %v5319 = vshll.u32 %v5183, 16
      %v5321 = vor.u32 %v5318, %v5319
      %v5322 = vsel %vm5204, %v5314, %v5321
      %v5323 = vrot.slane %v5318, 4
      %v5325 = vshrl.u32 %v5184, 16
      %v5327 = vrot.slane %v5325, 7
      %v5328 = vshll.u32 %v5184, 16
      %v5330 = vor.u32 %v5327, %v5328
      %v5331 = vrot.slane %v5327, 4
      %v5333 = vshrl.u32 %v5185, 16
      %v5335 = vrot.slane %v5333, 7
      %v5336 = vshll.u32 %v5185, 16
      %v5338 = vor.u32 %v5335, %v5336
      %v5339 = vsel %vm5204, %v5331, %v5338
      %v5340 = vrot.slane %v5335, 4
      %v5342 = vshrl.u32 %v5186, 16
      %v5344 = vrot.slane %v5342, 7
      %v5345 = vshll.u32 %v5186, 16
      %v5347 = vor.u32 %v5344, %v5345
      %v5348 = vrot.slane %v5344, 4
      %v5350 = vshrl.u32 %v5187, 16
      %v5352 = vrot.slane %v5350, 7
      %v5353 = vshll.u32 %v5187, 16
      %v5355 = vor.u32 %v5352, %v5353
      %v5356 = vsel %vm5204, %v5348, %v5355
      %v5357 = vrot.slane %v5352, 4
      %v5359 = vshrl.u32 %v5188, 16
      %v5361 = vrot.slane %v5359, 7
      %v5362 = vshll.u32 %v5188, 16
      %v5364 = vor.u32 %v5361, %v5362
      %v5365 = vrot.slane %v5361, 4
      %v5367 = vshrl.u32 %v5189, 16
      %v5369 = vrot.slane %v5367, 7
      %v5370 = vshll.u32 %v5189, 16
      %v5372 = vor.u32 %v5369, %v5370
      %v5373 = vsel %vm5204, %v5365, %v5372
      %v5374 = vrot.slane %v5369, 4
      %v5376 = vshrl.u32 %v5190, 16
      %v5378 = vrot.slane %v5376, 7
      %v5379 = vshll.u32 %v5190, 16
      %v5381 = vor.u32 %v5378, %v5379
      %v5382 = vrot.slane %v5378, 4
      %v5384 = vshrl.u32 %v5191, 16
      %v5386 = vrot.slane %v5384, 7
      %v5387 = vshll.u32 %v5191, 16
      %v5389 = vor.u32 %v5386, %v5387
      %v5390 = vsel %vm5204, %v5382, %v5389
      %v5391 = vrot.slane %v5386, 4
      %v5393 = vshrl.u32 %v5192, 16
      %v5395 = vrot.slane %v5393, 7
      %v5396 = vshll.u32 %v5192, 16
      %v5398 = vor.u32 %v5395, %v5396
      %v5399 = vrot.slane %v5395, 4
      %v5401 = vshrl.u32 %v5193, 16
      %v5403 = vrot.slane %v5401, 7
      %v5404 = vshll.u32 %v5193, 16
      %v5406 = vor.u32 %v5403, %v5404
      %v5407 = vsel %vm5204, %v5399, %v5406
      %v5408 = vrot.slane %v5403, 4
      %v5410 = vshrl.u32 %v5194, 16
      %v5412 = vrot.slane %v5410, 7
      %v5413 = vshll.u32 %v5194, 16
      %v5415 = vor.u32 %v5412, %v5413
      %v5416 = vrot.slane %v5412, 4
      %v5418 = vshrl.u32 %v5195, 16
      %v5420 = vrot.slane %v5418, 7
      %v5421 = vshll.u32 %v5195, 16
      %v5423 = vor.u32 %v5420, %v5421
      %v5424 = vsel %vm5204, %v5416, %v5423
      %v5425 = vrot.slane %v5420, 4
      %v5427 = vshrl.u32 %v5196, 16
      %v5429 = vrot.slane %v5427, 7
      %v5430 = vshll.u32 %v5196, 16
      %v5432 = vor.u32 %v5429, %v5430
      %v5433 = vrot.slane %v5429, 4
      %v5435 = vshrl.u32 %v5197, 16
      %v5437 = vrot.slane %v5435, 7
      %v5438 = vshll.u32 %v5197, 16
      %v5440 = vor.u32 %v5437, %v5438
      %v5441 = vsel %vm5204, %v5433, %v5440
      %v5442 = vrot.slane %v5437, 4
      %v5444 = vshrl.u32 %v5198, 16
      %v5446 = vrot.slane %v5444, 7
      %v5447 = vshll.u32 %v5198, 16
      %v5449 = vor.u32 %v5446, %v5447
      %v5450 = vrot.slane %v5446, 4
      %v5452 = vshrl.u32 %v5199, 16
      %v5454 = vrot.slane %v5452, 7
      %v5455 = vshll.u32 %v5199, 16
      %v5457 = vor.u32 %v5454, %v5455
      %v5458 = vsel %vm5204, %v5450, %v5457
      %v5459 = vrot.slane %v5454, 4
      %v5461 = vshrl.u32 %v5200, 16
      %v5463 = vrot.slane %v5461, 7
      %v5464 = vshll.u32 %v5200, 16
      %v5466 = vor.u32 %v5463, %v5464
      %v5467 = vrot.slane %v5463, 4
      %v5469 = vshrl.u32 %v5201, 16
      %v5471 = vrot.slane %v5469, 7
      %v5472 = vshll.u32 %v5201, 16
      %v5474 = vor.u32 %v5471, %v5472
      %v5475 = vsel %vm5204, %v5467, %v5474
      %v5476 = vrot.slane %v5471, 4
      %s5525 = scalar_lea.vmem %s170, 12
      %vm5526 = vcmask 1043456
      %vm5527 = vsmask.f32 7938
      %vm5528 = vmand %vm5526, %vm5527
      %v5529 = vld [vmem:[%s5525] sm:$0xf]
      %v5530 = vsel %vm5528, %v5211, %v5529
      %5531 = vst [vmem:[%s5525] sm:$0xf] %v5530
      %5532 = vst [vmem:[%s5525 + $0x4] sm:$0xf] %v5220
      %vm5533 = vcmask 1040384
      %vm5534 = vmand %vm5533, %vm5202
      %v5535 = vld [vmem:[%s5525 + $0x8] sm:$0x1]
      %v5536 = vsel %vm5534, %v5221, %v5535
      %5537 = vst [vmem:[%s5525 + $0x8] sm:$0x1] %v5536
      %v5538 = vld [vmem:[%s5525 + $0xc] sm:$0xf]
      %v5539 = vsel %vm5528, %v5228, %v5538
      %5540 = vst [vmem:[%s5525 + $0xc] sm:$0xf] %v5539
      %5541 = vst [vmem:[%s5525 + $0x10] sm:$0xf] %v5237
      %v5542 = vld [vmem:[%s5525 + $0x14] sm:$0x1]
      %v5543 = vsel %vm5534, %v5238, %v5542
      %5544 = vst [vmem:[%s5525 + $0x14] sm:$0x1] %v5543
      %v5545 = vld [vmem:[%s5525 + $0x18] sm:$0xf]
      %v5546 = vsel %vm5528, %v5245, %v5545
      %5547 = vst [vmem:[%s5525 + $0x18] sm:$0xf] %v5546
      %5548 = vst [vmem:[%s5525 + $0x1c] sm:$0xf] %v5254
      %v5549 = vld [vmem:[%s5525 + $0x20] sm:$0x1]
      %v5550 = vsel %vm5534, %v5255, %v5549
      %5551 = vst [vmem:[%s5525 + $0x20] sm:$0x1] %v5550
      %v5552 = vld [vmem:[%s5525 + $0x24] sm:$0xf]
      %v5553 = vsel %vm5528, %v5262, %v5552
      %5554 = vst [vmem:[%s5525 + $0x24] sm:$0xf] %v5553
      %5555 = vst [vmem:[%s5525 + $0x28] sm:$0xf] %v5271
      %v5556 = vld [vmem:[%s5525 + $0x2c] sm:$0x1]
      %v5557 = vsel %vm5534, %v5272, %v5556
      %5558 = vst [vmem:[%s5525 + $0x2c] sm:$0x1] %v5557
      %v5559 = vld [vmem:[%s5525 + $0x30] sm:$0xf]
      %v5560 = vsel %vm5528, %v5279, %v5559
      %5561 = vst [vmem:[%s5525 + $0x30] sm:$0xf] %v5560
      %5562 = vst [vmem:[%s5525 + $0x34] sm:$0xf] %v5288
      %v5563 = vld [vmem:[%s5525 + $0x38] sm:$0x1]
      %v5564 = vsel %vm5534, %v5289, %v5563
      %5565 = vst [vmem:[%s5525 + $0x38] sm:$0x1] %v5564
      %v5566 = vld [vmem:[%s5525 + $0x3c] sm:$0xf]
      %v5567 = vsel %vm5528, %v5296, %v5566
      %5568 = vst [vmem:[%s5525 + $0x3c] sm:$0xf] %v5567
      %5569 = vst [vmem:[%s5525 + $0x40] sm:$0xf] %v5305
      %v5570 = vld [vmem:[%s5525 + $0x44] sm:$0x1]
      %v5571 = vsel %vm5534, %v5306, %v5570
      %5572 = vst [vmem:[%s5525 + $0x44] sm:$0x1] %v5571
      %v5573 = vld [vmem:[%s5525 + $0x48] sm:$0xf]
      %v5574 = vsel %vm5528, %v5313, %v5573
      %5575 = vst [vmem:[%s5525 + $0x48] sm:$0xf] %v5574
      %5576 = vst [vmem:[%s5525 + $0x4c] sm:$0xf] %v5322
      %v5577 = vld [vmem:[%s5525 + $0x50] sm:$0x1]
      %v5578 = vsel %vm5534, %v5323, %v5577
      %5579 = vst [vmem:[%s5525 + $0x50] sm:$0x1] %v5578
      %v5580 = vld [vmem:[%s5525 + $0x54] sm:$0xf]
      %v5581 = vsel %vm5528, %v5330, %v5580
      %5582 = vst [vmem:[%s5525 + $0x54] sm:$0xf] %v5581
      %5583 = vst [vmem:[%s5525 + $0x58] sm:$0xf] %v5339
      %v5584 = vld [vmem:[%s5525 + $0x5c] sm:$0x1]
      %v5585 = vsel %vm5534, %v5340, %v5584
      %5586 = vst [vmem:[%s5525 + $0x5c] sm:$0x1] %v5585
      %v5587 = vld [vmem:[%s5525 + $0x60] sm:$0xf]
      %v5588 = vsel %vm5528, %v5347, %v5587
      %5589 = vst [vmem:[%s5525 + $0x60] sm:$0xf] %v5588
      %5590 = vst [vmem:[%s5525 + $0x64] sm:$0xf] %v5356
      %v5591 = vld [vmem:[%s5525 + $0x68] sm:$0x1]
      %v5592 = vsel %vm5534, %v5357, %v5591
      %5593 = vst [vmem:[%s5525 + $0x68] sm:$0x1] %v5592
      %v5594 = vld [vmem:[%s5525 + $0x6c] sm:$0xf]
      %v5595 = vsel %vm5528, %v5364, %v5594
      %5596 = vst [vmem:[%s5525 + $0x6c] sm:$0xf] %v5595
      %5597 = vst [vmem:[%s5525 + $0x70] sm:$0xf] %v5373
      %v5598 = vld [vmem:[%s5525 + $0x74] sm:$0x1]
      %v5599 = vsel %vm5534, %v5374, %v5598
      %5600 = vst [vmem:[%s5525 + $0x74] sm:$0x1] %v5599
      %v5601 = vld [vmem:[%s5525 + $0x78] sm:$0xf]
      %v5602 = vsel %vm5528, %v5381, %v5601
      %5603 = vst [vmem:[%s5525 + $0x78] sm:$0xf] %v5602
      %5604 = vst [vmem:[%s5525 + $0x7c] sm:$0xf] %v5390
      %v5605 = vld [vmem:[%s5525 + $0x80] sm:$0x1]
      %v5606 = vsel %vm5534, %v5391, %v5605
      %5607 = vst [vmem:[%s5525 + $0x80] sm:$0x1] %v5606
      %v5608 = vld [vmem:[%s5525 + $0x84] sm:$0xf]
      %v5609 = vsel %vm5528, %v5398, %v5608
      %5610 = vst [vmem:[%s5525 + $0x84] sm:$0xf] %v5609
      %5611 = vst [vmem:[%s5525 + $0x88] sm:$0xf] %v5407
      %v5612 = vld [vmem:[%s5525 + $0x8c] sm:$0x1]
      %v5613 = vsel %vm5534, %v5408, %v5612
      %5614 = vst [vmem:[%s5525 + $0x8c] sm:$0x1] %v5613
      %v5615 = vld [vmem:[%s5525 + $0x90] sm:$0xf]
      %v5616 = vsel %vm5528, %v5415, %v5615
      %5617 = vst [vmem:[%s5525 + $0x90] sm:$0xf] %v5616
      %5618 = vst [vmem:[%s5525 + $0x94] sm:$0xf] %v5424
      %v5619 = vld [vmem:[%s5525 + $0x98] sm:$0x1]
      %v5620 = vsel %vm5534, %v5425, %v5619
      %5621 = vst [vmem:[%s5525 + $0x98] sm:$0x1] %v5620
      %v5622 = vld [vmem:[%s5525 + $0x9c] sm:$0xf]
      %v5623 = vsel %vm5528, %v5432, %v5622
      %5624 = vst [vmem:[%s5525 + $0x9c] sm:$0xf] %v5623
      %5625 = vst [vmem:[%s5525 + $0xa0] sm:$0xf] %v5441
      %v5626 = vld [vmem:[%s5525 + $0xa4] sm:$0x1]
      %v5627 = vsel %vm5534, %v5442, %v5626
      %5628 = vst [vmem:[%s5525 + $0xa4] sm:$0x1] %v5627
      %v5629 = vld [vmem:[%s5525 + $0xa8] sm:$0xf]
      %v5630 = vsel %vm5528, %v5449, %v5629
      %5631 = vst [vmem:[%s5525 + $0xa8] sm:$0xf] %v5630
      %5632 = vst [vmem:[%s5525 + $0xac] sm:$0xf] %v5458
      %v5633 = vld [vmem:[%s5525 + $0xb0] sm:$0x1]
      %v5634 = vsel %vm5534, %v5459, %v5633
      %5635 = vst [vmem:[%s5525 + $0xb0] sm:$0x1] %v5634
      %v5636 = vld [vmem:[%s5525 + $0xb4] sm:$0xf]
      %v5637 = vsel %vm5528, %v5466, %v5636
      %5638 = vst [vmem:[%s5525 + $0xb4] sm:$0xf] %v5637
      %5639 = vst [vmem:[%s5525 + $0xb8] sm:$0xf] %v5475
      %v5640 = vld [vmem:[%s5525 + $0xbc] sm:$0x1]
      %v5641 = vsel %vm5534, %v5476, %v5640
      %5642 = vst [vmem:[%s5525 + $0xbc] sm:$0x1] %v5641
      %p5643 = scmp.lt.s32.totalorder %s14, 1
      %s5644 = scalar_select %p5643, %s14, 1
      %s5645 = smul.addr %s5644, 54
      %s5646 = smul.addr %s5645, 4
      %s5647 = scalar_lea.vmem %s3, %s5646
      // Predicated region
      $region33: #{up_block_forward.4} parent=31 // pred_check
        %p5648 = pneg %p100
      $region34: #{up_block_forward.4} parent=31 // pred_check_branch
        %5650 = sbr.rel (%p5648) target = $region36
      $region35: #{up_block_forward.4} parent=31 // pred_region
        _
      $region36: #{up_block_forward.4} parent=31 // pred_fallthru
        _
    $region32: #{up_block_forward.4} parent=5 // pred_fallthru
      _
    %p5651 = scmp.le.s32.totalorder 2, %s9
    // Predicated region
    $region37: #{up_block_forward.4} parent=5 // pred_check
      %p5652 = pneg %p5651
    $region38: #{up_block_forward.4} parent=5 // pred_check_branch
      %5654 = sbr.rel (%p5652) target = $region40
    $region39: #{up_block_forward.4} parent=5 // pred_region
      %s5655 = ssub.s32 %s9, 2
      // Predicated region
      $region41: #{up_block_forward.4} parent=39 // pred_check
        %p5656 = pneg %p106
      $region42: #{up_block_forward.4} parent=39 // pred_check_branch
        %5658 = sbr.rel (%p5656) target = $region44
      $region43: #{up_block_forward.4} parent=39 // pred_region
        %p5659 = scmp.lt.s32.totalorder %s15, 1
        %s5660 = scalar_select %p5659, %s15, 1
        %s5661 = smul.addr %s5660, 54
        %s5662 = smul.addr %s5661, 4
        %s5663 = scalar_lea.vmem %s3, %s5662
      $region44: #{up_block_forward.4} parent=39 // pred_fallthru
        _
    $region40: #{up_block_forward.4} parent=5 // pred_fallthru
      _
  $region6: #{up_block_forward.4} parent=0 // loop_footer
    %s13 = sadd.s32 1, %s9
  $region7: #{up_block_forward.4} parent=0 // loop_footer_branch
    %8 = sbr.rel target = $region3
  $region8: #{up_block_forward.4} parent=0 // loop_exit
    _

</llo_original>
